<compile_context>
chip_gen: v6e
topology: v6e:2x2x1
jax: 0.10.0
libtpu: 0.0.40
codegen_flags: <defaults>
</compile_context>

<pallas_src>
import functools

import jax
import jax.numpy as jnp
from jax.experimental import pallas as pl
from jax.experimental.pallas import tpu as pltpu


# ----------------------------------------------------------------------------
# The single Pallas kernel: tiled matmul + bias (+ optional ReLU) epilogue
# ----------------------------------------------------------------------------
def _matmul_bias_kernel(x_ref, w_ref, b_ref, o_ref, *, relu):
    acc = jnp.dot(x_ref[...], w_ref[...], preferred_element_type=jnp.float32)
    acc = acc + b_ref[...]                       # (1, N) f32 bias broadcast
    if relu:
        acc = jnp.maximum(acc, 0.0)              # VPU max rides free in the epilogue
    o_ref[...] = acc.astype(o_ref.dtype)


_MAX_TM = 1024  # (1024, 2200) bf16 x-block = 4.4 MiB; far under VMEM on v5e/v6e/v7x


def _pick_tm(m, max_tm=_MAX_TM):
    """Full-M block for small M (1 step, no padded tail); otherwise a divisor of
    M so tail blocks are never padding, with >=2 grid steps (v7x megacore)."""
    if m <= 256:
        return m
    limit = min(max_tm, m // 2)
    limit -= limit % 8
    for tm in range(limit, 7, -8):
        if m % tm == 0:
            return tm
    # Fallback: padded tail.  Rows are independent, so OOB tail rows are
    # garbage-in / masked-out and never affect valid output rows.
    return min(max_tm, m)


def matmul_bias(x, w, b, *, relu=False, out_dtype=jnp.bfloat16):
    """x:(M,K) bf16 @ w:(K,N) bf16 + b:(1,N) f32 -> (M,N) out_dtype, tiled over M."""
    x = x.astype(jnp.bfloat16)
    m, k = x.shape
    n = w.shape[1]
    tm = _pick_tm(m)
    kernel = functools.partial(_matmul_bias_kernel, relu=relu)
    return pl.pallas_call(
        kernel,
        out_shape=jax.ShapeDtypeStruct((m, n), out_dtype),
        grid=(pl.cdiv(m, tm),),
        in_specs=[
            pl.BlockSpec((tm, k), lambda i: (i, 0)),
            pl.BlockSpec((k, n), lambda i: (0, 0)),
            pl.BlockSpec((1, n), lambda i: (0, 0)),
        ],
        out_specs=pl.BlockSpec((tm, n), lambda i: (i, 0)),
        compiler_params=pltpu.CompilerParams(
            dimension_semantics=("parallel",)),
    )(x, w, b)


# ----------------------------------------------------------------------------
# NHWC im2col + conv wrapper (bf16 throughout), XLA 2x2 max-pool
# ----------------------------------------------------------------------------
def _im2col_nhwc(x, kh, kw, pad):
    """x is bf16, so the kh*kw tap-stack is materialized at half width."""
    B, H, W, C = x.shape
    if pad:
        x = jnp.pad(x, ((0, 0), (pad, pad), (pad, pad), (0, 0)))
    Hp, Wp = x.shape[1], x.shape[2]
    Ho, Wo = Hp - kh + 1, Wp - kw + 1
    taps = jnp.stack(
        [x[:, i:i + Ho, j:j + Wo, :] for i in range(kh) for j in range(kw)],
        axis=3)                                          # (B, Ho, Wo, kh*kw, C)
    return taps.reshape(B * Ho * Wo, kh * kw * C), Ho, Wo


def conv2d(x, w2, b2, kh, kw, pad=0, relu=False, out_dtype=jnp.bfloat16):
    """NHWC conv, stride 1.  w2: prepared (kh*kw*Cin, Cout) bf16, b2: (1,Cout) f32."""
    B, H, W, C = x.shape
    if kh == 1 and kw == 1 and pad == 0:
        patches, Ho, Wo = x.reshape(B * H * W, C), H, W
    else:
        patches, Ho, Wo = _im2col_nhwc(x, kh, kw, pad)
    out = matmul_bias(patches, w2, b2, relu=relu, out_dtype=out_dtype)
    return out.reshape(B, Ho, Wo, w2.shape[1])


def maxpool2(x):
    """2x2 / stride-2 max-pool.  ReLU is already fused into the preceding conv
    epilogue (relu∘mp == mp∘relu), so this is a trivial XLA reduce on bf16."""
    B, H, W, C = x.shape
    return x.reshape(B, H // 2, 2, W // 2, 2, C).max(axis=(2, 4))


# ----------------------------------------------------------------------------
# Parameters: PyTorch-layout init, then one-time preparation (fusions hoisted)
# ----------------------------------------------------------------------------
def _conv_params(key, cout, cin, k):
    kw_, kb_ = jax.random.split(key)
    w = jax.random.normal(kw_, (cout, cin, k, k), jnp.float32) * 0.05
    b = jax.random.normal(kb_, (cout,), jnp.float32) * 0.05
    return w, b


def init_inception_params(key, in_channels):
    ks = jax.random.split(key, 7)
    p = {}
    p["c1x1_w"], p["c1x1_b"] = _conv_params(ks[0], 16, in_channels, 1)
    p["c5_1_w"], p["c5_1_b"] = _conv_params(ks[1], 16, in_channels, 1)
    p["c5_2_w"], p["c5_2_b"] = _conv_params(ks[2], 24, 16, 5)
    p["c3_1_w"], p["c3_1_b"] = _conv_params(ks[3], 16, in_channels, 1)
    p["c3_2_w"], p["c3_2_b"] = _conv_params(ks[4], 24, 16, 3)
    p["c3_3_w"], p["c3_3_b"] = _conv_params(ks[5], 24, 24, 3)
    p["pool_w"], p["pool_b"] = _conv_params(ks[6], 24, in_channels, 1)
    return p


def init_net_params(key):
    ks = jax.random.split(key, 6)
    p = {}
    p["conv1_w"], p["conv1_b"] = _conv_params(ks[0], 10, 1, 5)
    p["conv2_w"], p["conv2_b"] = _conv_params(ks[1], 20, 88, 5)
    p["inc1"] = init_inception_params(ks[2], 10)
    p["inc2"] = init_inception_params(ks[3], 20)
    p["fc_w"] = jax.random.normal(ks[4], (10, 1408), jnp.float32) * 0.02  # torch layout
    p["fc_b"] = jax.random.normal(ks[5], (10,), jnp.float32) * 0.02
    return p


def _prep_conv(w, b):
    """(Cout,Cin,kh,kw) -> (kh*kw*Cin, Cout) bf16, matching NHWC im2col K order."""
    cout, cin, kh, kw = w.shape
    w2 = w.transpose(2, 3, 1, 0).reshape(kh * kw * cin, cout).astype(jnp.bfloat16)
    b2 = b.reshape(1, cout).astype(jnp.float32)
    return w2, b2


def prepare_inception_params(p):
    cin = p["c1x1_w"].shape[1]
    q = {}
    # Stage 1: one (9*cin, 72) weight on the shared 3x3/pad1 patch slab.
    #   cols  0:48  three 1x1 stems (conv1x1, conv5x5_1, conv3x3_1) -> centre tap only
    #   cols 48:72  avg_pool2d(3, pad=1, count_include_pad=True) + pool 1x1 -> w/9 on all taps
    stem = jnp.concatenate(
        [p["c1x1_w"], p["c5_1_w"], p["c3_1_w"]], axis=0)[:, :, 0, 0].T    # (cin, 48)
    pool = p["pool_w"][:, :, 0, 0].T / 9.0                                # (cin, 24)
    w1 = jnp.zeros((9, cin, 72), jnp.float32)
    w1 = w1.at[4, :, :48].set(stem)                      # tap (1,1) of the 3x3 window
    w1 = w1.at[:, :, 48:].set(jnp.broadcast_to(pool[None], (9, cin, 24)))
    q["s1_w"] = w1.reshape(9 * cin, 72).astype(jnp.bfloat16)
    q["s1_b"] = jnp.concatenate(
        [p["c1x1_b"], p["c5_1_b"], p["c3_1_b"], p["pool_b"]]
    ).reshape(1, 72).astype(jnp.float32)
    # Stage 2: block-diagonal fusion of conv5x5_2 (K=400) and conv3x3_2 (K=144).
    w5, b5 = _prep_conv(p["c5_2_w"], p["c5_2_b"])
    w3, b3 = _prep_conv(p["c3_2_w"], p["c3_2_b"])
    (k5, n5), (k3, n3) = w5.shape, w3.shape
    q["s2_w"] = jnp.concatenate([
        jnp.concatenate([w5, jnp.zeros((k5, n3), w5.dtype)], axis=1),
        jnp.concatenate([jnp.zeros((k3, n5), w3.dtype), w3], axis=1)], axis=0)
    q["s2_b"] = jnp.concatenate([b5, b3], axis=1)
    # Stage 3.
    q["c3_3_w"], q["c3_3_b"] = _prep_conv(p["c3_3_w"], p["c3_3_b"])
    return q


def prepare_net_params(p):
    q = {}
    q["conv1_w"], q["conv1_b"] = _prep_conv(p["conv1_w"], p["conv1_b"])
    q["conv2_w"], q["conv2_b"] = _prep_conv(p["conv2_w"], p["conv2_b"])
    q["inc1"] = prepare_inception_params(p["inc1"])
    q["inc2"] = prepare_inception_params(p["inc2"])
    # Torch fc consumes a (C,H,W)-ordered flatten; we flatten NHWC -> permute rows once.
    fc = p["fc_w"].reshape(10, 88, 4, 4).transpose(0, 2, 3, 1).reshape(10, 1408)
    q["fc_w"] = fc.T.astype(jnp.bfloat16)                     # (1408, 10)
    q["fc_b"] = p["fc_b"].reshape(1, 10).astype(jnp.float32)
    return q


# ----------------------------------------------------------------------------
# Forward pass (bf16 NHWC throughout; 9 pallas_calls total)
# ----------------------------------------------------------------------------
def inception_forward(x, p):
    B, H, W, Cin = x.shape
    # Stage 1: fused [1x1-stems | folded avgpool+1x1] on one 3x3/pad1 patch slab.
    patches1, _, _ = _im2col_nhwc(x, 3, 3, 1)                     # (M, 9*Cin)
    s1 = matmul_bias(patches1, p["s1_w"], p["s1_b"]).reshape(B, H, W, 72)
    b1x1, t5, t3, bpool = s1[..., :16], s1[..., 16:32], s1[..., 32:48], s1[..., 48:]
    # Stage 2: block-diagonal fusion of conv5x5_2 and conv3x3_2 (shared M).
    p5, _, _ = _im2col_nhwc(t5, 5, 5, 2)                          # (M, 400)
    p3, _, _ = _im2col_nhwc(t3, 3, 3, 1)                          # (M, 144)
    s2 = matmul_bias(jnp.concatenate([p5, p3], axis=1),
                     p["s2_w"], p["s2_b"]).reshape(B, H, W, 48)
    b5x5, t3b = s2[..., :24], s2[..., 24:]
    # Stage 3: conv3x3_3.
    b3x3 = conv2d(t3b, p["c3_3_w"], p["c3_3_b"], 3, 3, pad=1)
    # Same channel order as the PyTorch module: [1x1, 3x3, 5x5, pool]
    return jnp.concatenate([b1x1, b3x3, b5x5, bpool], axis=-1)    # (B,H,W,88)


@jax.jit
def net_forward(x_nchw, params):
    # x: (B, 1, 28, 28)  [1408 = 88*4*4 flatten requires 28x28]
    B = x_nchw.shape[0]
    x = jnp.transpose(x_nchw, (0, 2, 3, 1)).astype(jnp.bfloat16)        # NCHW->NHWC, bf16 once
    x = conv2d(x, params["conv1_w"], params["conv1_b"], 5, 5, relu=True)  # (B,24,24,10)
    x = maxpool2(x)                                                        # (B,12,12,10)
    x = inception_forward(x, params["inc1"])                               # (B,12,12,88)
    x = conv2d(x, params["conv2_w"], params["conv2_b"], 5, 5, relu=True)   # (B,8,8,20)
    x = maxpool2(x)                                                        # (B,4,4,20)
    x = inception_forward(x, params["inc2"])                               # (B,4,4,88)
    x = x.reshape(B, 4 * 4 * 88)                 # NHWC flatten; fc rows pre-permuted
    return matmul_bias(x, params["fc_w"], params["fc_b"],
                       out_dtype=jnp.float32)                              # (B,10) f32


if __name__ == "__main__":
    key = jax.random.PRNGKey(0)
    kx, kp = jax.random.split(key)
    x = jax.random.normal(kx, (2, 1, 28, 28), jnp.float32)
    raw_params = init_net_params(kp)
    params = prepare_net_params(raw_params)      # one-time weight reshape/fuse/fold (hoisted)

    out = jax.block_until_ready(net_forward(x, params))
    assert out.shape == (2, 10), out.shape
    assert bool(jnp.all(jnp.isfinite(out)))
    print("KERNEL_OK")
</pallas_src>

<mosaic_0001>
module attributes {stable_mosaic.version = 11 : i64} {
  func.func @_matmul_bias_kernel(%arg0: i32, %arg1: memref<576x25xbf16, #tpu.memory_space<vmem>>, %arg2: memref<25x10xbf16, #tpu.memory_space<vmem>>, %arg3: memref<1x10xf32, #tpu.memory_space<vmem>>, %arg4: memref<576x10xbf16, #tpu.memory_space<vmem>>) attributes {dimension_semantics = [#tpu.dimension_semantics<parallel>], iteration_bounds = array<i64: 2>, scalar_prefetch = 0 : i64, scratch_operands = 0 : i64, tpu.core_type = #tpu.core_type<tc>, window_params = [{transform_indices = @transform_0, window_bounds = array<i64: 576, 25>}, {pipeline_mode = #tpu.pipeline_mode<synchronous>, transform_indices = @transform_1, window_bounds = array<i64: 25, 10>}, {pipeline_mode = #tpu.pipeline_mode<synchronous>, transform_indices = @transform_2, window_bounds = array<i64: 1, 10>}, {transform_indices = @transform_3, window_bounds = array<i64: 576, 10>}]} {
    %c0 = arith.constant 0 : index
    %c0_0 = arith.constant 0 : index
    %0 = vector.load %arg1[%c0, %c0_0] : memref<576x25xbf16, #tpu.memory_space<vmem>>, vector<576x25xbf16>
    %c0_1 = arith.constant 0 : index
    %c0_2 = arith.constant 0 : index
    %1 = vector.load %arg2[%c0_1, %c0_2] : memref<25x10xbf16, #tpu.memory_space<vmem>>, vector<25x10xbf16>
    %cst = arith.constant dense<0.000000e+00> : vector<576x10xf32>
    %2 = tpu.matmul %0, %1, %cst {dimension_numbers = #tpu.dot_dimension_numbers<[1], [0], [0], [1], [0, 0, 1, 1], [], []>} : vector<576x25xbf16>, vector<25x10xbf16>, vector<576x10xf32> -> vector<576x10xf32>
    %c0_3 = arith.constant 0 : index
    %c0_4 = arith.constant 0 : index
    %3 = vector.load %arg3[%c0_3, %c0_4] : memref<1x10xf32, #tpu.memory_space<vmem>>, vector<1x10xf32>
    %4 = vector.broadcast %3 : vector<1x10xf32> to vector<576x10xf32>
    %5 = arith.addf %2, %4 : vector<576x10xf32>
    %cst_5 = arith.constant 0.000000e+00 : f32
    %6 = vector.broadcast %cst_5 : f32 to vector<576x10xf32>
    %7 = arith.maximumf %5, %6 : vector<576x10xf32>
    %8 = arith.truncf %7 : vector<576x10xf32> to vector<576x10xbf16>
    %c0_6 = arith.constant 0 : index
    %c0_7 = arith.constant 0 : index
    %9 = vector.load %arg4[%c0_6, %c0_7] : memref<576x10xbf16, #tpu.memory_space<vmem>>, vector<576x10xbf16>
    tpu.vector_store %arg4[%c0_6, %c0_7], %8 {strides = array<i32>} : memref<576x10xbf16, #tpu.memory_space<vmem>>, vector<576x10xbf16>,
    return
  }
  func.func @transform_0(%arg0: i32) -> (i32, i32) {
    %c0_i32 = arith.constant 0 : i32
    %c0_i32_0 = arith.constant 0 : i32
    return %arg0, %c0_i32 : i32, i32
  }
  func.func @transform_1(%arg0: i32) -> (i32, i32) {
    %c0_i32 = arith.constant 0 : i32
    %c0_i32_0 = arith.constant 0 : i32
    %c0_i32_1 = arith.constant 0 : i32
    return %c0_i32, %c0_i32_0 : i32, i32
  }
  func.func @transform_2(%arg0: i32) -> (i32, i32) {
    %c0_i32 = arith.constant 0 : i32
    %c0_i32_0 = arith.constant 0 : i32
    %c0_i32_1 = arith.constant 0 : i32
    return %c0_i32, %c0_i32_0 : i32, i32
  }
  func.func @transform_3(%arg0: i32) -> (i32, i32) {
    %c0_i32 = arith.constant 0 : i32
    %c0_i32_0 = arith.constant 0 : i32
    return %arg0, %c0_i32 : i32, i32
  }
}

module attributes {stable_mosaic.version = 11 : i64} {
  func.func @_matmul_bias_kernel(%arg0: i32, %arg1: memref<144x90xbf16, #tpu.memory_space<vmem>>, %arg2: memref<90x72xbf16, #tpu.memory_space<vmem>>, %arg3: memref<1x72xf32, #tpu.memory_space<vmem>>, %arg4: memref<144x72xbf16, #tpu.memory_space<vmem>>) attributes {dimension_semantics = [#tpu.dimension_semantics<parallel>], iteration_bounds = array<i64: 2>, scalar_prefetch = 0 : i64, scratch_operands = 0 : i64, tpu.core_type = #tpu.core_type<tc>, window_params = [{transform_indices = @transform_0, window_bounds = array<i64: 144, 90>}, {pipeline_mode = #tpu.pipeline_mode<synchronous>, transform_indices = @transform_1, window_bounds = array<i64: 90, 72>}, {pipeline_mode = #tpu.pipeline_mode<synchronous>, transform_indices = @transform_2, window_bounds = array<i64: 1, 72>}, {transform_indices = @transform_3, window_bounds = array<i64: 144, 72>}]} {
    %c0 = arith.constant 0 : index
    %c0_0 = arith.constant 0 : index
    %0 = vector.load %arg1[%c0, %c0_0] : memref<144x90xbf16, #tpu.memory_space<vmem>>, vector<144x90xbf16>
    %c0_1 = arith.constant 0 : index
    %c0_2 = arith.constant 0 : index
    %1 = vector.load %arg2[%c0_1, %c0_2] : memref<90x72xbf16, #tpu.memory_space<vmem>>, vector<90x72xbf16>
    %cst = arith.constant dense<0.000000e+00> : vector<144x72xf32>
    %2 = tpu.matmul %0, %1, %cst {dimension_numbers = #tpu.dot_dimension_numbers<[1], [0], [0], [1], [0, 0, 1, 1], [], []>} : vector<144x90xbf16>, vector<90x72xbf16>, vector<144x72xf32> -> vector<144x72xf32>
    %c0_3 = arith.constant 0 : index
    %c0_4 = arith.constant 0 : index
    %3 = vector.load %arg3[%c0_3, %c0_4] : memref<1x72xf32, #tpu.memory_space<vmem>>, vector<1x72xf32>
    %4 = vector.broadcast %3 : vector<1x72xf32> to vector<144x72xf32>
    %5 = arith.addf %2, %4 : vector<144x72xf32>
    %6 = arith.truncf %5 : vector<144x72xf32> to vector<144x72xbf16>
    %c0_5 = arith.constant 0 : index
    %c0_6 = arith.constant 0 : index
    %7 = vector.load %arg4[%c0_5, %c0_6] : memref<144x72xbf16, #tpu.memory_space<vmem>>, vector<144x72xbf16>
    tpu.vector_store %arg4[%c0_5, %c0_6], %6 {strides = array<i32>} : memref<144x72xbf16, #tpu.memory_space<vmem>>, vector<144x72xbf16>,
    return
  }
  func.func @transform_0(%arg0: i32) -> (i32, i32) {
    %c0_i32 = arith.constant 0 : i32
    %c0_i32_0 = arith.constant 0 : i32
    return %arg0, %c0_i32 : i32, i32
  }
  func.func @transform_1(%arg0: i32) -> (i32, i32) {
    %c0_i32 = arith.constant 0 : i32
    %c0_i32_0 = arith.constant 0 : i32
    %c0_i32_1 = arith.constant 0 : i32
    return %c0_i32, %c0_i32_0 : i32, i32
  }
  func.func @transform_2(%arg0: i32) -> (i32, i32) {
    %c0_i32 = arith.constant 0 : i32
    %c0_i32_0 = arith.constant 0 : i32
    %c0_i32_1 = arith.constant 0 : i32
    return %c0_i32, %c0_i32_0 : i32, i32
  }
  func.func @transform_3(%arg0: i32) -> (i32, i32) {
    %c0_i32 = arith.constant 0 : i32
    %c0_i32_0 = arith.constant 0 : i32
    return %arg0, %c0_i32 : i32, i32
  }
}

module attributes {stable_mosaic.version = 11 : i64} {
  func.func @_matmul_bias_kernel(%arg0: i32, %arg1: memref<144x544xbf16, #tpu.memory_space<vmem>>, %arg2: memref<544x48xbf16, #tpu.memory_space<vmem>>, %arg3: memref<1x48xf32, #tpu.memory_space<vmem>>, %arg4: memref<144x48xbf16, #tpu.memory_space<vmem>>) attributes {dimension_semantics = [#tpu.dimension_semantics<parallel>], iteration_bounds = array<i64: 2>, scalar_prefetch = 0 : i64, scratch_operands = 0 : i64, tpu.core_type = #tpu.core_type<tc>, window_params = [{transform_indices = @transform_0, window_bounds = array<i64: 144, 544>}, {pipeline_mode = #tpu.pipeline_mode<synchronous>, transform_indices = @transform_1, window_bounds = array<i64: 544, 48>}, {pipeline_mode = #tpu.pipeline_mode<synchronous>, transform_indices = @transform_2, window_bounds = array<i64: 1, 48>}, {transform_indices = @transform_3, window_bounds = array<i64: 144, 48>}]} {
    %c0 = arith.constant 0 : index
    %c0_0 = arith.constant 0 : index
    %0 = vector.load %arg1[%c0, %c0_0] : memref<144x544xbf16, #tpu.memory_space<vmem>>, vector<144x544xbf16>
    %c0_1 = arith.constant 0 : index
    %c0_2 = arith.constant 0 : index
    %1 = vector.load %arg2[%c0_1, %c0_2] : memref<544x48xbf16, #tpu.memory_space<vmem>>, vector<544x48xbf16>
    %cst = arith.constant dense<0.000000e+00> : vector<144x48xf32>
    %2 = tpu.matmul %0, %1, %cst {dimension_numbers = #tpu.dot_dimension_numbers<[1], [0], [0], [1], [0, 0, 1, 1], [], []>} : vector<144x544xbf16>, vector<544x48xbf16>, vector<144x48xf32> -> vector<144x48xf32>
    %c0_3 = arith.constant 0 : index
    %c0_4 = arith.constant 0 : index
    %3 = vector.load %arg3[%c0_3, %c0_4] : memref<1x48xf32, #tpu.memory_space<vmem>>, vector<1x48xf32>
    %4 = vector.broadcast %3 : vector<1x48xf32> to vector<144x48xf32>
    %5 = arith.addf %2, %4 : vector<144x48xf32>
    %6 = arith.truncf %5 : vector<144x48xf32> to vector<144x48xbf16>
    %c0_5 = arith.constant 0 : index
    %c0_6 = arith.constant 0 : index
    %7 = vector.load %arg4[%c0_5, %c0_6] : memref<144x48xbf16, #tpu.memory_space<vmem>>, vector<144x48xbf16>
    tpu.vector_store %arg4[%c0_5, %c0_6], %6 {strides = array<i32>} : memref<144x48xbf16, #tpu.memory_space<vmem>>, vector<144x48xbf16>,
    return
  }
  func.func @transform_0(%arg0: i32) -> (i32, i32) {
    %c0_i32 = arith.constant 0 : i32
    %c0_i32_0 = arith.constant 0 : i32
    return %arg0, %c0_i32 : i32, i32
  }
  func.func @transform_1(%arg0: i32) -> (i32, i32) {
    %c0_i32 = arith.constant 0 : i32
    %c0_i32_0 = arith.constant 0 : i32
    %c0_i32_1 = arith.constant 0 : i32
    return %c0_i32, %c0_i32_0 : i32, i32
  }
  func.func @transform_2(%arg0: i32) -> (i32, i32) {
    %c0_i32 = arith.constant 0 : i32
    %c0_i32_0 = arith.constant 0 : i32
    %c0_i32_1 = arith.constant 0 : i32
    return %c0_i32, %c0_i32_0 : i32, i32
  }
  func.func @transform_3(%arg0: i32) -> (i32, i32) {
    %c0_i32 = arith.constant 0 : i32
    %c0_i32_0 = arith.constant 0 : i32
    return %arg0, %c0_i32 : i32, i32
  }
}

module attributes {stable_mosaic.version = 11 : i64} {
  func.func @_matmul_bias_kernel(%arg0: i32, %arg1: memref<144x216xbf16, #tpu.memory_space<vmem>>, %arg2: memref<216x24xbf16, #tpu.memory_space<vmem>>, %arg3: memref<1x24xf32, #tpu.memory_space<vmem>>, %arg4: memref<144x24xbf16, #tpu.memory_space<vmem>>) attributes {dimension_semantics = [#tpu.dimension_semantics<parallel>], iteration_bounds = array<i64: 2>, scalar_prefetch = 0 : i64, scratch_operands = 0 : i64, tpu.core_type = #tpu.core_type<tc>, window_params = [{transform_indices = @transform_0, window_bounds = array<i64: 144, 216>}, {pipeline_mode = #tpu.pipeline_mode<synchronous>, transform_indices = @transform_1, window_bounds = array<i64: 216, 24>}, {pipeline_mode = #tpu.pipeline_mode<synchronous>, transform_indices = @transform_2, window_bounds = array<i64: 1, 24>}, {transform_indices = @transform_3, window_bounds = array<i64: 144, 24>}]} {
    %c0 = arith.constant 0 : index
    %c0_0 = arith.constant 0 : index
    %0 = vector.load %arg1[%c0, %c0_0] : memref<144x216xbf16, #tpu.memory_space<vmem>>, vector<144x216xbf16>
    %c0_1 = arith.constant 0 : index
    %c0_2 = arith.constant 0 : index
    %1 = vector.load %arg2[%c0_1, %c0_2] : memref<216x24xbf16, #tpu.memory_space<vmem>>, vector<216x24xbf16>
    %cst = arith.constant dense<0.000000e+00> : vector<144x24xf32>
    %2 = tpu.matmul %0, %1, %cst {dimension_numbers = #tpu.dot_dimension_numbers<[1], [0], [0], [1], [0, 0, 1, 1], [], []>} : vector<144x216xbf16>, vector<216x24xbf16>, vector<144x24xf32> -> vector<144x24xf32>
    %c0_3 = arith.constant 0 : index
    %c0_4 = arith.constant 0 : index
    %3 = vector.load %arg3[%c0_3, %c0_4] : memref<1x24xf32, #tpu.memory_space<vmem>>, vector<1x24xf32>
    %4 = vector.broadcast %3 : vector<1x24xf32> to vector<144x24xf32>
    %5 = arith.addf %2, %4 : vector<144x24xf32>
    %6 = arith.truncf %5 : vector<144x24xf32> to vector<144x24xbf16>
    %c0_5 = arith.constant 0 : index
    %c0_6 = arith.constant 0 : index
    %7 = vector.load %arg4[%c0_5, %c0_6] : memref<144x24xbf16, #tpu.memory_space<vmem>>, vector<144x24xbf16>
    tpu.vector_store %arg4[%c0_5, %c0_6], %6 {strides = array<i32>} : memref<144x24xbf16, #tpu.memory_space<vmem>>, vector<144x24xbf16>,
    return
  }
  func.func @transform_0(%arg0: i32) -> (i32, i32) {
    %c0_i32 = arith.constant 0 : i32
    %c0_i32_0 = arith.constant 0 : i32
    return %arg0, %c0_i32 : i32, i32
  }
  func.func @transform_1(%arg0: i32) -> (i32, i32) {
    %c0_i32 = arith.constant 0 : i32
    %c0_i32_0 = arith.constant 0 : i32
    %c0_i32_1 = arith.constant 0 : i32
    return %c0_i32, %c0_i32_0 : i32, i32
  }
  func.func @transform_2(%arg0: i32) -> (i32, i32) {
    %c0_i32 = arith.constant 0 : i32
    %c0_i32_0 = arith.constant 0 : i32
    %c0_i32_1 = arith.constant 0 : i32
    return %c0_i32, %c0_i32_0 : i32, i32
  }
  func.func @transform_3(%arg0: i32) -> (i32, i32) {
    %c0_i32 = arith.constant 0 : i32
    %c0_i32_0 = arith.constant 0 : i32
    return %arg0, %c0_i32 : i32, i32
  }
}

module attributes {stable_mosaic.version = 11 : i64} {
  func.func @_matmul_bias_kernel(%arg0: i32, %arg1: memref<128x2200xbf16, #tpu.memory_space<vmem>>, %arg2: memref<2200x20xbf16, #tpu.memory_space<vmem>>, %arg3: memref<1x20xf32, #tpu.memory_space<vmem>>, %arg4: memref<128x20xbf16, #tpu.memory_space<vmem>>) attributes {dimension_semantics = [#tpu.dimension_semantics<parallel>], iteration_bounds = array<i64: 1>, scalar_prefetch = 0 : i64, scratch_operands = 0 : i64, tpu.core_type = #tpu.core_type<tc>, window_params = [{transform_indices = @transform_0, window_bounds = array<i64: 128, 2200>}, {pipeline_mode = #tpu.pipeline_mode<synchronous>, transform_indices = @transform_1, window_bounds = array<i64: 2200, 20>}, {pipeline_mode = #tpu.pipeline_mode<synchronous>, transform_indices = @transform_2, window_bounds = array<i64: 1, 20>}, {transform_indices = @transform_3, window_bounds = array<i64: 128, 20>}]} {
    %c0 = arith.constant 0 : index
    %c0_0 = arith.constant 0 : index
    %0 = vector.load %arg1[%c0, %c0_0] : memref<128x2200xbf16, #tpu.memory_space<vmem>>, vector<128x2200xbf16>
    %c0_1 = arith.constant 0 : index
    %c0_2 = arith.constant 0 : index
    %1 = vector.load %arg2[%c0_1, %c0_2] : memref<2200x20xbf16, #tpu.memory_space<vmem>>, vector<2200x20xbf16>
    %cst = arith.constant dense<0.000000e+00> : vector<128x20xf32>
    %2 = tpu.matmul %0, %1, %cst {dimension_numbers = #tpu.dot_dimension_numbers<[1], [0], [0], [1], [0, 0, 1, 1], [], []>} : vector<128x2200xbf16>, vector<2200x20xbf16>, vector<128x20xf32> -> vector<128x20xf32>
    %c0_3 = arith.constant 0 : index
    %c0_4 = arith.constant 0 : index
    %3 = vector.load %arg3[%c0_3, %c0_4] : memref<1x20xf32, #tpu.memory_space<vmem>>, vector<1x20xf32>
    %4 = vector.broadcast %3 : vector<1x20xf32> to vector<128x20xf32>
    %5 = arith.addf %2, %4 : vector<128x20xf32>
    %cst_5 = arith.constant 0.000000e+00 : f32
    %6 = vector.broadcast %cst_5 : f32 to vector<128x20xf32>
    %7 = arith.maximumf %5, %6 : vector<128x20xf32>
    %8 = arith.truncf %7 : vector<128x20xf32> to vector<128x20xbf16>
    %c0_6 = arith.constant 0 : index
    %c0_7 = arith.constant 0 : index
    %9 = vector.load %arg4[%c0_6, %c0_7] : memref<128x20xbf16, #tpu.memory_space<vmem>>, vector<128x20xbf16>
    tpu.vector_store %arg4[%c0_6, %c0_7], %8 {strides = array<i32>} : memref<128x20xbf16, #tpu.memory_space<vmem>>, vector<128x20xbf16>,
    return
  }
  func.func @transform_0(%arg0: i32) -> (i32, i32) {
    %c0_i32 = arith.constant 0 : i32
    %c0_i32_0 = arith.constant 0 : i32
    return %arg0, %c0_i32 : i32, i32
  }
  func.func @transform_1(%arg0: i32) -> (i32, i32) {
    %c0_i32 = arith.constant 0 : i32
    %c0_i32_0 = arith.constant 0 : i32
    %c0_i32_1 = arith.constant 0 : i32
    return %c0_i32, %c0_i32_0 : i32, i32
  }
  func.func @transform_2(%arg0: i32) -> (i32, i32) {
    %c0_i32 = arith.constant 0 : i32
    %c0_i32_0 = arith.constant 0 : i32
    %c0_i32_1 = arith.constant 0 : i32
    return %c0_i32, %c0_i32_0 : i32, i32
  }
  func.func @transform_3(%arg0: i32) -> (i32, i32) {
    %c0_i32 = arith.constant 0 : i32
    %c0_i32_0 = arith.constant 0 : i32
    return %arg0, %c0_i32 : i32, i32
  }
}

module attributes {stable_mosaic.version = 11 : i64} {
  func.func @_matmul_bias_kernel(%arg0: i32, %arg1: memref<32x180xbf16, #tpu.memory_space<vmem>>, %arg2: memref<180x72xbf16, #tpu.memory_space<vmem>>, %arg3: memref<1x72xf32, #tpu.memory_space<vmem>>, %arg4: memref<32x72xbf16, #tpu.memory_space<vmem>>) attributes {dimension_semantics = [#tpu.dimension_semantics<parallel>], iteration_bounds = array<i64: 1>, scalar_prefetch = 0 : i64, scratch_operands = 0 : i64, tpu.core_type = #tpu.core_type<tc>, window_params = [{transform_indices = @transform_0, window_bounds = array<i64: 32, 180>}, {pipeline_mode = #tpu.pipeline_mode<synchronous>, transform_indices = @transform_1, window_bounds = array<i64: 180, 72>}, {pipeline_mode = #tpu.pipeline_mode<synchronous>, transform_indices = @transform_2, window_bounds = array<i64: 1, 72>}, {transform_indices = @transform_3, window_bounds = array<i64: 32, 72>}]} {
    %c0 = arith.constant 0 : index
    %c0_0 = arith.constant 0 : index
    %0 = vector.load %arg1[%c0, %c0_0] : memref<32x180xbf16, #tpu.memory_space<vmem>>, vector<32x180xbf16>
    %c0_1 = arith.constant 0 : index
    %c0_2 = arith.constant 0 : index
    %1 = vector.load %arg2[%c0_1, %c0_2] : memref<180x72xbf16, #tpu.memory_space<vmem>>, vector<180x72xbf16>
    %cst = arith.constant dense<0.000000e+00> : vector<32x72xf32>
    %2 = tpu.matmul %0, %1, %cst {dimension_numbers = #tpu.dot_dimension_numbers<[1], [0], [0], [1], [0, 0, 1, 1], [], []>} : vector<32x180xbf16>, vector<180x72xbf16>, vector<32x72xf32> -> vector<32x72xf32>
    %c0_3 = arith.constant 0 : index
    %c0_4 = arith.constant 0 : index
    %3 = vector.load %arg3[%c0_3, %c0_4] : memref<1x72xf32, #tpu.memory_space<vmem>>, vector<1x72xf32>
    %4 = vector.broadcast %3 : vector<1x72xf32> to vector<32x72xf32>
    %5 = arith.addf %2, %4 : vector<32x72xf32>
    %6 = arith.truncf %5 : vector<32x72xf32> to vector<32x72xbf16>
    %c0_5 = arith.constant 0 : index
    %c0_6 = arith.constant 0 : index
    %7 = vector.load %arg4[%c0_5, %c0_6] : memref<32x72xbf16, #tpu.memory_space<vmem>>, vector<32x72xbf16>
    tpu.vector_store %arg4[%c0_5, %c0_6], %6 {strides = array<i32>} : memref<32x72xbf16, #tpu.memory_space<vmem>>, vector<32x72xbf16>,
    return
  }
  func.func @transform_0(%arg0: i32) -> (i32, i32) {
    %c0_i32 = arith.constant 0 : i32
    %c0_i32_0 = arith.constant 0 : i32
    return %arg0, %c0_i32 : i32, i32
  }
  func.func @transform_1(%arg0: i32) -> (i32, i32) {
    %c0_i32 = arith.constant 0 : i32
    %c0_i32_0 = arith.constant 0 : i32
    %c0_i32_1 = arith.constant 0 : i32
    return %c0_i32, %c0_i32_0 : i32, i32
  }
  func.func @transform_2(%arg0: i32) -> (i32, i32) {
    %c0_i32 = arith.constant 0 : i32
    %c0_i32_0 = arith.constant 0 : i32
    %c0_i32_1 = arith.constant 0 : i32
    return %c0_i32, %c0_i32_0 : i32, i32
  }
  func.func @transform_3(%arg0: i32) -> (i32, i32) {
    %c0_i32 = arith.constant 0 : i32
    %c0_i32_0 = arith.constant 0 : i32
    return %arg0, %c0_i32 : i32, i32
  }
}

module attributes {stable_mosaic.version = 11 : i64} {
  func.func @_matmul_bias_kernel(%arg0: i32, %arg1: memref<32x544xbf16, #tpu.memory_space<vmem>>, %arg2: memref<544x48xbf16, #tpu.memory_space<vmem>>, %arg3: memref<1x48xf32, #tpu.memory_space<vmem>>, %arg4: memref<32x48xbf16, #tpu.memory_space<vmem>>) attributes {dimension_semantics = [#tpu.dimension_semantics<parallel>], iteration_bounds = array<i64: 1>, scalar_prefetch = 0 : i64, scratch_operands = 0 : i64, tpu.core_type = #tpu.core_type<tc>, window_params = [{transform_indices = @transform_0, window_bounds = array<i64: 32, 544>}, {pipeline_mode = #tpu.pipeline_mode<synchronous>, transform_indices = @transform_1, window_bounds = array<i64: 544, 48>}, {pipeline_mode = #tpu.pipeline_mode<synchronous>, transform_indices = @transform_2, window_bounds = array<i64: 1, 48>}, {transform_indices = @transform_3, window_bounds = array<i64: 32, 48>}]} {
    %c0 = arith.constant 0 : index
    %c0_0 = arith.constant 0 : index
    %0 = vector.load %arg1[%c0, %c0_0] : memref<32x544xbf16, #tpu.memory_space<vmem>>, vector<32x544xbf16>
    %c0_1 = arith.constant 0 : index
    %c0_2 = arith.constant 0 : index
    %1 = vector.load %arg2[%c0_1, %c0_2] : memref<544x48xbf16, #tpu.memory_space<vmem>>, vector<544x48xbf16>
    %cst = arith.constant dense<0.000000e+00> : vector<32x48xf32>
    %2 = tpu.matmul %0, %1, %cst {dimension_numbers = #tpu.dot_dimension_numbers<[1], [0], [0], [1], [0, 0, 1, 1], [], []>} : vector<32x544xbf16>, vector<544x48xbf16>, vector<32x48xf32> -> vector<32x48xf32>
    %c0_3 = arith.constant 0 : index
    %c0_4 = arith.constant 0 : index
    %3 = vector.load %arg3[%c0_3, %c0_4] : memref<1x48xf32, #tpu.memory_space<vmem>>, vector<1x48xf32>
    %4 = vector.broadcast %3 : vector<1x48xf32> to vector<32x48xf32>
    %5 = arith.addf %2, %4 : vector<32x48xf32>
    %6 = arith.truncf %5 : vector<32x48xf32> to vector<32x48xbf16>
    %c0_5 = arith.constant 0 : index
    %c0_6 = arith.constant 0 : index
    %7 = vector.load %arg4[%c0_5, %c0_6] : memref<32x48xbf16, #tpu.memory_space<vmem>>, vector<32x48xbf16>
    tpu.vector_store %arg4[%c0_5, %c0_6], %6 {strides = array<i32>} : memref<32x48xbf16, #tpu.memory_space<vmem>>, vector<32x48xbf16>,
    return
  }
  func.func @transform_0(%arg0: i32) -> (i32, i32) {
    %c0_i32 = arith.constant 0 : i32
    %c0_i32_0 = arith.constant 0 : i32
    return %arg0, %c0_i32 : i32, i32
  }
  func.func @transform_1(%arg0: i32) -> (i32, i32) {
    %c0_i32 = arith.constant 0 : i32
    %c0_i32_0 = arith.constant 0 : i32
    %c0_i32_1 = arith.constant 0 : i32
    return %c0_i32, %c0_i32_0 : i32, i32
  }
  func.func @transform_2(%arg0: i32) -> (i32, i32) {
    %c0_i32 = arith.constant 0 : i32
    %c0_i32_0 = arith.constant 0 : i32
    %c0_i32_1 = arith.constant 0 : i32
    return %c0_i32, %c0_i32_0 : i32, i32
  }
  func.func @transform_3(%arg0: i32) -> (i32, i32) {
    %c0_i32 = arith.constant 0 : i32
    %c0_i32_0 = arith.constant 0 : i32
    return %arg0, %c0_i32 : i32, i32
  }
}

module attributes {stable_mosaic.version = 11 : i64} {
  func.func @_matmul_bias_kernel(%arg0: i32, %arg1: memref<32x216xbf16, #tpu.memory_space<vmem>>, %arg2: memref<216x24xbf16, #tpu.memory_space<vmem>>, %arg3: memref<1x24xf32, #tpu.memory_space<vmem>>, %arg4: memref<32x24xbf16, #tpu.memory_space<vmem>>) attributes {dimension_semantics = [#tpu.dimension_semantics<parallel>], iteration_bounds = array<i64: 1>, scalar_prefetch = 0 : i64, scratch_operands = 0 : i64, tpu.core_type = #tpu.core_type<tc>, window_params = [{transform_indices = @transform_0, window_bounds = array<i64: 32, 216>}, {pipeline_mode = #tpu.pipeline_mode<synchronous>, transform_indices = @transform_1, window_bounds = array<i64: 216, 24>}, {pipeline_mode = #tpu.pipeline_mode<synchronous>, transform_indices = @transform_2, window_bounds = array<i64: 1, 24>}, {transform_indices = @transform_3, window_bounds = array<i64: 32, 24>}]} {
    %c0 = arith.constant 0 : index
    %c0_0 = arith.constant 0 : index
    %0 = vector.load %arg1[%c0, %c0_0] : memref<32x216xbf16, #tpu.memory_space<vmem>>, vector<32x216xbf16>
    %c0_1 = arith.constant 0 : index
    %c0_2 = arith.constant 0 : index
    %1 = vector.load %arg2[%c0_1, %c0_2] : memref<216x24xbf16, #tpu.memory_space<vmem>>, vector<216x24xbf16>
    %cst = arith.constant dense<0.000000e+00> : vector<32x24xf32>
    %2 = tpu.matmul %0, %1, %cst {dimension_numbers = #tpu.dot_dimension_numbers<[1], [0], [0], [1], [0, 0, 1, 1], [], []>} : vector<32x216xbf16>, vector<216x24xbf16>, vector<32x24xf32> -> vector<32x24xf32>
    %c0_3 = arith.constant 0 : index
    %c0_4 = arith.constant 0 : index
    %3 = vector.load %arg3[%c0_3, %c0_4] : memref<1x24xf32, #tpu.memory_space<vmem>>, vector<1x24xf32>
    %4 = vector.broadcast %3 : vector<1x24xf32> to vector<32x24xf32>
    %5 = arith.addf %2, %4 : vector<32x24xf32>
    %6 = arith.truncf %5 : vector<32x24xf32> to vector<32x24xbf16>
    %c0_5 = arith.constant 0 : index
    %c0_6 = arith.constant 0 : index
    %7 = vector.load %arg4[%c0_5, %c0_6] : memref<32x24xbf16, #tpu.memory_space<vmem>>, vector<32x24xbf16>
    tpu.vector_store %arg4[%c0_5, %c0_6], %6 {strides = array<i32>} : memref<32x24xbf16, #tpu.memory_space<vmem>>, vector<32x24xbf16>,
    return
  }
  func.func @transform_0(%arg0: i32) -> (i32, i32) {
    %c0_i32 = arith.constant 0 : i32
    %c0_i32_0 = arith.constant 0 : i32
    return %arg0, %c0_i32 : i32, i32
  }
  func.func @transform_1(%arg0: i32) -> (i32, i32) {
    %c0_i32 = arith.constant 0 : i32
    %c0_i32_0 = arith.constant 0 : i32
    %c0_i32_1 = arith.constant 0 : i32
    return %c0_i32, %c0_i32_0 : i32, i32
  }
  func.func @transform_2(%arg0: i32) -> (i32, i32) {
    %c0_i32 = arith.constant 0 : i32
    %c0_i32_0 = arith.constant 0 : i32
    %c0_i32_1 = arith.constant 0 : i32
    return %c0_i32, %c0_i32_0 : i32, i32
  }
  func.func @transform_3(%arg0: i32) -> (i32, i32) {
    %c0_i32 = arith.constant 0 : i32
    %c0_i32_0 = arith.constant 0 : i32
    return %arg0, %c0_i32 : i32, i32
  }
}

module attributes {stable_mosaic.version = 11 : i64} {
  func.func @_matmul_bias_kernel(%arg0: i32, %arg1: memref<2x1408xbf16, #tpu.memory_space<vmem>>, %arg2: memref<1408x10xbf16, #tpu.memory_space<vmem>>, %arg3: memref<1x10xf32, #tpu.memory_space<vmem>>, %arg4: memref<2x10xf32, #tpu.memory_space<vmem>>) attributes {dimension_semantics = [#tpu.dimension_semantics<parallel>], iteration_bounds = array<i64: 1>, scalar_prefetch = 0 : i64, scratch_operands = 0 : i64, tpu.core_type = #tpu.core_type<tc>, window_params = [{transform_indices = @transform_0, window_bounds = array<i64: 2, 1408>}, {pipeline_mode = #tpu.pipeline_mode<synchronous>, transform_indices = @transform_1, window_bounds = array<i64: 1408, 10>}, {pipeline_mode = #tpu.pipeline_mode<synchronous>, transform_indices = @transform_2, window_bounds = array<i64: 1, 10>}, {transform_indices = @transform_3, window_bounds = array<i64: 2, 10>}]} {
    %c0 = arith.constant 0 : index
    %c0_0 = arith.constant 0 : index
    %0 = vector.load %arg1[%c0, %c0_0] : memref<2x1408xbf16, #tpu.memory_space<vmem>>, vector<2x1408xbf16>
    %c0_1 = arith.constant 0 : index
    %c0_2 = arith.constant 0 : index
    %1 = vector.load %arg2[%c0_1, %c0_2] : memref<1408x10xbf16, #tpu.memory_space<vmem>>, vector<1408x10xbf16>
    %cst = arith.constant dense<0.000000e+00> : vector<2x10xf32>
    %2 = tpu.matmul %0, %1, %cst {dimension_numbers = #tpu.dot_dimension_numbers<[1], [0], [0], [1], [0, 0, 1, 1], [], []>} : vector<2x1408xbf16>, vector<1408x10xbf16>, vector<2x10xf32> -> vector<2x10xf32>
    %c0_3 = arith.constant 0 : index
    %c0_4 = arith.constant 0 : index
    %3 = vector.load %arg3[%c0_3, %c0_4] : memref<1x10xf32, #tpu.memory_space<vmem>>, vector<1x10xf32>
    %4 = vector.broadcast %3 : vector<1x10xf32> to vector<2x10xf32>
    %5 = arith.addf %2, %4 : vector<2x10xf32>
    %c0_5 = arith.constant 0 : index
    %c0_6 = arith.constant 0 : index
    %6 = vector.load %arg4[%c0_5, %c0_6] : memref<2x10xf32, #tpu.memory_space<vmem>>, vector<2x10xf32>
    tpu.vector_store %arg4[%c0_5, %c0_6], %5 {strides = array<i32>} : memref<2x10xf32, #tpu.memory_space<vmem>>, vector<2x10xf32>,
    return
  }
  func.func @transform_0(%arg0: i32) -> (i32, i32) {
    %c0_i32 = arith.constant 0 : i32
    %c0_i32_0 = arith.constant 0 : i32
    return %arg0, %c0_i32 : i32, i32
  }
  func.func @transform_1(%arg0: i32) -> (i32, i32) {
    %c0_i32 = arith.constant 0 : i32
    %c0_i32_0 = arith.constant 0 : i32
    %c0_i32_1 = arith.constant 0 : i32
    return %c0_i32, %c0_i32_0 : i32, i32
  }
  func.func @transform_2(%arg0: i32) -> (i32, i32) {
    %c0_i32 = arith.constant 0 : i32
    %c0_i32_0 = arith.constant 0 : i32
    %c0_i32_1 = arith.constant 0 : i32
    return %c0_i32, %c0_i32_0 : i32, i32
  }
  func.func @transform_3(%arg0: i32) -> (i32, i32) {
    %c0_i32 = arith.constant 0 : i32
    %c0_i32_0 = arith.constant 0 : i32
    return %arg0, %c0_i32 : i32, i32
  }
}

</mosaic_0001>

<llo_original>
// kernel: net_forward.9
$region0: #{net_forward.9}
  #allocation0 [shape = 'u32[]', space=smem, size = 0x4, offset = 0x4, fixed_abs, tag = 'smem constant byte address 0x4 - core index']
  #allocation1 [shape = 'u32[144,128]{1,0:T(1,128)}', space=vmem, size = 0x12000, scoped, tag = 'internal scratch']
  %s0 = inlined_call_operand.vmem [shape: bf16[1152,25], index: 0, kind: input, shape index: {}]
  %s1 = inlined_call_operand.vmem [shape: bf16[25,10], index: 1, kind: input, shape index: {}]
  %s2 = inlined_call_operand.hbm [shape: f32[1,10], index: 2, kind: input, shape index: {}]
  %s3 = inlined_call_operand.vmem [shape: bf16[1152,10], index: 3, kind: output, shape index: {}]
  %s4 = sld [smem:[#allocation0]]
  $region49: #{net_forward.9} parent=0
    _
  %s6 = ssub.s32 1, %s4
  %s7 = scalar_select 0, %s6, %s4
  $region1: #{net_forward.9} parent=0
    #allocation2 [shape = 'u8[512]{0}', space=vmem, size = 0x400, scoped, tag = 'input window, operand 2, single buffered']
    #allocation3 [shape = 's32[2]{0}', space=sflag, size = 0x8, scoped, tag = 'scoped memory for net_forward.9']
    %8 = vsyncpa [#allocation3], 0
    loop: start=0, step=1, limit=4
    $region2: #{net_forward.9} parent=1 // loop_pre_header
      _
    $region3: #{net_forward.9} parent=1 // loop_header
      %s10 = sphi 0, %s14
      %p11 = scmp.ge.s32.totalorder %s10, 4
      %s20 = sphi 0, %s22
      %s23 = sphi 0, %s20
      %s24 = sphi 0, %s23
      %s40 = sphi 0, %s24
      %s44 = sphi 0, %s44
      %s46 = sphi 0, %s44
      %s47 = sphi 0, %s46
      %s61 = sphi 0, %s47
      %s65 = sphi 0, %s65
      %s67 = sphi 0, %s65
      %s68 = sphi 0, %s67
      %s82 = sphi 0, %s68
      %s88 = sphi 0, %s90
      %s91 = sphi 0, %s88
      %s92 = sphi 0, %s91
      %s108 = sphi 0, %s92
    $region4: #{net_forward.9} parent=1 // loop_header_branch
      %13 = sbr.rel (%p11) target = $region8
    $region5: #{net_forward.9} parent=1 // loop_body
      %s15 = ssub.s32 %s10, 1
      %s16 = ssub.s32 %s10, 2
      %s17 = sadd.s32 %s10, 1
      %s18 = ssub.s32 %s10, %s17
      %p19 = scmp.eq.s32.totalorder %s18, 0
      %s21 = sadd.s32 %s20, 1
      %s22 = scalar_select %p19, %s20, %s21
      %p25 = pneg %p19
      %p26 = scmp.eq.s32.totalorder %s10, 1
      %p27 = por %p25, %p26
      %p28 = scmp.ne.s32.totalorder %s20, %s23
      %p29 = scmp.eq.s32.totalorder %s10, 0
      %p30 = por %p28, %p29
      %p31 = scmp.ne.s32.totalorder %s20, %s23
      %p32 = scmp.eq.s32.totalorder %s15, 1
      %p33 = por %p31, %p32
      %p34 = scmp.ne.s32.totalorder %s23, %s24
      %p35 = scmp.eq.s32.totalorder %s15, 0
      %p36 = por %p34, %p35
      %p37 = scmp.ne.s32.totalorder %s23, %s24
      %p38 = scmp.eq.s32.totalorder %s16, 1
      %p39 = por %p37, %p38
      %p41 = scmp.ne.s32.totalorder %s24, %s40
      %p42 = scmp.eq.s32.totalorder %s16, 0
      %p43 = por %p41, %p42
      %s45 = sadd.s32 %s44, 1
      %p48 = scmp.eq.s32.totalorder %s10, 1
      %p49 = scmp.ne.s32.totalorder %s44, %s46
      %p50 = scmp.eq.s32.totalorder %s10, 0
      %p51 = por %p49, %p50
      %p52 = scmp.ne.s32.totalorder %s44, %s46
      %p53 = scmp.eq.s32.totalorder %s15, 1
      %p54 = por %p52, %p53
      %p55 = scmp.ne.s32.totalorder %s46, %s47
      %p56 = scmp.eq.s32.totalorder %s15, 0
      %p57 = por %p55, %p56
      %p58 = scmp.ne.s32.totalorder %s46, %s47
      %p59 = scmp.eq.s32.totalorder %s16, 1
      %p60 = por %p58, %p59
      %p62 = scmp.ne.s32.totalorder %s47, %s61
      %p63 = scmp.eq.s32.totalorder %s16, 0
      %p64 = por %p62, %p63
      %s66 = sadd.s32 %s65, 1
      %p69 = scmp.eq.s32.totalorder %s10, 1
      %p70 = scmp.ne.s32.totalorder %s65, %s67
      %p71 = scmp.eq.s32.totalorder %s10, 0
      %p72 = por %p70, %p71
      %p73 = scmp.ne.s32.totalorder %s65, %s67
      %p74 = scmp.eq.s32.totalorder %s15, 1
      %p75 = por %p73, %p74
      %p76 = scmp.ne.s32.totalorder %s67, %s68
      %p77 = scmp.eq.s32.totalorder %s15, 0
      %p78 = por %p76, %p77
      %p79 = scmp.ne.s32.totalorder %s67, %s68
      %p80 = scmp.eq.s32.totalorder %s16, 1
      %p81 = por %p79, %p80
      %p83 = scmp.ne.s32.totalorder %s68, %s82
      %p84 = scmp.eq.s32.totalorder %s16, 0
      %p85 = por %p83, %p84
      %s86 = ssub.s32 %s10, %s17
      %p87 = scmp.eq.s32.totalorder %s86, 0
      %s89 = sadd.s32 %s88, 1
      %s90 = scalar_select %p87, %s88, %s89
      %p93 = pneg %p87
      %p94 = scmp.eq.s32.totalorder %s10, 1
      %p95 = por %p93, %p94
      %p96 = scmp.ne.s32.totalorder %s88, %s91
      %p97 = scmp.eq.s32.totalorder %s10, 0
      %p98 = por %p96, %p97
      %p99 = scmp.ne.s32.totalorder %s88, %s91
      %p100 = scmp.eq.s32.totalorder %s15, 1
      %p101 = por %p99, %p100
      %p102 = scmp.ne.s32.totalorder %s91, %s92
      %p103 = scmp.eq.s32.totalorder %s15, 0
      %p104 = por %p102, %p103
      %p105 = scmp.ne.s32.totalorder %s91, %s92
      %p106 = scmp.eq.s32.totalorder %s16, 1
      %p107 = por %p105, %p106
      %p109 = scmp.ne.s32.totalorder %s92, %s108
      %p110 = scmp.eq.s32.totalorder %s16, 0
      %p111 = por %p109, %p110
      %p112 = scmp.le.s32.totalorder 1, %s10
      %p113 = scmp.lt.s32.totalorder %s10, 3
      %p114 = pnand %p112, %p113
      %p115 = pneg %p114
      // Predicated region
      $region9: #{net_forward.9} parent=5 // pred_check
        _
      $region10: #{net_forward.9} parent=5 // pred_check_branch
        %117 = sbr.rel (%p114) target = $region12
      $region11: #{net_forward.9} parent=5 // pred_region
        %s118 = ssub.s32 %s10, 1
        // Predicated region
        $region13: #{net_forward.9} parent=11 // pred_check
          %p119 = pneg %p57
        $region14: #{net_forward.9} parent=11 // pred_check_branch
          %121 = sbr.rel (%p119) target = $region16
        $region15: #{net_forward.9} parent=11 // pred_region
          _
        $region16: #{net_forward.9} parent=11 // pred_fallthru
          _
        // Predicated region
        $region17: #{net_forward.9} parent=11 // pred_check
          %p122 = pneg %p78
        $region18: #{net_forward.9} parent=11 // pred_check_branch
          %124 = sbr.rel (%p122) target = $region20
        $region19: #{net_forward.9} parent=11 // pred_region
          %s126 = ssub.s32 16, 16
          %127 = vsyncadd [#allocation3], %s126
          %s129 = sshll.u32 [#allocation2], 4
          %s130 = int_to_ptr.vmem [resolvable:$true] %s129
          %132 = dma.hbm_to_vmem [thread:$0]  %s2, 16, %s130, [#allocation3]
        $region20: #{net_forward.9} parent=11 // pred_fallthru
          _
      $region12: #{net_forward.9} parent=5 // pred_fallthru
        _
      %p133 = scmp.lt.s32.totalorder %s10, 2
      // Predicated region
      $region21: #{net_forward.9} parent=5 // pred_check
        %p134 = pneg %p133
      $region22: #{net_forward.9} parent=5 // pred_check_branch
        %136 = sbr.rel (%p134) target = $region24
      $region23: #{net_forward.9} parent=5 // pred_region
        // Predicated region
        $region25: #{net_forward.9} parent=23 // pred_check
          %p137 = pneg %p30
        $region26: #{net_forward.9} parent=23 // pred_check_branch
          %139 = sbr.rel (%p137) target = $region28
        $region27: #{net_forward.9} parent=23 // pred_region
          %s140 = smul.u32 72, %s10
          %p141 = scmp.lt.s32.totalorder %s140, 143
          %s142 = scalar_select %p141, %s140, 143
          %s143 = smul.addr %s142, 4
          %s144 = scalar_lea.vmem %s0, %s143
          %s145 = smul.u32 72, %s10
        $region28: #{net_forward.9} parent=23 // pred_fallthru
          _
      $region24: #{net_forward.9} parent=5 // pred_fallthru
        _
      %p146 = scmp.le.s32.totalorder 1, %s10
      %p147 = scmp.lt.s32.totalorder %s10, 3
      %p148 = pnand %p146, %p147
      %p149 = pneg %p148
      // Predicated region
      $region29: #{net_forward.9} parent=5 // pred_check
        _
      $region30: #{net_forward.9} parent=5 // pred_check_branch
        %151 = sbr.rel (%p148) target = $region32
      $region31: #{net_forward.9} parent=5 // pred_region
        %s152 = ssub.s32 %s10, 1
        // Predicated region
        $region33: #{net_forward.9} parent=31 // pred_check
          %p153 = pneg %p78
        $region34: #{net_forward.9} parent=31 // pred_check_branch
          %155 = sbr.rel (%p153) target = $region36
        $region35: #{net_forward.9} parent=31 // pred_region
          %156 = dma.done [#allocation3], 16
        $region36: #{net_forward.9} parent=31 // pred_fallthru
          _
        %s157 = smul.u32 72, %s15
        %p158 = scmp.lt.s32.totalorder %s157, 143
        %s159 = scalar_select %p158, %s157, 143
        %s160 = smul.addr %s159, 4
        %s161 = scalar_lea.vmem %s0, %s160
        %p162 = pneg %p36
        %p163 = pneg %p33
        %p164 = pneg %p57
        %p165 = pneg %p54
        %p166 = pneg %p78
        %p167 = pneg %p75
        %p168 = pneg %p104
        %p169 = pneg %p101
        %s170 = smul.u32 72, %s15
        %p171 = scmp.lt.s32.totalorder %s170, 143
        %s172 = scalar_select %p171, %s170, 143
        %s173 = smul.addr %s172, 4
        %s174 = scalar_lea.vmem %s3, %s173
        %s175 = smul.u32 72, %s15
        %p176 = scmp.lt.s32.totalorder %s175, 143
        %s177 = scalar_select %p176, %s175, 143
        %s178 = smul.addr %s177, 4
        %s179 = scalar_lea.vmem %s0, %s178
        %s180 = smul.u32 72, %s15
        %s181 = smul.u32 72, %s15
        %p182 = scmp.lt.s32.totalorder %s181, 143
        %s183 = scalar_select %p182, %s181, 143
        %s184 = smul.addr %s183, 4
        %s185 = scalar_lea.vmem %s3, %s184
        %s186 = smul.u32 72, %s15
        %v188 = vld [vmem:[%s179] sm:$0xf]
        %v189 = vld [vmem:[%s179 + $0x4] sm:$0xf]
        %v190 = vld [vmem:[%s179 + $0x8] sm:$0xf]
        %v191 = vld [vmem:[%s179 + $0xc] sm:$0xf]
        %v192 = vld [vmem:[%s179 + $0x10] sm:$0xf]
        %v193 = vld [vmem:[%s179 + $0x14] sm:$0xf]
        %v194 = vld [vmem:[%s179 + $0x18] sm:$0xf]
        %v195 = vld [vmem:[%s179 + $0x1c] sm:$0xf]
        %v196 = vld [vmem:[%s179 + $0x20] sm:$0xf]
        %v197 = vld [vmem:[%s179 + $0x24] sm:$0xf]
        %v198 = vld [vmem:[%s179 + $0x28] sm:$0xf]
        %v199 = vld [vmem:[%s179 + $0x2c] sm:$0xf]
        %v200 = vld [vmem:[%s179 + $0x30] sm:$0xf]
        %v201 = vld [vmem:[%s179 + $0x34] sm:$0xf]
        %v202 = vld [vmem:[%s179 + $0x38] sm:$0xf]
        %v203 = vld [vmem:[%s179 + $0x3c] sm:$0xf]
        %v204 = vld [vmem:[%s179 + $0x40] sm:$0xf]
        %v205 = vld [vmem:[%s179 + $0x44] sm:$0xf]
        %v206 = vld [vmem:[%s179 + $0x48] sm:$0xf]
        %v207 = vld [vmem:[%s179 + $0x4c] sm:$0xf]
        %v208 = vld [vmem:[%s179 + $0x50] sm:$0xf]
        %v209 = vld [vmem:[%s179 + $0x54] sm:$0xf]
        %v210 = vld [vmem:[%s179 + $0x58] sm:$0xf]
        %v211 = vld [vmem:[%s179 + $0x5c] sm:$0xf]
        %v212 = vld [vmem:[%s179 + $0x60] sm:$0xf]
        %v213 = vld [vmem:[%s179 + $0x64] sm:$0xf]
        %v214 = vld [vmem:[%s179 + $0x68] sm:$0xf]
        %v215 = vld [vmem:[%s179 + $0x6c] sm:$0xf]
        %v216 = vld [vmem:[%s179 + $0x70] sm:$0xf]
        %v217 = vld [vmem:[%s179 + $0x74] sm:$0xf]
        %v218 = vld [vmem:[%s179 + $0x78] sm:$0xf]
        %v219 = vld [vmem:[%s179 + $0x7c] sm:$0xf]
        %v220 = vld [vmem:[%s179 + $0x80] sm:$0xf]
        %v221 = vld [vmem:[%s179 + $0x84] sm:$0xf]
        %v222 = vld [vmem:[%s179 + $0x88] sm:$0xf]
        %v223 = vld [vmem:[%s179 + $0x8c] sm:$0xf]
        %v224 = vld [vmem:[%s179 + $0x90] sm:$0xf]
        %v225 = vld [vmem:[%s179 + $0x94] sm:$0xf]
        %v226 = vld [vmem:[%s179 + $0x98] sm:$0xf]
        %v227 = vld [vmem:[%s179 + $0x9c] sm:$0xf]
        %v228 = vld [vmem:[%s179 + $0xa0] sm:$0xf]
        %v229 = vld [vmem:[%s179 + $0xa4] sm:$0xf]
        %v230 = vld [vmem:[%s179 + $0xa8] sm:$0xf]
        %v231 = vld [vmem:[%s179 + $0xac] sm:$0xf]
        %v232 = vld [vmem:[%s179 + $0xb0] sm:$0xf]
        %v233 = vld [vmem:[%s179 + $0xb4] sm:$0xf]
        %v234 = vld [vmem:[%s179 + $0xb8] sm:$0xf]
        %v235 = vld [vmem:[%s179 + $0xbc] sm:$0xf]
        %v236 = vld [vmem:[%s179 + $0xc0] sm:$0xf]
        %v237 = vld [vmem:[%s179 + $0xc4] sm:$0xf]
        %v238 = vld [vmem:[%s179 + $0xc8] sm:$0xf]
        %v239 = vld [vmem:[%s179 + $0xcc] sm:$0xf]
        %v240 = vld [vmem:[%s179 + $0xd0] sm:$0xf]
        %v241 = vld [vmem:[%s179 + $0xd4] sm:$0xf]
        %v242 = vld [vmem:[%s179 + $0xd8] sm:$0xf]
        %v243 = vld [vmem:[%s179 + $0xdc] sm:$0xf]
        %v244 = vld [vmem:[%s179 + $0xe0] sm:$0xf]
        %v245 = vld [vmem:[%s179 + $0xe4] sm:$0xf]
        %v246 = vld [vmem:[%s179 + $0xe8] sm:$0xf]
        %v247 = vld [vmem:[%s179 + $0xec] sm:$0xf]
        %v248 = vld [vmem:[%s179 + $0xf0] sm:$0xf]
        %v249 = vld [vmem:[%s179 + $0xf4] sm:$0xf]
        %v250 = vld [vmem:[%s179 + $0xf8] sm:$0xf]
        %v251 = vld [vmem:[%s179 + $0xfc] sm:$0xf]
        %v252 = vld [vmem:[%s179 + $0x100] sm:$0xf]
        %v253 = vld [vmem:[%s179 + $0x104] sm:$0xf]
        %v254 = vld [vmem:[%s179 + $0x108] sm:$0xf]
        %v255 = vld [vmem:[%s179 + $0x10c] sm:$0xf]
        %v256 = vld [vmem:[%s179 + $0x110] sm:$0xf]
        %v257 = vld [vmem:[%s179 + $0x114] sm:$0xf]
        %v258 = vld [vmem:[%s179 + $0x118] sm:$0xf]
        %v259 = vld [vmem:[%s179 + $0x11c] sm:$0xf]
        %v260 = vld [vmem:[%s1] sm:$0xf]
        %v261 = vld [vmem:[%s1 + $0x4] sm:$0xf]
        %v262 = vld [vmem:[%s1 + $0x8] sm:$0xf]
        %v263 = vld [vmem:[%s1 + $0xc] sm:$0x1]
        %v264 = vld [vmem:[#allocation2] sm:$0x1]
        %v266 = vlaneseq
        %v267 = vshrl.u32 %v266, 7
        %v268 = vsub.s32 0, %v267
        %v269 = vrot.slane %v264, %v268
        %v343 = vunpack.c.l.b16 %v188
        %v344 = vunpack.c.l.b16 %v189
        %v345 = vunpack.c.l.b16 %v190
        %v346 = vunpack.c.l.b16 %v191
        %v347 = vunpack.c.l.b16 %v192
        %v348 = vunpack.c.l.b16 %v193
        %v349 = vunpack.c.l.b16 %v194
        %v350 = vunpack.c.l.b16 %v195
        %v351 = vunpack.c.l.b16 %v196
        %v352 = vunpack.c.l.b16 %v197
        %v353 = vunpack.c.l.b16 %v198
        %v354 = vunpack.c.l.b16 %v199
        %v355 = vunpack.c.l.b16 %v200
        %v356 = vunpack.c.l.b16 %v201
        %v357 = vunpack.c.l.b16 %v202
        %v358 = vunpack.c.l.b16 %v203
        %v359 = vunpack.c.l.b16 %v204
        %v360 = vunpack.c.l.b16 %v205
        %v361 = vunpack.c.l.b16 %v206
        %v362 = vunpack.c.l.b16 %v207
        %v363 = vunpack.c.l.b16 %v208
        %v364 = vunpack.c.l.b16 %v209
        %v365 = vunpack.c.l.b16 %v210
        %v366 = vunpack.c.l.b16 %v211
        %v367 = vunpack.c.l.b16 %v212
        %v368 = vunpack.c.l.b16 %v213
        %v369 = vunpack.c.l.b16 %v214
        %v370 = vunpack.c.l.b16 %v215
        %v371 = vunpack.c.l.b16 %v216
        %v372 = vunpack.c.l.b16 %v217
        %v373 = vunpack.c.l.b16 %v218
        %v374 = vunpack.c.l.b16 %v219
        %v375 = vunpack.c.l.b16 %v220
        %v376 = vunpack.c.l.b16 %v221
        %v377 = vunpack.c.l.b16 %v222
        %v378 = vunpack.c.l.b16 %v223
        %v379 = vunpack.c.l.b16 %v224
        %v380 = vunpack.c.l.b16 %v225
        %v381 = vunpack.c.l.b16 %v226
        %v382 = vunpack.c.l.b16 %v227
        %v383 = vunpack.c.l.b16 %v228
        %v384 = vunpack.c.l.b16 %v229
        %v385 = vunpack.c.l.b16 %v230
        %v386 = vunpack.c.l.b16 %v231
        %v387 = vunpack.c.l.b16 %v232
        %v388 = vunpack.c.l.b16 %v233
        %v389 = vunpack.c.l.b16 %v234
        %v390 = vunpack.c.l.b16 %v235
        %v391 = vunpack.c.l.b16 %v236
        %v392 = vunpack.c.l.b16 %v237
        %v393 = vunpack.c.l.b16 %v238
        %v394 = vunpack.c.l.b16 %v239
        %v395 = vunpack.c.l.b16 %v240
        %v396 = vunpack.c.l.b16 %v241
        %v397 = vunpack.c.l.b16 %v242
        %v398 = vunpack.c.l.b16 %v243
        %v399 = vunpack.c.l.b16 %v244
        %v400 = vunpack.c.l.b16 %v245
        %v401 = vunpack.c.l.b16 %v246
        %v402 = vunpack.c.l.b16 %v247
        %v403 = vunpack.c.l.b16 %v248
        %v404 = vunpack.c.l.b16 %v249
        %v405 = vunpack.c.l.b16 %v250
        %v406 = vunpack.c.l.b16 %v251
        %v407 = vunpack.c.l.b16 %v252
        %v408 = vunpack.c.l.b16 %v253
        %v409 = vunpack.c.l.b16 %v254
        %v410 = vunpack.c.l.b16 %v255
        %v411 = vunpack.c.l.b16 %v256
        %v412 = vunpack.c.l.b16 %v257
        %v413 = vunpack.c.l.b16 %v258
        %v414 = vunpack.c.l.b16 %v259
        %v415 = vpack.c.b16 %v344, %v343
        %v416 = vpack.c.b16 %v346, %v345
        %v417 = vpack.c.b16 %v348, %v347
        %v418 = vpack.c.b16 %v350, %v349
        %v419 = vpack.c.b16 %v352, %v351
        %v420 = vpack.c.b16 %v354, %v353
        %v421 = vpack.c.b16 %v356, %v355
        %v422 = vpack.c.b16 %v358, %v357
        %v423 = vpack.c.b16 %v360, %v359
        %v424 = vpack.c.b16 %v362, %v361
        %v425 = vpack.c.b16 %v364, %v363
        %v426 = vpack.c.b16 %v366, %v365
        %v427 = vpack.c.b16 %v368, %v367
        %v428 = vpack.c.b16 %v370, %v369
        %v429 = vpack.c.b16 %v372, %v371
        %v430 = vpack.c.b16 %v374, %v373
        %v431 = vpack.c.b16 %v376, %v375
        %v432 = vpack.c.b16 %v378, %v377
        %v433 = vpack.c.b16 %v380, %v379
        %v434 = vpack.c.b16 %v382, %v381
        %v435 = vpack.c.b16 %v384, %v383
        %v436 = vpack.c.b16 %v386, %v385
        %v437 = vpack.c.b16 %v388, %v387
        %v438 = vpack.c.b16 %v390, %v389
        %v439 = vpack.c.b16 %v392, %v391
        %v440 = vpack.c.b16 %v394, %v393
        %v441 = vpack.c.b16 %v396, %v395
        %v442 = vpack.c.b16 %v398, %v397
        %v443 = vpack.c.b16 %v400, %v399
        %v444 = vpack.c.b16 %v402, %v401
        %v445 = vpack.c.b16 %v404, %v403
        %v446 = vpack.c.b16 %v406, %v405
        %v447 = vpack.c.b16 %v408, %v407
        %v448 = vpack.c.b16 %v410, %v409
        %v449 = vpack.c.b16 %v412, %v411
        %v450 = vpack.c.b16 %v414, %v413
        %v455 = vunpack.c.l.b16 %v260
        %v456 = vunpack.c.l.b16 %v261
        %v457 = vunpack.c.l.b16 %v262
        %v458 = vunpack.c.l.b16 %v263
        %v459 = vpack.c.b16 %v456, %v455
        %v460 = vpack.c.b16 %v458, %v457
        %vm462 = vcmask 203776
        %v464 = vsel %vm462, %v415, 0
        %v467 = vsel %vm462, %v416, 0
        %v470 = vsel %vm462, %v417, 0
        %v473 = vsel %vm462, %v418, 0
        %v476 = vsel %vm462, %v419, 0
        %v479 = vsel %vm462, %v420, 0
        %v482 = vsel %vm462, %v421, 0
        %v485 = vsel %vm462, %v422, 0
        %v488 = vsel %vm462, %v423, 0
        %v491 = vsel %vm462, %v424, 0
        %v494 = vsel %vm462, %v425, 0
        %v497 = vsel %vm462, %v426, 0
        %v500 = vsel %vm462, %v427, 0
        %v503 = vsel %vm462, %v428, 0
        %v506 = vsel %vm462, %v429, 0
        %v509 = vsel %vm462, %v430, 0
        %v512 = vsel %vm462, %v431, 0
        %v515 = vsel %vm462, %v432, 0
        %v518 = vsel %vm462, %v433, 0
        %v521 = vsel %vm462, %v434, 0
        %v524 = vsel %vm462, %v435, 0
        %v527 = vsel %vm462, %v436, 0
        %v530 = vsel %vm462, %v437, 0
        %v533 = vsel %vm462, %v438, 0
        %v536 = vsel %vm462, %v439, 0
        %v539 = vsel %vm462, %v440, 0
        %v542 = vsel %vm462, %v441, 0
        %v545 = vsel %vm462, %v442, 0
        %v548 = vsel %vm462, %v443, 0
        %v551 = vsel %vm462, %v444, 0
        %v554 = vsel %vm462, %v445, 0
        %v557 = vsel %vm462, %v446, 0
        %v560 = vsel %vm462, %v447, 0
        %v563 = vsel %vm462, %v448, 0
        %v566 = vsel %vm462, %v449, 0
        %v569 = vsel %vm462, %v450, 0
        %vm571 = vcmask 1043456
        %vm572 = vcmask 1044480
        %v573 = vsel %vm571, 4294967295, 65535
        %v574 = vsel %vm572, %v573, 0
        %v576 = vand.u32 %v460, %v574
        %578 = vmatprep.subr.bf16.mxu0 0
        %579 = vmatpush1.bf16.msra.mxu0 0
        %580 = vmatprep.subr.bf16.mxu0 0
        %581 = vmatpush1.bf16.msra.mxu0 0
        %582 = vmatprep.subr.bf16.mxu0 0
        %583 = vmatpush1.bf16.msra.mxu0 0
        %584 = vmatprep.subr.bf16.mxu0 0
        %585 = vmatpush1.bf16.msra.mxu0 0
        %586 = vmatprep.subr.bf16.mxu0 0
        %587 = vmatpush1.bf16.msra.mxu0 0
        %588 = vmatprep.subr.bf16.mxu0 0
        %589 = vmatpush1.bf16.msra.mxu0 0
        %590 = vmatprep.subr.bf16.mxu0 0
        %591 = vmatpush1.bf16.msra.mxu0 %v576
        %592 = vmatprep.subr.bf16.mxu0 0
        %593 = vmatpush1.bf16.msra.mxu0 %v459
        %594 = vmatprep.subr.bf16.mxu0 0
        %595 = vmatpush2.bf16.msra.mxu0 0
        %596 = vmatprep.subr.bf16.mxu0 0
        %597 = vmatpush2.bf16.msra.mxu0 0
        %598 = vmatprep.subr.bf16.mxu0 0
        %599 = vmatpush2.bf16.msra.mxu0 0
        %600 = vmatprep.subr.bf16.mxu0 0
        %601 = vmatpush2.bf16.msra.mxu0 0
        %602 = vmatprep.subr.bf16.mxu0 0
        %603 = vmatpush2.bf16.msra.mxu0 0
        %604 = vmatprep.subr.bf16.mxu0 0
        %605 = vmatpush2.bf16.msra.mxu0 0
        %606 = vmatprep.subr.bf16.mxu0 0
        %607 = vmatpush2.bf16.msra.mxu0 0
        %608 = vmatprep.subr.bf16.mxu0 0
        %609 = vmatpush2.bf16.msra.mxu0 0
        %610 = vmatprep.mubr.bf16.mxu0 0
        %611 = vmatmul.mubr.bf16.gmra.mxu0 %v464
        %v612 = vpop.f32.mrf.mxu0
        %v613 = vadd.f32 %v269, %v612
        %v614 = vpop.f32.mrf.mxu0
        %v615 = vpop.f32.mrf.mxu0
        %v616 = vadd.f32 %v269, %v615
        %v617 = vpop.f32.mrf.mxu0
        %618 = vmatprep.mubr.bf16.mxu0 0
        %619 = vmatmul.mubr.bf16.gmra.mxu0 %v467
        %v620 = vpop.f32.mrf.mxu0
        %v621 = vadd.f32 %v269, %v620
        %v622 = vpop.f32.mrf.mxu0
        %v623 = vpop.f32.mrf.mxu0
        %v624 = vadd.f32 %v269, %v623
        %v625 = vpop.f32.mrf.mxu0
        %626 = vmatprep.mubr.bf16.mxu0 0
        %627 = vmatmul.mubr.bf16.gmra.mxu0 %v470
        %v628 = vpop.f32.mrf.mxu0
        %v629 = vadd.f32 %v269, %v628
        %v630 = vpop.f32.mrf.mxu0
        %v631 = vpop.f32.mrf.mxu0
        %v632 = vadd.f32 %v269, %v631
        %v633 = vpop.f32.mrf.mxu0
        %634 = vmatprep.mubr.bf16.mxu0 0
        %635 = vmatmul.mubr.bf16.gmra.mxu0 %v473
        %v636 = vpop.f32.mrf.mxu0
        %v637 = vadd.f32 %v269, %v636
        %v638 = vpop.f32.mrf.mxu0
        %v639 = vpop.f32.mrf.mxu0
        %v640 = vadd.f32 %v269, %v639
        %v641 = vpop.f32.mrf.mxu0
        %642 = vmatprep.mubr.bf16.mxu0 0
        %643 = vmatmul.mubr.bf16.gmra.mxu0 %v476
        %v644 = vpop.f32.mrf.mxu0
        %v645 = vadd.f32 %v269, %v644
        %v646 = vpop.f32.mrf.mxu0
        %v647 = vpop.f32.mrf.mxu0
        %v648 = vadd.f32 %v269, %v647
        %v649 = vpop.f32.mrf.mxu0
        %650 = vmatprep.mubr.bf16.mxu0 0
        %651 = vmatmul.mubr.bf16.gmra.mxu0 %v479
        %v652 = vpop.f32.mrf.mxu0
        %v653 = vadd.f32 %v269, %v652
        %v654 = vpop.f32.mrf.mxu0
        %v655 = vpop.f32.mrf.mxu0
        %v656 = vadd.f32 %v269, %v655
        %v657 = vpop.f32.mrf.mxu0
        %658 = vmatprep.mubr.bf16.mxu0 0
        %659 = vmatmul.mubr.bf16.gmra.mxu0 %v482
        %v660 = vpop.f32.mrf.mxu0
        %v661 = vadd.f32 %v269, %v660
        %v662 = vpop.f32.mrf.mxu0
        %v663 = vpop.f32.mrf.mxu0
        %v664 = vadd.f32 %v269, %v663
        %v665 = vpop.f32.mrf.mxu0
        %666 = vmatprep.mubr.bf16.mxu0 0
        %667 = vmatmul.mubr.bf16.gmra.mxu0 %v485
        %v668 = vpop.f32.mrf.mxu0
        %v669 = vadd.f32 %v269, %v668
        %v670 = vpop.f32.mrf.mxu0
        %v671 = vpop.f32.mrf.mxu0
        %v672 = vadd.f32 %v269, %v671
        %v673 = vpop.f32.mrf.mxu0
        %674 = vmatprep.mubr.bf16.mxu0 0
        %675 = vmatmul.mubr.bf16.gmra.mxu0 %v488
        %v676 = vpop.f32.mrf.mxu0
        %v677 = vadd.f32 %v269, %v676
        %v678 = vpop.f32.mrf.mxu0
        %v679 = vpop.f32.mrf.mxu0
        %v680 = vadd.f32 %v269, %v679
        %v681 = vpop.f32.mrf.mxu0
        %682 = vmatprep.mubr.bf16.mxu0 0
        %683 = vmatmul.mubr.bf16.gmra.mxu0 %v491
        %v684 = vpop.f32.mrf.mxu0
        %v685 = vadd.f32 %v269, %v684
        %v686 = vpop.f32.mrf.mxu0
        %v687 = vpop.f32.mrf.mxu0
        %v688 = vadd.f32 %v269, %v687
        %v689 = vpop.f32.mrf.mxu0
        %690 = vmatprep.mubr.bf16.mxu0 0
        %691 = vmatmul.mubr.bf16.gmra.mxu0 %v494
        %v692 = vpop.f32.mrf.mxu0
        %v693 = vadd.f32 %v269, %v692
        %v694 = vpop.f32.mrf.mxu0
        %v695 = vpop.f32.mrf.mxu0
        %v696 = vadd.f32 %v269, %v695
        %v697 = vpop.f32.mrf.mxu0
        %698 = vmatprep.mubr.bf16.mxu0 0
        %699 = vmatmul.mubr.bf16.gmra.mxu0 %v497
        %v700 = vpop.f32.mrf.mxu0
        %v701 = vadd.f32 %v269, %v700
        %v702 = vpop.f32.mrf.mxu0
        %v703 = vpop.f32.mrf.mxu0
        %v704 = vadd.f32 %v269, %v703
        %v705 = vpop.f32.mrf.mxu0
        %706 = vmatprep.mubr.bf16.mxu0 0
        %707 = vmatmul.mubr.bf16.gmra.mxu0 %v500
        %v708 = vpop.f32.mrf.mxu0
        %v709 = vadd.f32 %v269, %v708
        %v710 = vpop.f32.mrf.mxu0
        %v711 = vpop.f32.mrf.mxu0
        %v712 = vadd.f32 %v269, %v711
        %v713 = vpop.f32.mrf.mxu0
        %714 = vmatprep.mubr.bf16.mxu0 0
        %715 = vmatmul.mubr.bf16.gmra.mxu0 %v503
        %v716 = vpop.f32.mrf.mxu0
        %v717 = vadd.f32 %v269, %v716
        %v718 = vpop.f32.mrf.mxu0
        %v719 = vpop.f32.mrf.mxu0
        %v720 = vadd.f32 %v269, %v719
        %v721 = vpop.f32.mrf.mxu0
        %722 = vmatprep.mubr.bf16.mxu0 0
        %723 = vmatmul.mubr.bf16.gmra.mxu0 %v506
        %v724 = vpop.f32.mrf.mxu0
        %v725 = vadd.f32 %v269, %v724
        %v726 = vpop.f32.mrf.mxu0
        %v727 = vpop.f32.mrf.mxu0
        %v728 = vadd.f32 %v269, %v727
        %v729 = vpop.f32.mrf.mxu0
        %730 = vmatprep.mubr.bf16.mxu0 0
        %731 = vmatmul.mubr.bf16.gmra.mxu0 %v509
        %v732 = vpop.f32.mrf.mxu0
        %v733 = vadd.f32 %v269, %v732
        %v734 = vpop.f32.mrf.mxu0
        %v735 = vpop.f32.mrf.mxu0
        %v736 = vadd.f32 %v269, %v735
        %v737 = vpop.f32.mrf.mxu0
        %738 = vmatprep.mubr.bf16.mxu0 0
        %739 = vmatmul.mubr.bf16.gmra.mxu0 %v512
        %v740 = vpop.f32.mrf.mxu0
        %v741 = vadd.f32 %v269, %v740
        %v742 = vpop.f32.mrf.mxu0
        %v743 = vpop.f32.mrf.mxu0
        %v744 = vadd.f32 %v269, %v743
        %v745 = vpop.f32.mrf.mxu0
        %746 = vmatprep.mubr.bf16.mxu0 0
        %747 = vmatmul.mubr.bf16.gmra.mxu0 %v515
        %v748 = vpop.f32.mrf.mxu0
        %v749 = vadd.f32 %v269, %v748
        %v750 = vpop.f32.mrf.mxu0
        %v751 = vpop.f32.mrf.mxu0
        %v752 = vadd.f32 %v269, %v751
        %v753 = vpop.f32.mrf.mxu0
        %754 = vmatprep.mubr.bf16.mxu0 0
        %755 = vmatmul.mubr.bf16.gmra.mxu0 %v518
        %v756 = vpop.f32.mrf.mxu0
        %v757 = vadd.f32 %v269, %v756
        %v758 = vpop.f32.mrf.mxu0
        %v759 = vpop.f32.mrf.mxu0
        %v760 = vadd.f32 %v269, %v759
        %v761 = vpop.f32.mrf.mxu0
        %762 = vmatprep.mubr.bf16.mxu0 0
        %763 = vmatmul.mubr.bf16.gmra.mxu0 %v521
        %v764 = vpop.f32.mrf.mxu0
        %v765 = vadd.f32 %v269, %v764
        %v766 = vpop.f32.mrf.mxu0
        %v767 = vpop.f32.mrf.mxu0
        %v768 = vadd.f32 %v269, %v767
        %v769 = vpop.f32.mrf.mxu0
        %770 = vmatprep.mubr.bf16.mxu0 0
        %771 = vmatmul.mubr.bf16.gmra.mxu0 %v524
        %v772 = vpop.f32.mrf.mxu0
        %v773 = vadd.f32 %v269, %v772
        %v774 = vpop.f32.mrf.mxu0
        %v775 = vpop.f32.mrf.mxu0
        %v776 = vadd.f32 %v269, %v775
        %v777 = vpop.f32.mrf.mxu0
        %778 = vmatprep.mubr.bf16.mxu0 0
        %779 = vmatmul.mubr.bf16.gmra.mxu0 %v527
        %v780 = vpop.f32.mrf.mxu0
        %v781 = vadd.f32 %v269, %v780
        %v782 = vpop.f32.mrf.mxu0
        %v783 = vpop.f32.mrf.mxu0
        %v784 = vadd.f32 %v269, %v783
        %v785 = vpop.f32.mrf.mxu0
        %786 = vmatprep.mubr.bf16.mxu0 0
        %787 = vmatmul.mubr.bf16.gmra.mxu0 %v530
        %v788 = vpop.f32.mrf.mxu0
        %v789 = vadd.f32 %v269, %v788
        %v790 = vpop.f32.mrf.mxu0
        %v791 = vpop.f32.mrf.mxu0
        %v792 = vadd.f32 %v269, %v791
        %v793 = vpop.f32.mrf.mxu0
        %794 = vmatprep.mubr.bf16.mxu0 0
        %795 = vmatmul.mubr.bf16.gmra.mxu0 %v533
        %v796 = vpop.f32.mrf.mxu0
        %v797 = vadd.f32 %v269, %v796
        %v798 = vpop.f32.mrf.mxu0
        %v799 = vpop.f32.mrf.mxu0
        %v800 = vadd.f32 %v269, %v799
        %v801 = vpop.f32.mrf.mxu0
        %802 = vmatprep.mubr.bf16.mxu0 0
        %803 = vmatmul.mubr.bf16.gmra.mxu0 %v536
        %v804 = vpop.f32.mrf.mxu0
        %v805 = vadd.f32 %v269, %v804
        %v806 = vpop.f32.mrf.mxu0
        %v807 = vpop.f32.mrf.mxu0
        %v808 = vadd.f32 %v269, %v807
        %v809 = vpop.f32.mrf.mxu0
        %810 = vmatprep.mubr.bf16.mxu0 0
        %811 = vmatmul.mubr.bf16.gmra.mxu0 %v539
        %v812 = vpop.f32.mrf.mxu0
        %v813 = vadd.f32 %v269, %v812
        %v814 = vpop.f32.mrf.mxu0
        %v815 = vpop.f32.mrf.mxu0
        %v816 = vadd.f32 %v269, %v815
        %v817 = vpop.f32.mrf.mxu0
        %818 = vmatprep.mubr.bf16.mxu0 0
        %819 = vmatmul.mubr.bf16.gmra.mxu0 %v542
        %v820 = vpop.f32.mrf.mxu0
        %v821 = vadd.f32 %v269, %v820
        %v822 = vpop.f32.mrf.mxu0
        %v823 = vpop.f32.mrf.mxu0
        %v824 = vadd.f32 %v269, %v823
        %v825 = vpop.f32.mrf.mxu0
        %826 = vmatprep.mubr.bf16.mxu0 0
        %827 = vmatmul.mubr.bf16.gmra.mxu0 %v545
        %v828 = vpop.f32.mrf.mxu0
        %v829 = vadd.f32 %v269, %v828
        %v830 = vpop.f32.mrf.mxu0
        %v831 = vpop.f32.mrf.mxu0
        %v832 = vadd.f32 %v269, %v831
        %v833 = vpop.f32.mrf.mxu0
        %834 = vmatprep.mubr.bf16.mxu0 0
        %835 = vmatmul.mubr.bf16.gmra.mxu0 %v548
        %v836 = vpop.f32.mrf.mxu0
        %v837 = vadd.f32 %v269, %v836
        %v838 = vpop.f32.mrf.mxu0
        %v839 = vpop.f32.mrf.mxu0
        %v840 = vadd.f32 %v269, %v839
        %v841 = vpop.f32.mrf.mxu0
        %842 = vmatprep.mubr.bf16.mxu0 0
        %843 = vmatmul.mubr.bf16.gmra.mxu0 %v551
        %v844 = vpop.f32.mrf.mxu0
        %v845 = vadd.f32 %v269, %v844
        %v846 = vpop.f32.mrf.mxu0
        %v847 = vpop.f32.mrf.mxu0
        %v848 = vadd.f32 %v269, %v847
        %v849 = vpop.f32.mrf.mxu0
        %850 = vmatprep.mubr.bf16.mxu0 0
        %851 = vmatmul.mubr.bf16.gmra.mxu0 %v554
        %v852 = vpop.f32.mrf.mxu0
        %v853 = vadd.f32 %v269, %v852
        %v854 = vpop.f32.mrf.mxu0
        %v855 = vpop.f32.mrf.mxu0
        %v856 = vadd.f32 %v269, %v855
        %v857 = vpop.f32.mrf.mxu0
        %858 = vmatprep.mubr.bf16.mxu0 0
        %859 = vmatmul.mubr.bf16.gmra.mxu0 %v557
        %v860 = vpop.f32.mrf.mxu0
        %v861 = vadd.f32 %v269, %v860
        %v862 = vpop.f32.mrf.mxu0
        %v863 = vpop.f32.mrf.mxu0
        %v864 = vadd.f32 %v269, %v863
        %v865 = vpop.f32.mrf.mxu0
        %866 = vmatprep.mubr.bf16.mxu0 0
        %867 = vmatmul.mubr.bf16.gmra.mxu0 %v560
        %v868 = vpop.f32.mrf.mxu0
        %v869 = vadd.f32 %v269, %v868
        %v870 = vpop.f32.mrf.mxu0
        %v871 = vpop.f32.mrf.mxu0
        %v872 = vadd.f32 %v269, %v871
        %v873 = vpop.f32.mrf.mxu0
        %874 = vmatprep.mubr.bf16.mxu0 0
        %875 = vmatmul.mubr.bf16.gmra.mxu0 %v563
        %v876 = vpop.f32.mrf.mxu0
        %v877 = vadd.f32 %v269, %v876
        %v878 = vpop.f32.mrf.mxu0
        %v879 = vpop.f32.mrf.mxu0
        %v880 = vadd.f32 %v269, %v879
        %v881 = vpop.f32.mrf.mxu0
        %882 = vmatprep.mubr.bf16.mxu0 0
        %883 = vmatmul.mubr.bf16.gmra.mxu0 %v566
        %v884 = vpop.f32.mrf.mxu0
        %v885 = vadd.f32 %v269, %v884
        %v886 = vpop.f32.mrf.mxu0
        %v887 = vpop.f32.mrf.mxu0
        %v888 = vadd.f32 %v269, %v887
        %v889 = vpop.f32.mrf.mxu0
        %890 = vmatprep.mubr.bf16.mxu0 0
        %891 = vmatmul.mubr.bf16.gmra.mxu0 %v569
        %v892 = vpop.f32.mrf.mxu0
        %v893 = vadd.f32 %v269, %v892
        %v894 = vpop.f32.mrf.mxu0
        %v895 = vpop.f32.mrf.mxu0
        %v896 = vadd.f32 %v269, %v895
        %v897 = vpop.f32.mrf.mxu0
        %898 = vdwg.mxu0
        %v899 = vmax.f32 %v613, 0.0
        %v900 = vmax.f32 %v616, 0.0
        %v901 = vmax.f32 %v621, 0.0
        %v902 = vmax.f32 %v624, 0.0
        %v903 = vmax.f32 %v629, 0.0
        %v904 = vmax.f32 %v632, 0.0
        %v905 = vmax.f32 %v637, 0.0
        %v906 = vmax.f32 %v640, 0.0
        %v907 = vmax.f32 %v645, 0.0
        %v908 = vmax.f32 %v648, 0.0
        %v909 = vmax.f32 %v653, 0.0
        %v910 = vmax.f32 %v656, 0.0
        %v911 = vmax.f32 %v661, 0.0
        %v912 = vmax.f32 %v664, 0.0
        %v913 = vmax.f32 %v669, 0.0
        %v914 = vmax.f32 %v672, 0.0
        %v915 = vmax.f32 %v677, 0.0
        %v916 = vmax.f32 %v680, 0.0
        %v917 = vmax.f32 %v685, 0.0
        %v918 = vmax.f32 %v688, 0.0
        %v919 = vmax.f32 %v693, 0.0
        %v920 = vmax.f32 %v696, 0.0
        %v921 = vmax.f32 %v701, 0.0
        %v922 = vmax.f32 %v704, 0.0
        %v923 = vmax.f32 %v709, 0.0
        %v924 = vmax.f32 %v712, 0.0
        %v925 = vmax.f32 %v717, 0.0
        %v926 = vmax.f32 %v720, 0.0
        %v927 = vmax.f32 %v725, 0.0
        %v928 = vmax.f32 %v728, 0.0
        %v929 = vmax.f32 %v733, 0.0
        %v930 = vmax.f32 %v736, 0.0
        %v931 = vmax.f32 %v741, 0.0
        %v932 = vmax.f32 %v744, 0.0
        %v933 = vmax.f32 %v749, 0.0
        %v934 = vmax.f32 %v752, 0.0
        %v935 = vmax.f32 %v757, 0.0
        %v936 = vmax.f32 %v760, 0.0
        %v937 = vmax.f32 %v765, 0.0
        %v938 = vmax.f32 %v768, 0.0
        %v939 = vmax.f32 %v773, 0.0
        %v940 = vmax.f32 %v776, 0.0
        %v941 = vmax.f32 %v781, 0.0
        %v942 = vmax.f32 %v784, 0.0
        %v943 = vmax.f32 %v789, 0.0
        %v944 = vmax.f32 %v792, 0.0
        %v945 = vmax.f32 %v797, 0.0
        %v946 = vmax.f32 %v800, 0.0
        %v947 = vmax.f32 %v805, 0.0
        %v948 = vmax.f32 %v808, 0.0
        %v949 = vmax.f32 %v813, 0.0
        %v950 = vmax.f32 %v816, 0.0
        %v951 = vmax.f32 %v821, 0.0
        %v952 = vmax.f32 %v824, 0.0
        %v953 = vmax.f32 %v829, 0.0
        %v954 = vmax.f32 %v832, 0.0
        %v955 = vmax.f32 %v837, 0.0
        %v956 = vmax.f32 %v840, 0.0
        %v957 = vmax.f32 %v845, 0.0
        %v958 = vmax.f32 %v848, 0.0
        %v959 = vmax.f32 %v853, 0.0
        %v960 = vmax.f32 %v856, 0.0
        %v961 = vmax.f32 %v861, 0.0
        %v962 = vmax.f32 %v864, 0.0
        %v963 = vmax.f32 %v869, 0.0
        %v964 = vmax.f32 %v872, 0.0
        %v965 = vmax.f32 %v877, 0.0
        %v966 = vmax.f32 %v880, 0.0
        %v967 = vmax.f32 %v885, 0.0
        %v968 = vmax.f32 %v888, 0.0
        %v969 = vmax.f32 %v893, 0.0
        %v970 = vmax.f32 %v896, 0.0
        %v971 = vpack.c.bf16 %v900, %v899
        %v972 = vpack.c.bf16 %v902, %v901
        %v973 = vpack.c.bf16 %v904, %v903
        %v974 = vpack.c.bf16 %v906, %v905
        %v975 = vpack.c.bf16 %v908, %v907
        %v976 = vpack.c.bf16 %v910, %v909
        %v977 = vpack.c.bf16 %v912, %v911
        %v978 = vpack.c.bf16 %v914, %v913
        %v979 = vpack.c.bf16 %v916, %v915
        %v980 = vpack.c.bf16 %v918, %v917
        %v981 = vpack.c.bf16 %v920, %v919
        %v982 = vpack.c.bf16 %v922, %v921
        %v983 = vpack.c.bf16 %v924, %v923
        %v984 = vpack.c.bf16 %v926, %v925
        %v985 = vpack.c.bf16 %v928, %v927
        %v986 = vpack.c.bf16 %v930, %v929
        %v987 = vpack.c.bf16 %v932, %v931
        %v988 = vpack.c.bf16 %v934, %v933
        %v989 = vpack.c.bf16 %v936, %v935
        %v990 = vpack.c.bf16 %v938, %v937
        %v991 = vpack.c.bf16 %v940, %v939
        %v992 = vpack.c.bf16 %v942, %v941
        %v993 = vpack.c.bf16 %v944, %v943
        %v994 = vpack.c.bf16 %v946, %v945
        %v995 = vpack.c.bf16 %v948, %v947
        %v996 = vpack.c.bf16 %v950, %v949
        %v997 = vpack.c.bf16 %v952, %v951
        %v998 = vpack.c.bf16 %v954, %v953
        %v999 = vpack.c.bf16 %v956, %v955
        %v1000 = vpack.c.bf16 %v958, %v957
        %v1001 = vpack.c.bf16 %v960, %v959
        %v1002 = vpack.c.bf16 %v962, %v961
        %v1003 = vpack.c.bf16 %v964, %v963
        %v1004 = vpack.c.bf16 %v966, %v965
        %v1005 = vpack.c.bf16 %v968, %v967
        %v1006 = vpack.c.bf16 %v970, %v969
        %v1043 = vunpack.c.l.b16 %v971
        %v1044 = vunpack.c.h.b16 %v971
        %v1045 = vunpack.c.l.b16 %v972
        %v1046 = vunpack.c.h.b16 %v972
        %v1047 = vunpack.c.l.b16 %v973
        %v1048 = vunpack.c.h.b16 %v973
        %v1049 = vunpack.c.l.b16 %v974
        %v1050 = vunpack.c.h.b16 %v974
        %v1051 = vunpack.c.l.b16 %v975
        %v1052 = vunpack.c.h.b16 %v975
        %v1053 = vunpack.c.l.b16 %v976
        %v1054 = vunpack.c.h.b16 %v976
        %v1055 = vunpack.c.l.b16 %v977
        %v1056 = vunpack.c.h.b16 %v977
        %v1057 = vunpack.c.l.b16 %v978
        %v1058 = vunpack.c.h.b16 %v978
        %v1059 = vunpack.c.l.b16 %v979
        %v1060 = vunpack.c.h.b16 %v979
        %v1061 = vunpack.c.l.b16 %v980
        %v1062 = vunpack.c.h.b16 %v980
        %v1063 = vunpack.c.l.b16 %v981
        %v1064 = vunpack.c.h.b16 %v981
        %v1065 = vunpack.c.l.b16 %v982
        %v1066 = vunpack.c.h.b16 %v982
        %v1067 = vunpack.c.l.b16 %v983
        %v1068 = vunpack.c.h.b16 %v983
        %v1069 = vunpack.c.l.b16 %v984
        %v1070 = vunpack.c.h.b16 %v984
        %v1071 = vunpack.c.l.b16 %v985
        %v1072 = vunpack.c.h.b16 %v985
        %v1073 = vunpack.c.l.b16 %v986
        %v1074 = vunpack.c.h.b16 %v986
        %v1075 = vunpack.c.l.b16 %v987
        %v1076 = vunpack.c.h.b16 %v987
        %v1077 = vunpack.c.l.b16 %v988
        %v1078 = vunpack.c.h.b16 %v988
        %v1079 = vunpack.c.l.b16 %v989
        %v1080 = vunpack.c.h.b16 %v989
        %v1081 = vunpack.c.l.b16 %v990
        %v1082 = vunpack.c.h.b16 %v990
        %v1083 = vunpack.c.l.b16 %v991
        %v1084 = vunpack.c.h.b16 %v991
        %v1085 = vunpack.c.l.b16 %v992
        %v1086 = vunpack.c.h.b16 %v992
        %v1087 = vunpack.c.l.b16 %v993
        %v1088 = vunpack.c.h.b16 %v993
        %v1089 = vunpack.c.l.b16 %v994
        %v1090 = vunpack.c.h.b16 %v994
        %v1091 = vunpack.c.l.b16 %v995
        %v1092 = vunpack.c.h.b16 %v995
        %v1093 = vunpack.c.l.b16 %v996
        %v1094 = vunpack.c.h.b16 %v996
        %v1095 = vunpack.c.l.b16 %v997
        %v1096 = vunpack.c.h.b16 %v997
        %v1097 = vunpack.c.l.b16 %v998
        %v1098 = vunpack.c.h.b16 %v998
        %v1099 = vunpack.c.l.b16 %v999
        %v1100 = vunpack.c.h.b16 %v999
        %v1101 = vunpack.c.l.b16 %v1000
        %v1102 = vunpack.c.h.b16 %v1000
        %v1103 = vunpack.c.l.b16 %v1001
        %v1104 = vunpack.c.h.b16 %v1001
        %v1105 = vunpack.c.l.b16 %v1002
        %v1106 = vunpack.c.h.b16 %v1002
        %v1107 = vunpack.c.l.b16 %v1003
        %v1108 = vunpack.c.h.b16 %v1003
        %v1109 = vunpack.c.l.b16 %v1004
        %v1110 = vunpack.c.h.b16 %v1004
        %v1111 = vunpack.c.l.b16 %v1005
        %v1112 = vunpack.c.h.b16 %v1005
        %v1113 = vunpack.c.l.b16 %v1006
        %v1114 = vunpack.c.h.b16 %v1006
        %v1115 = vpack.c.b16 %v1043, %v1043
        %v1116 = vpack.c.b16 %v1044, %v1044
        %v1117 = vpack.c.b16 %v1045, %v1045
        %v1118 = vpack.c.b16 %v1046, %v1046
        %v1119 = vpack.c.b16 %v1047, %v1047
        %v1120 = vpack.c.b16 %v1048, %v1048
        %v1121 = vpack.c.b16 %v1049, %v1049
        %v1122 = vpack.c.b16 %v1050, %v1050
        %v1123 = vpack.c.b16 %v1051, %v1051
        %v1124 = vpack.c.b16 %v1052, %v1052
        %v1125 = vpack.c.b16 %v1053, %v1053
        %v1126 = vpack.c.b16 %v1054, %v1054
        %v1127 = vpack.c.b16 %v1055, %v1055
        %v1128 = vpack.c.b16 %v1056, %v1056
        %v1129 = vpack.c.b16 %v1057, %v1057
        %v1130 = vpack.c.b16 %v1058, %v1058
        %v1131 = vpack.c.b16 %v1059, %v1059
        %v1132 = vpack.c.b16 %v1060, %v1060
        %v1133 = vpack.c.b16 %v1061, %v1061
        %v1134 = vpack.c.b16 %v1062, %v1062
        %v1135 = vpack.c.b16 %v1063, %v1063
        %v1136 = vpack.c.b16 %v1064, %v1064
        %v1137 = vpack.c.b16 %v1065, %v1065
        %v1138 = vpack.c.b16 %v1066, %v1066
        %v1139 = vpack.c.b16 %v1067, %v1067
        %v1140 = vpack.c.b16 %v1068, %v1068
        %v1141 = vpack.c.b16 %v1069, %v1069
        %v1142 = vpack.c.b16 %v1070, %v1070
        %v1143 = vpack.c.b16 %v1071, %v1071
        %v1144 = vpack.c.b16 %v1072, %v1072
        %v1145 = vpack.c.b16 %v1073, %v1073
        %v1146 = vpack.c.b16 %v1074, %v1074
        %v1147 = vpack.c.b16 %v1075, %v1075
        %v1148 = vpack.c.b16 %v1076, %v1076
        %v1149 = vpack.c.b16 %v1077, %v1077
        %v1150 = vpack.c.b16 %v1078, %v1078
        %v1151 = vpack.c.b16 %v1079, %v1079
        %v1152 = vpack.c.b16 %v1080, %v1080
        %v1153 = vpack.c.b16 %v1081, %v1081
        %v1154 = vpack.c.b16 %v1082, %v1082
        %v1155 = vpack.c.b16 %v1083, %v1083
        %v1156 = vpack.c.b16 %v1084, %v1084
        %v1157 = vpack.c.b16 %v1085, %v1085
        %v1158 = vpack.c.b16 %v1086, %v1086
        %v1159 = vpack.c.b16 %v1087, %v1087
        %v1160 = vpack.c.b16 %v1088, %v1088
        %v1161 = vpack.c.b16 %v1089, %v1089
        %v1162 = vpack.c.b16 %v1090, %v1090
        %v1163 = vpack.c.b16 %v1091, %v1091
        %v1164 = vpack.c.b16 %v1092, %v1092
        %v1165 = vpack.c.b16 %v1093, %v1093
        %v1166 = vpack.c.b16 %v1094, %v1094
        %v1167 = vpack.c.b16 %v1095, %v1095
        %v1168 = vpack.c.b16 %v1096, %v1096
        %v1169 = vpack.c.b16 %v1097, %v1097
        %v1170 = vpack.c.b16 %v1098, %v1098
        %v1171 = vpack.c.b16 %v1099, %v1099
        %v1172 = vpack.c.b16 %v1100, %v1100
        %v1173 = vpack.c.b16 %v1101, %v1101
        %v1174 = vpack.c.b16 %v1102, %v1102
        %v1175 = vpack.c.b16 %v1103, %v1103
        %v1176 = vpack.c.b16 %v1104, %v1104
        %v1177 = vpack.c.b16 %v1105, %v1105
        %v1178 = vpack.c.b16 %v1106, %v1106
        %v1179 = vpack.c.b16 %v1107, %v1107
        %v1180 = vpack.c.b16 %v1108, %v1108
        %v1181 = vpack.c.b16 %v1109, %v1109
        %v1182 = vpack.c.b16 %v1110, %v1110
        %v1183 = vpack.c.b16 %v1111, %v1111
        %v1184 = vpack.c.b16 %v1112, %v1112
        %v1185 = vpack.c.b16 %v1113, %v1113
        %v1186 = vpack.c.b16 %v1114, %v1114
        %vm1259 = vcmask 76800
        %1260 = vst.msk [vmem:[%s185] sm:$0xf] %vm1259, %v1115
        %1261 = vst.msk [vmem:[%s185 + $0x4] sm:$0xf] %vm1259, %v1116
        %1262 = vst.msk [vmem:[%s185 + $0x8] sm:$0xf] %vm1259, %v1117
        %1263 = vst.msk [vmem:[%s185 + $0xc] sm:$0xf] %vm1259, %v1118
        %1264 = vst.msk [vmem:[%s185 + $0x10] sm:$0xf] %vm1259, %v1119
        %1265 = vst.msk [vmem:[%s185 + $0x14] sm:$0xf] %vm1259, %v1120
        %1266 = vst.msk [vmem:[%s185 + $0x18] sm:$0xf] %vm1259, %v1121
        %1267 = vst.msk [vmem:[%s185 + $0x1c] sm:$0xf] %vm1259, %v1122
        %1268 = vst.msk [vmem:[%s185 + $0x20] sm:$0xf] %vm1259, %v1123
        %1269 = vst.msk [vmem:[%s185 + $0x24] sm:$0xf] %vm1259, %v1124
        %1270 = vst.msk [vmem:[%s185 + $0x28] sm:$0xf] %vm1259, %v1125
        %1271 = vst.msk [vmem:[%s185 + $0x2c] sm:$0xf] %vm1259, %v1126
        %1272 = vst.msk [vmem:[%s185 + $0x30] sm:$0xf] %vm1259, %v1127
        %1273 = vst.msk [vmem:[%s185 + $0x34] sm:$0xf] %vm1259, %v1128
        %1274 = vst.msk [vmem:[%s185 + $0x38] sm:$0xf] %vm1259, %v1129
        %1275 = vst.msk [vmem:[%s185 + $0x3c] sm:$0xf] %vm1259, %v1130
        %1276 = vst.msk [vmem:[%s185 + $0x40] sm:$0xf] %vm1259, %v1131
        %1277 = vst.msk [vmem:[%s185 + $0x44] sm:$0xf] %vm1259, %v1132
        %1278 = vst.msk [vmem:[%s185 + $0x48] sm:$0xf] %vm1259, %v1133
        %1279 = vst.msk [vmem:[%s185 + $0x4c] sm:$0xf] %vm1259, %v1134
        %1280 = vst.msk [vmem:[%s185 + $0x50] sm:$0xf] %vm1259, %v1135
        %1281 = vst.msk [vmem:[%s185 + $0x54] sm:$0xf] %vm1259, %v1136
        %1282 = vst.msk [vmem:[%s185 + $0x58] sm:$0xf] %vm1259, %v1137
        %1283 = vst.msk [vmem:[%s185 + $0x5c] sm:$0xf] %vm1259, %v1138
        %1284 = vst.msk [vmem:[%s185 + $0x60] sm:$0xf] %vm1259, %v1139
        %1285 = vst.msk [vmem:[%s185 + $0x64] sm:$0xf] %vm1259, %v1140
        %1286 = vst.msk [vmem:[%s185 + $0x68] sm:$0xf] %vm1259, %v1141
        %1287 = vst.msk [vmem:[%s185 + $0x6c] sm:$0xf] %vm1259, %v1142
        %1288 = vst.msk [vmem:[%s185 + $0x70] sm:$0xf] %vm1259, %v1143
        %1289 = vst.msk [vmem:[%s185 + $0x74] sm:$0xf] %vm1259, %v1144
        %1290 = vst.msk [vmem:[%s185 + $0x78] sm:$0xf] %vm1259, %v1145
        %1291 = vst.msk [vmem:[%s185 + $0x7c] sm:$0xf] %vm1259, %v1146
        %1292 = vst.msk [vmem:[%s185 + $0x80] sm:$0xf] %vm1259, %v1147
        %1293 = vst.msk [vmem:[%s185 + $0x84] sm:$0xf] %vm1259, %v1148
        %1294 = vst.msk [vmem:[%s185 + $0x88] sm:$0xf] %vm1259, %v1149
        %1295 = vst.msk [vmem:[%s185 + $0x8c] sm:$0xf] %vm1259, %v1150
        %1296 = vst.msk [vmem:[%s185 + $0x90] sm:$0xf] %vm1259, %v1151
        %1297 = vst.msk [vmem:[%s185 + $0x94] sm:$0xf] %vm1259, %v1152
        %1298 = vst.msk [vmem:[%s185 + $0x98] sm:$0xf] %vm1259, %v1153
        %1299 = vst.msk [vmem:[%s185 + $0x9c] sm:$0xf] %vm1259, %v1154
        %1300 = vst.msk [vmem:[%s185 + $0xa0] sm:$0xf] %vm1259, %v1155
        %1301 = vst.msk [vmem:[%s185 + $0xa4] sm:$0xf] %vm1259, %v1156
        %1302 = vst.msk [vmem:[%s185 + $0xa8] sm:$0xf] %vm1259, %v1157
        %1303 = vst.msk [vmem:[%s185 + $0xac] sm:$0xf] %vm1259, %v1158
        %1304 = vst.msk [vmem:[%s185 + $0xb0] sm:$0xf] %vm1259, %v1159
        %1305 = vst.msk [vmem:[%s185 + $0xb4] sm:$0xf] %vm1259, %v1160
        %1306 = vst.msk [vmem:[%s185 + $0xb8] sm:$0xf] %vm1259, %v1161
        %1307 = vst.msk [vmem:[%s185 + $0xbc] sm:$0xf] %vm1259, %v1162
        %1308 = vst.msk [vmem:[%s185 + $0xc0] sm:$0xf] %vm1259, %v1163
        %1309 = vst.msk [vmem:[%s185 + $0xc4] sm:$0xf] %vm1259, %v1164
        %1310 = vst.msk [vmem:[%s185 + $0xc8] sm:$0xf] %vm1259, %v1165
        %1311 = vst.msk [vmem:[%s185 + $0xcc] sm:$0xf] %vm1259, %v1166
        %1312 = vst.msk [vmem:[%s185 + $0xd0] sm:$0xf] %vm1259, %v1167
        %1313 = vst.msk [vmem:[%s185 + $0xd4] sm:$0xf] %vm1259, %v1168
        %1314 = vst.msk [vmem:[%s185 + $0xd8] sm:$0xf] %vm1259, %v1169
        %1315 = vst.msk [vmem:[%s185 + $0xdc] sm:$0xf] %vm1259, %v1170
        %1316 = vst.msk [vmem:[%s185 + $0xe0] sm:$0xf] %vm1259, %v1171
        %1317 = vst.msk [vmem:[%s185 + $0xe4] sm:$0xf] %vm1259, %v1172
        %1318 = vst.msk [vmem:[%s185 + $0xe8] sm:$0xf] %vm1259, %v1173
        %1319 = vst.msk [vmem:[%s185 + $0xec] sm:$0xf] %vm1259, %v1174
        %1320 = vst.msk [vmem:[%s185 + $0xf0] sm:$0xf] %vm1259, %v1175
        %1321 = vst.msk [vmem:[%s185 + $0xf4] sm:$0xf] %vm1259, %v1176
        %1322 = vst.msk [vmem:[%s185 + $0xf8] sm:$0xf] %vm1259, %v1177
        %1323 = vst.msk [vmem:[%s185 + $0xfc] sm:$0xf] %vm1259, %v1178
        %1324 = vst.msk [vmem:[%s185 + $0x100] sm:$0xf] %vm1259, %v1179
        %1325 = vst.msk [vmem:[%s185 + $0x104] sm:$0xf] %vm1259, %v1180
        %1326 = vst.msk [vmem:[%s185 + $0x108] sm:$0xf] %vm1259, %v1181
        %1327 = vst.msk [vmem:[%s185 + $0x10c] sm:$0xf] %vm1259, %v1182
        %1328 = vst.msk [vmem:[%s185 + $0x110] sm:$0xf] %vm1259, %v1183
        %1329 = vst.msk [vmem:[%s185 + $0x114] sm:$0xf] %vm1259, %v1184
        %1330 = vst.msk [vmem:[%s185 + $0x118] sm:$0xf] %vm1259, %v1185
        %1331 = vst.msk [vmem:[%s185 + $0x11c] sm:$0xf] %vm1259, %v1186
        %s1332 = smul.u32 72, %s15
        %p1333 = scmp.lt.s32.totalorder %s1332, 143
        %s1334 = scalar_select %p1333, %s1332, 143
        %s1335 = smul.addr %s1334, 4
        %s1336 = scalar_lea.vmem %s3, %s1335
        // Predicated region
        $region37: #{net_forward.9} parent=31 // pred_check
          %p1337 = pneg %p101
        $region38: #{net_forward.9} parent=31 // pred_check_branch
          %1339 = sbr.rel (%p1337) target = $region40
        $region39: #{net_forward.9} parent=31 // pred_region
          %s1340 = smul.u32 72, %s15
        $region40: #{net_forward.9} parent=31 // pred_fallthru
          _
      $region32: #{net_forward.9} parent=5 // pred_fallthru
        _
      %p1341 = scmp.le.s32.totalorder 2, %s10
      // Predicated region
      $region41: #{net_forward.9} parent=5 // pred_check
        %p1342 = pneg %p1341
      $region42: #{net_forward.9} parent=5 // pred_check_branch
        %1344 = sbr.rel (%p1342) target = $region44
      $region43: #{net_forward.9} parent=5 // pred_region
        %s1345 = ssub.s32 %s10, 2
        // Predicated region
        $region45: #{net_forward.9} parent=43 // pred_check
          %p1346 = pneg %p107
        $region46: #{net_forward.9} parent=43 // pred_check_branch
          %1348 = sbr.rel (%p1346) target = $region48
        $region47: #{net_forward.9} parent=43 // pred_region
          %s1349 = smul.u32 72, %s16
          %p1350 = scmp.lt.s32.totalorder %s1349, 143
          %s1351 = scalar_select %p1350, %s1349, 143
          %s1352 = smul.addr %s1351, 4
          %s1353 = scalar_lea.vmem %s3, %s1352
        $region48: #{net_forward.9} parent=43 // pred_fallthru
          _
      $region44: #{net_forward.9} parent=5 // pred_fallthru
        _
    $region6: #{net_forward.9} parent=1 // loop_footer
      %s14 = sadd.s32 1, %s10
    $region7: #{net_forward.9} parent=1 // loop_footer_branch
      %9 = sbr.rel target = $region3
    $region8: #{net_forward.9} parent=1 // loop_exit
      _
    %1354 = vsyncpa [#allocation3], 1
    %s1355 = scalar_lea.sflag [#allocation3], 1
    %1356 = vsyncpa %s1355, 1

// kernel: net_forward.10
$region0: #{net_forward.10}
  #allocation0 [shape = 'u32[]', space=smem, size = 0x4, offset = 0x4, fixed_abs, tag = 'smem constant byte address 0x4 - core index']
  #allocation1 [shape = 'u32[144,128]{1,0:T(1,128)}', space=vmem, size = 0x12000, scoped, tag = 'internal scratch']
  %s0 = inlined_call_operand.vmem [shape: bf16[288,90], index: 0, kind: input, shape index: {}]
  %s1 = inlined_call_operand.vmem [shape: bf16[90,72], index: 1, kind: input, shape index: {}]
  %s2 = inlined_call_operand.vmem [shape: f32[1,72], index: 2, kind: input, shape index: {}]
  %s3 = inlined_call_operand.vmem [shape: bf16[288,72], index: 3, kind: output, shape index: {}]
  %s4 = sld [smem:[#allocation0]]
  $region45: #{net_forward.10} parent=0
    _
  %s6 = ssub.s32 1, %s4
  %s7 = scalar_select 0, %s6, %s4
  loop: start=0, step=1, limit=4
  $region2: #{net_forward.10} parent=0 // loop_pre_header
    _
  $region3: #{net_forward.10} parent=0 // loop_header
    %s9 = sphi 0, %s13
    %p10 = scmp.ge.s32.totalorder %s9, 4
    %s19 = sphi 0, %s21
    %s22 = sphi 0, %s19
    %s23 = sphi 0, %s22
    %s39 = sphi 0, %s23
    %s43 = sphi 0, %s43
    %s45 = sphi 0, %s43
    %s46 = sphi 0, %s45
    %s60 = sphi 0, %s46
    %s64 = sphi 0, %s64
    %s66 = sphi 0, %s64
    %s67 = sphi 0, %s66
    %s81 = sphi 0, %s67
    %s87 = sphi 0, %s89
    %s90 = sphi 0, %s87
    %s91 = sphi 0, %s90
    %s107 = sphi 0, %s91
  $region4: #{net_forward.10} parent=0 // loop_header_branch
    %12 = sbr.rel (%p10) target = $region8
  $region5: #{net_forward.10} parent=0 // loop_body
    %s14 = ssub.s32 %s9, 1
    %s15 = ssub.s32 %s9, 2
    %s16 = sadd.s32 %s9, 1
    %s17 = ssub.s32 %s9, %s16
    %p18 = scmp.eq.s32.totalorder %s17, 0
    %s20 = sadd.s32 %s19, 1
    %s21 = scalar_select %p18, %s19, %s20
    %p24 = pneg %p18
    %p25 = scmp.eq.s32.totalorder %s9, 1
    %p26 = por %p24, %p25
    %p27 = scmp.ne.s32.totalorder %s19, %s22
    %p28 = scmp.eq.s32.totalorder %s9, 0
    %p29 = por %p27, %p28
    %p30 = scmp.ne.s32.totalorder %s19, %s22
    %p31 = scmp.eq.s32.totalorder %s14, 1
    %p32 = por %p30, %p31
    %p33 = scmp.ne.s32.totalorder %s22, %s23
    %p34 = scmp.eq.s32.totalorder %s14, 0
    %p35 = por %p33, %p34
    %p36 = scmp.ne.s32.totalorder %s22, %s23
    %p37 = scmp.eq.s32.totalorder %s15, 1
    %p38 = por %p36, %p37
    %p40 = scmp.ne.s32.totalorder %s23, %s39
    %p41 = scmp.eq.s32.totalorder %s15, 0
    %p42 = por %p40, %p41
    %s44 = sadd.s32 %s43, 1
    %p47 = scmp.eq.s32.totalorder %s9, 1
    %p48 = scmp.ne.s32.totalorder %s43, %s45
    %p49 = scmp.eq.s32.totalorder %s9, 0
    %p50 = por %p48, %p49
    %p51 = scmp.ne.s32.totalorder %s43, %s45
    %p52 = scmp.eq.s32.totalorder %s14, 1
    %p53 = por %p51, %p52
    %p54 = scmp.ne.s32.totalorder %s45, %s46
    %p55 = scmp.eq.s32.totalorder %s14, 0
    %p56 = por %p54, %p55
    %p57 = scmp.ne.s32.totalorder %s45, %s46
    %p58 = scmp.eq.s32.totalorder %s15, 1
    %p59 = por %p57, %p58
    %p61 = scmp.ne.s32.totalorder %s46, %s60
    %p62 = scmp.eq.s32.totalorder %s15, 0
    %p63 = por %p61, %p62
    %s65 = sadd.s32 %s64, 1
    %p68 = scmp.eq.s32.totalorder %s9, 1
    %p69 = scmp.ne.s32.totalorder %s64, %s66
    %p70 = scmp.eq.s32.totalorder %s9, 0
    %p71 = por %p69, %p70
    %p72 = scmp.ne.s32.totalorder %s64, %s66
    %p73 = scmp.eq.s32.totalorder %s14, 1
    %p74 = por %p72, %p73
    %p75 = scmp.ne.s32.totalorder %s66, %s67
    %p76 = scmp.eq.s32.totalorder %s14, 0
    %p77 = por %p75, %p76
    %p78 = scmp.ne.s32.totalorder %s66, %s67
    %p79 = scmp.eq.s32.totalorder %s15, 1
    %p80 = por %p78, %p79
    %p82 = scmp.ne.s32.totalorder %s67, %s81
    %p83 = scmp.eq.s32.totalorder %s15, 0
    %p84 = por %p82, %p83
    %s85 = ssub.s32 %s9, %s16
    %p86 = scmp.eq.s32.totalorder %s85, 0
    %s88 = sadd.s32 %s87, 1
    %s89 = scalar_select %p86, %s87, %s88
    %p92 = pneg %p86
    %p93 = scmp.eq.s32.totalorder %s9, 1
    %p94 = por %p92, %p93
    %p95 = scmp.ne.s32.totalorder %s87, %s90
    %p96 = scmp.eq.s32.totalorder %s9, 0
    %p97 = por %p95, %p96
    %p98 = scmp.ne.s32.totalorder %s87, %s90
    %p99 = scmp.eq.s32.totalorder %s14, 1
    %p100 = por %p98, %p99
    %p101 = scmp.ne.s32.totalorder %s90, %s91
    %p102 = scmp.eq.s32.totalorder %s14, 0
    %p103 = por %p101, %p102
    %p104 = scmp.ne.s32.totalorder %s90, %s91
    %p105 = scmp.eq.s32.totalorder %s15, 1
    %p106 = por %p104, %p105
    %p108 = scmp.ne.s32.totalorder %s91, %s107
    %p109 = scmp.eq.s32.totalorder %s15, 0
    %p110 = por %p108, %p109
    %p111 = scmp.le.s32.totalorder 1, %s9
    %p112 = scmp.lt.s32.totalorder %s9, 3
    %p113 = pnand %p111, %p112
    %p114 = pneg %p113
    // Predicated region
    $region9: #{net_forward.10} parent=5 // pred_check
      _
    $region10: #{net_forward.10} parent=5 // pred_check_branch
      %116 = sbr.rel (%p113) target = $region12
    $region11: #{net_forward.10} parent=5 // pred_region
      %s117 = ssub.s32 %s9, 1
      // Predicated region
      $region13: #{net_forward.10} parent=11 // pred_check
        %p118 = pneg %p56
      $region14: #{net_forward.10} parent=11 // pred_check_branch
        %120 = sbr.rel (%p118) target = $region16
      $region15: #{net_forward.10} parent=11 // pred_region
        _
      $region16: #{net_forward.10} parent=11 // pred_fallthru
        _
      // Predicated region
      $region17: #{net_forward.10} parent=11 // pred_check
        %p121 = pneg %p77
      $region18: #{net_forward.10} parent=11 // pred_check_branch
        %123 = sbr.rel (%p121) target = $region20
      $region19: #{net_forward.10} parent=11 // pred_region
        _
      $region20: #{net_forward.10} parent=11 // pred_fallthru
        _
    $region12: #{net_forward.10} parent=5 // pred_fallthru
      _
    %p124 = scmp.lt.s32.totalorder %s9, 2
    // Predicated region
    $region21: #{net_forward.10} parent=5 // pred_check
      %p125 = pneg %p124
    $region22: #{net_forward.10} parent=5 // pred_check_branch
      %127 = sbr.rel (%p125) target = $region24
    $region23: #{net_forward.10} parent=5 // pred_region
      // Predicated region
      $region25: #{net_forward.10} parent=23 // pred_check
        %p128 = pneg %p29
      $region26: #{net_forward.10} parent=23 // pred_check_branch
        %130 = sbr.rel (%p128) target = $region28
      $region27: #{net_forward.10} parent=23 // pred_region
        %s131 = smul.u32 18, %s9
        %p132 = scmp.lt.s32.totalorder %s131, 35
        %s133 = scalar_select %p132, %s131, 35
        %s134 = smul.addr %s133, 4
        %s135 = scalar_lea.vmem %s0, %s134
        %s136 = smul.u32 18, %s9
      $region28: #{net_forward.10} parent=23 // pred_fallthru
        _
    $region24: #{net_forward.10} parent=5 // pred_fallthru
      _
    %p137 = scmp.le.s32.totalorder 1, %s9
    %p138 = scmp.lt.s32.totalorder %s9, 3
    %p139 = pnand %p137, %p138
    %p140 = pneg %p139
    // Predicated region
    $region29: #{net_forward.10} parent=5 // pred_check
      _
    $region30: #{net_forward.10} parent=5 // pred_check_branch
      %142 = sbr.rel (%p139) target = $region32
    $region31: #{net_forward.10} parent=5 // pred_region
      %s143 = ssub.s32 %s9, 1
      %s144 = smul.u32 18, %s14
      %p145 = scmp.lt.s32.totalorder %s144, 35
      %s146 = scalar_select %p145, %s144, 35
      %s147 = smul.addr %s146, 4
      %s148 = scalar_lea.vmem %s0, %s147
      %p149 = pneg %p35
      %p150 = pneg %p32
      %p151 = pneg %p56
      %p152 = pneg %p53
      %p153 = pneg %p77
      %p154 = pneg %p74
      %p155 = pneg %p103
      %p156 = pneg %p100
      %s157 = smul.u32 18, %s14
      %p158 = scmp.lt.s32.totalorder %s157, 35
      %s159 = scalar_select %p158, %s157, 35
      %s160 = smul.addr %s159, 4
      %s161 = scalar_lea.vmem %s3, %s160
      %s162 = smul.u32 18, %s14
      %p163 = scmp.lt.s32.totalorder %s162, 35
      %s164 = scalar_select %p163, %s162, 35
      %s165 = smul.addr %s164, 4
      %s166 = scalar_lea.vmem %s0, %s165
      %s167 = smul.u32 18, %s14
      %s168 = smul.u32 18, %s14
      %p169 = scmp.lt.s32.totalorder %s168, 35
      %s170 = scalar_select %p169, %s168, 35
      %s171 = smul.addr %s170, 4
      %s172 = scalar_lea.vmem %s3, %s171
      %s173 = smul.u32 18, %s14
      %v175 = vld [vmem:[%s166] sm:$0xf]
      %v176 = vld [vmem:[%s166 + $0x4] sm:$0xf]
      %v177 = vld [vmem:[%s166 + $0x8] sm:$0xf]
      %v178 = vld [vmem:[%s166 + $0xc] sm:$0xf]
      %v179 = vld [vmem:[%s166 + $0x10] sm:$0xf]
      %v180 = vld [vmem:[%s166 + $0x14] sm:$0xf]
      %v181 = vld [vmem:[%s166 + $0x18] sm:$0xf]
      %v182 = vld [vmem:[%s166 + $0x1c] sm:$0xf]
      %v183 = vld [vmem:[%s166 + $0x20] sm:$0xf]
      %v184 = vld [vmem:[%s166 + $0x24] sm:$0xf]
      %v185 = vld [vmem:[%s166 + $0x28] sm:$0xf]
      %v186 = vld [vmem:[%s166 + $0x2c] sm:$0xf]
      %v187 = vld [vmem:[%s166 + $0x30] sm:$0xf]
      %v188 = vld [vmem:[%s166 + $0x34] sm:$0xf]
      %v189 = vld [vmem:[%s166 + $0x38] sm:$0xf]
      %v190 = vld [vmem:[%s166 + $0x3c] sm:$0xf]
      %v191 = vld [vmem:[%s166 + $0x40] sm:$0xf]
      %v192 = vld [vmem:[%s166 + $0x44] sm:$0xf]
      %v193 = vld [vmem:[%s1] sm:$0xf]
      %v194 = vld [vmem:[%s1 + $0x4] sm:$0xf]
      %v195 = vld [vmem:[%s1 + $0x8] sm:$0xf]
      %v196 = vld [vmem:[%s1 + $0xc] sm:$0xf]
      %v197 = vld [vmem:[%s1 + $0x10] sm:$0xf]
      %v198 = vld [vmem:[%s1 + $0x14] sm:$0xf]
      %v199 = vld [vmem:[%s1 + $0x18] sm:$0xf]
      %v200 = vld [vmem:[%s1 + $0x1c] sm:$0xf]
      %v201 = vld [vmem:[%s1 + $0x20] sm:$0xf]
      %v202 = vld [vmem:[%s1 + $0x24] sm:$0xf]
      %v203 = vld [vmem:[%s1 + $0x28] sm:$0xf]
      %v204 = vld [vmem:[%s1 + $0x2c] sm:$0x1]
      %v205 = vld [vmem:[%s2] sm:$0x1]
      %v207 = vlaneseq
      %v208 = vshrl.u32 %v207, 7
      %v209 = vsub.s32 0, %v208
      %v210 = vrot.slane %v205, %v209
      %v230 = vunpack.c.l.b16 %v175
      %v231 = vunpack.c.l.b16 %v176
      %v232 = vunpack.c.l.b16 %v177
      %v233 = vunpack.c.l.b16 %v178
      %v234 = vunpack.c.l.b16 %v179
      %v235 = vunpack.c.l.b16 %v180
      %v236 = vunpack.c.l.b16 %v181
      %v237 = vunpack.c.l.b16 %v182
      %v238 = vunpack.c.l.b16 %v183
      %v239 = vunpack.c.l.b16 %v184
      %v240 = vunpack.c.l.b16 %v185
      %v241 = vunpack.c.l.b16 %v186
      %v242 = vunpack.c.l.b16 %v187
      %v243 = vunpack.c.l.b16 %v188
      %v244 = vunpack.c.l.b16 %v189
      %v245 = vunpack.c.l.b16 %v190
      %v246 = vunpack.c.l.b16 %v191
      %v247 = vunpack.c.l.b16 %v192
      %v248 = vpack.c.b16 %v231, %v230
      %v249 = vpack.c.b16 %v233, %v232
      %v250 = vpack.c.b16 %v235, %v234
      %v251 = vpack.c.b16 %v237, %v236
      %v252 = vpack.c.b16 %v239, %v238
      %v253 = vpack.c.b16 %v241, %v240
      %v254 = vpack.c.b16 %v243, %v242
      %v255 = vpack.c.b16 %v245, %v244
      %v256 = vpack.c.b16 %v247, %v246
      %v269 = vunpack.c.l.b16 %v193
      %v270 = vunpack.c.l.b16 %v194
      %v271 = vunpack.c.l.b16 %v195
      %v272 = vunpack.c.l.b16 %v196
      %v273 = vunpack.c.l.b16 %v197
      %v274 = vunpack.c.l.b16 %v198
      %v275 = vunpack.c.l.b16 %v199
      %v276 = vunpack.c.l.b16 %v200
      %v277 = vunpack.c.l.b16 %v201
      %v278 = vunpack.c.l.b16 %v202
      %v279 = vunpack.c.l.b16 %v203
      %v280 = vunpack.c.l.b16 %v204
      %v281 = vpack.c.b16 %v270, %v269
      %v282 = vpack.c.b16 %v272, %v271
      %v283 = vpack.c.b16 %v274, %v273
      %v284 = vpack.c.b16 %v276, %v275
      %v285 = vpack.c.b16 %v278, %v277
      %v286 = vpack.c.b16 %v280, %v279
      %vm292 = vcmask 736256
      %v294 = vsel %vm292, %v248, 0
      %v297 = vsel %vm292, %v249, 0
      %v300 = vsel %vm292, %v250, 0
      %v303 = vsel %vm292, %v251, 0
      %v306 = vsel %vm292, %v252, 0
      %v309 = vsel %vm292, %v253, 0
      %v312 = vsel %vm292, %v254, 0
      %v315 = vsel %vm292, %v255, 0
      %v318 = vsel %vm292, %v256, 0
      %vm320 = vcmask 1044480
      %v322 = vsel %vm320, %v286, 0
      %324 = vmatprep.subr.bf16.mxu0 0
      %325 = vmatpush1.bf16.msra.mxu0 0
      %326 = vmatprep.subr.bf16.mxu0 0
      %327 = vmatpush1.bf16.msra.mxu0 0
      %328 = vmatprep.subr.bf16.mxu0 0
      %329 = vmatpush1.bf16.msra.mxu0 %v322
      %330 = vmatprep.subr.bf16.mxu0 0
      %331 = vmatpush1.bf16.msra.mxu0 %v285
      %332 = vmatprep.subr.bf16.mxu0 0
      %333 = vmatpush1.bf16.msra.mxu0 %v284
      %334 = vmatprep.subr.bf16.mxu0 0
      %335 = vmatpush1.bf16.msra.mxu0 %v283
      %336 = vmatprep.subr.bf16.mxu0 0
      %337 = vmatpush1.bf16.msra.mxu0 %v282
      %338 = vmatprep.subr.bf16.mxu0 0
      %339 = vmatpush1.bf16.msra.mxu0 %v281
      %340 = vmatprep.subr.bf16.mxu0 0
      %341 = vmatpush2.bf16.msra.mxu0 0
      %342 = vmatprep.subr.bf16.mxu0 0
      %343 = vmatpush2.bf16.msra.mxu0 0
      %344 = vmatprep.subr.bf16.mxu0 0
      %345 = vmatpush2.bf16.msra.mxu0 0
      %346 = vmatprep.subr.bf16.mxu0 0
      %347 = vmatpush2.bf16.msra.mxu0 0
      %348 = vmatprep.subr.bf16.mxu0 0
      %349 = vmatpush2.bf16.msra.mxu0 0
      %350 = vmatprep.subr.bf16.mxu0 0
      %351 = vmatpush2.bf16.msra.mxu0 0
      %352 = vmatprep.subr.bf16.mxu0 0
      %353 = vmatpush2.bf16.msra.mxu0 0
      %354 = vmatprep.subr.bf16.mxu0 0
      %355 = vmatpush2.bf16.msra.mxu0 0
      %356 = vmatprep.mubr.bf16.mxu0 0
      %357 = vmatmul.mubr.bf16.gmra.mxu0 %v294
      %v358 = vpop.f32.mrf.mxu0
      %v359 = vadd.f32 %v210, %v358
      %v360 = vpop.f32.mrf.mxu0
      %v361 = vpop.f32.mrf.mxu0
      %v362 = vadd.f32 %v210, %v361
      %v363 = vpop.f32.mrf.mxu0
      %364 = vmatprep.mubr.bf16.mxu0 0
      %365 = vmatmul.mubr.bf16.gmra.mxu0 %v297
      %v366 = vpop.f32.mrf.mxu0
      %v367 = vadd.f32 %v210, %v366
      %v368 = vpop.f32.mrf.mxu0
      %v369 = vpop.f32.mrf.mxu0
      %v370 = vadd.f32 %v210, %v369
      %v371 = vpop.f32.mrf.mxu0
      %372 = vmatprep.mubr.bf16.mxu0 0
      %373 = vmatmul.mubr.bf16.gmra.mxu0 %v300
      %v374 = vpop.f32.mrf.mxu0
      %v375 = vadd.f32 %v210, %v374
      %v376 = vpop.f32.mrf.mxu0
      %v377 = vpop.f32.mrf.mxu0
      %v378 = vadd.f32 %v210, %v377
      %v379 = vpop.f32.mrf.mxu0
      %380 = vmatprep.mubr.bf16.mxu0 0
      %381 = vmatmul.mubr.bf16.gmra.mxu0 %v303
      %v382 = vpop.f32.mrf.mxu0
      %v383 = vadd.f32 %v210, %v382
      %v384 = vpop.f32.mrf.mxu0
      %v385 = vpop.f32.mrf.mxu0
      %v386 = vadd.f32 %v210, %v385
      %v387 = vpop.f32.mrf.mxu0
      %388 = vmatprep.mubr.bf16.mxu0 0
      %389 = vmatmul.mubr.bf16.gmra.mxu0 %v306
      %v390 = vpop.f32.mrf.mxu0
      %v391 = vadd.f32 %v210, %v390
      %v392 = vpop.f32.mrf.mxu0
      %v393 = vpop.f32.mrf.mxu0
      %v394 = vadd.f32 %v210, %v393
      %v395 = vpop.f32.mrf.mxu0
      %396 = vmatprep.mubr.bf16.mxu0 0
      %397 = vmatmul.mubr.bf16.gmra.mxu0 %v309
      %v398 = vpop.f32.mrf.mxu0
      %v399 = vadd.f32 %v210, %v398
      %v400 = vpop.f32.mrf.mxu0
      %v401 = vpop.f32.mrf.mxu0
      %v402 = vadd.f32 %v210, %v401
      %v403 = vpop.f32.mrf.mxu0
      %404 = vmatprep.mubr.bf16.mxu0 0
      %405 = vmatmul.mubr.bf16.gmra.mxu0 %v312
      %v406 = vpop.f32.mrf.mxu0
      %v407 = vadd.f32 %v210, %v406
      %v408 = vpop.f32.mrf.mxu0
      %v409 = vpop.f32.mrf.mxu0
      %v410 = vadd.f32 %v210, %v409
      %v411 = vpop.f32.mrf.mxu0
      %412 = vmatprep.mubr.bf16.mxu0 0
      %413 = vmatmul.mubr.bf16.gmra.mxu0 %v315
      %v414 = vpop.f32.mrf.mxu0
      %v415 = vadd.f32 %v210, %v414
      %v416 = vpop.f32.mrf.mxu0
      %v417 = vpop.f32.mrf.mxu0
      %v418 = vadd.f32 %v210, %v417
      %v419 = vpop.f32.mrf.mxu0
      %420 = vmatprep.mubr.bf16.mxu0 0
      %421 = vmatmul.mubr.bf16.gmra.mxu0 %v318
      %v422 = vpop.f32.mrf.mxu0
      %v423 = vadd.f32 %v210, %v422
      %v424 = vpop.f32.mrf.mxu0
      %v425 = vpop.f32.mrf.mxu0
      %v426 = vadd.f32 %v210, %v425
      %v427 = vpop.f32.mrf.mxu0
      %428 = vdwg.mxu0
      %v429 = vpack.c.bf16 %v362, %v359
      %v430 = vpack.c.bf16 %v370, %v367
      %v431 = vpack.c.bf16 %v378, %v375
      %v432 = vpack.c.bf16 %v386, %v383
      %v433 = vpack.c.bf16 %v394, %v391
      %v434 = vpack.c.bf16 %v402, %v399
      %v435 = vpack.c.bf16 %v410, %v407
      %v436 = vpack.c.bf16 %v418, %v415
      %v437 = vpack.c.bf16 %v426, %v423
      %v447 = vunpack.c.l.b16 %v429
      %v448 = vunpack.c.h.b16 %v429
      %v449 = vunpack.c.l.b16 %v430
      %v450 = vunpack.c.h.b16 %v430
      %v451 = vunpack.c.l.b16 %v431
      %v452 = vunpack.c.h.b16 %v431
      %v453 = vunpack.c.l.b16 %v432
      %v454 = vunpack.c.h.b16 %v432
      %v455 = vunpack.c.l.b16 %v433
      %v456 = vunpack.c.h.b16 %v433
      %v457 = vunpack.c.l.b16 %v434
      %v458 = vunpack.c.h.b16 %v434
      %v459 = vunpack.c.l.b16 %v435
      %v460 = vunpack.c.h.b16 %v435
      %v461 = vunpack.c.l.b16 %v436
      %v462 = vunpack.c.h.b16 %v436
      %v463 = vunpack.c.l.b16 %v437
      %v464 = vunpack.c.h.b16 %v437
      %v465 = vpack.c.b16 %v447, %v447
      %v466 = vpack.c.b16 %v448, %v448
      %v467 = vpack.c.b16 %v449, %v449
      %v468 = vpack.c.b16 %v450, %v450
      %v469 = vpack.c.b16 %v451, %v451
      %v470 = vpack.c.b16 %v452, %v452
      %v471 = vpack.c.b16 %v453, %v453
      %v472 = vpack.c.b16 %v454, %v454
      %v473 = vpack.c.b16 %v455, %v455
      %v474 = vpack.c.b16 %v456, %v456
      %v475 = vpack.c.b16 %v457, %v457
      %v476 = vpack.c.b16 %v458, %v458
      %v477 = vpack.c.b16 %v459, %v459
      %v478 = vpack.c.b16 %v460, %v460
      %v479 = vpack.c.b16 %v461, %v461
      %v480 = vpack.c.b16 %v462, %v462
      %v481 = vpack.c.b16 %v463, %v463
      %v482 = vpack.c.b16 %v464, %v464
      %vm501 = vcmask 584704
      %502 = vst.msk [vmem:[%s172] sm:$0xf] %vm501, %v465
      %503 = vst.msk [vmem:[%s172 + $0x4] sm:$0xf] %vm501, %v466
      %504 = vst.msk [vmem:[%s172 + $0x8] sm:$0xf] %vm501, %v467
      %505 = vst.msk [vmem:[%s172 + $0xc] sm:$0xf] %vm501, %v468
      %506 = vst.msk [vmem:[%s172 + $0x10] sm:$0xf] %vm501, %v469
      %507 = vst.msk [vmem:[%s172 + $0x14] sm:$0xf] %vm501, %v470
      %508 = vst.msk [vmem:[%s172 + $0x18] sm:$0xf] %vm501, %v471
      %509 = vst.msk [vmem:[%s172 + $0x1c] sm:$0xf] %vm501, %v472
      %510 = vst.msk [vmem:[%s172 + $0x20] sm:$0xf] %vm501, %v473
      %511 = vst.msk [vmem:[%s172 + $0x24] sm:$0xf] %vm501, %v474
      %512 = vst.msk [vmem:[%s172 + $0x28] sm:$0xf] %vm501, %v475
      %513 = vst.msk [vmem:[%s172 + $0x2c] sm:$0xf] %vm501, %v476
      %514 = vst.msk [vmem:[%s172 + $0x30] sm:$0xf] %vm501, %v477
      %515 = vst.msk [vmem:[%s172 + $0x34] sm:$0xf] %vm501, %v478
      %516 = vst.msk [vmem:[%s172 + $0x38] sm:$0xf] %vm501, %v479
      %517 = vst.msk [vmem:[%s172 + $0x3c] sm:$0xf] %vm501, %v480
      %518 = vst.msk [vmem:[%s172 + $0x40] sm:$0xf] %vm501, %v481
      %519 = vst.msk [vmem:[%s172 + $0x44] sm:$0xf] %vm501, %v482
      %s520 = smul.u32 18, %s14
      %p521 = scmp.lt.s32.totalorder %s520, 35
      %s522 = scalar_select %p521, %s520, 35
      %s523 = smul.addr %s522, 4
      %s524 = scalar_lea.vmem %s3, %s523
      // Predicated region
      $region33: #{net_forward.10} parent=31 // pred_check
        %p525 = pneg %p100
      $region34: #{net_forward.10} parent=31 // pred_check_branch
        %527 = sbr.rel (%p525) target = $region36
      $region35: #{net_forward.10} parent=31 // pred_region
        %s528 = smul.u32 18, %s14
      $region36: #{net_forward.10} parent=31 // pred_fallthru
        _
    $region32: #{net_forward.10} parent=5 // pred_fallthru
      _
    %p529 = scmp.le.s32.totalorder 2, %s9
    // Predicated region
    $region37: #{net_forward.10} parent=5 // pred_check
      %p530 = pneg %p529
    $region38: #{net_forward.10} parent=5 // pred_check_branch
      %532 = sbr.rel (%p530) target = $region40
    $region39: #{net_forward.10} parent=5 // pred_region
      %s533 = ssub.s32 %s9, 2
      // Predicated region
      $region41: #{net_forward.10} parent=39 // pred_check
        %p534 = pneg %p106
      $region42: #{net_forward.10} parent=39 // pred_check_branch
        %536 = sbr.rel (%p534) target = $region44
      $region43: #{net_forward.10} parent=39 // pred_region
        %s537 = smul.u32 18, %s15
        %p538 = scmp.lt.s32.totalorder %s537, 35
        %s539 = scalar_select %p538, %s537, 35
        %s540 = smul.addr %s539, 4
        %s541 = scalar_lea.vmem %s3, %s540
      $region44: #{net_forward.10} parent=39 // pred_fallthru
        _
    $region40: #{net_forward.10} parent=5 // pred_fallthru
      _
  $region6: #{net_forward.10} parent=0 // loop_footer
    %s13 = sadd.s32 1, %s9
  $region7: #{net_forward.10} parent=0 // loop_footer_branch
    %8 = sbr.rel target = $region3
  $region8: #{net_forward.10} parent=0 // loop_exit
    _

// kernel: net_forward.11
$region0: #{net_forward.11}
  #allocation0 [shape = 'u32[]', space=smem, size = 0x4, offset = 0x4, fixed_abs, tag = 'smem constant byte address 0x4 - core index']
  #allocation1 [shape = 'u32[144,128]{1,0:T(1,128)}', space=vmem, size = 0x12000, scoped, tag = 'internal scratch']
  %s0 = inlined_call_operand.vmem [shape: bf16[288,544], index: 0, kind: input, shape index: {}]
  %s1 = inlined_call_operand.vmem [shape: bf16[544,48], index: 1, kind: input, shape index: {}]
  %s2 = inlined_call_operand.vmem [shape: f32[1,48], index: 2, kind: input, shape index: {}]
  %s3 = inlined_call_operand.vmem [shape: bf16[288,48], index: 3, kind: output, shape index: {}]
  %s4 = sld [smem:[#allocation0]]
  $region45: #{net_forward.11} parent=0
    _
  %s6 = ssub.s32 1, %s4
  %s7 = scalar_select 0, %s6, %s4
  loop: start=0, step=1, limit=4
  $region2: #{net_forward.11} parent=0 // loop_pre_header
    _
  $region3: #{net_forward.11} parent=0 // loop_header
    %s9 = sphi 0, %s13
    %p10 = scmp.ge.s32.totalorder %s9, 4
    %s19 = sphi 0, %s21
    %s22 = sphi 0, %s19
    %s23 = sphi 0, %s22
    %s39 = sphi 0, %s23
    %s43 = sphi 0, %s43
    %s45 = sphi 0, %s43
    %s46 = sphi 0, %s45
    %s60 = sphi 0, %s46
    %s64 = sphi 0, %s64
    %s66 = sphi 0, %s64
    %s67 = sphi 0, %s66
    %s81 = sphi 0, %s67
    %s87 = sphi 0, %s89
    %s90 = sphi 0, %s87
    %s91 = sphi 0, %s90
    %s107 = sphi 0, %s91
  $region4: #{net_forward.11} parent=0 // loop_header_branch
    %12 = sbr.rel (%p10) target = $region8
  $region5: #{net_forward.11} parent=0 // loop_body
    %s14 = ssub.s32 %s9, 1
    %s15 = ssub.s32 %s9, 2
    %s16 = sadd.s32 %s9, 1
    %s17 = ssub.s32 %s9, %s16
    %p18 = scmp.eq.s32.totalorder %s17, 0
    %s20 = sadd.s32 %s19, 1
    %s21 = scalar_select %p18, %s19, %s20
    %p24 = pneg %p18
    %p25 = scmp.eq.s32.totalorder %s9, 1
    %p26 = por %p24, %p25
    %p27 = scmp.ne.s32.totalorder %s19, %s22
    %p28 = scmp.eq.s32.totalorder %s9, 0
    %p29 = por %p27, %p28
    %p30 = scmp.ne.s32.totalorder %s19, %s22
    %p31 = scmp.eq.s32.totalorder %s14, 1
    %p32 = por %p30, %p31
    %p33 = scmp.ne.s32.totalorder %s22, %s23
    %p34 = scmp.eq.s32.totalorder %s14, 0
    %p35 = por %p33, %p34
    %p36 = scmp.ne.s32.totalorder %s22, %s23
    %p37 = scmp.eq.s32.totalorder %s15, 1
    %p38 = por %p36, %p37
    %p40 = scmp.ne.s32.totalorder %s23, %s39
    %p41 = scmp.eq.s32.totalorder %s15, 0
    %p42 = por %p40, %p41
    %s44 = sadd.s32 %s43, 1
    %p47 = scmp.eq.s32.totalorder %s9, 1
    %p48 = scmp.ne.s32.totalorder %s43, %s45
    %p49 = scmp.eq.s32.totalorder %s9, 0
    %p50 = por %p48, %p49
    %p51 = scmp.ne.s32.totalorder %s43, %s45
    %p52 = scmp.eq.s32.totalorder %s14, 1
    %p53 = por %p51, %p52
    %p54 = scmp.ne.s32.totalorder %s45, %s46
    %p55 = scmp.eq.s32.totalorder %s14, 0
    %p56 = por %p54, %p55
    %p57 = scmp.ne.s32.totalorder %s45, %s46
    %p58 = scmp.eq.s32.totalorder %s15, 1
    %p59 = por %p57, %p58
    %p61 = scmp.ne.s32.totalorder %s46, %s60
    %p62 = scmp.eq.s32.totalorder %s15, 0
    %p63 = por %p61, %p62
    %s65 = sadd.s32 %s64, 1
    %p68 = scmp.eq.s32.totalorder %s9, 1
    %p69 = scmp.ne.s32.totalorder %s64, %s66
    %p70 = scmp.eq.s32.totalorder %s9, 0
    %p71 = por %p69, %p70
    %p72 = scmp.ne.s32.totalorder %s64, %s66
    %p73 = scmp.eq.s32.totalorder %s14, 1
    %p74 = por %p72, %p73
    %p75 = scmp.ne.s32.totalorder %s66, %s67
    %p76 = scmp.eq.s32.totalorder %s14, 0
    %p77 = por %p75, %p76
    %p78 = scmp.ne.s32.totalorder %s66, %s67
    %p79 = scmp.eq.s32.totalorder %s15, 1
    %p80 = por %p78, %p79
    %p82 = scmp.ne.s32.totalorder %s67, %s81
    %p83 = scmp.eq.s32.totalorder %s15, 0
    %p84 = por %p82, %p83
    %s85 = ssub.s32 %s9, %s16
    %p86 = scmp.eq.s32.totalorder %s85, 0
    %s88 = sadd.s32 %s87, 1
    %s89 = scalar_select %p86, %s87, %s88
    %p92 = pneg %p86
    %p93 = scmp.eq.s32.totalorder %s9, 1
    %p94 = por %p92, %p93
    %p95 = scmp.ne.s32.totalorder %s87, %s90
    %p96 = scmp.eq.s32.totalorder %s9, 0
    %p97 = por %p95, %p96
    %p98 = scmp.ne.s32.totalorder %s87, %s90
    %p99 = scmp.eq.s32.totalorder %s14, 1
    %p100 = por %p98, %p99
    %p101 = scmp.ne.s32.totalorder %s90, %s91
    %p102 = scmp.eq.s32.totalorder %s14, 0
    %p103 = por %p101, %p102
    %p104 = scmp.ne.s32.totalorder %s90, %s91
    %p105 = scmp.eq.s32.totalorder %s15, 1
    %p106 = por %p104, %p105
    %p108 = scmp.ne.s32.totalorder %s91, %s107
    %p109 = scmp.eq.s32.totalorder %s15, 0
    %p110 = por %p108, %p109
    %p111 = scmp.le.s32.totalorder 1, %s9
    %p112 = scmp.lt.s32.totalorder %s9, 3
    %p113 = pnand %p111, %p112
    %p114 = pneg %p113
    // Predicated region
    $region9: #{net_forward.11} parent=5 // pred_check
      _
    $region10: #{net_forward.11} parent=5 // pred_check_branch
      %116 = sbr.rel (%p113) target = $region12
    $region11: #{net_forward.11} parent=5 // pred_region
      %s117 = ssub.s32 %s9, 1
      // Predicated region
      $region13: #{net_forward.11} parent=11 // pred_check
        %p118 = pneg %p56
      $region14: #{net_forward.11} parent=11 // pred_check_branch
        %120 = sbr.rel (%p118) target = $region16
      $region15: #{net_forward.11} parent=11 // pred_region
        _
      $region16: #{net_forward.11} parent=11 // pred_fallthru
        _
      // Predicated region
      $region17: #{net_forward.11} parent=11 // pred_check
        %p121 = pneg %p77
      $region18: #{net_forward.11} parent=11 // pred_check_branch
        %123 = sbr.rel (%p121) target = $region20
      $region19: #{net_forward.11} parent=11 // pred_region
        _
      $region20: #{net_forward.11} parent=11 // pred_fallthru
        _
    $region12: #{net_forward.11} parent=5 // pred_fallthru
      _
    %p124 = scmp.lt.s32.totalorder %s9, 2
    // Predicated region
    $region21: #{net_forward.11} parent=5 // pred_check
      %p125 = pneg %p124
    $region22: #{net_forward.11} parent=5 // pred_check_branch
      %127 = sbr.rel (%p125) target = $region24
    $region23: #{net_forward.11} parent=5 // pred_region
      // Predicated region
      $region25: #{net_forward.11} parent=23 // pred_check
        %p128 = pneg %p29
      $region26: #{net_forward.11} parent=23 // pred_check_branch
        %130 = sbr.rel (%p128) target = $region28
      $region27: #{net_forward.11} parent=23 // pred_region
        %s131 = smul.u32 18, %s9
        %p132 = scmp.lt.s32.totalorder %s131, 35
        %s133 = scalar_select %p132, %s131, 35
        %s134 = smul.addr %s133, 5
        %s135 = smul.addr %s134, 4
        %s136 = scalar_lea.vmem %s0, %s135
        %s137 = smul.u32 18, %s9
      $region28: #{net_forward.11} parent=23 // pred_fallthru
        _
    $region24: #{net_forward.11} parent=5 // pred_fallthru
      _
    %p138 = scmp.le.s32.totalorder 1, %s9
    %p139 = scmp.lt.s32.totalorder %s9, 3
    %p140 = pnand %p138, %p139
    %p141 = pneg %p140
    // Predicated region
    $region29: #{net_forward.11} parent=5 // pred_check
      _
    $region30: #{net_forward.11} parent=5 // pred_check_branch
      %143 = sbr.rel (%p140) target = $region32
    $region31: #{net_forward.11} parent=5 // pred_region
      %s144 = ssub.s32 %s9, 1
      %s145 = smul.u32 18, %s14
      %p146 = scmp.lt.s32.totalorder %s145, 35
      %s147 = scalar_select %p146, %s145, 35
      %s148 = smul.addr %s147, 5
      %s149 = smul.addr %s148, 4
      %s150 = scalar_lea.vmem %s0, %s149
      %p151 = pneg %p35
      %p152 = pneg %p32
      %p153 = pneg %p56
      %p154 = pneg %p53
      %p155 = pneg %p77
      %p156 = pneg %p74
      %p157 = pneg %p103
      %p158 = pneg %p100
      %s159 = smul.u32 18, %s14
      %p160 = scmp.lt.s32.totalorder %s159, 35
      %s161 = scalar_select %p160, %s159, 35
      %s162 = smul.addr %s161, 4
      %s163 = scalar_lea.vmem %s3, %s162
      %s164 = smul.u32 18, %s14
      %p165 = scmp.lt.s32.totalorder %s164, 35
      %s166 = scalar_select %p165, %s164, 35
      %s167 = smul.addr %s166, 5
      %s168 = smul.addr %s167, 4
      %s169 = scalar_lea.vmem %s0, %s168
      %s170 = smul.u32 18, %s14
      %s171 = smul.u32 18, %s14
      %p172 = scmp.lt.s32.totalorder %s171, 35
      %s173 = scalar_select %p172, %s171, 35
      %s174 = smul.addr %s173, 4
      %s175 = scalar_lea.vmem %s3, %s174
      %s176 = smul.u32 18, %s14
      %v178 = vld [vmem:[%s169] sm:$0xff]
      %v179 = vld [vmem:[%s169 + $0x8] sm:$0xff]
      %v180 = vld [vmem:[%s169 + $0x10] sm:$0xf]
      %v181 = vld [vmem:[%s169 + $0x14] sm:$0xff]
      %v182 = vld [vmem:[%s169 + $0x1c] sm:$0xff]
      %v183 = vld [vmem:[%s169 + $0x24] sm:$0xf]
      %v184 = vld [vmem:[%s169 + $0x28] sm:$0xff]
      %v185 = vld [vmem:[%s169 + $0x30] sm:$0xff]
      %v186 = vld [vmem:[%s169 + $0x38] sm:$0xf]
      %v187 = vld [vmem:[%s169 + $0x3c] sm:$0xff]
      %v188 = vld [vmem:[%s169 + $0x44] sm:$0xff]
      %v189 = vld [vmem:[%s169 + $0x4c] sm:$0xf]
      %v190 = vld [vmem:[%s169 + $0x50] sm:$0xff]
      %v191 = vld [vmem:[%s169 + $0x58] sm:$0xff]
      %v192 = vld [vmem:[%s169 + $0x60] sm:$0xf]
      %v193 = vld [vmem:[%s169 + $0x64] sm:$0xff]
      %v194 = vld [vmem:[%s169 + $0x6c] sm:$0xff]
      %v195 = vld [vmem:[%s169 + $0x74] sm:$0xf]
      %v196 = vld [vmem:[%s169 + $0x78] sm:$0xff]
      %v197 = vld [vmem:[%s169 + $0x80] sm:$0xff]
      %v198 = vld [vmem:[%s169 + $0x88] sm:$0xf]
      %v199 = vld [vmem:[%s169 + $0x8c] sm:$0xff]
      %v200 = vld [vmem:[%s169 + $0x94] sm:$0xff]
      %v201 = vld [vmem:[%s169 + $0x9c] sm:$0xf]
      %v202 = vld [vmem:[%s169 + $0xa0] sm:$0xff]
      %v203 = vld [vmem:[%s169 + $0xa8] sm:$0xff]
      %v204 = vld [vmem:[%s169 + $0xb0] sm:$0xf]
      %v205 = vld [vmem:[%s169 + $0xb4] sm:$0xff]
      %v206 = vld [vmem:[%s169 + $0xbc] sm:$0xff]
      %v207 = vld [vmem:[%s169 + $0xc4] sm:$0xf]
      %v208 = vld [vmem:[%s169 + $0xc8] sm:$0xff]
      %v209 = vld [vmem:[%s169 + $0xd0] sm:$0xff]
      %v210 = vld [vmem:[%s169 + $0xd8] sm:$0xf]
      %v211 = vld [vmem:[%s169 + $0xdc] sm:$0xff]
      %v212 = vld [vmem:[%s169 + $0xe4] sm:$0xff]
      %v213 = vld [vmem:[%s169 + $0xec] sm:$0xf]
      %v214 = vld [vmem:[%s169 + $0xf0] sm:$0xff]
      %v215 = vld [vmem:[%s169 + $0xf8] sm:$0xff]
      %v216 = vld [vmem:[%s169 + $0x100] sm:$0xf]
      %v217 = vld [vmem:[%s169 + $0x104] sm:$0xff]
      %v218 = vld [vmem:[%s169 + $0x10c] sm:$0xff]
      %v219 = vld [vmem:[%s169 + $0x114] sm:$0xf]
      %v220 = vld [vmem:[%s169 + $0x118] sm:$0xff]
      %v221 = vld [vmem:[%s169 + $0x120] sm:$0xff]
      %v222 = vld [vmem:[%s169 + $0x128] sm:$0xf]
      %v223 = vld [vmem:[%s169 + $0x12c] sm:$0xff]
      %v224 = vld [vmem:[%s169 + $0x134] sm:$0xff]
      %v225 = vld [vmem:[%s169 + $0x13c] sm:$0xf]
      %v226 = vld [vmem:[%s169 + $0x140] sm:$0xff]
      %v227 = vld [vmem:[%s169 + $0x148] sm:$0xff]
      %v228 = vld [vmem:[%s169 + $0x150] sm:$0xf]
      %v229 = vld [vmem:[%s169 + $0x154] sm:$0xff]
      %v230 = vld [vmem:[%s169 + $0x15c] sm:$0xff]
      %v231 = vld [vmem:[%s169 + $0x164] sm:$0xf]
      %v232 = vld [vmem:[%s1] sm:$0xf]
      %v233 = vld [vmem:[%s1 + $0x4] sm:$0xf]
      %v234 = vld [vmem:[%s1 + $0x8] sm:$0xf]
      %v235 = vld [vmem:[%s1 + $0xc] sm:$0xf]
      %v236 = vld [vmem:[%s1 + $0x10] sm:$0xf]
      %v237 = vld [vmem:[%s1 + $0x14] sm:$0xf]
      %v238 = vld [vmem:[%s1 + $0x18] sm:$0xf]
      %v239 = vld [vmem:[%s1 + $0x1c] sm:$0xf]
      %v240 = vld [vmem:[%s1 + $0x20] sm:$0xf]
      %v241 = vld [vmem:[%s1 + $0x24] sm:$0xf]
      %v242 = vld [vmem:[%s1 + $0x28] sm:$0xf]
      %v243 = vld [vmem:[%s1 + $0x2c] sm:$0xf]
      %v244 = vld [vmem:[%s1 + $0x30] sm:$0xf]
      %v245 = vld [vmem:[%s1 + $0x34] sm:$0xf]
      %v246 = vld [vmem:[%s1 + $0x38] sm:$0xf]
      %v247 = vld [vmem:[%s1 + $0x3c] sm:$0xf]
      %v248 = vld [vmem:[%s1 + $0x40] sm:$0xf]
      %v249 = vld [vmem:[%s1 + $0x44] sm:$0xf]
      %v250 = vld [vmem:[%s1 + $0x48] sm:$0xf]
      %v251 = vld [vmem:[%s1 + $0x4c] sm:$0xf]
      %v252 = vld [vmem:[%s1 + $0x50] sm:$0xf]
      %v253 = vld [vmem:[%s1 + $0x54] sm:$0xf]
      %v254 = vld [vmem:[%s1 + $0x58] sm:$0xf]
      %v255 = vld [vmem:[%s1 + $0x5c] sm:$0xf]
      %v256 = vld [vmem:[%s1 + $0x60] sm:$0xf]
      %v257 = vld [vmem:[%s1 + $0x64] sm:$0xf]
      %v258 = vld [vmem:[%s1 + $0x68] sm:$0xf]
      %v259 = vld [vmem:[%s1 + $0x6c] sm:$0xf]
      %v260 = vld [vmem:[%s1 + $0x70] sm:$0xf]
      %v261 = vld [vmem:[%s1 + $0x74] sm:$0xf]
      %v262 = vld [vmem:[%s1 + $0x78] sm:$0xf]
      %v263 = vld [vmem:[%s1 + $0x7c] sm:$0xf]
      %v264 = vld [vmem:[%s1 + $0x80] sm:$0xf]
      %v265 = vld [vmem:[%s1 + $0x84] sm:$0xf]
      %v266 = vld [vmem:[%s1 + $0x88] sm:$0xf]
      %v267 = vld [vmem:[%s1 + $0x8c] sm:$0xf]
      %v268 = vld [vmem:[%s1 + $0x90] sm:$0xf]
      %v269 = vld [vmem:[%s1 + $0x94] sm:$0xf]
      %v270 = vld [vmem:[%s1 + $0x98] sm:$0xf]
      %v271 = vld [vmem:[%s1 + $0x9c] sm:$0xf]
      %v272 = vld [vmem:[%s1 + $0xa0] sm:$0xf]
      %v273 = vld [vmem:[%s1 + $0xa4] sm:$0xf]
      %v274 = vld [vmem:[%s1 + $0xa8] sm:$0xf]
      %v275 = vld [vmem:[%s1 + $0xac] sm:$0xf]
      %v276 = vld [vmem:[%s1 + $0xb0] sm:$0xf]
      %v277 = vld [vmem:[%s1 + $0xb4] sm:$0xf]
      %v278 = vld [vmem:[%s1 + $0xb8] sm:$0xf]
      %v279 = vld [vmem:[%s1 + $0xbc] sm:$0xf]
      %v280 = vld [vmem:[%s1 + $0xc0] sm:$0xf]
      %v281 = vld [vmem:[%s1 + $0xc4] sm:$0xf]
      %v282 = vld [vmem:[%s1 + $0xc8] sm:$0xf]
      %v283 = vld [vmem:[%s1 + $0xcc] sm:$0xf]
      %v284 = vld [vmem:[%s1 + $0xd0] sm:$0xf]
      %v285 = vld [vmem:[%s1 + $0xd4] sm:$0xf]
      %v286 = vld [vmem:[%s1 + $0xd8] sm:$0xf]
      %v287 = vld [vmem:[%s1 + $0xdc] sm:$0xf]
      %v288 = vld [vmem:[%s1 + $0xe0] sm:$0xf]
      %v289 = vld [vmem:[%s1 + $0xe4] sm:$0xf]
      %v290 = vld [vmem:[%s1 + $0xe8] sm:$0xf]
      %v291 = vld [vmem:[%s1 + $0xec] sm:$0xf]
      %v292 = vld [vmem:[%s1 + $0xf0] sm:$0xf]
      %v293 = vld [vmem:[%s1 + $0xf4] sm:$0xf]
      %v294 = vld [vmem:[%s1 + $0xf8] sm:$0xf]
      %v295 = vld [vmem:[%s1 + $0xfc] sm:$0xf]
      %v296 = vld [vmem:[%s1 + $0x100] sm:$0xf]
      %v297 = vld [vmem:[%s1 + $0x104] sm:$0xf]
      %v298 = vld [vmem:[%s1 + $0x108] sm:$0xf]
      %v299 = vld [vmem:[%s1 + $0x10c] sm:$0xf]
      %v300 = vld [vmem:[%s2] sm:$0x1]
      %v302 = vlaneseq
      %v303 = vshrl.u32 %v302, 7
      %v304 = vsub.s32 0, %v303
      %v305 = vrot.slane %v300, %v304
      %v361 = vunpack.c.l.b16 %v178
      %v362 = vunpack.c.h.b16 %v178
      %v363 = vunpack.c.l.b16 %v179
      %v364 = vunpack.c.h.b16 %v179
      %v365 = vunpack.c.l.b16 %v180
      %v366 = vunpack.c.l.b16 %v181
      %v367 = vunpack.c.h.b16 %v181
      %v368 = vunpack.c.l.b16 %v182
      %v369 = vunpack.c.h.b16 %v182
      %v370 = vunpack.c.l.b16 %v183
      %v371 = vunpack.c.l.b16 %v184
      %v372 = vunpack.c.h.b16 %v184
      %v373 = vunpack.c.l.b16 %v185
      %v374 = vunpack.c.h.b16 %v185
      %v375 = vunpack.c.l.b16 %v186
      %v376 = vunpack.c.l.b16 %v187
      %v377 = vunpack.c.h.b16 %v187
      %v378 = vunpack.c.l.b16 %v188
      %v379 = vunpack.c.h.b16 %v188
      %v380 = vunpack.c.l.b16 %v189
      %v381 = vunpack.c.l.b16 %v190
      %v382 = vunpack.c.h.b16 %v190
      %v383 = vunpack.c.l.b16 %v191
      %v384 = vunpack.c.h.b16 %v191
      %v385 = vunpack.c.l.b16 %v192
      %v386 = vunpack.c.l.b16 %v193
      %v387 = vunpack.c.h.b16 %v193
      %v388 = vunpack.c.l.b16 %v194
      %v389 = vunpack.c.h.b16 %v194
      %v390 = vunpack.c.l.b16 %v195
      %v391 = vunpack.c.l.b16 %v196
      %v392 = vunpack.c.h.b16 %v196
      %v393 = vunpack.c.l.b16 %v197
      %v394 = vunpack.c.h.b16 %v197
      %v395 = vunpack.c.l.b16 %v198
      %v396 = vunpack.c.l.b16 %v199
      %v397 = vunpack.c.h.b16 %v199
      %v398 = vunpack.c.l.b16 %v200
      %v399 = vunpack.c.h.b16 %v200
      %v400 = vunpack.c.l.b16 %v201
      %v401 = vunpack.c.l.b16 %v202
      %v402 = vunpack.c.h.b16 %v202
      %v403 = vunpack.c.l.b16 %v203
      %v404 = vunpack.c.h.b16 %v203
      %v405 = vunpack.c.l.b16 %v204
      %v406 = vunpack.c.l.b16 %v205
      %v407 = vunpack.c.h.b16 %v205
      %v408 = vunpack.c.l.b16 %v206
      %v409 = vunpack.c.h.b16 %v206
      %v410 = vunpack.c.l.b16 %v207
      %v411 = vunpack.c.l.b16 %v208
      %v412 = vunpack.c.h.b16 %v208
      %v413 = vunpack.c.l.b16 %v209
      %v414 = vunpack.c.h.b16 %v209
      %v415 = vunpack.c.l.b16 %v210
      %v416 = vunpack.c.l.b16 %v211
      %v417 = vunpack.c.h.b16 %v211
      %v418 = vunpack.c.l.b16 %v212
      %v419 = vunpack.c.h.b16 %v212
      %v420 = vunpack.c.l.b16 %v213
      %v421 = vunpack.c.l.b16 %v214
      %v422 = vunpack.c.h.b16 %v214
      %v423 = vunpack.c.l.b16 %v215
      %v424 = vunpack.c.h.b16 %v215
      %v425 = vunpack.c.l.b16 %v216
      %v426 = vunpack.c.l.b16 %v217
      %v427 = vunpack.c.h.b16 %v217
      %v428 = vunpack.c.l.b16 %v218
      %v429 = vunpack.c.h.b16 %v218
      %v430 = vunpack.c.l.b16 %v219
      %v431 = vunpack.c.l.b16 %v220
      %v432 = vunpack.c.h.b16 %v220
      %v433 = vunpack.c.l.b16 %v221
      %v434 = vunpack.c.h.b16 %v221
      %v435 = vunpack.c.l.b16 %v222
      %v436 = vunpack.c.l.b16 %v223
      %v437 = vunpack.c.h.b16 %v223
      %v438 = vunpack.c.l.b16 %v224
      %v439 = vunpack.c.h.b16 %v224
      %v440 = vunpack.c.l.b16 %v225
      %v441 = vunpack.c.l.b16 %v226
      %v442 = vunpack.c.h.b16 %v226
      %v443 = vunpack.c.l.b16 %v227
      %v444 = vunpack.c.h.b16 %v227
      %v445 = vunpack.c.l.b16 %v228
      %v446 = vunpack.c.l.b16 %v229
      %v447 = vunpack.c.h.b16 %v229
      %v448 = vunpack.c.l.b16 %v230
      %v449 = vunpack.c.h.b16 %v230
      %v450 = vunpack.c.l.b16 %v231
      %v451 = vpack.c.b16 %v366, %v361
      %v452 = vpack.c.b16 %v367, %v362
      %v453 = vpack.c.b16 %v368, %v363
      %v454 = vpack.c.b16 %v369, %v364
      %v455 = vpack.c.b16 %v370, %v365
      %v456 = vpack.c.b16 %v376, %v371
      %v457 = vpack.c.b16 %v377, %v372
      %v458 = vpack.c.b16 %v378, %v373
      %v459 = vpack.c.b16 %v379, %v374
      %v460 = vpack.c.b16 %v380, %v375
      %v461 = vpack.c.b16 %v386, %v381
      %v462 = vpack.c.b16 %v387, %v382
      %v463 = vpack.c.b16 %v388, %v383
      %v464 = vpack.c.b16 %v389, %v384
      %v465 = vpack.c.b16 %v390, %v385
      %v466 = vpack.c.b16 %v396, %v391
      %v467 = vpack.c.b16 %v397, %v392
      %v468 = vpack.c.b16 %v398, %v393
      %v469 = vpack.c.b16 %v399, %v394
      %v470 = vpack.c.b16 %v400, %v395
      %v471 = vpack.c.b16 %v406, %v401
      %v472 = vpack.c.b16 %v407, %v402
      %v473 = vpack.c.b16 %v408, %v403
      %v474 = vpack.c.b16 %v409, %v404
      %v475 = vpack.c.b16 %v410, %v405
      %v476 = vpack.c.b16 %v416, %v411
      %v477 = vpack.c.b16 %v417, %v412
      %v478 = vpack.c.b16 %v418, %v413
      %v479 = vpack.c.b16 %v419, %v414
      %v480 = vpack.c.b16 %v420, %v415
      %v481 = vpack.c.b16 %v426, %v421
      %v482 = vpack.c.b16 %v427, %v422
      %v483 = vpack.c.b16 %v428, %v423
      %v484 = vpack.c.b16 %v429, %v424
      %v485 = vpack.c.b16 %v430, %v425
      %v486 = vpack.c.b16 %v436, %v431
      %v487 = vpack.c.b16 %v437, %v432
      %v488 = vpack.c.b16 %v438, %v433
      %v489 = vpack.c.b16 %v439, %v434
      %v490 = vpack.c.b16 %v440, %v435
      %v491 = vpack.c.b16 %v446, %v441
      %v492 = vpack.c.b16 %v447, %v442
      %v493 = vpack.c.b16 %v448, %v443
      %v494 = vpack.c.b16 %v449, %v444
      %v495 = vpack.c.b16 %v450, %v445
      %v600 = vunpack.c.l.b16 %v232
      %v601 = vunpack.c.l.b16 %v233
      %v602 = vunpack.c.l.b16 %v234
      %v603 = vunpack.c.l.b16 %v235
      %v604 = vunpack.c.l.b16 %v236
      %v605 = vunpack.c.l.b16 %v237
      %v606 = vunpack.c.l.b16 %v238
      %v607 = vunpack.c.l.b16 %v239
      %v608 = vunpack.c.l.b16 %v240
      %v609 = vunpack.c.l.b16 %v241
      %v610 = vunpack.c.l.b16 %v242
      %v611 = vunpack.c.l.b16 %v243
      %v612 = vunpack.c.l.b16 %v244
      %v613 = vunpack.c.l.b16 %v245
      %v614 = vunpack.c.l.b16 %v246
      %v615 = vunpack.c.l.b16 %v247
      %v616 = vunpack.c.l.b16 %v248
      %v617 = vunpack.c.l.b16 %v249
      %v618 = vunpack.c.l.b16 %v250
      %v619 = vunpack.c.l.b16 %v251
      %v620 = vunpack.c.l.b16 %v252
      %v621 = vunpack.c.l.b16 %v253
      %v622 = vunpack.c.l.b16 %v254
      %v623 = vunpack.c.l.b16 %v255
      %v624 = vunpack.c.l.b16 %v256
      %v625 = vunpack.c.l.b16 %v257
      %v626 = vunpack.c.l.b16 %v258
      %v627 = vunpack.c.l.b16 %v259
      %v628 = vunpack.c.l.b16 %v260
      %v629 = vunpack.c.l.b16 %v261
      %v630 = vunpack.c.l.b16 %v262
      %v631 = vunpack.c.l.b16 %v263
      %v632 = vunpack.c.l.b16 %v264
      %v633 = vunpack.c.l.b16 %v265
      %v634 = vunpack.c.l.b16 %v266
      %v635 = vunpack.c.l.b16 %v267
      %v636 = vunpack.c.l.b16 %v268
      %v637 = vunpack.c.l.b16 %v269
      %v638 = vunpack.c.l.b16 %v270
      %v639 = vunpack.c.l.b16 %v271
      %v640 = vunpack.c.l.b16 %v272
      %v641 = vunpack.c.l.b16 %v273
      %v642 = vunpack.c.l.b16 %v274
      %v643 = vunpack.c.l.b16 %v275
      %v644 = vunpack.c.l.b16 %v276
      %v645 = vunpack.c.l.b16 %v277
      %v646 = vunpack.c.l.b16 %v278
      %v647 = vunpack.c.l.b16 %v279
      %v648 = vunpack.c.l.b16 %v280
      %v649 = vunpack.c.l.b16 %v281
      %v650 = vunpack.c.l.b16 %v282
      %v651 = vunpack.c.l.b16 %v283
      %v652 = vunpack.c.l.b16 %v284
      %v653 = vunpack.c.l.b16 %v285
      %v654 = vunpack.c.l.b16 %v286
      %v655 = vunpack.c.l.b16 %v287
      %v656 = vunpack.c.l.b16 %v288
      %v657 = vunpack.c.l.b16 %v289
      %v658 = vunpack.c.l.b16 %v290
      %v659 = vunpack.c.l.b16 %v291
      %v660 = vunpack.c.l.b16 %v292
      %v661 = vunpack.c.l.b16 %v293
      %v662 = vunpack.c.l.b16 %v294
      %v663 = vunpack.c.l.b16 %v295
      %v664 = vunpack.c.l.b16 %v296
      %v665 = vunpack.c.l.b16 %v297
      %v666 = vunpack.c.l.b16 %v298
      %v667 = vunpack.c.l.b16 %v299
      %v668 = vpack.c.b16 %v601, %v600
      %v669 = vpack.c.b16 %v603, %v602
      %v670 = vpack.c.b16 %v605, %v604
      %v671 = vpack.c.b16 %v607, %v606
      %v672 = vpack.c.b16 %v609, %v608
      %v673 = vpack.c.b16 %v611, %v610
      %v674 = vpack.c.b16 %v613, %v612
      %v675 = vpack.c.b16 %v615, %v614
      %v676 = vpack.c.b16 %v617, %v616
      %v677 = vpack.c.b16 %v619, %v618
      %v678 = vpack.c.b16 %v621, %v620
      %v679 = vpack.c.b16 %v623, %v622
      %v680 = vpack.c.b16 %v625, %v624
      %v681 = vpack.c.b16 %v627, %v626
      %v682 = vpack.c.b16 %v629, %v628
      %v683 = vpack.c.b16 %v631, %v630
      %v684 = vpack.c.b16 %v633, %v632
      %v685 = vpack.c.b16 %v635, %v634
      %v686 = vpack.c.b16 %v637, %v636
      %v687 = vpack.c.b16 %v639, %v638
      %v688 = vpack.c.b16 %v641, %v640
      %v689 = vpack.c.b16 %v643, %v642
      %v690 = vpack.c.b16 %v645, %v644
      %v691 = vpack.c.b16 %v647, %v646
      %v692 = vpack.c.b16 %v649, %v648
      %v693 = vpack.c.b16 %v651, %v650
      %v694 = vpack.c.b16 %v653, %v652
      %v695 = vpack.c.b16 %v655, %v654
      %v696 = vpack.c.b16 %v657, %v656
      %v697 = vpack.c.b16 %v659, %v658
      %v698 = vpack.c.b16 %v661, %v660
      %v699 = vpack.c.b16 %v663, %v662
      %v700 = vpack.c.b16 %v665, %v664
      %v701 = vpack.c.b16 %v667, %v666
      %vm736 = vcmask 261120
      %v738 = vsel %vm736, %v455, 0
      %v741 = vsel %vm736, %v460, 0
      %v744 = vsel %vm736, %v465, 0
      %v747 = vsel %vm736, %v470, 0
      %v750 = vsel %vm736, %v475, 0
      %v753 = vsel %vm736, %v480, 0
      %v756 = vsel %vm736, %v485, 0
      %v759 = vsel %vm736, %v490, 0
      %v762 = vsel %vm736, %v495, 0
      %764 = vmatprep.subr.bf16.mxu0 0
      %765 = vmatpush1.bf16.msra.mxu0 %v675
      %766 = vmatprep.subr.bf16.mxu0 0
      %767 = vmatpush1.bf16.msra.mxu0 %v674
      %768 = vmatprep.subr.bf16.mxu0 0
      %769 = vmatpush1.bf16.msra.mxu0 %v673
      %770 = vmatprep.subr.bf16.mxu0 0
      %771 = vmatpush1.bf16.msra.mxu0 %v672
      %772 = vmatprep.subr.bf16.mxu0 0
      %773 = vmatpush1.bf16.msra.mxu0 %v671
      %774 = vmatprep.subr.bf16.mxu0 0
      %775 = vmatpush1.bf16.msra.mxu0 %v670
      %776 = vmatprep.subr.bf16.mxu0 0
      %777 = vmatpush1.bf16.msra.mxu0 %v669
      %778 = vmatprep.subr.bf16.mxu0 0
      %779 = vmatpush1.bf16.msra.mxu0 %v668
      %780 = vmatprep.subr.bf16.mxu0 0
      %781 = vmatpush2.bf16.msra.mxu0 %v683
      %782 = vmatprep.subr.bf16.mxu0 0
      %783 = vmatpush2.bf16.msra.mxu0 %v682
      %784 = vmatprep.subr.bf16.mxu0 0
      %785 = vmatpush2.bf16.msra.mxu0 %v681
      %786 = vmatprep.subr.bf16.mxu0 0
      %787 = vmatpush2.bf16.msra.mxu0 %v680
      %788 = vmatprep.subr.bf16.mxu0 0
      %789 = vmatpush2.bf16.msra.mxu0 %v679
      %790 = vmatprep.subr.bf16.mxu0 0
      %791 = vmatpush2.bf16.msra.mxu0 %v678
      %792 = vmatprep.subr.bf16.mxu0 0
      %793 = vmatpush2.bf16.msra.mxu0 %v677
      %794 = vmatprep.subr.bf16.mxu0 0
      %795 = vmatpush2.bf16.msra.mxu0 %v676
      %796 = vmatprep.mubr.bf16.mxu0 %v452
      %797 = vmatmul.mubr.bf16.gmra.mxu0 %v451
      %v798 = vpop.f32.mrf.mxu0
      %v799 = vadd.f32 %v305, %v798
      %v800 = vpop.f32.mrf.mxu0
      %v801 = vpop.f32.mrf.mxu0
      %v802 = vadd.f32 %v305, %v801
      %v803 = vpop.f32.mrf.mxu0
      %804 = vmatprep.mubr.bf16.mxu0 %v457
      %805 = vmatmul.mubr.bf16.gmra.mxu0 %v456
      %v806 = vpop.f32.mrf.mxu0
      %v807 = vadd.f32 %v305, %v806
      %v808 = vpop.f32.mrf.mxu0
      %v809 = vpop.f32.mrf.mxu0
      %v810 = vadd.f32 %v305, %v809
      %v811 = vpop.f32.mrf.mxu0
      %812 = vmatprep.mubr.bf16.mxu0 %v462
      %813 = vmatmul.mubr.bf16.gmra.mxu0 %v461
      %v814 = vpop.f32.mrf.mxu0
      %v815 = vadd.f32 %v305, %v814
      %v816 = vpop.f32.mrf.mxu0
      %v817 = vpop.f32.mrf.mxu0
      %v818 = vadd.f32 %v305, %v817
      %v819 = vpop.f32.mrf.mxu0
      %820 = vmatprep.mubr.bf16.mxu0 %v467
      %821 = vmatmul.mubr.bf16.gmra.mxu0 %v466
      %v822 = vpop.f32.mrf.mxu0
      %v823 = vadd.f32 %v305, %v822
      %v824 = vpop.f32.mrf.mxu0
      %v825 = vpop.f32.mrf.mxu0
      %v826 = vadd.f32 %v305, %v825
      %v827 = vpop.f32.mrf.mxu0
      %828 = vmatprep.mubr.bf16.mxu0 %v472
      %829 = vmatmul.mubr.bf16.gmra.mxu0 %v471
      %v830 = vpop.f32.mrf.mxu0
      %v831 = vadd.f32 %v305, %v830
      %v832 = vpop.f32.mrf.mxu0
      %v833 = vpop.f32.mrf.mxu0
      %v834 = vadd.f32 %v305, %v833
      %v835 = vpop.f32.mrf.mxu0
      %836 = vmatprep.mubr.bf16.mxu0 %v477
      %837 = vmatmul.mubr.bf16.gmra.mxu0 %v476
      %v838 = vpop.f32.mrf.mxu0
      %v839 = vadd.f32 %v305, %v838
      %v840 = vpop.f32.mrf.mxu0
      %v841 = vpop.f32.mrf.mxu0
      %v842 = vadd.f32 %v305, %v841
      %v843 = vpop.f32.mrf.mxu0
      %844 = vmatprep.mubr.bf16.mxu0 %v482
      %845 = vmatmul.mubr.bf16.gmra.mxu0 %v481
      %v846 = vpop.f32.mrf.mxu0
      %v847 = vadd.f32 %v305, %v846
      %v848 = vpop.f32.mrf.mxu0
      %v849 = vpop.f32.mrf.mxu0
      %v850 = vadd.f32 %v305, %v849
      %v851 = vpop.f32.mrf.mxu0
      %852 = vmatprep.mubr.bf16.mxu0 %v487
      %853 = vmatmul.mubr.bf16.gmra.mxu0 %v486
      %v854 = vpop.f32.mrf.mxu0
      %v855 = vadd.f32 %v305, %v854
      %v856 = vpop.f32.mrf.mxu0
      %v857 = vpop.f32.mrf.mxu0
      %v858 = vadd.f32 %v305, %v857
      %v859 = vpop.f32.mrf.mxu0
      %860 = vmatprep.mubr.bf16.mxu0 %v492
      %861 = vmatmul.mubr.bf16.gmra.mxu0 %v491
      %v862 = vpop.f32.mrf.mxu0
      %v863 = vadd.f32 %v305, %v862
      %v864 = vpop.f32.mrf.mxu0
      %v865 = vpop.f32.mrf.mxu0
      %v866 = vadd.f32 %v305, %v865
      %v867 = vpop.f32.mrf.mxu0
      %868 = vdwg.mxu0
      %869 = vmatprep.subr.bf16.mxu0 0
      %870 = vmatpush1.bf16.msra.mxu0 %v691
      %871 = vmatprep.subr.bf16.mxu0 0
      %872 = vmatpush1.bf16.msra.mxu0 %v690
      %873 = vmatprep.subr.bf16.mxu0 0
      %874 = vmatpush1.bf16.msra.mxu0 %v689
      %875 = vmatprep.subr.bf16.mxu0 0
      %876 = vmatpush1.bf16.msra.mxu0 %v688
      %877 = vmatprep.subr.bf16.mxu0 0
      %878 = vmatpush1.bf16.msra.mxu0 %v687
      %879 = vmatprep.subr.bf16.mxu0 0
      %880 = vmatpush1.bf16.msra.mxu0 %v686
      %881 = vmatprep.subr.bf16.mxu0 0
      %882 = vmatpush1.bf16.msra.mxu0 %v685
      %883 = vmatprep.subr.bf16.mxu0 0
      %884 = vmatpush1.bf16.msra.mxu0 %v684
      %885 = vmatprep.subr.bf16.mxu0 0
      %886 = vmatpush2.bf16.msra.mxu0 %v699
      %887 = vmatprep.subr.bf16.mxu0 0
      %888 = vmatpush2.bf16.msra.mxu0 %v698
      %889 = vmatprep.subr.bf16.mxu0 0
      %890 = vmatpush2.bf16.msra.mxu0 %v697
      %891 = vmatprep.subr.bf16.mxu0 0
      %892 = vmatpush2.bf16.msra.mxu0 %v696
      %893 = vmatprep.subr.bf16.mxu0 0
      %894 = vmatpush2.bf16.msra.mxu0 %v695
      %895 = vmatprep.subr.bf16.mxu0 0
      %896 = vmatpush2.bf16.msra.mxu0 %v694
      %897 = vmatprep.subr.bf16.mxu0 0
      %898 = vmatpush2.bf16.msra.mxu0 %v693
      %899 = vmatprep.subr.bf16.mxu0 0
      %900 = vmatpush2.bf16.msra.mxu0 %v692
      %901 = vmatprep.mubr.bf16.mxu0 %v454
      %902 = vmatmul.mubr.bf16.gmra.mxu0 %v453
      %v903 = vpop.f32.mrf.mxu0
      %v904 = vadd.f32 %v799, %v903
      %v905 = vpop.f32.mrf.mxu0
      %v906 = vpop.f32.mrf.mxu0
      %v907 = vadd.f32 %v802, %v906
      %v908 = vpop.f32.mrf.mxu0
      %909 = vmatprep.mubr.bf16.mxu0 %v459
      %910 = vmatmul.mubr.bf16.gmra.mxu0 %v458
      %v911 = vpop.f32.mrf.mxu0
      %v912 = vadd.f32 %v807, %v911
      %v913 = vpop.f32.mrf.mxu0
      %v914 = vpop.f32.mrf.mxu0
      %v915 = vadd.f32 %v810, %v914
      %v916 = vpop.f32.mrf.mxu0
      %917 = vmatprep.mubr.bf16.mxu0 %v464
      %918 = vmatmul.mubr.bf16.gmra.mxu0 %v463
      %v919 = vpop.f32.mrf.mxu0
      %v920 = vadd.f32 %v815, %v919
      %v921 = vpop.f32.mrf.mxu0
      %v922 = vpop.f32.mrf.mxu0
      %v923 = vadd.f32 %v818, %v922
      %v924 = vpop.f32.mrf.mxu0
      %925 = vmatprep.mubr.bf16.mxu0 %v469
      %926 = vmatmul.mubr.bf16.gmra.mxu0 %v468
      %v927 = vpop.f32.mrf.mxu0
      %v928 = vadd.f32 %v823, %v927
      %v929 = vpop.f32.mrf.mxu0
      %v930 = vpop.f32.mrf.mxu0
      %v931 = vadd.f32 %v826, %v930
      %v932 = vpop.f32.mrf.mxu0
      %933 = vmatprep.mubr.bf16.mxu0 %v474
      %934 = vmatmul.mubr.bf16.gmra.mxu0 %v473
      %v935 = vpop.f32.mrf.mxu0
      %v936 = vadd.f32 %v831, %v935
      %v937 = vpop.f32.mrf.mxu0
      %v938 = vpop.f32.mrf.mxu0
      %v939 = vadd.f32 %v834, %v938
      %v940 = vpop.f32.mrf.mxu0
      %941 = vmatprep.mubr.bf16.mxu0 %v479
      %942 = vmatmul.mubr.bf16.gmra.mxu0 %v478
      %v943 = vpop.f32.mrf.mxu0
      %v944 = vadd.f32 %v839, %v943
      %v945 = vpop.f32.mrf.mxu0
      %v946 = vpop.f32.mrf.mxu0
      %v947 = vadd.f32 %v842, %v946
      %v948 = vpop.f32.mrf.mxu0
      %949 = vmatprep.mubr.bf16.mxu0 %v484
      %950 = vmatmul.mubr.bf16.gmra.mxu0 %v483
      %v951 = vpop.f32.mrf.mxu0
      %v952 = vadd.f32 %v847, %v951
      %v953 = vpop.f32.mrf.mxu0
      %v954 = vpop.f32.mrf.mxu0
      %v955 = vadd.f32 %v850, %v954
      %v956 = vpop.f32.mrf.mxu0
      %957 = vmatprep.mubr.bf16.mxu0 %v489
      %958 = vmatmul.mubr.bf16.gmra.mxu0 %v488
      %v959 = vpop.f32.mrf.mxu0
      %v960 = vadd.f32 %v855, %v959
      %v961 = vpop.f32.mrf.mxu0
      %v962 = vpop.f32.mrf.mxu0
      %v963 = vadd.f32 %v858, %v962
      %v964 = vpop.f32.mrf.mxu0
      %965 = vmatprep.mubr.bf16.mxu0 %v494
      %966 = vmatmul.mubr.bf16.gmra.mxu0 %v493
      %v967 = vpop.f32.mrf.mxu0
      %v968 = vadd.f32 %v863, %v967
      %v969 = vpop.f32.mrf.mxu0
      %v970 = vpop.f32.mrf.mxu0
      %v971 = vadd.f32 %v866, %v970
      %v972 = vpop.f32.mrf.mxu0
      %973 = vdwg.mxu0
      %974 = vmatprep.subr.bf16.mxu0 0
      %975 = vmatpush1.bf16.msra.mxu0 0
      %976 = vmatprep.subr.bf16.mxu0 0
      %977 = vmatpush1.bf16.msra.mxu0 0
      %978 = vmatprep.subr.bf16.mxu0 0
      %979 = vmatpush1.bf16.msra.mxu0 0
      %980 = vmatprep.subr.bf16.mxu0 0
      %981 = vmatpush1.bf16.msra.mxu0 0
      %982 = vmatprep.subr.bf16.mxu0 0
      %983 = vmatpush1.bf16.msra.mxu0 0
      %984 = vmatprep.subr.bf16.mxu0 0
      %985 = vmatpush1.bf16.msra.mxu0 0
      %986 = vmatprep.subr.bf16.mxu0 0
      %987 = vmatpush1.bf16.msra.mxu0 %v701
      %988 = vmatprep.subr.bf16.mxu0 0
      %989 = vmatpush1.bf16.msra.mxu0 %v700
      %990 = vmatprep.subr.bf16.mxu0 0
      %991 = vmatpush2.bf16.msra.mxu0 0
      %992 = vmatprep.subr.bf16.mxu0 0
      %993 = vmatpush2.bf16.msra.mxu0 0
      %994 = vmatprep.subr.bf16.mxu0 0
      %995 = vmatpush2.bf16.msra.mxu0 0
      %996 = vmatprep.subr.bf16.mxu0 0
      %997 = vmatpush2.bf16.msra.mxu0 0
      %998 = vmatprep.subr.bf16.mxu0 0
      %999 = vmatpush2.bf16.msra.mxu0 0
      %1000 = vmatprep.subr.bf16.mxu0 0
      %1001 = vmatpush2.bf16.msra.mxu0 0
      %1002 = vmatprep.subr.bf16.mxu0 0
      %1003 = vmatpush2.bf16.msra.mxu0 0
      %1004 = vmatprep.subr.bf16.mxu0 0
      %1005 = vmatpush2.bf16.msra.mxu0 0
      %1006 = vmatprep.mubr.bf16.mxu0 0
      %1007 = vmatmul.mubr.bf16.gmra.mxu0 %v738
      %v1008 = vpop.f32.mrf.mxu0
      %v1009 = vadd.f32 %v904, %v1008
      %v1010 = vpop.f32.mrf.mxu0
      %v1011 = vpop.f32.mrf.mxu0
      %v1012 = vadd.f32 %v907, %v1011
      %v1013 = vpop.f32.mrf.mxu0
      %1014 = vmatprep.mubr.bf16.mxu0 0
      %1015 = vmatmul.mubr.bf16.gmra.mxu0 %v741
      %v1016 = vpop.f32.mrf.mxu0
      %v1017 = vadd.f32 %v912, %v1016
      %v1018 = vpop.f32.mrf.mxu0
      %v1019 = vpop.f32.mrf.mxu0
      %v1020 = vadd.f32 %v915, %v1019
      %v1021 = vpop.f32.mrf.mxu0
      %1022 = vmatprep.mubr.bf16.mxu0 0
      %1023 = vmatmul.mubr.bf16.gmra.mxu0 %v744
      %v1024 = vpop.f32.mrf.mxu0
      %v1025 = vadd.f32 %v920, %v1024
      %v1026 = vpop.f32.mrf.mxu0
      %v1027 = vpop.f32.mrf.mxu0
      %v1028 = vadd.f32 %v923, %v1027
      %v1029 = vpop.f32.mrf.mxu0
      %1030 = vmatprep.mubr.bf16.mxu0 0
      %1031 = vmatmul.mubr.bf16.gmra.mxu0 %v747
      %v1032 = vpop.f32.mrf.mxu0
      %v1033 = vadd.f32 %v928, %v1032
      %v1034 = vpop.f32.mrf.mxu0
      %v1035 = vpop.f32.mrf.mxu0
      %v1036 = vadd.f32 %v931, %v1035
      %v1037 = vpop.f32.mrf.mxu0
      %1038 = vmatprep.mubr.bf16.mxu0 0
      %1039 = vmatmul.mubr.bf16.gmra.mxu0 %v750
      %v1040 = vpop.f32.mrf.mxu0
      %v1041 = vadd.f32 %v936, %v1040
      %v1042 = vpop.f32.mrf.mxu0
      %v1043 = vpop.f32.mrf.mxu0
      %v1044 = vadd.f32 %v939, %v1043
      %v1045 = vpop.f32.mrf.mxu0
      %1046 = vmatprep.mubr.bf16.mxu0 0
      %1047 = vmatmul.mubr.bf16.gmra.mxu0 %v753
      %v1048 = vpop.f32.mrf.mxu0
      %v1049 = vadd.f32 %v944, %v1048
      %v1050 = vpop.f32.mrf.mxu0
      %v1051 = vpop.f32.mrf.mxu0
      %v1052 = vadd.f32 %v947, %v1051
      %v1053 = vpop.f32.mrf.mxu0
      %1054 = vmatprep.mubr.bf16.mxu0 0
      %1055 = vmatmul.mubr.bf16.gmra.mxu0 %v756
      %v1056 = vpop.f32.mrf.mxu0
      %v1057 = vadd.f32 %v952, %v1056
      %v1058 = vpop.f32.mrf.mxu0
      %v1059 = vpop.f32.mrf.mxu0
      %v1060 = vadd.f32 %v955, %v1059
      %v1061 = vpop.f32.mrf.mxu0
      %1062 = vmatprep.mubr.bf16.mxu0 0
      %1063 = vmatmul.mubr.bf16.gmra.mxu0 %v759
      %v1064 = vpop.f32.mrf.mxu0
      %v1065 = vadd.f32 %v960, %v1064
      %v1066 = vpop.f32.mrf.mxu0
      %v1067 = vpop.f32.mrf.mxu0
      %v1068 = vadd.f32 %v963, %v1067
      %v1069 = vpop.f32.mrf.mxu0
      %1070 = vmatprep.mubr.bf16.mxu0 0
      %1071 = vmatmul.mubr.bf16.gmra.mxu0 %v762
      %v1072 = vpop.f32.mrf.mxu0
      %v1073 = vadd.f32 %v968, %v1072
      %v1074 = vpop.f32.mrf.mxu0
      %v1075 = vpop.f32.mrf.mxu0
      %v1076 = vadd.f32 %v971, %v1075
      %v1077 = vpop.f32.mrf.mxu0
      %1078 = vdwg.mxu0
      %v1079 = vpack.c.bf16 %v1012, %v1009
      %v1080 = vpack.c.bf16 %v1020, %v1017
      %v1081 = vpack.c.bf16 %v1028, %v1025
      %v1082 = vpack.c.bf16 %v1036, %v1033
      %v1083 = vpack.c.bf16 %v1044, %v1041
      %v1084 = vpack.c.bf16 %v1052, %v1049
      %v1085 = vpack.c.bf16 %v1060, %v1057
      %v1086 = vpack.c.bf16 %v1068, %v1065
      %v1087 = vpack.c.bf16 %v1076, %v1073
      %v1097 = vunpack.c.l.b16 %v1079
      %v1098 = vunpack.c.h.b16 %v1079
      %v1099 = vunpack.c.l.b16 %v1080
      %v1100 = vunpack.c.h.b16 %v1080
      %v1101 = vunpack.c.l.b16 %v1081
      %v1102 = vunpack.c.h.b16 %v1081
      %v1103 = vunpack.c.l.b16 %v1082
      %v1104 = vunpack.c.h.b16 %v1082
      %v1105 = vunpack.c.l.b16 %v1083
      %v1106 = vunpack.c.h.b16 %v1083
      %v1107 = vunpack.c.l.b16 %v1084
      %v1108 = vunpack.c.h.b16 %v1084
      %v1109 = vunpack.c.l.b16 %v1085
      %v1110 = vunpack.c.h.b16 %v1085
      %v1111 = vunpack.c.l.b16 %v1086
      %v1112 = vunpack.c.h.b16 %v1086
      %v1113 = vunpack.c.l.b16 %v1087
      %v1114 = vunpack.c.h.b16 %v1087
      %v1115 = vpack.c.b16 %v1097, %v1097
      %v1116 = vpack.c.b16 %v1098, %v1098
      %v1117 = vpack.c.b16 %v1099, %v1099
      %v1118 = vpack.c.b16 %v1100, %v1100
      %v1119 = vpack.c.b16 %v1101, %v1101
      %v1120 = vpack.c.b16 %v1102, %v1102
      %v1121 = vpack.c.b16 %v1103, %v1103
      %v1122 = vpack.c.b16 %v1104, %v1104
      %v1123 = vpack.c.b16 %v1105, %v1105
      %v1124 = vpack.c.b16 %v1106, %v1106
      %v1125 = vpack.c.b16 %v1107, %v1107
      %v1126 = vpack.c.b16 %v1108, %v1108
      %v1127 = vpack.c.b16 %v1109, %v1109
      %v1128 = vpack.c.b16 %v1110, %v1110
      %v1129 = vpack.c.b16 %v1111, %v1111
      %v1130 = vpack.c.b16 %v1112, %v1112
      %v1131 = vpack.c.b16 %v1113, %v1113
      %v1132 = vpack.c.b16 %v1114, %v1114
      %vm1151 = vcmask 388096
      %1152 = vst.msk [vmem:[%s175] sm:$0xf] %vm1151, %v1115
      %1153 = vst.msk [vmem:[%s175 + $0x4] sm:$0xf] %vm1151, %v1116
      %1154 = vst.msk [vmem:[%s175 + $0x8] sm:$0xf] %vm1151, %v1117
      %1155 = vst.msk [vmem:[%s175 + $0xc] sm:$0xf] %vm1151, %v1118
      %1156 = vst.msk [vmem:[%s175 + $0x10] sm:$0xf] %vm1151, %v1119
      %1157 = vst.msk [vmem:[%s175 + $0x14] sm:$0xf] %vm1151, %v1120
      %1158 = vst.msk [vmem:[%s175 + $0x18] sm:$0xf] %vm1151, %v1121
      %1159 = vst.msk [vmem:[%s175 + $0x1c] sm:$0xf] %vm1151, %v1122
      %1160 = vst.msk [vmem:[%s175 + $0x20] sm:$0xf] %vm1151, %v1123
      %1161 = vst.msk [vmem:[%s175 + $0x24] sm:$0xf] %vm1151, %v1124
      %1162 = vst.msk [vmem:[%s175 + $0x28] sm:$0xf] %vm1151, %v1125
      %1163 = vst.msk [vmem:[%s175 + $0x2c] sm:$0xf] %vm1151, %v1126
      %1164 = vst.msk [vmem:[%s175 + $0x30] sm:$0xf] %vm1151, %v1127
      %1165 = vst.msk [vmem:[%s175 + $0x34] sm:$0xf] %vm1151, %v1128
      %1166 = vst.msk [vmem:[%s175 + $0x38] sm:$0xf] %vm1151, %v1129
      %1167 = vst.msk [vmem:[%s175 + $0x3c] sm:$0xf] %vm1151, %v1130
      %1168 = vst.msk [vmem:[%s175 + $0x40] sm:$0xf] %vm1151, %v1131
      %1169 = vst.msk [vmem:[%s175 + $0x44] sm:$0xf] %vm1151, %v1132
      %s1170 = smul.u32 18, %s14
      %p1171 = scmp.lt.s32.totalorder %s1170, 35
      %s1172 = scalar_select %p1171, %s1170, 35
      %s1173 = smul.addr %s1172, 4
      %s1174 = scalar_lea.vmem %s3, %s1173
      // Predicated region
      $region33: #{net_forward.11} parent=31 // pred_check
        %p1175 = pneg %p100
      $region34: #{net_forward.11} parent=31 // pred_check_branch
        %1177 = sbr.rel (%p1175) target = $region36
      $region35: #{net_forward.11} parent=31 // pred_region
        %s1178 = smul.u32 18, %s14
      $region36: #{net_forward.11} parent=31 // pred_fallthru
        _
    $region32: #{net_forward.11} parent=5 // pred_fallthru
      _
    %p1179 = scmp.le.s32.totalorder 2, %s9
    // Predicated region
    $region37: #{net_forward.11} parent=5 // pred_check
      %p1180 = pneg %p1179
    $region38: #{net_forward.11} parent=5 // pred_check_branch
      %1182 = sbr.rel (%p1180) target = $region40
    $region39: #{net_forward.11} parent=5 // pred_region
      %s1183 = ssub.s32 %s9, 2
      // Predicated region
      $region41: #{net_forward.11} parent=39 // pred_check
        %p1184 = pneg %p106
      $region42: #{net_forward.11} parent=39 // pred_check_branch
        %1186 = sbr.rel (%p1184) target = $region44
      $region43: #{net_forward.11} parent=39 // pred_region
        %s1187 = smul.u32 18, %s15
        %p1188 = scmp.lt.s32.totalorder %s1187, 35
        %s1189 = scalar_select %p1188, %s1187, 35
        %s1190 = smul.addr %s1189, 4
        %s1191 = scalar_lea.vmem %s3, %s1190
      $region44: #{net_forward.11} parent=39 // pred_fallthru
        _
    $region40: #{net_forward.11} parent=5 // pred_fallthru
      _
  $region6: #{net_forward.11} parent=0 // loop_footer
    %s13 = sadd.s32 1, %s9
  $region7: #{net_forward.11} parent=0 // loop_footer_branch
    %8 = sbr.rel target = $region3
  $region8: #{net_forward.11} parent=0 // loop_exit
    _

// kernel: net_forward.12
$region0: #{net_forward.12}
  #allocation0 [shape = 'u32[]', space=smem, size = 0x4, offset = 0x4, fixed_abs, tag = 'smem constant byte address 0x4 - core index']
  #allocation1 [shape = 'u32[144,128]{1,0:T(1,128)}', space=vmem, size = 0x12000, scoped, tag = 'internal scratch']
  %s0 = inlined_call_operand.vmem [shape: bf16[288,216], index: 0, kind: input, shape index: {}]
  %s1 = inlined_call_operand.vmem [shape: bf16[216,24], index: 1, kind: input, shape index: {}]
  %s2 = inlined_call_operand.vmem [shape: f32[1,24], index: 2, kind: input, shape index: {}]
  %s3 = inlined_call_operand.vmem [shape: bf16[288,24], index: 3, kind: output, shape index: {}]
  %s4 = sld [smem:[#allocation0]]
  $region45: #{net_forward.12} parent=0
    _
  %s6 = ssub.s32 1, %s4
  %s7 = scalar_select 0, %s6, %s4
  loop: start=0, step=1, limit=4
  $region2: #{net_forward.12} parent=0 // loop_pre_header
    _
  $region3: #{net_forward.12} parent=0 // loop_header
    %s9 = sphi 0, %s13
    %p10 = scmp.ge.s32.totalorder %s9, 4
    %s19 = sphi 0, %s21
    %s22 = sphi 0, %s19
    %s23 = sphi 0, %s22
    %s39 = sphi 0, %s23
    %s43 = sphi 0, %s43
    %s45 = sphi 0, %s43
    %s46 = sphi 0, %s45
    %s60 = sphi 0, %s46
    %s64 = sphi 0, %s64
    %s66 = sphi 0, %s64
    %s67 = sphi 0, %s66
    %s81 = sphi 0, %s67
    %s87 = sphi 0, %s89
    %s90 = sphi 0, %s87
    %s91 = sphi 0, %s90
    %s107 = sphi 0, %s91
  $region4: #{net_forward.12} parent=0 // loop_header_branch
    %12 = sbr.rel (%p10) target = $region8
  $region5: #{net_forward.12} parent=0 // loop_body
    %s14 = ssub.s32 %s9, 1
    %s15 = ssub.s32 %s9, 2
    %s16 = sadd.s32 %s9, 1
    %s17 = ssub.s32 %s9, %s16
    %p18 = scmp.eq.s32.totalorder %s17, 0
    %s20 = sadd.s32 %s19, 1
    %s21 = scalar_select %p18, %s19, %s20
    %p24 = pneg %p18
    %p25 = scmp.eq.s32.totalorder %s9, 1
    %p26 = por %p24, %p25
    %p27 = scmp.ne.s32.totalorder %s19, %s22
    %p28 = scmp.eq.s32.totalorder %s9, 0
    %p29 = por %p27, %p28
    %p30 = scmp.ne.s32.totalorder %s19, %s22
    %p31 = scmp.eq.s32.totalorder %s14, 1
    %p32 = por %p30, %p31
    %p33 = scmp.ne.s32.totalorder %s22, %s23
    %p34 = scmp.eq.s32.totalorder %s14, 0
    %p35 = por %p33, %p34
    %p36 = scmp.ne.s32.totalorder %s22, %s23
    %p37 = scmp.eq.s32.totalorder %s15, 1
    %p38 = por %p36, %p37
    %p40 = scmp.ne.s32.totalorder %s23, %s39
    %p41 = scmp.eq.s32.totalorder %s15, 0
    %p42 = por %p40, %p41
    %s44 = sadd.s32 %s43, 1
    %p47 = scmp.eq.s32.totalorder %s9, 1
    %p48 = scmp.ne.s32.totalorder %s43, %s45
    %p49 = scmp.eq.s32.totalorder %s9, 0
    %p50 = por %p48, %p49
    %p51 = scmp.ne.s32.totalorder %s43, %s45
    %p52 = scmp.eq.s32.totalorder %s14, 1
    %p53 = por %p51, %p52
    %p54 = scmp.ne.s32.totalorder %s45, %s46
    %p55 = scmp.eq.s32.totalorder %s14, 0
    %p56 = por %p54, %p55
    %p57 = scmp.ne.s32.totalorder %s45, %s46
    %p58 = scmp.eq.s32.totalorder %s15, 1
    %p59 = por %p57, %p58
    %p61 = scmp.ne.s32.totalorder %s46, %s60
    %p62 = scmp.eq.s32.totalorder %s15, 0
    %p63 = por %p61, %p62
    %s65 = sadd.s32 %s64, 1
    %p68 = scmp.eq.s32.totalorder %s9, 1
    %p69 = scmp.ne.s32.totalorder %s64, %s66
    %p70 = scmp.eq.s32.totalorder %s9, 0
    %p71 = por %p69, %p70
    %p72 = scmp.ne.s32.totalorder %s64, %s66
    %p73 = scmp.eq.s32.totalorder %s14, 1
    %p74 = por %p72, %p73
    %p75 = scmp.ne.s32.totalorder %s66, %s67
    %p76 = scmp.eq.s32.totalorder %s14, 0
    %p77 = por %p75, %p76
    %p78 = scmp.ne.s32.totalorder %s66, %s67
    %p79 = scmp.eq.s32.totalorder %s15, 1
    %p80 = por %p78, %p79
    %p82 = scmp.ne.s32.totalorder %s67, %s81
    %p83 = scmp.eq.s32.totalorder %s15, 0
    %p84 = por %p82, %p83
    %s85 = ssub.s32 %s9, %s16
    %p86 = scmp.eq.s32.totalorder %s85, 0
    %s88 = sadd.s32 %s87, 1
    %s89 = scalar_select %p86, %s87, %s88
    %p92 = pneg %p86
    %p93 = scmp.eq.s32.totalorder %s9, 1
    %p94 = por %p92, %p93
    %p95 = scmp.ne.s32.totalorder %s87, %s90
    %p96 = scmp.eq.s32.totalorder %s9, 0
    %p97 = por %p95, %p96
    %p98 = scmp.ne.s32.totalorder %s87, %s90
    %p99 = scmp.eq.s32.totalorder %s14, 1
    %p100 = por %p98, %p99
    %p101 = scmp.ne.s32.totalorder %s90, %s91
    %p102 = scmp.eq.s32.totalorder %s14, 0
    %p103 = por %p101, %p102
    %p104 = scmp.ne.s32.totalorder %s90, %s91
    %p105 = scmp.eq.s32.totalorder %s15, 1
    %p106 = por %p104, %p105
    %p108 = scmp.ne.s32.totalorder %s91, %s107
    %p109 = scmp.eq.s32.totalorder %s15, 0
    %p110 = por %p108, %p109
    %p111 = scmp.le.s32.totalorder 1, %s9
    %p112 = scmp.lt.s32.totalorder %s9, 3
    %p113 = pnand %p111, %p112
    %p114 = pneg %p113
    // Predicated region
    $region9: #{net_forward.12} parent=5 // pred_check
      _
    $region10: #{net_forward.12} parent=5 // pred_check_branch
      %116 = sbr.rel (%p113) target = $region12
    $region11: #{net_forward.12} parent=5 // pred_region
      %s117 = ssub.s32 %s9, 1
      // Predicated region
      $region13: #{net_forward.12} parent=11 // pred_check
        %p118 = pneg %p56
      $region14: #{net_forward.12} parent=11 // pred_check_branch
        %120 = sbr.rel (%p118) target = $region16
      $region15: #{net_forward.12} parent=11 // pred_region
        _
      $region16: #{net_forward.12} parent=11 // pred_fallthru
        _
      // Predicated region
      $region17: #{net_forward.12} parent=11 // pred_check
        %p121 = pneg %p77
      $region18: #{net_forward.12} parent=11 // pred_check_branch
        %123 = sbr.rel (%p121) target = $region20
      $region19: #{net_forward.12} parent=11 // pred_region
        _
      $region20: #{net_forward.12} parent=11 // pred_fallthru
        _
    $region12: #{net_forward.12} parent=5 // pred_fallthru
      _
    %p124 = scmp.lt.s32.totalorder %s9, 2
    // Predicated region
    $region21: #{net_forward.12} parent=5 // pred_check
      %p125 = pneg %p124
    $region22: #{net_forward.12} parent=5 // pred_check_branch
      %127 = sbr.rel (%p125) target = $region24
    $region23: #{net_forward.12} parent=5 // pred_region
      // Predicated region
      $region25: #{net_forward.12} parent=23 // pred_check
        %p128 = pneg %p29
      $region26: #{net_forward.12} parent=23 // pred_check_branch
        %130 = sbr.rel (%p128) target = $region28
      $region27: #{net_forward.12} parent=23 // pred_region
        %s131 = smul.u32 18, %s9
        %p132 = scmp.lt.s32.totalorder %s131, 35
        %s133 = scalar_select %p132, %s131, 35
        %s134 = smul.addr %s133, 2
        %s135 = smul.addr %s134, 4
        %s136 = scalar_lea.vmem %s0, %s135
        %s137 = smul.u32 18, %s9
      $region28: #{net_forward.12} parent=23 // pred_fallthru
        _
    $region24: #{net_forward.12} parent=5 // pred_fallthru
      _
    %p138 = scmp.le.s32.totalorder 1, %s9
    %p139 = scmp.lt.s32.totalorder %s9, 3
    %p140 = pnand %p138, %p139
    %p141 = pneg %p140
    // Predicated region
    $region29: #{net_forward.12} parent=5 // pred_check
      _
    $region30: #{net_forward.12} parent=5 // pred_check_branch
      %143 = sbr.rel (%p140) target = $region32
    $region31: #{net_forward.12} parent=5 // pred_region
      %s144 = ssub.s32 %s9, 1
      %s145 = smul.u32 18, %s14
      %p146 = scmp.lt.s32.totalorder %s145, 35
      %s147 = scalar_select %p146, %s145, 35
      %s148 = smul.addr %s147, 2
      %s149 = smul.addr %s148, 4
      %s150 = scalar_lea.vmem %s0, %s149
      %p151 = pneg %p35
      %p152 = pneg %p32
      %p153 = pneg %p56
      %p154 = pneg %p53
      %p155 = pneg %p77
      %p156 = pneg %p74
      %p157 = pneg %p103
      %p158 = pneg %p100
      %s159 = smul.u32 18, %s14
      %p160 = scmp.lt.s32.totalorder %s159, 35
      %s161 = scalar_select %p160, %s159, 35
      %s162 = smul.addr %s161, 4
      %s163 = scalar_lea.vmem %s3, %s162
      %s164 = smul.u32 18, %s14
      %p165 = scmp.lt.s32.totalorder %s164, 35
      %s166 = scalar_select %p165, %s164, 35
      %s167 = smul.addr %s166, 2
      %s168 = smul.addr %s167, 4
      %s169 = scalar_lea.vmem %s0, %s168
      %s170 = smul.u32 18, %s14
      %s171 = smul.u32 18, %s14
      %p172 = scmp.lt.s32.totalorder %s171, 35
      %s173 = scalar_select %p172, %s171, 35
      %s174 = smul.addr %s173, 4
      %s175 = scalar_lea.vmem %s3, %s174
      %s176 = smul.u32 18, %s14
      %v178 = vld [vmem:[%s169] sm:$0xff]
      %v179 = vld [vmem:[%s169 + $0x8] sm:$0xff]
      %v180 = vld [vmem:[%s169 + $0x10] sm:$0xff]
      %v181 = vld [vmem:[%s169 + $0x18] sm:$0xff]
      %v182 = vld [vmem:[%s169 + $0x20] sm:$0xff]
      %v183 = vld [vmem:[%s169 + $0x28] sm:$0xff]
      %v184 = vld [vmem:[%s169 + $0x30] sm:$0xff]
      %v185 = vld [vmem:[%s169 + $0x38] sm:$0xff]
      %v186 = vld [vmem:[%s169 + $0x40] sm:$0xff]
      %v187 = vld [vmem:[%s169 + $0x48] sm:$0xff]
      %v188 = vld [vmem:[%s169 + $0x50] sm:$0xff]
      %v189 = vld [vmem:[%s169 + $0x58] sm:$0xff]
      %v190 = vld [vmem:[%s169 + $0x60] sm:$0xff]
      %v191 = vld [vmem:[%s169 + $0x68] sm:$0xff]
      %v192 = vld [vmem:[%s169 + $0x70] sm:$0xff]
      %v193 = vld [vmem:[%s169 + $0x78] sm:$0xff]
      %v194 = vld [vmem:[%s169 + $0x80] sm:$0xff]
      %v195 = vld [vmem:[%s169 + $0x88] sm:$0xff]
      %v196 = vld [vmem:[%s1] sm:$0xf]
      %v197 = vld [vmem:[%s1 + $0x4] sm:$0xf]
      %v198 = vld [vmem:[%s1 + $0x8] sm:$0xf]
      %v199 = vld [vmem:[%s1 + $0xc] sm:$0xf]
      %v200 = vld [vmem:[%s1 + $0x10] sm:$0xf]
      %v201 = vld [vmem:[%s1 + $0x14] sm:$0xf]
      %v202 = vld [vmem:[%s1 + $0x18] sm:$0xf]
      %v203 = vld [vmem:[%s1 + $0x1c] sm:$0xf]
      %v204 = vld [vmem:[%s1 + $0x20] sm:$0xf]
      %v205 = vld [vmem:[%s1 + $0x24] sm:$0xf]
      %v206 = vld [vmem:[%s1 + $0x28] sm:$0xf]
      %v207 = vld [vmem:[%s1 + $0x2c] sm:$0xf]
      %v208 = vld [vmem:[%s1 + $0x30] sm:$0xf]
      %v209 = vld [vmem:[%s1 + $0x34] sm:$0xf]
      %v210 = vld [vmem:[%s1 + $0x38] sm:$0xf]
      %v211 = vld [vmem:[%s1 + $0x3c] sm:$0xf]
      %v212 = vld [vmem:[%s1 + $0x40] sm:$0xf]
      %v213 = vld [vmem:[%s1 + $0x44] sm:$0xf]
      %v214 = vld [vmem:[%s1 + $0x48] sm:$0xf]
      %v215 = vld [vmem:[%s1 + $0x4c] sm:$0xf]
      %v216 = vld [vmem:[%s1 + $0x50] sm:$0xf]
      %v217 = vld [vmem:[%s1 + $0x54] sm:$0xf]
      %v218 = vld [vmem:[%s1 + $0x58] sm:$0xf]
      %v219 = vld [vmem:[%s1 + $0x5c] sm:$0xf]
      %v220 = vld [vmem:[%s1 + $0x60] sm:$0xf]
      %v221 = vld [vmem:[%s1 + $0x64] sm:$0xf]
      %v222 = vld [vmem:[%s1 + $0x68] sm:$0xf]
      %v223 = vld [vmem:[%s2] sm:$0x1]
      %v225 = vlaneseq
      %v226 = vshrl.u32 %v225, 7
      %v227 = vsub.s32 0, %v226
      %v228 = vrot.slane %v223, %v227
      %v248 = vunpack.c.l.b16 %v178
      %v249 = vunpack.c.h.b16 %v178
      %v250 = vunpack.c.l.b16 %v179
      %v251 = vunpack.c.h.b16 %v179
      %v252 = vunpack.c.l.b16 %v180
      %v253 = vunpack.c.h.b16 %v180
      %v254 = vunpack.c.l.b16 %v181
      %v255 = vunpack.c.h.b16 %v181
      %v256 = vunpack.c.l.b16 %v182
      %v257 = vunpack.c.h.b16 %v182
      %v258 = vunpack.c.l.b16 %v183
      %v259 = vunpack.c.h.b16 %v183
      %v260 = vunpack.c.l.b16 %v184
      %v261 = vunpack.c.h.b16 %v184
      %v262 = vunpack.c.l.b16 %v185
      %v263 = vunpack.c.h.b16 %v185
      %v264 = vunpack.c.l.b16 %v186
      %v265 = vunpack.c.h.b16 %v186
      %v266 = vunpack.c.l.b16 %v187
      %v267 = vunpack.c.h.b16 %v187
      %v268 = vunpack.c.l.b16 %v188
      %v269 = vunpack.c.h.b16 %v188
      %v270 = vunpack.c.l.b16 %v189
      %v271 = vunpack.c.h.b16 %v189
      %v272 = vunpack.c.l.b16 %v190
      %v273 = vunpack.c.h.b16 %v190
      %v274 = vunpack.c.l.b16 %v191
      %v275 = vunpack.c.h.b16 %v191
      %v276 = vunpack.c.l.b16 %v192
      %v277 = vunpack.c.h.b16 %v192
      %v278 = vunpack.c.l.b16 %v193
      %v279 = vunpack.c.h.b16 %v193
      %v280 = vunpack.c.l.b16 %v194
      %v281 = vunpack.c.h.b16 %v194
      %v282 = vunpack.c.l.b16 %v195
      %v283 = vunpack.c.h.b16 %v195
      %v284 = vpack.c.b16 %v250, %v248
      %v285 = vpack.c.b16 %v251, %v249
      %v286 = vpack.c.b16 %v254, %v252
      %v287 = vpack.c.b16 %v255, %v253
      %v288 = vpack.c.b16 %v258, %v256
      %v289 = vpack.c.b16 %v259, %v257
      %v290 = vpack.c.b16 %v262, %v260
      %v291 = vpack.c.b16 %v263, %v261
      %v292 = vpack.c.b16 %v266, %v264
      %v293 = vpack.c.b16 %v267, %v265
      %v294 = vpack.c.b16 %v270, %v268
      %v295 = vpack.c.b16 %v271, %v269
      %v296 = vpack.c.b16 %v274, %v272
      %v297 = vpack.c.b16 %v275, %v273
      %v298 = vpack.c.b16 %v278, %v276
      %v299 = vpack.c.b16 %v279, %v277
      %v300 = vpack.c.b16 %v282, %v280
      %v301 = vpack.c.b16 %v283, %v281
      %v338 = vunpack.c.l.b16 %v196
      %v339 = vunpack.c.l.b16 %v197
      %v340 = vunpack.c.l.b16 %v198
      %v341 = vunpack.c.l.b16 %v199
      %v342 = vunpack.c.l.b16 %v200
      %v343 = vunpack.c.l.b16 %v201
      %v344 = vunpack.c.l.b16 %v202
      %v345 = vunpack.c.l.b16 %v203
      %v346 = vunpack.c.l.b16 %v204
      %v347 = vunpack.c.l.b16 %v205
      %v348 = vunpack.c.l.b16 %v206
      %v349 = vunpack.c.l.b16 %v207
      %v350 = vunpack.c.l.b16 %v208
      %v351 = vunpack.c.l.b16 %v209
      %v352 = vunpack.c.l.b16 %v210
      %v353 = vunpack.c.l.b16 %v211
      %v354 = vunpack.c.l.b16 %v212
      %v355 = vunpack.c.l.b16 %v213
      %v356 = vunpack.c.l.b16 %v214
      %v357 = vunpack.c.l.b16 %v215
      %v358 = vunpack.c.l.b16 %v216
      %v359 = vunpack.c.l.b16 %v217
      %v360 = vunpack.c.l.b16 %v218
      %v361 = vunpack.c.l.b16 %v219
      %v362 = vunpack.c.l.b16 %v220
      %v363 = vunpack.c.l.b16 %v221
      %v364 = vunpack.c.l.b16 %v222
      %v365 = vpack.c.b16 %v339, %v338
      %v366 = vpack.c.b16 %v341, %v340
      %v367 = vpack.c.b16 %v343, %v342
      %v368 = vpack.c.b16 %v345, %v344
      %v369 = vpack.c.b16 %v347, %v346
      %v370 = vpack.c.b16 %v349, %v348
      %v371 = vpack.c.b16 %v351, %v350
      %v372 = vpack.c.b16 %v353, %v352
      %v373 = vpack.c.b16 %v355, %v354
      %v374 = vpack.c.b16 %v357, %v356
      %v375 = vpack.c.b16 %v359, %v358
      %v376 = vpack.c.b16 %v361, %v360
      %v377 = vpack.c.b16 %v363, %v362
      %v378 = vpack.c.b16 %v364, %v364
      %vm392 = vcmask 719872
      %v394 = vsel %vm392, %v285, 0
      %v397 = vsel %vm392, %v287, 0
      %v400 = vsel %vm392, %v289, 0
      %v403 = vsel %vm392, %v291, 0
      %v406 = vsel %vm392, %v293, 0
      %v409 = vsel %vm392, %v295, 0
      %v412 = vsel %vm392, %v297, 0
      %v415 = vsel %vm392, %v299, 0
      %v418 = vsel %vm392, %v301, 0
      %vm420 = vcmask 1043456
      %v422 = vsel %vm420, %v378, 0
      %424 = vmatprep.subr.bf16.mxu0 0
      %425 = vmatpush1.bf16.msra.mxu0 %v372
      %426 = vmatprep.subr.bf16.mxu0 0
      %427 = vmatpush1.bf16.msra.mxu0 %v371
      %428 = vmatprep.subr.bf16.mxu0 0
      %429 = vmatpush1.bf16.msra.mxu0 %v370
      %430 = vmatprep.subr.bf16.mxu0 0
      %431 = vmatpush1.bf16.msra.mxu0 %v369
      %432 = vmatprep.subr.bf16.mxu0 0
      %433 = vmatpush1.bf16.msra.mxu0 %v368
      %434 = vmatprep.subr.bf16.mxu0 0
      %435 = vmatpush1.bf16.msra.mxu0 %v367
      %436 = vmatprep.subr.bf16.mxu0 0
      %437 = vmatpush1.bf16.msra.mxu0 %v366
      %438 = vmatprep.subr.bf16.mxu0 0
      %439 = vmatpush1.bf16.msra.mxu0 %v365
      %440 = vmatprep.subr.bf16.mxu0 0
      %441 = vmatpush2.bf16.msra.mxu0 0
      %442 = vmatprep.subr.bf16.mxu0 0
      %443 = vmatpush2.bf16.msra.mxu0 0
      %444 = vmatprep.subr.bf16.mxu0 0
      %445 = vmatpush2.bf16.msra.mxu0 %v422
      %446 = vmatprep.subr.bf16.mxu0 0
      %447 = vmatpush2.bf16.msra.mxu0 %v377
      %448 = vmatprep.subr.bf16.mxu0 0
      %449 = vmatpush2.bf16.msra.mxu0 %v376
      %450 = vmatprep.subr.bf16.mxu0 0
      %451 = vmatpush2.bf16.msra.mxu0 %v375
      %452 = vmatprep.subr.bf16.mxu0 0
      %453 = vmatpush2.bf16.msra.mxu0 %v374
      %454 = vmatprep.subr.bf16.mxu0 0
      %455 = vmatpush2.bf16.msra.mxu0 %v373
      %456 = vmatprep.mubr.bf16.mxu0 %v394
      %457 = vmatmul.mubr.bf16.gmra.mxu0 %v284
      %v458 = vpop.f32.mrf.mxu0
      %v459 = vadd.f32 %v228, %v458
      %v460 = vpop.f32.mrf.mxu0
      %v461 = vpop.f32.mrf.mxu0
      %v462 = vadd.f32 %v228, %v461
      %v463 = vpop.f32.mrf.mxu0
      %464 = vmatprep.mubr.bf16.mxu0 %v397
      %465 = vmatmul.mubr.bf16.gmra.mxu0 %v286
      %v466 = vpop.f32.mrf.mxu0
      %v467 = vadd.f32 %v228, %v466
      %v468 = vpop.f32.mrf.mxu0
      %v469 = vpop.f32.mrf.mxu0
      %v470 = vadd.f32 %v228, %v469
      %v471 = vpop.f32.mrf.mxu0
      %472 = vmatprep.mubr.bf16.mxu0 %v400
      %473 = vmatmul.mubr.bf16.gmra.mxu0 %v288
      %v474 = vpop.f32.mrf.mxu0
      %v475 = vadd.f32 %v228, %v474
      %v476 = vpop.f32.mrf.mxu0
      %v477 = vpop.f32.mrf.mxu0
      %v478 = vadd.f32 %v228, %v477
      %v479 = vpop.f32.mrf.mxu0
      %480 = vmatprep.mubr.bf16.mxu0 %v403
      %481 = vmatmul.mubr.bf16.gmra.mxu0 %v290
      %v482 = vpop.f32.mrf.mxu0
      %v483 = vadd.f32 %v228, %v482
      %v484 = vpop.f32.mrf.mxu0
      %v485 = vpop.f32.mrf.mxu0
      %v486 = vadd.f32 %v228, %v485
      %v487 = vpop.f32.mrf.mxu0
      %488 = vmatprep.mubr.bf16.mxu0 %v406
      %489 = vmatmul.mubr.bf16.gmra.mxu0 %v292
      %v490 = vpop.f32.mrf.mxu0
      %v491 = vadd.f32 %v228, %v490
      %v492 = vpop.f32.mrf.mxu0
      %v493 = vpop.f32.mrf.mxu0
      %v494 = vadd.f32 %v228, %v493
      %v495 = vpop.f32.mrf.mxu0
      %496 = vmatprep.mubr.bf16.mxu0 %v409
      %497 = vmatmul.mubr.bf16.gmra.mxu0 %v294
      %v498 = vpop.f32.mrf.mxu0
      %v499 = vadd.f32 %v228, %v498
      %v500 = vpop.f32.mrf.mxu0
      %v501 = vpop.f32.mrf.mxu0
      %v502 = vadd.f32 %v228, %v501
      %v503 = vpop.f32.mrf.mxu0
      %504 = vmatprep.mubr.bf16.mxu0 %v412
      %505 = vmatmul.mubr.bf16.gmra.mxu0 %v296
      %v506 = vpop.f32.mrf.mxu0
      %v507 = vadd.f32 %v228, %v506
      %v508 = vpop.f32.mrf.mxu0
      %v509 = vpop.f32.mrf.mxu0
      %v510 = vadd.f32 %v228, %v509
      %v511 = vpop.f32.mrf.mxu0
      %512 = vmatprep.mubr.bf16.mxu0 %v415
      %513 = vmatmul.mubr.bf16.gmra.mxu0 %v298
      %v514 = vpop.f32.mrf.mxu0
      %v515 = vadd.f32 %v228, %v514
      %v516 = vpop.f32.mrf.mxu0
      %v517 = vpop.f32.mrf.mxu0
      %v518 = vadd.f32 %v228, %v517
      %v519 = vpop.f32.mrf.mxu0
      %520 = vmatprep.mubr.bf16.mxu0 %v418
      %521 = vmatmul.mubr.bf16.gmra.mxu0 %v300
      %v522 = vpop.f32.mrf.mxu0
      %v523 = vadd.f32 %v228, %v522
      %v524 = vpop.f32.mrf.mxu0
      %v525 = vpop.f32.mrf.mxu0
      %v526 = vadd.f32 %v228, %v525
      %v527 = vpop.f32.mrf.mxu0
      %528 = vdwg.mxu0
      %v529 = vpack.c.bf16 %v462, %v459
      %v530 = vpack.c.bf16 %v470, %v467
      %v531 = vpack.c.bf16 %v478, %v475
      %v532 = vpack.c.bf16 %v486, %v483
      %v533 = vpack.c.bf16 %v494, %v491
      %v534 = vpack.c.bf16 %v502, %v499
      %v535 = vpack.c.bf16 %v510, %v507
      %v536 = vpack.c.bf16 %v518, %v515
      %v537 = vpack.c.bf16 %v526, %v523
      %v547 = vunpack.c.l.b16 %v529
      %v548 = vunpack.c.h.b16 %v529
      %v549 = vunpack.c.l.b16 %v530
      %v550 = vunpack.c.h.b16 %v530
      %v551 = vunpack.c.l.b16 %v531
      %v552 = vunpack.c.h.b16 %v531
      %v553 = vunpack.c.l.b16 %v532
      %v554 = vunpack.c.h.b16 %v532
      %v555 = vunpack.c.l.b16 %v533
      %v556 = vunpack.c.h.b16 %v533
      %v557 = vunpack.c.l.b16 %v534
      %v558 = vunpack.c.h.b16 %v534
      %v559 = vunpack.c.l.b16 %v535
      %v560 = vunpack.c.h.b16 %v535
      %v561 = vunpack.c.l.b16 %v536
      %v562 = vunpack.c.h.b16 %v536
      %v563 = vunpack.c.l.b16 %v537
      %v564 = vunpack.c.h.b16 %v537
      %v565 = vpack.c.b16 %v547, %v547
      %v566 = vpack.c.b16 %v548, %v548
      %v567 = vpack.c.b16 %v549, %v549
      %v568 = vpack.c.b16 %v550, %v550
      %v569 = vpack.c.b16 %v551, %v551
      %v570 = vpack.c.b16 %v552, %v552
      %v571 = vpack.c.b16 %v553, %v553
      %v572 = vpack.c.b16 %v554, %v554
      %v573 = vpack.c.b16 %v555, %v555
      %v574 = vpack.c.b16 %v556, %v556
      %v575 = vpack.c.b16 %v557, %v557
      %v576 = vpack.c.b16 %v558, %v558
      %v577 = vpack.c.b16 %v559, %v559
      %v578 = vpack.c.b16 %v560, %v560
      %v579 = vpack.c.b16 %v561, %v561
      %v580 = vpack.c.b16 %v562, %v562
      %v581 = vpack.c.b16 %v563, %v563
      %v582 = vpack.c.b16 %v564, %v564
      %vm601 = vcmask 191488
      %602 = vst.msk [vmem:[%s175] sm:$0xf] %vm601, %v565
      %603 = vst.msk [vmem:[%s175 + $0x4] sm:$0xf] %vm601, %v566
      %604 = vst.msk [vmem:[%s175 + $0x8] sm:$0xf] %vm601, %v567
      %605 = vst.msk [vmem:[%s175 + $0xc] sm:$0xf] %vm601, %v568
      %606 = vst.msk [vmem:[%s175 + $0x10] sm:$0xf] %vm601, %v569
      %607 = vst.msk [vmem:[%s175 + $0x14] sm:$0xf] %vm601, %v570
      %608 = vst.msk [vmem:[%s175 + $0x18] sm:$0xf] %vm601, %v571
      %609 = vst.msk [vmem:[%s175 + $0x1c] sm:$0xf] %vm601, %v572
      %610 = vst.msk [vmem:[%s175 + $0x20] sm:$0xf] %vm601, %v573
      %611 = vst.msk [vmem:[%s175 + $0x24] sm:$0xf] %vm601, %v574
      %612 = vst.msk [vmem:[%s175 + $0x28] sm:$0xf] %vm601, %v575
      %613 = vst.msk [vmem:[%s175 + $0x2c] sm:$0xf] %vm601, %v576
      %614 = vst.msk [vmem:[%s175 + $0x30] sm:$0xf] %vm601, %v577
      %615 = vst.msk [vmem:[%s175 + $0x34] sm:$0xf] %vm601, %v578
      %616 = vst.msk [vmem:[%s175 + $0x38] sm:$0xf] %vm601, %v579
      %617 = vst.msk [vmem:[%s175 + $0x3c] sm:$0xf] %vm601, %v580
      %618 = vst.msk [vmem:[%s175 + $0x40] sm:$0xf] %vm601, %v581
      %619 = vst.msk [vmem:[%s175 + $0x44] sm:$0xf] %vm601, %v582
      %s620 = smul.u32 18, %s14
      %p621 = scmp.lt.s32.totalorder %s620, 35
      %s622 = scalar_select %p621, %s620, 35
      %s623 = smul.addr %s622, 4
      %s624 = scalar_lea.vmem %s3, %s623
      // Predicated region
      $region33: #{net_forward.12} parent=31 // pred_check
        %p625 = pneg %p100
      $region34: #{net_forward.12} parent=31 // pred_check_branch
        %627 = sbr.rel (%p625) target = $region36
      $region35: #{net_forward.12} parent=31 // pred_region
        %s628 = smul.u32 18, %s14
      $region36: #{net_forward.12} parent=31 // pred_fallthru
        _
    $region32: #{net_forward.12} parent=5 // pred_fallthru
      _
    %p629 = scmp.le.s32.totalorder 2, %s9
    // Predicated region
    $region37: #{net_forward.12} parent=5 // pred_check
      %p630 = pneg %p629
    $region38: #{net_forward.12} parent=5 // pred_check_branch
      %632 = sbr.rel (%p630) target = $region40
    $region39: #{net_forward.12} parent=5 // pred_region
      %s633 = ssub.s32 %s9, 2
      // Predicated region
      $region41: #{net_forward.12} parent=39 // pred_check
        %p634 = pneg %p106
      $region42: #{net_forward.12} parent=39 // pred_check_branch
        %636 = sbr.rel (%p634) target = $region44
      $region43: #{net_forward.12} parent=39 // pred_region
        %s637 = smul.u32 18, %s15
        %p638 = scmp.lt.s32.totalorder %s637, 35
        %s639 = scalar_select %p638, %s637, 35
        %s640 = smul.addr %s639, 4
        %s641 = scalar_lea.vmem %s3, %s640
      $region44: #{net_forward.12} parent=39 // pred_fallthru
        _
    $region40: #{net_forward.12} parent=5 // pred_fallthru
      _
  $region6: #{net_forward.12} parent=0 // loop_footer
    %s13 = sadd.s32 1, %s9
  $region7: #{net_forward.12} parent=0 // loop_footer_branch
    %8 = sbr.rel target = $region3
  $region8: #{net_forward.12} parent=0 // loop_exit
    _

// kernel: net_forward.13
$region0: #{net_forward.13}
  #allocation0 [shape = 'u32[]', space=smem, size = 0x4, offset = 0x4, fixed_abs, tag = 'smem constant byte address 0x4 - core index']
  #allocation1 [shape = 'u32[144,128]{1,0:T(1,128)}', space=vmem, size = 0x12000, scoped, tag = 'internal scratch']
  %s0 = inlined_call_operand.vmem [shape: bf16[128,2200], index: 0, kind: input, shape index: {}]
  %s1 = inlined_call_operand.vmem [shape: bf16[2200,20], index: 1, kind: input, shape index: {}]
  %s2 = inlined_call_operand.vmem [shape: f32[1,20], index: 2, kind: input, shape index: {}]
  %s3 = inlined_call_operand.vmem [shape: bf16[128,20], index: 3, kind: output, shape index: {}]
  %s4 = sld [smem:[#allocation0]]
  $region22: #{net_forward.13} parent=0
    _
  %s6 = ssub.s32 1, %s4
  %s7 = scalar_select 0, %s6, %s4
  // Predicated region
  $region2: #{net_forward.13} parent=0 // pred_check
    _
  $region3: #{net_forward.13} parent=0 // pred_check_branch
    %9 = sbr.rel (0) target = $region5
  $region4: #{net_forward.13} parent=0 // pred_region
    _
  $region5: #{net_forward.13} parent=0 // pred_fallthru
    _
  // Predicated region
  $region6: #{net_forward.13} parent=0 // pred_check
    _
  $region7: #{net_forward.13} parent=0 // pred_check_branch
    %11 = sbr.rel (0) target = $region9
  $region8: #{net_forward.13} parent=0 // pred_region
    _
  $region9: #{net_forward.13} parent=0 // pred_fallthru
    _
  // Predicated region
  $region10: #{net_forward.13} parent=0 // pred_check
    _
  $region11: #{net_forward.13} parent=0 // pred_check_branch
    %13 = sbr.rel (0) target = $region13
  $region12: #{net_forward.13} parent=0 // pred_region
    _
  $region13: #{net_forward.13} parent=0 // pred_fallthru
    _
  %v15 = vld [vmem:[%s0] sm:$0xff]
  %v16 = vld [vmem:[%s0 + $0x8] sm:$0xff]
  %v17 = vld [vmem:[%s0 + $0x10] sm:$0xff]
  %v18 = vld [vmem:[%s0 + $0x18] sm:$0xff]
  %v19 = vld [vmem:[%s0 + $0x20] sm:$0xff]
  %v20 = vld [vmem:[%s0 + $0x28] sm:$0xff]
  %v21 = vld [vmem:[%s0 + $0x30] sm:$0xff]
  %v22 = vld [vmem:[%s0 + $0x38] sm:$0xff]
  %v23 = vld [vmem:[%s0 + $0x40] sm:$0xff]
  %v24 = vld [vmem:[%s0 + $0x48] sm:$0xff]
  %v25 = vld [vmem:[%s0 + $0x50] sm:$0xff]
  %v26 = vld [vmem:[%s0 + $0x58] sm:$0xff]
  %v27 = vld [vmem:[%s0 + $0x60] sm:$0xff]
  %v28 = vld [vmem:[%s0 + $0x68] sm:$0xff]
  %v29 = vld [vmem:[%s0 + $0x70] sm:$0xff]
  %v30 = vld [vmem:[%s0 + $0x78] sm:$0xff]
  %v31 = vld [vmem:[%s0 + $0x80] sm:$0xff]
  %v32 = vld [vmem:[%s0 + $0x88] sm:$0xff]
  %v33 = vld [vmem:[%s0 + $0x90] sm:$0xff]
  %v34 = vld [vmem:[%s0 + $0x98] sm:$0xff]
  %v35 = vld [vmem:[%s0 + $0xa0] sm:$0xff]
  %v36 = vld [vmem:[%s0 + $0xa8] sm:$0xff]
  %v37 = vld [vmem:[%s0 + $0xb0] sm:$0xff]
  %v38 = vld [vmem:[%s0 + $0xb8] sm:$0xff]
  %v39 = vld [vmem:[%s0 + $0xc0] sm:$0xff]
  %v40 = vld [vmem:[%s0 + $0xc8] sm:$0xff]
  %v41 = vld [vmem:[%s0 + $0xd0] sm:$0xff]
  %v42 = vld [vmem:[%s0 + $0xd8] sm:$0xff]
  %v43 = vld [vmem:[%s0 + $0xe0] sm:$0xff]
  %v44 = vld [vmem:[%s0 + $0xe8] sm:$0xff]
  %v45 = vld [vmem:[%s0 + $0xf0] sm:$0xff]
  %v46 = vld [vmem:[%s0 + $0xf8] sm:$0xff]
  %v47 = vld [vmem:[%s0 + $0x100] sm:$0xff]
  %v48 = vld [vmem:[%s0 + $0x108] sm:$0xff]
  %v49 = vld [vmem:[%s0 + $0x110] sm:$0xff]
  %v50 = vld [vmem:[%s0 + $0x118] sm:$0xff]
  %v51 = vld [vmem:[%s0 + $0x120] sm:$0xff]
  %v52 = vld [vmem:[%s0 + $0x128] sm:$0xff]
  %v53 = vld [vmem:[%s0 + $0x130] sm:$0xff]
  %v54 = vld [vmem:[%s0 + $0x138] sm:$0xff]
  %v55 = vld [vmem:[%s0 + $0x140] sm:$0xff]
  %v56 = vld [vmem:[%s0 + $0x148] sm:$0xff]
  %v57 = vld [vmem:[%s0 + $0x150] sm:$0xff]
  %v58 = vld [vmem:[%s0 + $0x158] sm:$0xff]
  %v59 = vld [vmem:[%s0 + $0x160] sm:$0xff]
  %v60 = vld [vmem:[%s0 + $0x168] sm:$0xff]
  %v61 = vld [vmem:[%s0 + $0x170] sm:$0xff]
  %v62 = vld [vmem:[%s0 + $0x178] sm:$0xff]
  %v63 = vld [vmem:[%s0 + $0x180] sm:$0xff]
  %v64 = vld [vmem:[%s0 + $0x188] sm:$0xff]
  %v65 = vld [vmem:[%s0 + $0x190] sm:$0xff]
  %v66 = vld [vmem:[%s0 + $0x198] sm:$0xff]
  %v67 = vld [vmem:[%s0 + $0x1a0] sm:$0xff]
  %v68 = vld [vmem:[%s0 + $0x1a8] sm:$0xff]
  %v69 = vld [vmem:[%s0 + $0x1b0] sm:$0xff]
  %v70 = vld [vmem:[%s0 + $0x1b8] sm:$0xff]
  %v71 = vld [vmem:[%s0 + $0x1c0] sm:$0xff]
  %v72 = vld [vmem:[%s0 + $0x1c8] sm:$0xff]
  %v73 = vld [vmem:[%s0 + $0x1d0] sm:$0xff]
  %v74 = vld [vmem:[%s0 + $0x1d8] sm:$0xff]
  %v75 = vld [vmem:[%s0 + $0x1e0] sm:$0xff]
  %v76 = vld [vmem:[%s0 + $0x1e8] sm:$0xff]
  %v77 = vld [vmem:[%s0 + $0x1f0] sm:$0xff]
  %v78 = vld [vmem:[%s0 + $0x1f8] sm:$0xff]
  %v79 = vld [vmem:[%s0 + $0x200] sm:$0xff]
  %v80 = vld [vmem:[%s0 + $0x208] sm:$0xff]
  %v81 = vld [vmem:[%s0 + $0x210] sm:$0xff]
  %v82 = vld [vmem:[%s0 + $0x218] sm:$0xff]
  %v83 = vld [vmem:[%s0 + $0x220] sm:$0xff]
  %v84 = vld [vmem:[%s0 + $0x228] sm:$0xff]
  %v85 = vld [vmem:[%s0 + $0x230] sm:$0xff]
  %v86 = vld [vmem:[%s0 + $0x238] sm:$0xff]
  %v87 = vld [vmem:[%s0 + $0x240] sm:$0xff]
  %v88 = vld [vmem:[%s0 + $0x248] sm:$0xff]
  %v89 = vld [vmem:[%s0 + $0x250] sm:$0xff]
  %v90 = vld [vmem:[%s0 + $0x258] sm:$0xff]
  %v91 = vld [vmem:[%s0 + $0x260] sm:$0xff]
  %v92 = vld [vmem:[%s0 + $0x268] sm:$0xff]
  %v93 = vld [vmem:[%s0 + $0x270] sm:$0xff]
  %v94 = vld [vmem:[%s0 + $0x278] sm:$0xff]
  %v95 = vld [vmem:[%s0 + $0x280] sm:$0xff]
  %v96 = vld [vmem:[%s0 + $0x288] sm:$0xff]
  %v97 = vld [vmem:[%s0 + $0x290] sm:$0xff]
  %v98 = vld [vmem:[%s0 + $0x298] sm:$0xff]
  %v99 = vld [vmem:[%s0 + $0x2a0] sm:$0xff]
  %v100 = vld [vmem:[%s0 + $0x2a8] sm:$0xff]
  %v101 = vld [vmem:[%s0 + $0x2b0] sm:$0xff]
  %v102 = vld [vmem:[%s0 + $0x2b8] sm:$0xff]
  %v103 = vld [vmem:[%s0 + $0x2c0] sm:$0xff]
  %v104 = vld [vmem:[%s0 + $0x2c8] sm:$0xff]
  %v105 = vld [vmem:[%s0 + $0x2d0] sm:$0xff]
  %v106 = vld [vmem:[%s0 + $0x2d8] sm:$0xff]
  %v107 = vld [vmem:[%s0 + $0x2e0] sm:$0xff]
  %v108 = vld [vmem:[%s0 + $0x2e8] sm:$0xff]
  %v109 = vld [vmem:[%s0 + $0x2f0] sm:$0xff]
  %v110 = vld [vmem:[%s0 + $0x2f8] sm:$0xff]
  %v111 = vld [vmem:[%s0 + $0x300] sm:$0xff]
  %v112 = vld [vmem:[%s0 + $0x308] sm:$0xff]
  %v113 = vld [vmem:[%s0 + $0x310] sm:$0xff]
  %v114 = vld [vmem:[%s0 + $0x318] sm:$0xff]
  %v115 = vld [vmem:[%s0 + $0x320] sm:$0xff]
  %v116 = vld [vmem:[%s0 + $0x328] sm:$0xff]
  %v117 = vld [vmem:[%s0 + $0x330] sm:$0xff]
  %v118 = vld [vmem:[%s0 + $0x338] sm:$0xff]
  %v119 = vld [vmem:[%s0 + $0x340] sm:$0xff]
  %v120 = vld [vmem:[%s0 + $0x348] sm:$0xff]
  %v121 = vld [vmem:[%s0 + $0x350] sm:$0xff]
  %v122 = vld [vmem:[%s0 + $0x358] sm:$0xff]
  %v123 = vld [vmem:[%s0 + $0x360] sm:$0xff]
  %v124 = vld [vmem:[%s0 + $0x368] sm:$0xff]
  %v125 = vld [vmem:[%s0 + $0x370] sm:$0xff]
  %v126 = vld [vmem:[%s0 + $0x378] sm:$0xff]
  %v127 = vld [vmem:[%s0 + $0x380] sm:$0xff]
  %v128 = vld [vmem:[%s0 + $0x388] sm:$0xff]
  %v129 = vld [vmem:[%s0 + $0x390] sm:$0xff]
  %v130 = vld [vmem:[%s0 + $0x398] sm:$0xff]
  %v131 = vld [vmem:[%s0 + $0x3a0] sm:$0xff]
  %v132 = vld [vmem:[%s0 + $0x3a8] sm:$0xff]
  %v133 = vld [vmem:[%s0 + $0x3b0] sm:$0xff]
  %v134 = vld [vmem:[%s0 + $0x3b8] sm:$0xff]
  %v135 = vld [vmem:[%s0 + $0x3c0] sm:$0xff]
  %v136 = vld [vmem:[%s0 + $0x3c8] sm:$0xff]
  %v137 = vld [vmem:[%s0 + $0x3d0] sm:$0xff]
  %v138 = vld [vmem:[%s0 + $0x3d8] sm:$0xff]
  %v139 = vld [vmem:[%s0 + $0x3e0] sm:$0xff]
  %v140 = vld [vmem:[%s0 + $0x3e8] sm:$0xff]
  %v141 = vld [vmem:[%s0 + $0x3f0] sm:$0xff]
  %v142 = vld [vmem:[%s0 + $0x3f8] sm:$0xff]
  %v143 = vld [vmem:[%s0 + $0x400] sm:$0xff]
  %v144 = vld [vmem:[%s0 + $0x408] sm:$0xff]
  %v145 = vld [vmem:[%s0 + $0x410] sm:$0xff]
  %v146 = vld [vmem:[%s0 + $0x418] sm:$0xff]
  %v147 = vld [vmem:[%s0 + $0x420] sm:$0xff]
  %v148 = vld [vmem:[%s0 + $0x428] sm:$0xff]
  %v149 = vld [vmem:[%s0 + $0x430] sm:$0xff]
  %v150 = vld [vmem:[%s0 + $0x438] sm:$0xff]
  %v151 = vld [vmem:[%s0 + $0x440] sm:$0xff]
  %v152 = vld [vmem:[%s0 + $0x448] sm:$0xff]
  %v153 = vld [vmem:[%s0 + $0x450] sm:$0xff]
  %v154 = vld [vmem:[%s0 + $0x458] sm:$0xff]
  %v155 = vld [vmem:[%s0 + $0x460] sm:$0xff]
  %v156 = vld [vmem:[%s0 + $0x468] sm:$0xff]
  %v157 = vld [vmem:[%s0 + $0x470] sm:$0xff]
  %v158 = vld [vmem:[%s0 + $0x478] sm:$0xff]
  %v159 = vld [vmem:[%s1] sm:$0xf]
  %v160 = vld [vmem:[%s1 + $0x4] sm:$0xf]
  %v161 = vld [vmem:[%s1 + $0x8] sm:$0xf]
  %v162 = vld [vmem:[%s1 + $0xc] sm:$0xf]
  %v163 = vld [vmem:[%s1 + $0x10] sm:$0xf]
  %v164 = vld [vmem:[%s1 + $0x14] sm:$0xf]
  %v165 = vld [vmem:[%s1 + $0x18] sm:$0xf]
  %v166 = vld [vmem:[%s1 + $0x1c] sm:$0xf]
  %v167 = vld [vmem:[%s1 + $0x20] sm:$0xf]
  %v168 = vld [vmem:[%s1 + $0x24] sm:$0xf]
  %v169 = vld [vmem:[%s1 + $0x28] sm:$0xf]
  %v170 = vld [vmem:[%s1 + $0x2c] sm:$0xf]
  %v171 = vld [vmem:[%s1 + $0x30] sm:$0xf]
  %v172 = vld [vmem:[%s1 + $0x34] sm:$0xf]
  %v173 = vld [vmem:[%s1 + $0x38] sm:$0xf]
  %v174 = vld [vmem:[%s1 + $0x3c] sm:$0xf]
  %v175 = vld [vmem:[%s1 + $0x40] sm:$0xf]
  %v176 = vld [vmem:[%s1 + $0x44] sm:$0xf]
  %v177 = vld [vmem:[%s1 + $0x48] sm:$0xf]
  %v178 = vld [vmem:[%s1 + $0x4c] sm:$0xf]
  %v179 = vld [vmem:[%s1 + $0x50] sm:$0xf]
  %v180 = vld [vmem:[%s1 + $0x54] sm:$0xf]
  %v181 = vld [vmem:[%s1 + $0x58] sm:$0xf]
  %v182 = vld [vmem:[%s1 + $0x5c] sm:$0xf]
  %v183 = vld [vmem:[%s1 + $0x60] sm:$0xf]
  %v184 = vld [vmem:[%s1 + $0x64] sm:$0xf]
  %v185 = vld [vmem:[%s1 + $0x68] sm:$0xf]
  %v186 = vld [vmem:[%s1 + $0x6c] sm:$0xf]
  %v187 = vld [vmem:[%s1 + $0x70] sm:$0xf]
  %v188 = vld [vmem:[%s1 + $0x74] sm:$0xf]
  %v189 = vld [vmem:[%s1 + $0x78] sm:$0xf]
  %v190 = vld [vmem:[%s1 + $0x7c] sm:$0xf]
  %v191 = vld [vmem:[%s1 + $0x80] sm:$0xf]
  %v192 = vld [vmem:[%s1 + $0x84] sm:$0xf]
  %v193 = vld [vmem:[%s1 + $0x88] sm:$0xf]
  %v194 = vld [vmem:[%s1 + $0x8c] sm:$0xf]
  %v195 = vld [vmem:[%s1 + $0x90] sm:$0xf]
  %v196 = vld [vmem:[%s1 + $0x94] sm:$0xf]
  %v197 = vld [vmem:[%s1 + $0x98] sm:$0xf]
  %v198 = vld [vmem:[%s1 + $0x9c] sm:$0xf]
  %v199 = vld [vmem:[%s1 + $0xa0] sm:$0xf]
  %v200 = vld [vmem:[%s1 + $0xa4] sm:$0xf]
  %v201 = vld [vmem:[%s1 + $0xa8] sm:$0xf]
  %v202 = vld [vmem:[%s1 + $0xac] sm:$0xf]
  %v203 = vld [vmem:[%s1 + $0xb0] sm:$0xf]
  %v204 = vld [vmem:[%s1 + $0xb4] sm:$0xf]
  %v205 = vld [vmem:[%s1 + $0xb8] sm:$0xf]
  %v206 = vld [vmem:[%s1 + $0xbc] sm:$0xf]
  %v207 = vld [vmem:[%s1 + $0xc0] sm:$0xf]
  %v208 = vld [vmem:[%s1 + $0xc4] sm:$0xf]
  %v209 = vld [vmem:[%s1 + $0xc8] sm:$0xf]
  %v210 = vld [vmem:[%s1 + $0xcc] sm:$0xf]
  %v211 = vld [vmem:[%s1 + $0xd0] sm:$0xf]
  %v212 = vld [vmem:[%s1 + $0xd4] sm:$0xf]
  %v213 = vld [vmem:[%s1 + $0xd8] sm:$0xf]
  %v214 = vld [vmem:[%s1 + $0xdc] sm:$0xf]
  %v215 = vld [vmem:[%s1 + $0xe0] sm:$0xf]
  %v216 = vld [vmem:[%s1 + $0xe4] sm:$0xf]
  %v217 = vld [vmem:[%s1 + $0xe8] sm:$0xf]
  %v218 = vld [vmem:[%s1 + $0xec] sm:$0xf]
  %v219 = vld [vmem:[%s1 + $0xf0] sm:$0xf]
  %v220 = vld [vmem:[%s1 + $0xf4] sm:$0xf]
  %v221 = vld [vmem:[%s1 + $0xf8] sm:$0xf]
  %v222 = vld [vmem:[%s1 + $0xfc] sm:$0xf]
  %v223 = vld [vmem:[%s1 + $0x100] sm:$0xf]
  %v224 = vld [vmem:[%s1 + $0x104] sm:$0xf]
  %v225 = vld [vmem:[%s1 + $0x108] sm:$0xf]
  %v226 = vld [vmem:[%s1 + $0x10c] sm:$0xf]
  %v227 = vld [vmem:[%s1 + $0x110] sm:$0xf]
  %v228 = vld [vmem:[%s1 + $0x114] sm:$0xf]
  %v229 = vld [vmem:[%s1 + $0x118] sm:$0xf]
  %v230 = vld [vmem:[%s1 + $0x11c] sm:$0xf]
  %v231 = vld [vmem:[%s1 + $0x120] sm:$0xf]
  %v232 = vld [vmem:[%s1 + $0x124] sm:$0xf]
  %v233 = vld [vmem:[%s1 + $0x128] sm:$0xf]
  %v234 = vld [vmem:[%s1 + $0x12c] sm:$0xf]
  %v235 = vld [vmem:[%s1 + $0x130] sm:$0xf]
  %v236 = vld [vmem:[%s1 + $0x134] sm:$0xf]
  %v237 = vld [vmem:[%s1 + $0x138] sm:$0xf]
  %v238 = vld [vmem:[%s1 + $0x13c] sm:$0xf]
  %v239 = vld [vmem:[%s1 + $0x140] sm:$0xf]
  %v240 = vld [vmem:[%s1 + $0x144] sm:$0xf]
  %v241 = vld [vmem:[%s1 + $0x148] sm:$0xf]
  %v242 = vld [vmem:[%s1 + $0x14c] sm:$0xf]
  %v243 = vld [vmem:[%s1 + $0x150] sm:$0xf]
  %v244 = vld [vmem:[%s1 + $0x154] sm:$0xf]
  %v245 = vld [vmem:[%s1 + $0x158] sm:$0xf]
  %v246 = vld [vmem:[%s1 + $0x15c] sm:$0xf]
  %v247 = vld [vmem:[%s1 + $0x160] sm:$0xf]
  %v248 = vld [vmem:[%s1 + $0x164] sm:$0xf]
  %v249 = vld [vmem:[%s1 + $0x168] sm:$0xf]
  %v250 = vld [vmem:[%s1 + $0x16c] sm:$0xf]
  %v251 = vld [vmem:[%s1 + $0x170] sm:$0xf]
  %v252 = vld [vmem:[%s1 + $0x174] sm:$0xf]
  %v253 = vld [vmem:[%s1 + $0x178] sm:$0xf]
  %v254 = vld [vmem:[%s1 + $0x17c] sm:$0xf]
  %v255 = vld [vmem:[%s1 + $0x180] sm:$0xf]
  %v256 = vld [vmem:[%s1 + $0x184] sm:$0xf]
  %v257 = vld [vmem:[%s1 + $0x188] sm:$0xf]
  %v258 = vld [vmem:[%s1 + $0x18c] sm:$0xf]
  %v259 = vld [vmem:[%s1 + $0x190] sm:$0xf]
  %v260 = vld [vmem:[%s1 + $0x194] sm:$0xf]
  %v261 = vld [vmem:[%s1 + $0x198] sm:$0xf]
  %v262 = vld [vmem:[%s1 + $0x19c] sm:$0xf]
  %v263 = vld [vmem:[%s1 + $0x1a0] sm:$0xf]
  %v264 = vld [vmem:[%s1 + $0x1a4] sm:$0xf]
  %v265 = vld [vmem:[%s1 + $0x1a8] sm:$0xf]
  %v266 = vld [vmem:[%s1 + $0x1ac] sm:$0xf]
  %v267 = vld [vmem:[%s1 + $0x1b0] sm:$0xf]
  %v268 = vld [vmem:[%s1 + $0x1b4] sm:$0xf]
  %v269 = vld [vmem:[%s1 + $0x1b8] sm:$0xf]
  %v270 = vld [vmem:[%s1 + $0x1bc] sm:$0xf]
  %v271 = vld [vmem:[%s1 + $0x1c0] sm:$0xf]
  %v272 = vld [vmem:[%s1 + $0x1c4] sm:$0xf]
  %v273 = vld [vmem:[%s1 + $0x1c8] sm:$0xf]
  %v274 = vld [vmem:[%s1 + $0x1cc] sm:$0xf]
  %v275 = vld [vmem:[%s1 + $0x1d0] sm:$0xf]
  %v276 = vld [vmem:[%s1 + $0x1d4] sm:$0xf]
  %v277 = vld [vmem:[%s1 + $0x1d8] sm:$0xf]
  %v278 = vld [vmem:[%s1 + $0x1dc] sm:$0xf]
  %v279 = vld [vmem:[%s1 + $0x1e0] sm:$0xf]
  %v280 = vld [vmem:[%s1 + $0x1e4] sm:$0xf]
  %v281 = vld [vmem:[%s1 + $0x1e8] sm:$0xf]
  %v282 = vld [vmem:[%s1 + $0x1ec] sm:$0xf]
  %v283 = vld [vmem:[%s1 + $0x1f0] sm:$0xf]
  %v284 = vld [vmem:[%s1 + $0x1f4] sm:$0xf]
  %v285 = vld [vmem:[%s1 + $0x1f8] sm:$0xf]
  %v286 = vld [vmem:[%s1 + $0x1fc] sm:$0xf]
  %v287 = vld [vmem:[%s1 + $0x200] sm:$0xf]
  %v288 = vld [vmem:[%s1 + $0x204] sm:$0xf]
  %v289 = vld [vmem:[%s1 + $0x208] sm:$0xf]
  %v290 = vld [vmem:[%s1 + $0x20c] sm:$0xf]
  %v291 = vld [vmem:[%s1 + $0x210] sm:$0xf]
  %v292 = vld [vmem:[%s1 + $0x214] sm:$0xf]
  %v293 = vld [vmem:[%s1 + $0x218] sm:$0xf]
  %v294 = vld [vmem:[%s1 + $0x21c] sm:$0xf]
  %v295 = vld [vmem:[%s1 + $0x220] sm:$0xf]
  %v296 = vld [vmem:[%s1 + $0x224] sm:$0xf]
  %v297 = vld [vmem:[%s1 + $0x228] sm:$0xf]
  %v298 = vld [vmem:[%s1 + $0x22c] sm:$0xf]
  %v299 = vld [vmem:[%s1 + $0x230] sm:$0xf]
  %v300 = vld [vmem:[%s1 + $0x234] sm:$0xf]
  %v301 = vld [vmem:[%s1 + $0x238] sm:$0xf]
  %v302 = vld [vmem:[%s1 + $0x23c] sm:$0xf]
  %v303 = vld [vmem:[%s1 + $0x240] sm:$0xf]
  %v304 = vld [vmem:[%s1 + $0x244] sm:$0xf]
  %v305 = vld [vmem:[%s1 + $0x248] sm:$0xf]
  %v306 = vld [vmem:[%s1 + $0x24c] sm:$0xf]
  %v307 = vld [vmem:[%s1 + $0x250] sm:$0xf]
  %v308 = vld [vmem:[%s1 + $0x254] sm:$0xf]
  %v309 = vld [vmem:[%s1 + $0x258] sm:$0xf]
  %v310 = vld [vmem:[%s1 + $0x25c] sm:$0xf]
  %v311 = vld [vmem:[%s1 + $0x260] sm:$0xf]
  %v312 = vld [vmem:[%s1 + $0x264] sm:$0xf]
  %v313 = vld [vmem:[%s1 + $0x268] sm:$0xf]
  %v314 = vld [vmem:[%s1 + $0x26c] sm:$0xf]
  %v315 = vld [vmem:[%s1 + $0x270] sm:$0xf]
  %v316 = vld [vmem:[%s1 + $0x274] sm:$0xf]
  %v317 = vld [vmem:[%s1 + $0x278] sm:$0xf]
  %v318 = vld [vmem:[%s1 + $0x27c] sm:$0xf]
  %v319 = vld [vmem:[%s1 + $0x280] sm:$0xf]
  %v320 = vld [vmem:[%s1 + $0x284] sm:$0xf]
  %v321 = vld [vmem:[%s1 + $0x288] sm:$0xf]
  %v322 = vld [vmem:[%s1 + $0x28c] sm:$0xf]
  %v323 = vld [vmem:[%s1 + $0x290] sm:$0xf]
  %v324 = vld [vmem:[%s1 + $0x294] sm:$0xf]
  %v325 = vld [vmem:[%s1 + $0x298] sm:$0xf]
  %v326 = vld [vmem:[%s1 + $0x29c] sm:$0xf]
  %v327 = vld [vmem:[%s1 + $0x2a0] sm:$0xf]
  %v328 = vld [vmem:[%s1 + $0x2a4] sm:$0xf]
  %v329 = vld [vmem:[%s1 + $0x2a8] sm:$0xf]
  %v330 = vld [vmem:[%s1 + $0x2ac] sm:$0xf]
  %v331 = vld [vmem:[%s1 + $0x2b0] sm:$0xf]
  %v332 = vld [vmem:[%s1 + $0x2b4] sm:$0xf]
  %v333 = vld [vmem:[%s1 + $0x2b8] sm:$0xf]
  %v334 = vld [vmem:[%s1 + $0x2bc] sm:$0xf]
  %v335 = vld [vmem:[%s1 + $0x2c0] sm:$0xf]
  %v336 = vld [vmem:[%s1 + $0x2c4] sm:$0xf]
  %v337 = vld [vmem:[%s1 + $0x2c8] sm:$0xf]
  %v338 = vld [vmem:[%s1 + $0x2cc] sm:$0xf]
  %v339 = vld [vmem:[%s1 + $0x2d0] sm:$0xf]
  %v340 = vld [vmem:[%s1 + $0x2d4] sm:$0xf]
  %v341 = vld [vmem:[%s1 + $0x2d8] sm:$0xf]
  %v342 = vld [vmem:[%s1 + $0x2dc] sm:$0xf]
  %v343 = vld [vmem:[%s1 + $0x2e0] sm:$0xf]
  %v344 = vld [vmem:[%s1 + $0x2e4] sm:$0xf]
  %v345 = vld [vmem:[%s1 + $0x2e8] sm:$0xf]
  %v346 = vld [vmem:[%s1 + $0x2ec] sm:$0xf]
  %v347 = vld [vmem:[%s1 + $0x2f0] sm:$0xf]
  %v348 = vld [vmem:[%s1 + $0x2f4] sm:$0xf]
  %v349 = vld [vmem:[%s1 + $0x2f8] sm:$0xf]
  %v350 = vld [vmem:[%s1 + $0x2fc] sm:$0xf]
  %v351 = vld [vmem:[%s1 + $0x300] sm:$0xf]
  %v352 = vld [vmem:[%s1 + $0x304] sm:$0xf]
  %v353 = vld [vmem:[%s1 + $0x308] sm:$0xf]
  %v354 = vld [vmem:[%s1 + $0x30c] sm:$0xf]
  %v355 = vld [vmem:[%s1 + $0x310] sm:$0xf]
  %v356 = vld [vmem:[%s1 + $0x314] sm:$0xf]
  %v357 = vld [vmem:[%s1 + $0x318] sm:$0xf]
  %v358 = vld [vmem:[%s1 + $0x31c] sm:$0xf]
  %v359 = vld [vmem:[%s1 + $0x320] sm:$0xf]
  %v360 = vld [vmem:[%s1 + $0x324] sm:$0xf]
  %v361 = vld [vmem:[%s1 + $0x328] sm:$0xf]
  %v362 = vld [vmem:[%s1 + $0x32c] sm:$0xf]
  %v363 = vld [vmem:[%s1 + $0x330] sm:$0xf]
  %v364 = vld [vmem:[%s1 + $0x334] sm:$0xf]
  %v365 = vld [vmem:[%s1 + $0x338] sm:$0xf]
  %v366 = vld [vmem:[%s1 + $0x33c] sm:$0xf]
  %v367 = vld [vmem:[%s1 + $0x340] sm:$0xf]
  %v368 = vld [vmem:[%s1 + $0x344] sm:$0xf]
  %v369 = vld [vmem:[%s1 + $0x348] sm:$0xf]
  %v370 = vld [vmem:[%s1 + $0x34c] sm:$0xf]
  %v371 = vld [vmem:[%s1 + $0x350] sm:$0xf]
  %v372 = vld [vmem:[%s1 + $0x354] sm:$0xf]
  %v373 = vld [vmem:[%s1 + $0x358] sm:$0xf]
  %v374 = vld [vmem:[%s1 + $0x35c] sm:$0xf]
  %v375 = vld [vmem:[%s1 + $0x360] sm:$0xf]
  %v376 = vld [vmem:[%s1 + $0x364] sm:$0xf]
  %v377 = vld [vmem:[%s1 + $0x368] sm:$0xf]
  %v378 = vld [vmem:[%s1 + $0x36c] sm:$0xf]
  %v379 = vld [vmem:[%s1 + $0x370] sm:$0xf]
  %v380 = vld [vmem:[%s1 + $0x374] sm:$0xf]
  %v381 = vld [vmem:[%s1 + $0x378] sm:$0xf]
  %v382 = vld [vmem:[%s1 + $0x37c] sm:$0xf]
  %v383 = vld [vmem:[%s1 + $0x380] sm:$0xf]
  %v384 = vld [vmem:[%s1 + $0x384] sm:$0xf]
  %v385 = vld [vmem:[%s1 + $0x388] sm:$0xf]
  %v386 = vld [vmem:[%s1 + $0x38c] sm:$0xf]
  %v387 = vld [vmem:[%s1 + $0x390] sm:$0xf]
  %v388 = vld [vmem:[%s1 + $0x394] sm:$0xf]
  %v389 = vld [vmem:[%s1 + $0x398] sm:$0xf]
  %v390 = vld [vmem:[%s1 + $0x39c] sm:$0xf]
  %v391 = vld [vmem:[%s1 + $0x3a0] sm:$0xf]
  %v392 = vld [vmem:[%s1 + $0x3a4] sm:$0xf]
  %v393 = vld [vmem:[%s1 + $0x3a8] sm:$0xf]
  %v394 = vld [vmem:[%s1 + $0x3ac] sm:$0xf]
  %v395 = vld [vmem:[%s1 + $0x3b0] sm:$0xf]
  %v396 = vld [vmem:[%s1 + $0x3b4] sm:$0xf]
  %v397 = vld [vmem:[%s1 + $0x3b8] sm:$0xf]
  %v398 = vld [vmem:[%s1 + $0x3bc] sm:$0xf]
  %v399 = vld [vmem:[%s1 + $0x3c0] sm:$0xf]
  %v400 = vld [vmem:[%s1 + $0x3c4] sm:$0xf]
  %v401 = vld [vmem:[%s1 + $0x3c8] sm:$0xf]
  %v402 = vld [vmem:[%s1 + $0x3cc] sm:$0xf]
  %v403 = vld [vmem:[%s1 + $0x3d0] sm:$0xf]
  %v404 = vld [vmem:[%s1 + $0x3d4] sm:$0xf]
  %v405 = vld [vmem:[%s1 + $0x3d8] sm:$0xf]
  %v406 = vld [vmem:[%s1 + $0x3dc] sm:$0xf]
  %v407 = vld [vmem:[%s1 + $0x3e0] sm:$0xf]
  %v408 = vld [vmem:[%s1 + $0x3e4] sm:$0xf]
  %v409 = vld [vmem:[%s1 + $0x3e8] sm:$0xf]
  %v410 = vld [vmem:[%s1 + $0x3ec] sm:$0xf]
  %v411 = vld [vmem:[%s1 + $0x3f0] sm:$0xf]
  %v412 = vld [vmem:[%s1 + $0x3f4] sm:$0xf]
  %v413 = vld [vmem:[%s1 + $0x3f8] sm:$0xf]
  %v414 = vld [vmem:[%s1 + $0x3fc] sm:$0xf]
  %v415 = vld [vmem:[%s1 + $0x400] sm:$0xf]
  %v416 = vld [vmem:[%s1 + $0x404] sm:$0xf]
  %v417 = vld [vmem:[%s1 + $0x408] sm:$0xf]
  %v418 = vld [vmem:[%s1 + $0x40c] sm:$0xf]
  %v419 = vld [vmem:[%s1 + $0x410] sm:$0xf]
  %v420 = vld [vmem:[%s1 + $0x414] sm:$0xf]
  %v421 = vld [vmem:[%s1 + $0x418] sm:$0xf]
  %v422 = vld [vmem:[%s1 + $0x41c] sm:$0xf]
  %v423 = vld [vmem:[%s1 + $0x420] sm:$0xf]
  %v424 = vld [vmem:[%s1 + $0x424] sm:$0xf]
  %v425 = vld [vmem:[%s1 + $0x428] sm:$0xf]
  %v426 = vld [vmem:[%s1 + $0x42c] sm:$0xf]
  %v427 = vld [vmem:[%s1 + $0x430] sm:$0xf]
  %v428 = vld [vmem:[%s1 + $0x434] sm:$0xf]
  %v429 = vld [vmem:[%s1 + $0x438] sm:$0xf]
  %v430 = vld [vmem:[%s1 + $0x43c] sm:$0xf]
  %v431 = vld [vmem:[%s1 + $0x440] sm:$0xf]
  %v432 = vld [vmem:[%s1 + $0x444] sm:$0xf]
  %v433 = vld [vmem:[%s1 + $0x448] sm:$0xf]
  %v434 = vld [vmem:[%s2] sm:$0x1]
  %v436 = vlaneseq
  %v437 = vshrl.u32 %v436, 7
  %v438 = vsub.s32 0, %v437
  %v439 = vrot.slane %v434, %v438
  %v585 = vunpack.c.l.b16 %v15
  %v586 = vunpack.c.h.b16 %v15
  %v587 = vunpack.c.l.b16 %v16
  %v588 = vunpack.c.h.b16 %v16
  %v589 = vunpack.c.l.b16 %v17
  %v590 = vunpack.c.h.b16 %v17
  %v591 = vunpack.c.l.b16 %v18
  %v592 = vunpack.c.h.b16 %v18
  %v593 = vunpack.c.l.b16 %v19
  %v594 = vunpack.c.h.b16 %v19
  %v595 = vunpack.c.l.b16 %v20
  %v596 = vunpack.c.h.b16 %v20
  %v597 = vunpack.c.l.b16 %v21
  %v598 = vunpack.c.h.b16 %v21
  %v599 = vunpack.c.l.b16 %v22
  %v600 = vunpack.c.h.b16 %v22
  %v601 = vunpack.c.l.b16 %v23
  %v602 = vunpack.c.h.b16 %v23
  %v603 = vunpack.c.l.b16 %v24
  %v604 = vunpack.c.h.b16 %v24
  %v605 = vunpack.c.l.b16 %v25
  %v606 = vunpack.c.h.b16 %v25
  %v607 = vunpack.c.l.b16 %v26
  %v608 = vunpack.c.h.b16 %v26
  %v609 = vunpack.c.l.b16 %v27
  %v610 = vunpack.c.h.b16 %v27
  %v611 = vunpack.c.l.b16 %v28
  %v612 = vunpack.c.h.b16 %v28
  %v613 = vunpack.c.l.b16 %v29
  %v614 = vunpack.c.h.b16 %v29
  %v615 = vunpack.c.l.b16 %v30
  %v616 = vunpack.c.h.b16 %v30
  %v617 = vunpack.c.l.b16 %v31
  %v618 = vunpack.c.h.b16 %v31
  %v619 = vunpack.c.l.b16 %v32
  %v620 = vunpack.c.h.b16 %v32
  %v621 = vunpack.c.l.b16 %v33
  %v622 = vunpack.c.h.b16 %v33
  %v623 = vunpack.c.l.b16 %v34
  %v624 = vunpack.c.h.b16 %v34
  %v625 = vunpack.c.l.b16 %v35
  %v626 = vunpack.c.h.b16 %v35
  %v627 = vunpack.c.l.b16 %v36
  %v628 = vunpack.c.h.b16 %v36
  %v629 = vunpack.c.l.b16 %v37
  %v630 = vunpack.c.h.b16 %v37
  %v631 = vunpack.c.l.b16 %v38
  %v632 = vunpack.c.h.b16 %v38
  %v633 = vunpack.c.l.b16 %v39
  %v634 = vunpack.c.h.b16 %v39
  %v635 = vunpack.c.l.b16 %v40
  %v636 = vunpack.c.h.b16 %v40
  %v637 = vunpack.c.l.b16 %v41
  %v638 = vunpack.c.h.b16 %v41
  %v639 = vunpack.c.l.b16 %v42
  %v640 = vunpack.c.h.b16 %v42
  %v641 = vunpack.c.l.b16 %v43
  %v642 = vunpack.c.h.b16 %v43
  %v643 = vunpack.c.l.b16 %v44
  %v644 = vunpack.c.h.b16 %v44
  %v645 = vunpack.c.l.b16 %v45
  %v646 = vunpack.c.h.b16 %v45
  %v647 = vunpack.c.l.b16 %v46
  %v648 = vunpack.c.h.b16 %v46
  %v649 = vunpack.c.l.b16 %v47
  %v650 = vunpack.c.h.b16 %v47
  %v651 = vunpack.c.l.b16 %v48
  %v652 = vunpack.c.h.b16 %v48
  %v653 = vunpack.c.l.b16 %v49
  %v654 = vunpack.c.h.b16 %v49
  %v655 = vunpack.c.l.b16 %v50
  %v656 = vunpack.c.h.b16 %v50
  %v657 = vunpack.c.l.b16 %v51
  %v658 = vunpack.c.h.b16 %v51
  %v659 = vunpack.c.l.b16 %v52
  %v660 = vunpack.c.h.b16 %v52
  %v661 = vunpack.c.l.b16 %v53
  %v662 = vunpack.c.h.b16 %v53
  %v663 = vunpack.c.l.b16 %v54
  %v664 = vunpack.c.h.b16 %v54
  %v665 = vunpack.c.l.b16 %v55
  %v666 = vunpack.c.h.b16 %v55
  %v667 = vunpack.c.l.b16 %v56
  %v668 = vunpack.c.h.b16 %v56
  %v669 = vunpack.c.l.b16 %v57
  %v670 = vunpack.c.h.b16 %v57
  %v671 = vunpack.c.l.b16 %v58
  %v672 = vunpack.c.h.b16 %v58
  %v673 = vunpack.c.l.b16 %v59
  %v674 = vunpack.c.h.b16 %v59
  %v675 = vunpack.c.l.b16 %v60
  %v676 = vunpack.c.h.b16 %v60
  %v677 = vunpack.c.l.b16 %v61
  %v678 = vunpack.c.h.b16 %v61
  %v679 = vunpack.c.l.b16 %v62
  %v680 = vunpack.c.h.b16 %v62
  %v681 = vunpack.c.l.b16 %v63
  %v682 = vunpack.c.h.b16 %v63
  %v683 = vunpack.c.l.b16 %v64
  %v684 = vunpack.c.h.b16 %v64
  %v685 = vunpack.c.l.b16 %v65
  %v686 = vunpack.c.h.b16 %v65
  %v687 = vunpack.c.l.b16 %v66
  %v688 = vunpack.c.h.b16 %v66
  %v689 = vunpack.c.l.b16 %v67
  %v690 = vunpack.c.h.b16 %v67
  %v691 = vunpack.c.l.b16 %v68
  %v692 = vunpack.c.h.b16 %v68
  %v693 = vunpack.c.l.b16 %v69
  %v694 = vunpack.c.h.b16 %v69
  %v695 = vunpack.c.l.b16 %v70
  %v696 = vunpack.c.h.b16 %v70
  %v697 = vunpack.c.l.b16 %v71
  %v698 = vunpack.c.h.b16 %v71
  %v699 = vunpack.c.l.b16 %v72
  %v700 = vunpack.c.h.b16 %v72
  %v701 = vunpack.c.l.b16 %v73
  %v702 = vunpack.c.h.b16 %v73
  %v703 = vunpack.c.l.b16 %v74
  %v704 = vunpack.c.h.b16 %v74
  %v705 = vunpack.c.l.b16 %v75
  %v706 = vunpack.c.h.b16 %v75
  %v707 = vunpack.c.l.b16 %v76
  %v708 = vunpack.c.h.b16 %v76
  %v709 = vunpack.c.l.b16 %v77
  %v710 = vunpack.c.h.b16 %v77
  %v711 = vunpack.c.l.b16 %v78
  %v712 = vunpack.c.h.b16 %v78
  %v713 = vunpack.c.l.b16 %v79
  %v714 = vunpack.c.h.b16 %v79
  %v715 = vunpack.c.l.b16 %v80
  %v716 = vunpack.c.h.b16 %v80
  %v717 = vunpack.c.l.b16 %v81
  %v718 = vunpack.c.h.b16 %v81
  %v719 = vunpack.c.l.b16 %v82
  %v720 = vunpack.c.h.b16 %v82
  %v721 = vunpack.c.l.b16 %v83
  %v722 = vunpack.c.h.b16 %v83
  %v723 = vunpack.c.l.b16 %v84
  %v724 = vunpack.c.h.b16 %v84
  %v725 = vunpack.c.l.b16 %v85
  %v726 = vunpack.c.h.b16 %v85
  %v727 = vunpack.c.l.b16 %v86
  %v728 = vunpack.c.h.b16 %v86
  %v729 = vunpack.c.l.b16 %v87
  %v730 = vunpack.c.h.b16 %v87
  %v731 = vunpack.c.l.b16 %v88
  %v732 = vunpack.c.h.b16 %v88
  %v733 = vunpack.c.l.b16 %v89
  %v734 = vunpack.c.h.b16 %v89
  %v735 = vunpack.c.l.b16 %v90
  %v736 = vunpack.c.h.b16 %v90
  %v737 = vunpack.c.l.b16 %v91
  %v738 = vunpack.c.h.b16 %v91
  %v739 = vunpack.c.l.b16 %v92
  %v740 = vunpack.c.h.b16 %v92
  %v741 = vunpack.c.l.b16 %v93
  %v742 = vunpack.c.h.b16 %v93
  %v743 = vunpack.c.l.b16 %v94
  %v744 = vunpack.c.h.b16 %v94
  %v745 = vunpack.c.l.b16 %v95
  %v746 = vunpack.c.h.b16 %v95
  %v747 = vunpack.c.l.b16 %v96
  %v748 = vunpack.c.h.b16 %v96
  %v749 = vunpack.c.l.b16 %v97
  %v750 = vunpack.c.h.b16 %v97
  %v751 = vunpack.c.l.b16 %v98
  %v752 = vunpack.c.h.b16 %v98
  %v753 = vunpack.c.l.b16 %v99
  %v754 = vunpack.c.h.b16 %v99
  %v755 = vunpack.c.l.b16 %v100
  %v756 = vunpack.c.h.b16 %v100
  %v757 = vunpack.c.l.b16 %v101
  %v758 = vunpack.c.h.b16 %v101
  %v759 = vunpack.c.l.b16 %v102
  %v760 = vunpack.c.h.b16 %v102
  %v761 = vunpack.c.l.b16 %v103
  %v762 = vunpack.c.h.b16 %v103
  %v763 = vunpack.c.l.b16 %v104
  %v764 = vunpack.c.h.b16 %v104
  %v765 = vunpack.c.l.b16 %v105
  %v766 = vunpack.c.h.b16 %v105
  %v767 = vunpack.c.l.b16 %v106
  %v768 = vunpack.c.h.b16 %v106
  %v769 = vunpack.c.l.b16 %v107
  %v770 = vunpack.c.h.b16 %v107
  %v771 = vunpack.c.l.b16 %v108
  %v772 = vunpack.c.h.b16 %v108
  %v773 = vunpack.c.l.b16 %v109
  %v774 = vunpack.c.h.b16 %v109
  %v775 = vunpack.c.l.b16 %v110
  %v776 = vunpack.c.h.b16 %v110
  %v777 = vunpack.c.l.b16 %v111
  %v778 = vunpack.c.h.b16 %v111
  %v779 = vunpack.c.l.b16 %v112
  %v780 = vunpack.c.h.b16 %v112
  %v781 = vunpack.c.l.b16 %v113
  %v782 = vunpack.c.h.b16 %v113
  %v783 = vunpack.c.l.b16 %v114
  %v784 = vunpack.c.h.b16 %v114
  %v785 = vunpack.c.l.b16 %v115
  %v786 = vunpack.c.h.b16 %v115
  %v787 = vunpack.c.l.b16 %v116
  %v788 = vunpack.c.h.b16 %v116
  %v789 = vunpack.c.l.b16 %v117
  %v790 = vunpack.c.h.b16 %v117
  %v791 = vunpack.c.l.b16 %v118
  %v792 = vunpack.c.h.b16 %v118
  %v793 = vunpack.c.l.b16 %v119
  %v794 = vunpack.c.h.b16 %v119
  %v795 = vunpack.c.l.b16 %v120
  %v796 = vunpack.c.h.b16 %v120
  %v797 = vunpack.c.l.b16 %v121
  %v798 = vunpack.c.h.b16 %v121
  %v799 = vunpack.c.l.b16 %v122
  %v800 = vunpack.c.h.b16 %v122
  %v801 = vunpack.c.l.b16 %v123
  %v802 = vunpack.c.h.b16 %v123
  %v803 = vunpack.c.l.b16 %v124
  %v804 = vunpack.c.h.b16 %v124
  %v805 = vunpack.c.l.b16 %v125
  %v806 = vunpack.c.h.b16 %v125
  %v807 = vunpack.c.l.b16 %v126
  %v808 = vunpack.c.h.b16 %v126
  %v809 = vunpack.c.l.b16 %v127
  %v810 = vunpack.c.h.b16 %v127
  %v811 = vunpack.c.l.b16 %v128
  %v812 = vunpack.c.h.b16 %v128
  %v813 = vunpack.c.l.b16 %v129
  %v814 = vunpack.c.h.b16 %v129
  %v815 = vunpack.c.l.b16 %v130
  %v816 = vunpack.c.h.b16 %v130
  %v817 = vunpack.c.l.b16 %v131
  %v818 = vunpack.c.h.b16 %v131
  %v819 = vunpack.c.l.b16 %v132
  %v820 = vunpack.c.h.b16 %v132
  %v821 = vunpack.c.l.b16 %v133
  %v822 = vunpack.c.h.b16 %v133
  %v823 = vunpack.c.l.b16 %v134
  %v824 = vunpack.c.h.b16 %v134
  %v825 = vunpack.c.l.b16 %v135
  %v826 = vunpack.c.h.b16 %v135
  %v827 = vunpack.c.l.b16 %v136
  %v828 = vunpack.c.h.b16 %v136
  %v829 = vunpack.c.l.b16 %v137
  %v830 = vunpack.c.h.b16 %v137
  %v831 = vunpack.c.l.b16 %v138
  %v832 = vunpack.c.h.b16 %v138
  %v833 = vunpack.c.l.b16 %v139
  %v834 = vunpack.c.h.b16 %v139
  %v835 = vunpack.c.l.b16 %v140
  %v836 = vunpack.c.h.b16 %v140
  %v837 = vunpack.c.l.b16 %v141
  %v838 = vunpack.c.h.b16 %v141
  %v839 = vunpack.c.l.b16 %v142
  %v840 = vunpack.c.h.b16 %v142
  %v841 = vunpack.c.l.b16 %v143
  %v842 = vunpack.c.h.b16 %v143
  %v843 = vunpack.c.l.b16 %v144
  %v844 = vunpack.c.h.b16 %v144
  %v845 = vunpack.c.l.b16 %v145
  %v846 = vunpack.c.h.b16 %v145
  %v847 = vunpack.c.l.b16 %v146
  %v848 = vunpack.c.h.b16 %v146
  %v849 = vunpack.c.l.b16 %v147
  %v850 = vunpack.c.h.b16 %v147
  %v851 = vunpack.c.l.b16 %v148
  %v852 = vunpack.c.h.b16 %v148
  %v853 = vunpack.c.l.b16 %v149
  %v854 = vunpack.c.h.b16 %v149
  %v855 = vunpack.c.l.b16 %v150
  %v856 = vunpack.c.h.b16 %v150
  %v857 = vunpack.c.l.b16 %v151
  %v858 = vunpack.c.h.b16 %v151
  %v859 = vunpack.c.l.b16 %v152
  %v860 = vunpack.c.h.b16 %v152
  %v861 = vunpack.c.l.b16 %v153
  %v862 = vunpack.c.h.b16 %v153
  %v863 = vunpack.c.l.b16 %v154
  %v864 = vunpack.c.h.b16 %v154
  %v865 = vunpack.c.l.b16 %v155
  %v866 = vunpack.c.h.b16 %v155
  %v867 = vunpack.c.l.b16 %v156
  %v868 = vunpack.c.h.b16 %v156
  %v869 = vunpack.c.l.b16 %v157
  %v870 = vunpack.c.h.b16 %v157
  %v871 = vunpack.c.l.b16 %v158
  %v872 = vunpack.c.h.b16 %v158
  %v873 = vpack.c.b16 %v603, %v585
  %v874 = vpack.c.b16 %v604, %v586
  %v875 = vpack.c.b16 %v605, %v587
  %v876 = vpack.c.b16 %v606, %v588
  %v877 = vpack.c.b16 %v607, %v589
  %v878 = vpack.c.b16 %v608, %v590
  %v879 = vpack.c.b16 %v609, %v591
  %v880 = vpack.c.b16 %v610, %v592
  %v881 = vpack.c.b16 %v611, %v593
  %v882 = vpack.c.b16 %v612, %v594
  %v883 = vpack.c.b16 %v613, %v595
  %v884 = vpack.c.b16 %v614, %v596
  %v885 = vpack.c.b16 %v615, %v597
  %v886 = vpack.c.b16 %v616, %v598
  %v887 = vpack.c.b16 %v617, %v599
  %v888 = vpack.c.b16 %v618, %v600
  %v889 = vpack.c.b16 %v619, %v601
  %v890 = vpack.c.b16 %v620, %v602
  %v891 = vpack.c.b16 %v639, %v621
  %v892 = vpack.c.b16 %v640, %v622
  %v893 = vpack.c.b16 %v641, %v623
  %v894 = vpack.c.b16 %v642, %v624
  %v895 = vpack.c.b16 %v643, %v625
  %v896 = vpack.c.b16 %v644, %v626
  %v897 = vpack.c.b16 %v645, %v627
  %v898 = vpack.c.b16 %v646, %v628
  %v899 = vpack.c.b16 %v647, %v629
  %v900 = vpack.c.b16 %v648, %v630
  %v901 = vpack.c.b16 %v649, %v631
  %v902 = vpack.c.b16 %v650, %v632
  %v903 = vpack.c.b16 %v651, %v633
  %v904 = vpack.c.b16 %v652, %v634
  %v905 = vpack.c.b16 %v653, %v635
  %v906 = vpack.c.b16 %v654, %v636
  %v907 = vpack.c.b16 %v655, %v637
  %v908 = vpack.c.b16 %v656, %v638
  %v909 = vpack.c.b16 %v675, %v657
  %v910 = vpack.c.b16 %v676, %v658
  %v911 = vpack.c.b16 %v677, %v659
  %v912 = vpack.c.b16 %v678, %v660
  %v913 = vpack.c.b16 %v679, %v661
  %v914 = vpack.c.b16 %v680, %v662
  %v915 = vpack.c.b16 %v681, %v663
  %v916 = vpack.c.b16 %v682, %v664
  %v917 = vpack.c.b16 %v683, %v665
  %v918 = vpack.c.b16 %v684, %v666
  %v919 = vpack.c.b16 %v685, %v667
  %v920 = vpack.c.b16 %v686, %v668
  %v921 = vpack.c.b16 %v687, %v669
  %v922 = vpack.c.b16 %v688, %v670
  %v923 = vpack.c.b16 %v689, %v671
  %v924 = vpack.c.b16 %v690, %v672
  %v925 = vpack.c.b16 %v691, %v673
  %v926 = vpack.c.b16 %v692, %v674
  %v927 = vpack.c.b16 %v711, %v693
  %v928 = vpack.c.b16 %v712, %v694
  %v929 = vpack.c.b16 %v713, %v695
  %v930 = vpack.c.b16 %v714, %v696
  %v931 = vpack.c.b16 %v715, %v697
  %v932 = vpack.c.b16 %v716, %v698
  %v933 = vpack.c.b16 %v717, %v699
  %v934 = vpack.c.b16 %v718, %v700
  %v935 = vpack.c.b16 %v719, %v701
  %v936 = vpack.c.b16 %v720, %v702
  %v937 = vpack.c.b16 %v721, %v703
  %v938 = vpack.c.b16 %v722, %v704
  %v939 = vpack.c.b16 %v723, %v705
  %v940 = vpack.c.b16 %v724, %v706
  %v941 = vpack.c.b16 %v725, %v707
  %v942 = vpack.c.b16 %v726, %v708
  %v943 = vpack.c.b16 %v727, %v709
  %v944 = vpack.c.b16 %v728, %v710
  %v945 = vpack.c.b16 %v747, %v729
  %v946 = vpack.c.b16 %v748, %v730
  %v947 = vpack.c.b16 %v749, %v731
  %v948 = vpack.c.b16 %v750, %v732
  %v949 = vpack.c.b16 %v751, %v733
  %v950 = vpack.c.b16 %v752, %v734
  %v951 = vpack.c.b16 %v753, %v735
  %v952 = vpack.c.b16 %v754, %v736
  %v953 = vpack.c.b16 %v755, %v737
  %v954 = vpack.c.b16 %v756, %v738
  %v955 = vpack.c.b16 %v757, %v739
  %v956 = vpack.c.b16 %v758, %v740
  %v957 = vpack.c.b16 %v759, %v741
  %v958 = vpack.c.b16 %v760, %v742
  %v959 = vpack.c.b16 %v761, %v743
  %v960 = vpack.c.b16 %v762, %v744
  %v961 = vpack.c.b16 %v763, %v745
  %v962 = vpack.c.b16 %v764, %v746
  %v963 = vpack.c.b16 %v783, %v765
  %v964 = vpack.c.b16 %v784, %v766
  %v965 = vpack.c.b16 %v785, %v767
  %v966 = vpack.c.b16 %v786, %v768
  %v967 = vpack.c.b16 %v787, %v769
  %v968 = vpack.c.b16 %v788, %v770
  %v969 = vpack.c.b16 %v789, %v771
  %v970 = vpack.c.b16 %v790, %v772
  %v971 = vpack.c.b16 %v791, %v773
  %v972 = vpack.c.b16 %v792, %v774
  %v973 = vpack.c.b16 %v793, %v775
  %v974 = vpack.c.b16 %v794, %v776
  %v975 = vpack.c.b16 %v795, %v777
  %v976 = vpack.c.b16 %v796, %v778
  %v977 = vpack.c.b16 %v797, %v779
  %v978 = vpack.c.b16 %v798, %v780
  %v979 = vpack.c.b16 %v799, %v781
  %v980 = vpack.c.b16 %v800, %v782
  %v981 = vpack.c.b16 %v819, %v801
  %v982 = vpack.c.b16 %v820, %v802
  %v983 = vpack.c.b16 %v821, %v803
  %v984 = vpack.c.b16 %v822, %v804
  %v985 = vpack.c.b16 %v823, %v805
  %v986 = vpack.c.b16 %v824, %v806
  %v987 = vpack.c.b16 %v825, %v807
  %v988 = vpack.c.b16 %v826, %v808
  %v989 = vpack.c.b16 %v827, %v809
  %v990 = vpack.c.b16 %v828, %v810
  %v991 = vpack.c.b16 %v829, %v811
  %v992 = vpack.c.b16 %v830, %v812
  %v993 = vpack.c.b16 %v831, %v813
  %v994 = vpack.c.b16 %v832, %v814
  %v995 = vpack.c.b16 %v833, %v815
  %v996 = vpack.c.b16 %v834, %v816
  %v997 = vpack.c.b16 %v835, %v817
  %v998 = vpack.c.b16 %v836, %v818
  %v999 = vpack.c.b16 %v855, %v837
  %v1000 = vpack.c.b16 %v856, %v838
  %v1001 = vpack.c.b16 %v857, %v839
  %v1002 = vpack.c.b16 %v858, %v840
  %v1003 = vpack.c.b16 %v859, %v841
  %v1004 = vpack.c.b16 %v860, %v842
  %v1005 = vpack.c.b16 %v861, %v843
  %v1006 = vpack.c.b16 %v862, %v844
  %v1007 = vpack.c.b16 %v863, %v845
  %v1008 = vpack.c.b16 %v864, %v846
  %v1009 = vpack.c.b16 %v865, %v847
  %v1010 = vpack.c.b16 %v866, %v848
  %v1011 = vpack.c.b16 %v867, %v849
  %v1012 = vpack.c.b16 %v868, %v850
  %v1013 = vpack.c.b16 %v869, %v851
  %v1014 = vpack.c.b16 %v870, %v852
  %v1015 = vpack.c.b16 %v871, %v853
  %v1016 = vpack.c.b16 %v872, %v854
  %v1428 = vunpack.c.l.b16 %v159
  %v1429 = vunpack.c.l.b16 %v160
  %v1430 = vunpack.c.l.b16 %v161
  %v1431 = vunpack.c.l.b16 %v162
  %v1432 = vunpack.c.l.b16 %v163
  %v1433 = vunpack.c.l.b16 %v164
  %v1434 = vunpack.c.l.b16 %v165
  %v1435 = vunpack.c.l.b16 %v166
  %v1436 = vunpack.c.l.b16 %v167
  %v1437 = vunpack.c.l.b16 %v168
  %v1438 = vunpack.c.l.b16 %v169
  %v1439 = vunpack.c.l.b16 %v170
  %v1440 = vunpack.c.l.b16 %v171
  %v1441 = vunpack.c.l.b16 %v172
  %v1442 = vunpack.c.l.b16 %v173
  %v1443 = vunpack.c.l.b16 %v174
  %v1444 = vunpack.c.l.b16 %v175
  %v1445 = vunpack.c.l.b16 %v176
  %v1446 = vunpack.c.l.b16 %v177
  %v1447 = vunpack.c.l.b16 %v178
  %v1448 = vunpack.c.l.b16 %v179
  %v1449 = vunpack.c.l.b16 %v180
  %v1450 = vunpack.c.l.b16 %v181
  %v1451 = vunpack.c.l.b16 %v182
  %v1452 = vunpack.c.l.b16 %v183
  %v1453 = vunpack.c.l.b16 %v184
  %v1454 = vunpack.c.l.b16 %v185
  %v1455 = vunpack.c.l.b16 %v186
  %v1456 = vunpack.c.l.b16 %v187
  %v1457 = vunpack.c.l.b16 %v188
  %v1458 = vunpack.c.l.b16 %v189
  %v1459 = vunpack.c.l.b16 %v190
  %v1460 = vunpack.c.l.b16 %v191
  %v1461 = vunpack.c.l.b16 %v192
  %v1462 = vunpack.c.l.b16 %v193
  %v1463 = vunpack.c.l.b16 %v194
  %v1464 = vunpack.c.l.b16 %v195
  %v1465 = vunpack.c.l.b16 %v196
  %v1466 = vunpack.c.l.b16 %v197
  %v1467 = vunpack.c.l.b16 %v198
  %v1468 = vunpack.c.l.b16 %v199
  %v1469 = vunpack.c.l.b16 %v200
  %v1470 = vunpack.c.l.b16 %v201
  %v1471 = vunpack.c.l.b16 %v202
  %v1472 = vunpack.c.l.b16 %v203
  %v1473 = vunpack.c.l.b16 %v204
  %v1474 = vunpack.c.l.b16 %v205
  %v1475 = vunpack.c.l.b16 %v206
  %v1476 = vunpack.c.l.b16 %v207
  %v1477 = vunpack.c.l.b16 %v208
  %v1478 = vunpack.c.l.b16 %v209
  %v1479 = vunpack.c.l.b16 %v210
  %v1480 = vunpack.c.l.b16 %v211
  %v1481 = vunpack.c.l.b16 %v212
  %v1482 = vunpack.c.l.b16 %v213
  %v1483 = vunpack.c.l.b16 %v214
  %v1484 = vunpack.c.l.b16 %v215
  %v1485 = vunpack.c.l.b16 %v216
  %v1486 = vunpack.c.l.b16 %v217
  %v1487 = vunpack.c.l.b16 %v218
  %v1488 = vunpack.c.l.b16 %v219
  %v1489 = vunpack.c.l.b16 %v220
  %v1490 = vunpack.c.l.b16 %v221
  %v1491 = vunpack.c.l.b16 %v222
  %v1492 = vunpack.c.l.b16 %v223
  %v1493 = vunpack.c.l.b16 %v224
  %v1494 = vunpack.c.l.b16 %v225
  %v1495 = vunpack.c.l.b16 %v226
  %v1496 = vunpack.c.l.b16 %v227
  %v1497 = vunpack.c.l.b16 %v228
  %v1498 = vunpack.c.l.b16 %v229
  %v1499 = vunpack.c.l.b16 %v230
  %v1500 = vunpack.c.l.b16 %v231
  %v1501 = vunpack.c.l.b16 %v232
  %v1502 = vunpack.c.l.b16 %v233
  %v1503 = vunpack.c.l.b16 %v234
  %v1504 = vunpack.c.l.b16 %v235
  %v1505 = vunpack.c.l.b16 %v236
  %v1506 = vunpack.c.l.b16 %v237
  %v1507 = vunpack.c.l.b16 %v238
  %v1508 = vunpack.c.l.b16 %v239
  %v1509 = vunpack.c.l.b16 %v240
  %v1510 = vunpack.c.l.b16 %v241
  %v1511 = vunpack.c.l.b16 %v242
  %v1512 = vunpack.c.l.b16 %v243
  %v1513 = vunpack.c.l.b16 %v244
  %v1514 = vunpack.c.l.b16 %v245
  %v1515 = vunpack.c.l.b16 %v246
  %v1516 = vunpack.c.l.b16 %v247
  %v1517 = vunpack.c.l.b16 %v248
  %v1518 = vunpack.c.l.b16 %v249
  %v1519 = vunpack.c.l.b16 %v250
  %v1520 = vunpack.c.l.b16 %v251
  %v1521 = vunpack.c.l.b16 %v252
  %v1522 = vunpack.c.l.b16 %v253
  %v1523 = vunpack.c.l.b16 %v254
  %v1524 = vunpack.c.l.b16 %v255
  %v1525 = vunpack.c.l.b16 %v256
  %v1526 = vunpack.c.l.b16 %v257
  %v1527 = vunpack.c.l.b16 %v258
  %v1528 = vunpack.c.l.b16 %v259
  %v1529 = vunpack.c.l.b16 %v260
  %v1530 = vunpack.c.l.b16 %v261
  %v1531 = vunpack.c.l.b16 %v262
  %v1532 = vunpack.c.l.b16 %v263
  %v1533 = vunpack.c.l.b16 %v264
  %v1534 = vunpack.c.l.b16 %v265
  %v1535 = vunpack.c.l.b16 %v266
  %v1536 = vunpack.c.l.b16 %v267
  %v1537 = vunpack.c.l.b16 %v268
  %v1538 = vunpack.c.l.b16 %v269
  %v1539 = vunpack.c.l.b16 %v270
  %v1540 = vunpack.c.l.b16 %v271
  %v1541 = vunpack.c.l.b16 %v272
  %v1542 = vunpack.c.l.b16 %v273
  %v1543 = vunpack.c.l.b16 %v274
  %v1544 = vunpack.c.l.b16 %v275
  %v1545 = vunpack.c.l.b16 %v276
  %v1546 = vunpack.c.l.b16 %v277
  %v1547 = vunpack.c.l.b16 %v278
  %v1548 = vunpack.c.l.b16 %v279
  %v1549 = vunpack.c.l.b16 %v280
  %v1550 = vunpack.c.l.b16 %v281
  %v1551 = vunpack.c.l.b16 %v282
  %v1552 = vunpack.c.l.b16 %v283
  %v1553 = vunpack.c.l.b16 %v284
  %v1554 = vunpack.c.l.b16 %v285
  %v1555 = vunpack.c.l.b16 %v286
  %v1556 = vunpack.c.l.b16 %v287
  %v1557 = vunpack.c.l.b16 %v288
  %v1558 = vunpack.c.l.b16 %v289
  %v1559 = vunpack.c.l.b16 %v290
  %v1560 = vunpack.c.l.b16 %v291
  %v1561 = vunpack.c.l.b16 %v292
  %v1562 = vunpack.c.l.b16 %v293
  %v1563 = vunpack.c.l.b16 %v294
  %v1564 = vunpack.c.l.b16 %v295
  %v1565 = vunpack.c.l.b16 %v296
  %v1566 = vunpack.c.l.b16 %v297
  %v1567 = vunpack.c.l.b16 %v298
  %v1568 = vunpack.c.l.b16 %v299
  %v1569 = vunpack.c.l.b16 %v300
  %v1570 = vunpack.c.l.b16 %v301
  %v1571 = vunpack.c.l.b16 %v302
  %v1572 = vunpack.c.l.b16 %v303
  %v1573 = vunpack.c.l.b16 %v304
  %v1574 = vunpack.c.l.b16 %v305
  %v1575 = vunpack.c.l.b16 %v306
  %v1576 = vunpack.c.l.b16 %v307
  %v1577 = vunpack.c.l.b16 %v308
  %v1578 = vunpack.c.l.b16 %v309
  %v1579 = vunpack.c.l.b16 %v310
  %v1580 = vunpack.c.l.b16 %v311
  %v1581 = vunpack.c.l.b16 %v312
  %v1582 = vunpack.c.l.b16 %v313
  %v1583 = vunpack.c.l.b16 %v314
  %v1584 = vunpack.c.l.b16 %v315
  %v1585 = vunpack.c.l.b16 %v316
  %v1586 = vunpack.c.l.b16 %v317
  %v1587 = vunpack.c.l.b16 %v318
  %v1588 = vunpack.c.l.b16 %v319
  %v1589 = vunpack.c.l.b16 %v320
  %v1590 = vunpack.c.l.b16 %v321
  %v1591 = vunpack.c.l.b16 %v322
  %v1592 = vunpack.c.l.b16 %v323
  %v1593 = vunpack.c.l.b16 %v324
  %v1594 = vunpack.c.l.b16 %v325
  %v1595 = vunpack.c.l.b16 %v326
  %v1596 = vunpack.c.l.b16 %v327
  %v1597 = vunpack.c.l.b16 %v328
  %v1598 = vunpack.c.l.b16 %v329
  %v1599 = vunpack.c.l.b16 %v330
  %v1600 = vunpack.c.l.b16 %v331
  %v1601 = vunpack.c.l.b16 %v332
  %v1602 = vunpack.c.l.b16 %v333
  %v1603 = vunpack.c.l.b16 %v334
  %v1604 = vunpack.c.l.b16 %v335
  %v1605 = vunpack.c.l.b16 %v336
  %v1606 = vunpack.c.l.b16 %v337
  %v1607 = vunpack.c.l.b16 %v338
  %v1608 = vunpack.c.l.b16 %v339
  %v1609 = vunpack.c.l.b16 %v340
  %v1610 = vunpack.c.l.b16 %v341
  %v1611 = vunpack.c.l.b16 %v342
  %v1612 = vunpack.c.l.b16 %v343
  %v1613 = vunpack.c.l.b16 %v344
  %v1614 = vunpack.c.l.b16 %v345
  %v1615 = vunpack.c.l.b16 %v346
  %v1616 = vunpack.c.l.b16 %v347
  %v1617 = vunpack.c.l.b16 %v348
  %v1618 = vunpack.c.l.b16 %v349
  %v1619 = vunpack.c.l.b16 %v350
  %v1620 = vunpack.c.l.b16 %v351
  %v1621 = vunpack.c.l.b16 %v352
  %v1622 = vunpack.c.l.b16 %v353
  %v1623 = vunpack.c.l.b16 %v354
  %v1624 = vunpack.c.l.b16 %v355
  %v1625 = vunpack.c.l.b16 %v356
  %v1626 = vunpack.c.l.b16 %v357
  %v1627 = vunpack.c.l.b16 %v358
  %v1628 = vunpack.c.l.b16 %v359
  %v1629 = vunpack.c.l.b16 %v360
  %v1630 = vunpack.c.l.b16 %v361
  %v1631 = vunpack.c.l.b16 %v362
  %v1632 = vunpack.c.l.b16 %v363
  %v1633 = vunpack.c.l.b16 %v364
  %v1634 = vunpack.c.l.b16 %v365
  %v1635 = vunpack.c.l.b16 %v366
  %v1636 = vunpack.c.l.b16 %v367
  %v1637 = vunpack.c.l.b16 %v368
  %v1638 = vunpack.c.l.b16 %v369
  %v1639 = vunpack.c.l.b16 %v370
  %v1640 = vunpack.c.l.b16 %v371
  %v1641 = vunpack.c.l.b16 %v372
  %v1642 = vunpack.c.l.b16 %v373
  %v1643 = vunpack.c.l.b16 %v374
  %v1644 = vunpack.c.l.b16 %v375
  %v1645 = vunpack.c.l.b16 %v376
  %v1646 = vunpack.c.l.b16 %v377
  %v1647 = vunpack.c.l.b16 %v378
  %v1648 = vunpack.c.l.b16 %v379
  %v1649 = vunpack.c.l.b16 %v380
  %v1650 = vunpack.c.l.b16 %v381
  %v1651 = vunpack.c.l.b16 %v382
  %v1652 = vunpack.c.l.b16 %v383
  %v1653 = vunpack.c.l.b16 %v384
  %v1654 = vunpack.c.l.b16 %v385
  %v1655 = vunpack.c.l.b16 %v386
  %v1656 = vunpack.c.l.b16 %v387
  %v1657 = vunpack.c.l.b16 %v388
  %v1658 = vunpack.c.l.b16 %v389
  %v1659 = vunpack.c.l.b16 %v390
  %v1660 = vunpack.c.l.b16 %v391
  %v1661 = vunpack.c.l.b16 %v392
  %v1662 = vunpack.c.l.b16 %v393
  %v1663 = vunpack.c.l.b16 %v394
  %v1664 = vunpack.c.l.b16 %v395
  %v1665 = vunpack.c.l.b16 %v396
  %v1666 = vunpack.c.l.b16 %v397
  %v1667 = vunpack.c.l.b16 %v398
  %v1668 = vunpack.c.l.b16 %v399
  %v1669 = vunpack.c.l.b16 %v400
  %v1670 = vunpack.c.l.b16 %v401
  %v1671 = vunpack.c.l.b16 %v402
  %v1672 = vunpack.c.l.b16 %v403
  %v1673 = vunpack.c.l.b16 %v404
  %v1674 = vunpack.c.l.b16 %v405
  %v1675 = vunpack.c.l.b16 %v406
  %v1676 = vunpack.c.l.b16 %v407
  %v1677 = vunpack.c.l.b16 %v408
  %v1678 = vunpack.c.l.b16 %v409
  %v1679 = vunpack.c.l.b16 %v410
  %v1680 = vunpack.c.l.b16 %v411
  %v1681 = vunpack.c.l.b16 %v412
  %v1682 = vunpack.c.l.b16 %v413
  %v1683 = vunpack.c.l.b16 %v414
  %v1684 = vunpack.c.l.b16 %v415
  %v1685 = vunpack.c.l.b16 %v416
  %v1686 = vunpack.c.l.b16 %v417
  %v1687 = vunpack.c.l.b16 %v418
  %v1688 = vunpack.c.l.b16 %v419
  %v1689 = vunpack.c.l.b16 %v420
  %v1690 = vunpack.c.l.b16 %v421
  %v1691 = vunpack.c.l.b16 %v422
  %v1692 = vunpack.c.l.b16 %v423
  %v1693 = vunpack.c.l.b16 %v424
  %v1694 = vunpack.c.l.b16 %v425
  %v1695 = vunpack.c.l.b16 %v426
  %v1696 = vunpack.c.l.b16 %v427
  %v1697 = vunpack.c.l.b16 %v428
  %v1698 = vunpack.c.l.b16 %v429
  %v1699 = vunpack.c.l.b16 %v430
  %v1700 = vunpack.c.l.b16 %v431
  %v1701 = vunpack.c.l.b16 %v432
  %v1702 = vunpack.c.l.b16 %v433
  %v1703 = vpack.c.b16 %v1429, %v1428
  %v1704 = vpack.c.b16 %v1431, %v1430
  %v1705 = vpack.c.b16 %v1433, %v1432
  %v1706 = vpack.c.b16 %v1435, %v1434
  %v1707 = vpack.c.b16 %v1437, %v1436
  %v1708 = vpack.c.b16 %v1439, %v1438
  %v1709 = vpack.c.b16 %v1441, %v1440
  %v1710 = vpack.c.b16 %v1443, %v1442
  %v1711 = vpack.c.b16 %v1445, %v1444
  %v1712 = vpack.c.b16 %v1447, %v1446
  %v1713 = vpack.c.b16 %v1449, %v1448
  %v1714 = vpack.c.b16 %v1451, %v1450
  %v1715 = vpack.c.b16 %v1453, %v1452
  %v1716 = vpack.c.b16 %v1455, %v1454
  %v1717 = vpack.c.b16 %v1457, %v1456
  %v1718 = vpack.c.b16 %v1459, %v1458
  %v1719 = vpack.c.b16 %v1461, %v1460
  %v1720 = vpack.c.b16 %v1463, %v1462
  %v1721 = vpack.c.b16 %v1465, %v1464
  %v1722 = vpack.c.b16 %v1467, %v1466
  %v1723 = vpack.c.b16 %v1469, %v1468
  %v1724 = vpack.c.b16 %v1471, %v1470
  %v1725 = vpack.c.b16 %v1473, %v1472
  %v1726 = vpack.c.b16 %v1475, %v1474
  %v1727 = vpack.c.b16 %v1477, %v1476
  %v1728 = vpack.c.b16 %v1479, %v1478
  %v1729 = vpack.c.b16 %v1481, %v1480
  %v1730 = vpack.c.b16 %v1483, %v1482
  %v1731 = vpack.c.b16 %v1485, %v1484
  %v1732 = vpack.c.b16 %v1487, %v1486
  %v1733 = vpack.c.b16 %v1489, %v1488
  %v1734 = vpack.c.b16 %v1491, %v1490
  %v1735 = vpack.c.b16 %v1493, %v1492
  %v1736 = vpack.c.b16 %v1495, %v1494
  %v1737 = vpack.c.b16 %v1497, %v1496
  %v1738 = vpack.c.b16 %v1499, %v1498
  %v1739 = vpack.c.b16 %v1501, %v1500
  %v1740 = vpack.c.b16 %v1503, %v1502
  %v1741 = vpack.c.b16 %v1505, %v1504
  %v1742 = vpack.c.b16 %v1507, %v1506
  %v1743 = vpack.c.b16 %v1509, %v1508
  %v1744 = vpack.c.b16 %v1511, %v1510
  %v1745 = vpack.c.b16 %v1513, %v1512
  %v1746 = vpack.c.b16 %v1515, %v1514
  %v1747 = vpack.c.b16 %v1517, %v1516
  %v1748 = vpack.c.b16 %v1519, %v1518
  %v1749 = vpack.c.b16 %v1521, %v1520
  %v1750 = vpack.c.b16 %v1523, %v1522
  %v1751 = vpack.c.b16 %v1525, %v1524
  %v1752 = vpack.c.b16 %v1527, %v1526
  %v1753 = vpack.c.b16 %v1529, %v1528
  %v1754 = vpack.c.b16 %v1531, %v1530
  %v1755 = vpack.c.b16 %v1533, %v1532
  %v1756 = vpack.c.b16 %v1535, %v1534
  %v1757 = vpack.c.b16 %v1537, %v1536
  %v1758 = vpack.c.b16 %v1539, %v1538
  %v1759 = vpack.c.b16 %v1541, %v1540
  %v1760 = vpack.c.b16 %v1543, %v1542
  %v1761 = vpack.c.b16 %v1545, %v1544
  %v1762 = vpack.c.b16 %v1547, %v1546
  %v1763 = vpack.c.b16 %v1549, %v1548
  %v1764 = vpack.c.b16 %v1551, %v1550
  %v1765 = vpack.c.b16 %v1553, %v1552
  %v1766 = vpack.c.b16 %v1555, %v1554
  %v1767 = vpack.c.b16 %v1557, %v1556
  %v1768 = vpack.c.b16 %v1559, %v1558
  %v1769 = vpack.c.b16 %v1561, %v1560
  %v1770 = vpack.c.b16 %v1563, %v1562
  %v1771 = vpack.c.b16 %v1565, %v1564
  %v1772 = vpack.c.b16 %v1567, %v1566
  %v1773 = vpack.c.b16 %v1569, %v1568
  %v1774 = vpack.c.b16 %v1571, %v1570
  %v1775 = vpack.c.b16 %v1573, %v1572
  %v1776 = vpack.c.b16 %v1575, %v1574
  %v1777 = vpack.c.b16 %v1577, %v1576
  %v1778 = vpack.c.b16 %v1579, %v1578
  %v1779 = vpack.c.b16 %v1581, %v1580
  %v1780 = vpack.c.b16 %v1583, %v1582
  %v1781 = vpack.c.b16 %v1585, %v1584
  %v1782 = vpack.c.b16 %v1587, %v1586
  %v1783 = vpack.c.b16 %v1589, %v1588
  %v1784 = vpack.c.b16 %v1591, %v1590
  %v1785 = vpack.c.b16 %v1593, %v1592
  %v1786 = vpack.c.b16 %v1595, %v1594
  %v1787 = vpack.c.b16 %v1597, %v1596
  %v1788 = vpack.c.b16 %v1599, %v1598
  %v1789 = vpack.c.b16 %v1601, %v1600
  %v1790 = vpack.c.b16 %v1603, %v1602
  %v1791 = vpack.c.b16 %v1605, %v1604
  %v1792 = vpack.c.b16 %v1607, %v1606
  %v1793 = vpack.c.b16 %v1609, %v1608
  %v1794 = vpack.c.b16 %v1611, %v1610
  %v1795 = vpack.c.b16 %v1613, %v1612
  %v1796 = vpack.c.b16 %v1615, %v1614
  %v1797 = vpack.c.b16 %v1617, %v1616
  %v1798 = vpack.c.b16 %v1619, %v1618
  %v1799 = vpack.c.b16 %v1621, %v1620
  %v1800 = vpack.c.b16 %v1623, %v1622
  %v1801 = vpack.c.b16 %v1625, %v1624
  %v1802 = vpack.c.b16 %v1627, %v1626
  %v1803 = vpack.c.b16 %v1629, %v1628
  %v1804 = vpack.c.b16 %v1631, %v1630
  %v1805 = vpack.c.b16 %v1633, %v1632
  %v1806 = vpack.c.b16 %v1635, %v1634
  %v1807 = vpack.c.b16 %v1637, %v1636
  %v1808 = vpack.c.b16 %v1639, %v1638
  %v1809 = vpack.c.b16 %v1641, %v1640
  %v1810 = vpack.c.b16 %v1643, %v1642
  %v1811 = vpack.c.b16 %v1645, %v1644
  %v1812 = vpack.c.b16 %v1647, %v1646
  %v1813 = vpack.c.b16 %v1649, %v1648
  %v1814 = vpack.c.b16 %v1651, %v1650
  %v1815 = vpack.c.b16 %v1653, %v1652
  %v1816 = vpack.c.b16 %v1655, %v1654
  %v1817 = vpack.c.b16 %v1657, %v1656
  %v1818 = vpack.c.b16 %v1659, %v1658
  %v1819 = vpack.c.b16 %v1661, %v1660
  %v1820 = vpack.c.b16 %v1663, %v1662
  %v1821 = vpack.c.b16 %v1665, %v1664
  %v1822 = vpack.c.b16 %v1667, %v1666
  %v1823 = vpack.c.b16 %v1669, %v1668
  %v1824 = vpack.c.b16 %v1671, %v1670
  %v1825 = vpack.c.b16 %v1673, %v1672
  %v1826 = vpack.c.b16 %v1675, %v1674
  %v1827 = vpack.c.b16 %v1677, %v1676
  %v1828 = vpack.c.b16 %v1679, %v1678
  %v1829 = vpack.c.b16 %v1681, %v1680
  %v1830 = vpack.c.b16 %v1683, %v1682
  %v1831 = vpack.c.b16 %v1685, %v1684
  %v1832 = vpack.c.b16 %v1687, %v1686
  %v1833 = vpack.c.b16 %v1689, %v1688
  %v1834 = vpack.c.b16 %v1691, %v1690
  %v1835 = vpack.c.b16 %v1693, %v1692
  %v1836 = vpack.c.b16 %v1695, %v1694
  %v1837 = vpack.c.b16 %v1697, %v1696
  %v1838 = vpack.c.b16 %v1699, %v1698
  %v1839 = vpack.c.b16 %v1701, %v1700
  %v1840 = vpack.c.b16 %v1702, %v1702
  %vm1978 = vcmask 195584
  %v1980 = vsel %vm1978, %v890, 0
  %v1983 = vsel %vm1978, %v908, 0
  %v1986 = vsel %vm1978, %v926, 0
  %v1989 = vsel %vm1978, %v944, 0
  %v1992 = vsel %vm1978, %v962, 0
  %v1995 = vsel %vm1978, %v980, 0
  %v1998 = vsel %vm1978, %v998, 0
  %v2001 = vsel %vm1978, %v1016, 0
  %vm2003 = vcmask 1043456
  %v2005 = vsel %vm2003, %v1840, 0
  %2007 = vmatprep.subr.bf16.mxu0 0
  %2008 = vmatpush1.bf16.msra.mxu0 %v1710
  %2009 = vmatprep.subr.bf16.mxu0 0
  %2010 = vmatpush1.bf16.msra.mxu0 %v1709
  %2011 = vmatprep.subr.bf16.mxu0 0
  %2012 = vmatpush1.bf16.msra.mxu0 %v1708
  %2013 = vmatprep.subr.bf16.mxu0 0
  %2014 = vmatpush1.bf16.msra.mxu0 %v1707
  %2015 = vmatprep.subr.bf16.mxu0 0
  %2016 = vmatpush1.bf16.msra.mxu0 %v1706
  %2017 = vmatprep.subr.bf16.mxu0 0
  %2018 = vmatpush1.bf16.msra.mxu0 %v1705
  %2019 = vmatprep.subr.bf16.mxu0 0
  %2020 = vmatpush1.bf16.msra.mxu0 %v1704
  %2021 = vmatprep.subr.bf16.mxu0 0
  %2022 = vmatpush1.bf16.msra.mxu0 %v1703
  %2023 = vmatprep.subr.bf16.mxu0 0
  %2024 = vmatpush2.bf16.msra.mxu0 %v1718
  %2025 = vmatprep.subr.bf16.mxu0 0
  %2026 = vmatpush2.bf16.msra.mxu0 %v1717
  %2027 = vmatprep.subr.bf16.mxu0 0
  %2028 = vmatpush2.bf16.msra.mxu0 %v1716
  %2029 = vmatprep.subr.bf16.mxu0 0
  %2030 = vmatpush2.bf16.msra.mxu0 %v1715
  %2031 = vmatprep.subr.bf16.mxu0 0
  %2032 = vmatpush2.bf16.msra.mxu0 %v1714
  %2033 = vmatprep.subr.bf16.mxu0 0
  %2034 = vmatpush2.bf16.msra.mxu0 %v1713
  %2035 = vmatprep.subr.bf16.mxu0 0
  %2036 = vmatpush2.bf16.msra.mxu0 %v1712
  %2037 = vmatprep.subr.bf16.mxu0 0
  %2038 = vmatpush2.bf16.msra.mxu0 %v1711
  %2039 = vmatprep.mubr.bf16.mxu0 %v874
  %2040 = vmatmul.mubr.bf16.gmra.mxu0 %v873
  %v2041 = vpop.f32.mrf.mxu0
  %v2042 = vadd.f32 %v439, %v2041
  %v2043 = vpop.f32.mrf.mxu0
  %v2044 = vpop.f32.mrf.mxu0
  %v2045 = vadd.f32 %v439, %v2044
  %v2046 = vpop.f32.mrf.mxu0
  %2047 = vmatprep.mubr.bf16.mxu0 %v892
  %2048 = vmatmul.mubr.bf16.gmra.mxu0 %v891
  %v2049 = vpop.f32.mrf.mxu0
  %v2050 = vadd.f32 %v439, %v2049
  %v2051 = vpop.f32.mrf.mxu0
  %v2052 = vpop.f32.mrf.mxu0
  %v2053 = vadd.f32 %v439, %v2052
  %v2054 = vpop.f32.mrf.mxu0
  %2055 = vmatprep.mubr.bf16.mxu0 %v910
  %2056 = vmatmul.mubr.bf16.gmra.mxu0 %v909
  %v2057 = vpop.f32.mrf.mxu0
  %v2058 = vadd.f32 %v439, %v2057
  %v2059 = vpop.f32.mrf.mxu0
  %v2060 = vpop.f32.mrf.mxu0
  %v2061 = vadd.f32 %v439, %v2060
  %v2062 = vpop.f32.mrf.mxu0
  %2063 = vmatprep.mubr.bf16.mxu0 %v928
  %2064 = vmatmul.mubr.bf16.gmra.mxu0 %v927
  %v2065 = vpop.f32.mrf.mxu0
  %v2066 = vadd.f32 %v439, %v2065
  %v2067 = vpop.f32.mrf.mxu0
  %v2068 = vpop.f32.mrf.mxu0
  %v2069 = vadd.f32 %v439, %v2068
  %v2070 = vpop.f32.mrf.mxu0
  %2071 = vmatprep.mubr.bf16.mxu0 %v946
  %2072 = vmatmul.mubr.bf16.gmra.mxu0 %v945
  %v2073 = vpop.f32.mrf.mxu0
  %v2074 = vadd.f32 %v439, %v2073
  %v2075 = vpop.f32.mrf.mxu0
  %v2076 = vpop.f32.mrf.mxu0
  %v2077 = vadd.f32 %v439, %v2076
  %v2078 = vpop.f32.mrf.mxu0
  %2079 = vmatprep.mubr.bf16.mxu0 %v964
  %2080 = vmatmul.mubr.bf16.gmra.mxu0 %v963
  %v2081 = vpop.f32.mrf.mxu0
  %v2082 = vadd.f32 %v439, %v2081
  %v2083 = vpop.f32.mrf.mxu0
  %v2084 = vpop.f32.mrf.mxu0
  %v2085 = vadd.f32 %v439, %v2084
  %v2086 = vpop.f32.mrf.mxu0
  %2087 = vmatprep.mubr.bf16.mxu0 %v982
  %2088 = vmatmul.mubr.bf16.gmra.mxu0 %v981
  %v2089 = vpop.f32.mrf.mxu0
  %v2090 = vadd.f32 %v439, %v2089
  %v2091 = vpop.f32.mrf.mxu0
  %v2092 = vpop.f32.mrf.mxu0
  %v2093 = vadd.f32 %v439, %v2092
  %v2094 = vpop.f32.mrf.mxu0
  %2095 = vmatprep.mubr.bf16.mxu0 %v1000
  %2096 = vmatmul.mubr.bf16.gmra.mxu0 %v999
  %v2097 = vpop.f32.mrf.mxu0
  %v2098 = vadd.f32 %v439, %v2097
  %v2099 = vpop.f32.mrf.mxu0
  %v2100 = vpop.f32.mrf.mxu0
  %v2101 = vadd.f32 %v439, %v2100
  %v2102 = vpop.f32.mrf.mxu0
  %2103 = vdwg.mxu0
  %2104 = vmatprep.subr.bf16.mxu0 0
  %2105 = vmatpush1.bf16.msra.mxu0 %v1726
  %2106 = vmatprep.subr.bf16.mxu0 0
  %2107 = vmatpush1.bf16.msra.mxu0 %v1725
  %2108 = vmatprep.subr.bf16.mxu0 0
  %2109 = vmatpush1.bf16.msra.mxu0 %v1724
  %2110 = vmatprep.subr.bf16.mxu0 0
  %2111 = vmatpush1.bf16.msra.mxu0 %v1723
  %2112 = vmatprep.subr.bf16.mxu0 0
  %2113 = vmatpush1.bf16.msra.mxu0 %v1722
  %2114 = vmatprep.subr.bf16.mxu0 0
  %2115 = vmatpush1.bf16.msra.mxu0 %v1721
  %2116 = vmatprep.subr.bf16.mxu0 0
  %2117 = vmatpush1.bf16.msra.mxu0 %v1720
  %2118 = vmatprep.subr.bf16.mxu0 0
  %2119 = vmatpush1.bf16.msra.mxu0 %v1719
  %2120 = vmatprep.subr.bf16.mxu0 0
  %2121 = vmatpush2.bf16.msra.mxu0 %v1734
  %2122 = vmatprep.subr.bf16.mxu0 0
  %2123 = vmatpush2.bf16.msra.mxu0 %v1733
  %2124 = vmatprep.subr.bf16.mxu0 0
  %2125 = vmatpush2.bf16.msra.mxu0 %v1732
  %2126 = vmatprep.subr.bf16.mxu0 0
  %2127 = vmatpush2.bf16.msra.mxu0 %v1731
  %2128 = vmatprep.subr.bf16.mxu0 0
  %2129 = vmatpush2.bf16.msra.mxu0 %v1730
  %2130 = vmatprep.subr.bf16.mxu0 0
  %2131 = vmatpush2.bf16.msra.mxu0 %v1729
  %2132 = vmatprep.subr.bf16.mxu0 0
  %2133 = vmatpush2.bf16.msra.mxu0 %v1728
  %2134 = vmatprep.subr.bf16.mxu0 0
  %2135 = vmatpush2.bf16.msra.mxu0 %v1727
  %2136 = vmatprep.mubr.bf16.mxu0 %v876
  %2137 = vmatmul.mubr.bf16.gmra.mxu0 %v875
  %v2138 = vpop.f32.mrf.mxu0
  %v2139 = vadd.f32 %v2042, %v2138
  %v2140 = vpop.f32.mrf.mxu0
  %v2141 = vpop.f32.mrf.mxu0
  %v2142 = vadd.f32 %v2045, %v2141
  %v2143 = vpop.f32.mrf.mxu0
  %2144 = vmatprep.mubr.bf16.mxu0 %v894
  %2145 = vmatmul.mubr.bf16.gmra.mxu0 %v893
  %v2146 = vpop.f32.mrf.mxu0
  %v2147 = vadd.f32 %v2050, %v2146
  %v2148 = vpop.f32.mrf.mxu0
  %v2149 = vpop.f32.mrf.mxu0
  %v2150 = vadd.f32 %v2053, %v2149
  %v2151 = vpop.f32.mrf.mxu0
  %2152 = vmatprep.mubr.bf16.mxu0 %v912
  %2153 = vmatmul.mubr.bf16.gmra.mxu0 %v911
  %v2154 = vpop.f32.mrf.mxu0
  %v2155 = vadd.f32 %v2058, %v2154
  %v2156 = vpop.f32.mrf.mxu0
  %v2157 = vpop.f32.mrf.mxu0
  %v2158 = vadd.f32 %v2061, %v2157
  %v2159 = vpop.f32.mrf.mxu0
  %2160 = vmatprep.mubr.bf16.mxu0 %v930
  %2161 = vmatmul.mubr.bf16.gmra.mxu0 %v929
  %v2162 = vpop.f32.mrf.mxu0
  %v2163 = vadd.f32 %v2066, %v2162
  %v2164 = vpop.f32.mrf.mxu0
  %v2165 = vpop.f32.mrf.mxu0
  %v2166 = vadd.f32 %v2069, %v2165
  %v2167 = vpop.f32.mrf.mxu0
  %2168 = vmatprep.mubr.bf16.mxu0 %v948
  %2169 = vmatmul.mubr.bf16.gmra.mxu0 %v947
  %v2170 = vpop.f32.mrf.mxu0
  %v2171 = vadd.f32 %v2074, %v2170
  %v2172 = vpop.f32.mrf.mxu0
  %v2173 = vpop.f32.mrf.mxu0
  %v2174 = vadd.f32 %v2077, %v2173
  %v2175 = vpop.f32.mrf.mxu0
  %2176 = vmatprep.mubr.bf16.mxu0 %v966
  %2177 = vmatmul.mubr.bf16.gmra.mxu0 %v965
  %v2178 = vpop.f32.mrf.mxu0
  %v2179 = vadd.f32 %v2082, %v2178
  %v2180 = vpop.f32.mrf.mxu0
  %v2181 = vpop.f32.mrf.mxu0
  %v2182 = vadd.f32 %v2085, %v2181
  %v2183 = vpop.f32.mrf.mxu0
  %2184 = vmatprep.mubr.bf16.mxu0 %v984
  %2185 = vmatmul.mubr.bf16.gmra.mxu0 %v983
  %v2186 = vpop.f32.mrf.mxu0
  %v2187 = vadd.f32 %v2090, %v2186
  %v2188 = vpop.f32.mrf.mxu0
  %v2189 = vpop.f32.mrf.mxu0
  %v2190 = vadd.f32 %v2093, %v2189
  %v2191 = vpop.f32.mrf.mxu0
  %2192 = vmatprep.mubr.bf16.mxu0 %v1002
  %2193 = vmatmul.mubr.bf16.gmra.mxu0 %v1001
  %v2194 = vpop.f32.mrf.mxu0
  %v2195 = vadd.f32 %v2098, %v2194
  %v2196 = vpop.f32.mrf.mxu0
  %v2197 = vpop.f32.mrf.mxu0
  %v2198 = vadd.f32 %v2101, %v2197
  %v2199 = vpop.f32.mrf.mxu0
  %2200 = vdwg.mxu0
  %2201 = vmatprep.subr.bf16.mxu0 0
  %2202 = vmatpush1.bf16.msra.mxu0 %v1742
  %2203 = vmatprep.subr.bf16.mxu0 0
  %2204 = vmatpush1.bf16.msra.mxu0 %v1741
  %2205 = vmatprep.subr.bf16.mxu0 0
  %2206 = vmatpush1.bf16.msra.mxu0 %v1740
  %2207 = vmatprep.subr.bf16.mxu0 0
  %2208 = vmatpush1.bf16.msra.mxu0 %v1739
  %2209 = vmatprep.subr.bf16.mxu0 0
  %2210 = vmatpush1.bf16.msra.mxu0 %v1738
  %2211 = vmatprep.subr.bf16.mxu0 0
  %2212 = vmatpush1.bf16.msra.mxu0 %v1737
  %2213 = vmatprep.subr.bf16.mxu0 0
  %2214 = vmatpush1.bf16.msra.mxu0 %v1736
  %2215 = vmatprep.subr.bf16.mxu0 0
  %2216 = vmatpush1.bf16.msra.mxu0 %v1735
  %2217 = vmatprep.subr.bf16.mxu0 0
  %2218 = vmatpush2.bf16.msra.mxu0 %v1750
  %2219 = vmatprep.subr.bf16.mxu0 0
  %2220 = vmatpush2.bf16.msra.mxu0 %v1749
  %2221 = vmatprep.subr.bf16.mxu0 0
  %2222 = vmatpush2.bf16.msra.mxu0 %v1748
  %2223 = vmatprep.subr.bf16.mxu0 0
  %2224 = vmatpush2.bf16.msra.mxu0 %v1747
  %2225 = vmatprep.subr.bf16.mxu0 0
  %2226 = vmatpush2.bf16.msra.mxu0 %v1746
  %2227 = vmatprep.subr.bf16.mxu0 0
  %2228 = vmatpush2.bf16.msra.mxu0 %v1745
  %2229 = vmatprep.subr.bf16.mxu0 0
  %2230 = vmatpush2.bf16.msra.mxu0 %v1744
  %2231 = vmatprep.subr.bf16.mxu0 0
  %2232 = vmatpush2.bf16.msra.mxu0 %v1743
  %2233 = vmatprep.mubr.bf16.mxu0 %v878
  %2234 = vmatmul.mubr.bf16.gmra.mxu0 %v877
  %v2235 = vpop.f32.mrf.mxu0
  %v2236 = vadd.f32 %v2139, %v2235
  %v2237 = vpop.f32.mrf.mxu0
  %v2238 = vpop.f32.mrf.mxu0
  %v2239 = vadd.f32 %v2142, %v2238
  %v2240 = vpop.f32.mrf.mxu0
  %2241 = vmatprep.mubr.bf16.mxu0 %v896
  %2242 = vmatmul.mubr.bf16.gmra.mxu0 %v895
  %v2243 = vpop.f32.mrf.mxu0
  %v2244 = vadd.f32 %v2147, %v2243
  %v2245 = vpop.f32.mrf.mxu0
  %v2246 = vpop.f32.mrf.mxu0
  %v2247 = vadd.f32 %v2150, %v2246
  %v2248 = vpop.f32.mrf.mxu0
  %2249 = vmatprep.mubr.bf16.mxu0 %v914
  %2250 = vmatmul.mubr.bf16.gmra.mxu0 %v913
  %v2251 = vpop.f32.mrf.mxu0
  %v2252 = vadd.f32 %v2155, %v2251
  %v2253 = vpop.f32.mrf.mxu0
  %v2254 = vpop.f32.mrf.mxu0
  %v2255 = vadd.f32 %v2158, %v2254
  %v2256 = vpop.f32.mrf.mxu0
  %2257 = vmatprep.mubr.bf16.mxu0 %v932
  %2258 = vmatmul.mubr.bf16.gmra.mxu0 %v931
  %v2259 = vpop.f32.mrf.mxu0
  %v2260 = vadd.f32 %v2163, %v2259
  %v2261 = vpop.f32.mrf.mxu0
  %v2262 = vpop.f32.mrf.mxu0
  %v2263 = vadd.f32 %v2166, %v2262
  %v2264 = vpop.f32.mrf.mxu0
  %2265 = vmatprep.mubr.bf16.mxu0 %v950
  %2266 = vmatmul.mubr.bf16.gmra.mxu0 %v949
  %v2267 = vpop.f32.mrf.mxu0
  %v2268 = vadd.f32 %v2171, %v2267
  %v2269 = vpop.f32.mrf.mxu0
  %v2270 = vpop.f32.mrf.mxu0
  %v2271 = vadd.f32 %v2174, %v2270
  %v2272 = vpop.f32.mrf.mxu0
  %2273 = vmatprep.mubr.bf16.mxu0 %v968
  %2274 = vmatmul.mubr.bf16.gmra.mxu0 %v967
  %v2275 = vpop.f32.mrf.mxu0
  %v2276 = vadd.f32 %v2179, %v2275
  %v2277 = vpop.f32.mrf.mxu0
  %v2278 = vpop.f32.mrf.mxu0
  %v2279 = vadd.f32 %v2182, %v2278
  %v2280 = vpop.f32.mrf.mxu0
  %2281 = vmatprep.mubr.bf16.mxu0 %v986
  %2282 = vmatmul.mubr.bf16.gmra.mxu0 %v985
  %v2283 = vpop.f32.mrf.mxu0
  %v2284 = vadd.f32 %v2187, %v2283
  %v2285 = vpop.f32.mrf.mxu0
  %v2286 = vpop.f32.mrf.mxu0
  %v2287 = vadd.f32 %v2190, %v2286
  %v2288 = vpop.f32.mrf.mxu0
  %2289 = vmatprep.mubr.bf16.mxu0 %v1004
  %2290 = vmatmul.mubr.bf16.gmra.mxu0 %v1003
  %v2291 = vpop.f32.mrf.mxu0
  %v2292 = vadd.f32 %v2195, %v2291
  %v2293 = vpop.f32.mrf.mxu0
  %v2294 = vpop.f32.mrf.mxu0
  %v2295 = vadd.f32 %v2198, %v2294
  %v2296 = vpop.f32.mrf.mxu0
  %2297 = vdwg.mxu0
  %2298 = vmatprep.subr.bf16.mxu0 0
  %2299 = vmatpush1.bf16.msra.mxu0 %v1758
  %2300 = vmatprep.subr.bf16.mxu0 0
  %2301 = vmatpush1.bf16.msra.mxu0 %v1757
  %2302 = vmatprep.subr.bf16.mxu0 0
  %2303 = vmatpush1.bf16.msra.mxu0 %v1756
  %2304 = vmatprep.subr.bf16.mxu0 0
  %2305 = vmatpush1.bf16.msra.mxu0 %v1755
  %2306 = vmatprep.subr.bf16.mxu0 0
  %2307 = vmatpush1.bf16.msra.mxu0 %v1754
  %2308 = vmatprep.subr.bf16.mxu0 0
  %2309 = vmatpush1.bf16.msra.mxu0 %v1753
  %2310 = vmatprep.subr.bf16.mxu0 0
  %2311 = vmatpush1.bf16.msra.mxu0 %v1752
  %2312 = vmatprep.subr.bf16.mxu0 0
  %2313 = vmatpush1.bf16.msra.mxu0 %v1751
  %2314 = vmatprep.subr.bf16.mxu0 0
  %2315 = vmatpush2.bf16.msra.mxu0 %v1766
  %2316 = vmatprep.subr.bf16.mxu0 0
  %2317 = vmatpush2.bf16.msra.mxu0 %v1765
  %2318 = vmatprep.subr.bf16.mxu0 0
  %2319 = vmatpush2.bf16.msra.mxu0 %v1764
  %2320 = vmatprep.subr.bf16.mxu0 0
  %2321 = vmatpush2.bf16.msra.mxu0 %v1763
  %2322 = vmatprep.subr.bf16.mxu0 0
  %2323 = vmatpush2.bf16.msra.mxu0 %v1762
  %2324 = vmatprep.subr.bf16.mxu0 0
  %2325 = vmatpush2.bf16.msra.mxu0 %v1761
  %2326 = vmatprep.subr.bf16.mxu0 0
  %2327 = vmatpush2.bf16.msra.mxu0 %v1760
  %2328 = vmatprep.subr.bf16.mxu0 0
  %2329 = vmatpush2.bf16.msra.mxu0 %v1759
  %2330 = vmatprep.mubr.bf16.mxu0 %v880
  %2331 = vmatmul.mubr.bf16.gmra.mxu0 %v879
  %v2332 = vpop.f32.mrf.mxu0
  %v2333 = vadd.f32 %v2236, %v2332
  %v2334 = vpop.f32.mrf.mxu0
  %v2335 = vpop.f32.mrf.mxu0
  %v2336 = vadd.f32 %v2239, %v2335
  %v2337 = vpop.f32.mrf.mxu0
  %2338 = vmatprep.mubr.bf16.mxu0 %v898
  %2339 = vmatmul.mubr.bf16.gmra.mxu0 %v897
  %v2340 = vpop.f32.mrf.mxu0
  %v2341 = vadd.f32 %v2244, %v2340
  %v2342 = vpop.f32.mrf.mxu0
  %v2343 = vpop.f32.mrf.mxu0
  %v2344 = vadd.f32 %v2247, %v2343
  %v2345 = vpop.f32.mrf.mxu0
  %2346 = vmatprep.mubr.bf16.mxu0 %v916
  %2347 = vmatmul.mubr.bf16.gmra.mxu0 %v915
  %v2348 = vpop.f32.mrf.mxu0
  %v2349 = vadd.f32 %v2252, %v2348
  %v2350 = vpop.f32.mrf.mxu0
  %v2351 = vpop.f32.mrf.mxu0
  %v2352 = vadd.f32 %v2255, %v2351
  %v2353 = vpop.f32.mrf.mxu0
  %2354 = vmatprep.mubr.bf16.mxu0 %v934
  %2355 = vmatmul.mubr.bf16.gmra.mxu0 %v933
  %v2356 = vpop.f32.mrf.mxu0
  %v2357 = vadd.f32 %v2260, %v2356
  %v2358 = vpop.f32.mrf.mxu0
  %v2359 = vpop.f32.mrf.mxu0
  %v2360 = vadd.f32 %v2263, %v2359
  %v2361 = vpop.f32.mrf.mxu0
  %2362 = vmatprep.mubr.bf16.mxu0 %v952
  %2363 = vmatmul.mubr.bf16.gmra.mxu0 %v951
  %v2364 = vpop.f32.mrf.mxu0
  %v2365 = vadd.f32 %v2268, %v2364
  %v2366 = vpop.f32.mrf.mxu0
  %v2367 = vpop.f32.mrf.mxu0
  %v2368 = vadd.f32 %v2271, %v2367
  %v2369 = vpop.f32.mrf.mxu0
  %2370 = vmatprep.mubr.bf16.mxu0 %v970
  %2371 = vmatmul.mubr.bf16.gmra.mxu0 %v969
  %v2372 = vpop.f32.mrf.mxu0
  %v2373 = vadd.f32 %v2276, %v2372
  %v2374 = vpop.f32.mrf.mxu0
  %v2375 = vpop.f32.mrf.mxu0
  %v2376 = vadd.f32 %v2279, %v2375
  %v2377 = vpop.f32.mrf.mxu0
  %2378 = vmatprep.mubr.bf16.mxu0 %v988
  %2379 = vmatmul.mubr.bf16.gmra.mxu0 %v987
  %v2380 = vpop.f32.mrf.mxu0
  %v2381 = vadd.f32 %v2284, %v2380
  %v2382 = vpop.f32.mrf.mxu0
  %v2383 = vpop.f32.mrf.mxu0
  %v2384 = vadd.f32 %v2287, %v2383
  %v2385 = vpop.f32.mrf.mxu0
  %2386 = vmatprep.mubr.bf16.mxu0 %v1006
  %2387 = vmatmul.mubr.bf16.gmra.mxu0 %v1005
  %v2388 = vpop.f32.mrf.mxu0
  %v2389 = vadd.f32 %v2292, %v2388
  %v2390 = vpop.f32.mrf.mxu0
  %v2391 = vpop.f32.mrf.mxu0
  %v2392 = vadd.f32 %v2295, %v2391
  %v2393 = vpop.f32.mrf.mxu0
  %2394 = vdwg.mxu0
  %2395 = vmatprep.subr.bf16.mxu0 0
  %2396 = vmatpush1.bf16.msra.mxu0 %v1774
  %2397 = vmatprep.subr.bf16.mxu0 0
  %2398 = vmatpush1.bf16.msra.mxu0 %v1773
  %2399 = vmatprep.subr.bf16.mxu0 0
  %2400 = vmatpush1.bf16.msra.mxu0 %v1772
  %2401 = vmatprep.subr.bf16.mxu0 0
  %2402 = vmatpush1.bf16.msra.mxu0 %v1771
  %2403 = vmatprep.subr.bf16.mxu0 0
  %2404 = vmatpush1.bf16.msra.mxu0 %v1770
  %2405 = vmatprep.subr.bf16.mxu0 0
  %2406 = vmatpush1.bf16.msra.mxu0 %v1769
  %2407 = vmatprep.subr.bf16.mxu0 0
  %2408 = vmatpush1.bf16.msra.mxu0 %v1768
  %2409 = vmatprep.subr.bf16.mxu0 0
  %2410 = vmatpush1.bf16.msra.mxu0 %v1767
  %2411 = vmatprep.subr.bf16.mxu0 0
  %2412 = vmatpush2.bf16.msra.mxu0 %v1782
  %2413 = vmatprep.subr.bf16.mxu0 0
  %2414 = vmatpush2.bf16.msra.mxu0 %v1781
  %2415 = vmatprep.subr.bf16.mxu0 0
  %2416 = vmatpush2.bf16.msra.mxu0 %v1780
  %2417 = vmatprep.subr.bf16.mxu0 0
  %2418 = vmatpush2.bf16.msra.mxu0 %v1779
  %2419 = vmatprep.subr.bf16.mxu0 0
  %2420 = vmatpush2.bf16.msra.mxu0 %v1778
  %2421 = vmatprep.subr.bf16.mxu0 0
  %2422 = vmatpush2.bf16.msra.mxu0 %v1777
  %2423 = vmatprep.subr.bf16.mxu0 0
  %2424 = vmatpush2.bf16.msra.mxu0 %v1776
  %2425 = vmatprep.subr.bf16.mxu0 0
  %2426 = vmatpush2.bf16.msra.mxu0 %v1775
  %2427 = vmatprep.mubr.bf16.mxu0 %v882
  %2428 = vmatmul.mubr.bf16.gmra.mxu0 %v881
  %v2429 = vpop.f32.mrf.mxu0
  %v2430 = vadd.f32 %v2333, %v2429
  %v2431 = vpop.f32.mrf.mxu0
  %v2432 = vpop.f32.mrf.mxu0
  %v2433 = vadd.f32 %v2336, %v2432
  %v2434 = vpop.f32.mrf.mxu0
  %2435 = vmatprep.mubr.bf16.mxu0 %v900
  %2436 = vmatmul.mubr.bf16.gmra.mxu0 %v899
  %v2437 = vpop.f32.mrf.mxu0
  %v2438 = vadd.f32 %v2341, %v2437
  %v2439 = vpop.f32.mrf.mxu0
  %v2440 = vpop.f32.mrf.mxu0
  %v2441 = vadd.f32 %v2344, %v2440
  %v2442 = vpop.f32.mrf.mxu0
  %2443 = vmatprep.mubr.bf16.mxu0 %v918
  %2444 = vmatmul.mubr.bf16.gmra.mxu0 %v917
  %v2445 = vpop.f32.mrf.mxu0
  %v2446 = vadd.f32 %v2349, %v2445
  %v2447 = vpop.f32.mrf.mxu0
  %v2448 = vpop.f32.mrf.mxu0
  %v2449 = vadd.f32 %v2352, %v2448
  %v2450 = vpop.f32.mrf.mxu0
  %2451 = vmatprep.mubr.bf16.mxu0 %v936
  %2452 = vmatmul.mubr.bf16.gmra.mxu0 %v935
  %v2453 = vpop.f32.mrf.mxu0
  %v2454 = vadd.f32 %v2357, %v2453
  %v2455 = vpop.f32.mrf.mxu0
  %v2456 = vpop.f32.mrf.mxu0
  %v2457 = vadd.f32 %v2360, %v2456
  %v2458 = vpop.f32.mrf.mxu0
  %2459 = vmatprep.mubr.bf16.mxu0 %v954
  %2460 = vmatmul.mubr.bf16.gmra.mxu0 %v953
  %v2461 = vpop.f32.mrf.mxu0
  %v2462 = vadd.f32 %v2365, %v2461
  %v2463 = vpop.f32.mrf.mxu0
  %v2464 = vpop.f32.mrf.mxu0
  %v2465 = vadd.f32 %v2368, %v2464
  %v2466 = vpop.f32.mrf.mxu0
  %2467 = vmatprep.mubr.bf16.mxu0 %v972
  %2468 = vmatmul.mubr.bf16.gmra.mxu0 %v971
  %v2469 = vpop.f32.mrf.mxu0
  %v2470 = vadd.f32 %v2373, %v2469
  %v2471 = vpop.f32.mrf.mxu0
  %v2472 = vpop.f32.mrf.mxu0
  %v2473 = vadd.f32 %v2376, %v2472
  %v2474 = vpop.f32.mrf.mxu0
  %2475 = vmatprep.mubr.bf16.mxu0 %v990
  %2476 = vmatmul.mubr.bf16.gmra.mxu0 %v989
  %v2477 = vpop.f32.mrf.mxu0
  %v2478 = vadd.f32 %v2381, %v2477
  %v2479 = vpop.f32.mrf.mxu0
  %v2480 = vpop.f32.mrf.mxu0
  %v2481 = vadd.f32 %v2384, %v2480
  %v2482 = vpop.f32.mrf.mxu0
  %2483 = vmatprep.mubr.bf16.mxu0 %v1008
  %2484 = vmatmul.mubr.bf16.gmra.mxu0 %v1007
  %v2485 = vpop.f32.mrf.mxu0
  %v2486 = vadd.f32 %v2389, %v2485
  %v2487 = vpop.f32.mrf.mxu0
  %v2488 = vpop.f32.mrf.mxu0
  %v2489 = vadd.f32 %v2392, %v2488
  %v2490 = vpop.f32.mrf.mxu0
  %2491 = vdwg.mxu0
  %2492 = vmatprep.subr.bf16.mxu0 0
  %2493 = vmatpush1.bf16.msra.mxu0 %v1790
  %2494 = vmatprep.subr.bf16.mxu0 0
  %2495 = vmatpush1.bf16.msra.mxu0 %v1789
  %2496 = vmatprep.subr.bf16.mxu0 0
  %2497 = vmatpush1.bf16.msra.mxu0 %v1788
  %2498 = vmatprep.subr.bf16.mxu0 0
  %2499 = vmatpush1.bf16.msra.mxu0 %v1787
  %2500 = vmatprep.subr.bf16.mxu0 0
  %2501 = vmatpush1.bf16.msra.mxu0 %v1786
  %2502 = vmatprep.subr.bf16.mxu0 0
  %2503 = vmatpush1.bf16.msra.mxu0 %v1785
  %2504 = vmatprep.subr.bf16.mxu0 0
  %2505 = vmatpush1.bf16.msra.mxu0 %v1784
  %2506 = vmatprep.subr.bf16.mxu0 0
  %2507 = vmatpush1.bf16.msra.mxu0 %v1783
  %2508 = vmatprep.subr.bf16.mxu0 0
  %2509 = vmatpush2.bf16.msra.mxu0 %v1798
  %2510 = vmatprep.subr.bf16.mxu0 0
  %2511 = vmatpush2.bf16.msra.mxu0 %v1797
  %2512 = vmatprep.subr.bf16.mxu0 0
  %2513 = vmatpush2.bf16.msra.mxu0 %v1796
  %2514 = vmatprep.subr.bf16.mxu0 0
  %2515 = vmatpush2.bf16.msra.mxu0 %v1795
  %2516 = vmatprep.subr.bf16.mxu0 0
  %2517 = vmatpush2.bf16.msra.mxu0 %v1794
  %2518 = vmatprep.subr.bf16.mxu0 0
  %2519 = vmatpush2.bf16.msra.mxu0 %v1793
  %2520 = vmatprep.subr.bf16.mxu0 0
  %2521 = vmatpush2.bf16.msra.mxu0 %v1792
  %2522 = vmatprep.subr.bf16.mxu0 0
  %2523 = vmatpush2.bf16.msra.mxu0 %v1791
  %2524 = vmatprep.mubr.bf16.mxu0 %v884
  %2525 = vmatmul.mubr.bf16.gmra.mxu0 %v883
  %v2526 = vpop.f32.mrf.mxu0
  %v2527 = vadd.f32 %v2430, %v2526
  %v2528 = vpop.f32.mrf.mxu0
  %v2529 = vpop.f32.mrf.mxu0
  %v2530 = vadd.f32 %v2433, %v2529
  %v2531 = vpop.f32.mrf.mxu0
  %2532 = vmatprep.mubr.bf16.mxu0 %v902
  %2533 = vmatmul.mubr.bf16.gmra.mxu0 %v901
  %v2534 = vpop.f32.mrf.mxu0
  %v2535 = vadd.f32 %v2438, %v2534
  %v2536 = vpop.f32.mrf.mxu0
  %v2537 = vpop.f32.mrf.mxu0
  %v2538 = vadd.f32 %v2441, %v2537
  %v2539 = vpop.f32.mrf.mxu0
  %2540 = vmatprep.mubr.bf16.mxu0 %v920
  %2541 = vmatmul.mubr.bf16.gmra.mxu0 %v919
  %v2542 = vpop.f32.mrf.mxu0
  %v2543 = vadd.f32 %v2446, %v2542
  %v2544 = vpop.f32.mrf.mxu0
  %v2545 = vpop.f32.mrf.mxu0
  %v2546 = vadd.f32 %v2449, %v2545
  %v2547 = vpop.f32.mrf.mxu0
  %2548 = vmatprep.mubr.bf16.mxu0 %v938
  %2549 = vmatmul.mubr.bf16.gmra.mxu0 %v937
  %v2550 = vpop.f32.mrf.mxu0
  %v2551 = vadd.f32 %v2454, %v2550
  %v2552 = vpop.f32.mrf.mxu0
  %v2553 = vpop.f32.mrf.mxu0
  %v2554 = vadd.f32 %v2457, %v2553
  %v2555 = vpop.f32.mrf.mxu0
  %2556 = vmatprep.mubr.bf16.mxu0 %v956
  %2557 = vmatmul.mubr.bf16.gmra.mxu0 %v955
  %v2558 = vpop.f32.mrf.mxu0
  %v2559 = vadd.f32 %v2462, %v2558
  %v2560 = vpop.f32.mrf.mxu0
  %v2561 = vpop.f32.mrf.mxu0
  %v2562 = vadd.f32 %v2465, %v2561
  %v2563 = vpop.f32.mrf.mxu0
  %2564 = vmatprep.mubr.bf16.mxu0 %v974
  %2565 = vmatmul.mubr.bf16.gmra.mxu0 %v973
  %v2566 = vpop.f32.mrf.mxu0
  %v2567 = vadd.f32 %v2470, %v2566
  %v2568 = vpop.f32.mrf.mxu0
  %v2569 = vpop.f32.mrf.mxu0
  %v2570 = vadd.f32 %v2473, %v2569
  %v2571 = vpop.f32.mrf.mxu0
  %2572 = vmatprep.mubr.bf16.mxu0 %v992
  %2573 = vmatmul.mubr.bf16.gmra.mxu0 %v991
  %v2574 = vpop.f32.mrf.mxu0
  %v2575 = vadd.f32 %v2478, %v2574
  %v2576 = vpop.f32.mrf.mxu0
  %v2577 = vpop.f32.mrf.mxu0
  %v2578 = vadd.f32 %v2481, %v2577
  %v2579 = vpop.f32.mrf.mxu0
  %2580 = vmatprep.mubr.bf16.mxu0 %v1010
  %2581 = vmatmul.mubr.bf16.gmra.mxu0 %v1009
  %v2582 = vpop.f32.mrf.mxu0
  %v2583 = vadd.f32 %v2486, %v2582
  %v2584 = vpop.f32.mrf.mxu0
  %v2585 = vpop.f32.mrf.mxu0
  %v2586 = vadd.f32 %v2489, %v2585
  %v2587 = vpop.f32.mrf.mxu0
  %2588 = vdwg.mxu0
  %2589 = vmatprep.subr.bf16.mxu0 0
  %2590 = vmatpush1.bf16.msra.mxu0 %v1806
  %2591 = vmatprep.subr.bf16.mxu0 0
  %2592 = vmatpush1.bf16.msra.mxu0 %v1805
  %2593 = vmatprep.subr.bf16.mxu0 0
  %2594 = vmatpush1.bf16.msra.mxu0 %v1804
  %2595 = vmatprep.subr.bf16.mxu0 0
  %2596 = vmatpush1.bf16.msra.mxu0 %v1803
  %2597 = vmatprep.subr.bf16.mxu0 0
  %2598 = vmatpush1.bf16.msra.mxu0 %v1802
  %2599 = vmatprep.subr.bf16.mxu0 0
  %2600 = vmatpush1.bf16.msra.mxu0 %v1801
  %2601 = vmatprep.subr.bf16.mxu0 0
  %2602 = vmatpush1.bf16.msra.mxu0 %v1800
  %2603 = vmatprep.subr.bf16.mxu0 0
  %2604 = vmatpush1.bf16.msra.mxu0 %v1799
  %2605 = vmatprep.subr.bf16.mxu0 0
  %2606 = vmatpush2.bf16.msra.mxu0 %v1814
  %2607 = vmatprep.subr.bf16.mxu0 0
  %2608 = vmatpush2.bf16.msra.mxu0 %v1813
  %2609 = vmatprep.subr.bf16.mxu0 0
  %2610 = vmatpush2.bf16.msra.mxu0 %v1812
  %2611 = vmatprep.subr.bf16.mxu0 0
  %2612 = vmatpush2.bf16.msra.mxu0 %v1811
  %2613 = vmatprep.subr.bf16.mxu0 0
  %2614 = vmatpush2.bf16.msra.mxu0 %v1810
  %2615 = vmatprep.subr.bf16.mxu0 0
  %2616 = vmatpush2.bf16.msra.mxu0 %v1809
  %2617 = vmatprep.subr.bf16.mxu0 0
  %2618 = vmatpush2.bf16.msra.mxu0 %v1808
  %2619 = vmatprep.subr.bf16.mxu0 0
  %2620 = vmatpush2.bf16.msra.mxu0 %v1807
  %2621 = vmatprep.mubr.bf16.mxu0 %v886
  %2622 = vmatmul.mubr.bf16.gmra.mxu0 %v885
  %v2623 = vpop.f32.mrf.mxu0
  %v2624 = vadd.f32 %v2527, %v2623
  %v2625 = vpop.f32.mrf.mxu0
  %v2626 = vpop.f32.mrf.mxu0
  %v2627 = vadd.f32 %v2530, %v2626
  %v2628 = vpop.f32.mrf.mxu0
  %2629 = vmatprep.mubr.bf16.mxu0 %v904
  %2630 = vmatmul.mubr.bf16.gmra.mxu0 %v903
  %v2631 = vpop.f32.mrf.mxu0
  %v2632 = vadd.f32 %v2535, %v2631
  %v2633 = vpop.f32.mrf.mxu0
  %v2634 = vpop.f32.mrf.mxu0
  %v2635 = vadd.f32 %v2538, %v2634
  %v2636 = vpop.f32.mrf.mxu0
  %2637 = vmatprep.mubr.bf16.mxu0 %v922
  %2638 = vmatmul.mubr.bf16.gmra.mxu0 %v921
  %v2639 = vpop.f32.mrf.mxu0
  %v2640 = vadd.f32 %v2543, %v2639
  %v2641 = vpop.f32.mrf.mxu0
  %v2642 = vpop.f32.mrf.mxu0
  %v2643 = vadd.f32 %v2546, %v2642
  %v2644 = vpop.f32.mrf.mxu0
  %2645 = vmatprep.mubr.bf16.mxu0 %v940
  %2646 = vmatmul.mubr.bf16.gmra.mxu0 %v939
  %v2647 = vpop.f32.mrf.mxu0
  %v2648 = vadd.f32 %v2551, %v2647
  %v2649 = vpop.f32.mrf.mxu0
  %v2650 = vpop.f32.mrf.mxu0
  %v2651 = vadd.f32 %v2554, %v2650
  %v2652 = vpop.f32.mrf.mxu0
  %2653 = vmatprep.mubr.bf16.mxu0 %v958
  %2654 = vmatmul.mubr.bf16.gmra.mxu0 %v957
  %v2655 = vpop.f32.mrf.mxu0
  %v2656 = vadd.f32 %v2559, %v2655
  %v2657 = vpop.f32.mrf.mxu0
  %v2658 = vpop.f32.mrf.mxu0
  %v2659 = vadd.f32 %v2562, %v2658
  %v2660 = vpop.f32.mrf.mxu0
  %2661 = vmatprep.mubr.bf16.mxu0 %v976
  %2662 = vmatmul.mubr.bf16.gmra.mxu0 %v975
  %v2663 = vpop.f32.mrf.mxu0
  %v2664 = vadd.f32 %v2567, %v2663
  %v2665 = vpop.f32.mrf.mxu0
  %v2666 = vpop.f32.mrf.mxu0
  %v2667 = vadd.f32 %v2570, %v2666
  %v2668 = vpop.f32.mrf.mxu0
  %2669 = vmatprep.mubr.bf16.mxu0 %v994
  %2670 = vmatmul.mubr.bf16.gmra.mxu0 %v993
  %v2671 = vpop.f32.mrf.mxu0
  %v2672 = vadd.f32 %v2575, %v2671
  %v2673 = vpop.f32.mrf.mxu0
  %v2674 = vpop.f32.mrf.mxu0
  %v2675 = vadd.f32 %v2578, %v2674
  %v2676 = vpop.f32.mrf.mxu0
  %2677 = vmatprep.mubr.bf16.mxu0 %v1012
  %2678 = vmatmul.mubr.bf16.gmra.mxu0 %v1011
  %v2679 = vpop.f32.mrf.mxu0
  %v2680 = vadd.f32 %v2583, %v2679
  %v2681 = vpop.f32.mrf.mxu0
  %v2682 = vpop.f32.mrf.mxu0
  %v2683 = vadd.f32 %v2586, %v2682
  %v2684 = vpop.f32.mrf.mxu0
  %2685 = vdwg.mxu0
  %2686 = vmatprep.subr.bf16.mxu0 0
  %2687 = vmatpush1.bf16.msra.mxu0 %v1822
  %2688 = vmatprep.subr.bf16.mxu0 0
  %2689 = vmatpush1.bf16.msra.mxu0 %v1821
  %2690 = vmatprep.subr.bf16.mxu0 0
  %2691 = vmatpush1.bf16.msra.mxu0 %v1820
  %2692 = vmatprep.subr.bf16.mxu0 0
  %2693 = vmatpush1.bf16.msra.mxu0 %v1819
  %2694 = vmatprep.subr.bf16.mxu0 0
  %2695 = vmatpush1.bf16.msra.mxu0 %v1818
  %2696 = vmatprep.subr.bf16.mxu0 0
  %2697 = vmatpush1.bf16.msra.mxu0 %v1817
  %2698 = vmatprep.subr.bf16.mxu0 0
  %2699 = vmatpush1.bf16.msra.mxu0 %v1816
  %2700 = vmatprep.subr.bf16.mxu0 0
  %2701 = vmatpush1.bf16.msra.mxu0 %v1815
  %2702 = vmatprep.subr.bf16.mxu0 0
  %2703 = vmatpush2.bf16.msra.mxu0 %v1830
  %2704 = vmatprep.subr.bf16.mxu0 0
  %2705 = vmatpush2.bf16.msra.mxu0 %v1829
  %2706 = vmatprep.subr.bf16.mxu0 0
  %2707 = vmatpush2.bf16.msra.mxu0 %v1828
  %2708 = vmatprep.subr.bf16.mxu0 0
  %2709 = vmatpush2.bf16.msra.mxu0 %v1827
  %2710 = vmatprep.subr.bf16.mxu0 0
  %2711 = vmatpush2.bf16.msra.mxu0 %v1826
  %2712 = vmatprep.subr.bf16.mxu0 0
  %2713 = vmatpush2.bf16.msra.mxu0 %v1825
  %2714 = vmatprep.subr.bf16.mxu0 0
  %2715 = vmatpush2.bf16.msra.mxu0 %v1824
  %2716 = vmatprep.subr.bf16.mxu0 0
  %2717 = vmatpush2.bf16.msra.mxu0 %v1823
  %2718 = vmatprep.mubr.bf16.mxu0 %v888
  %2719 = vmatmul.mubr.bf16.gmra.mxu0 %v887
  %v2720 = vpop.f32.mrf.mxu0
  %v2721 = vadd.f32 %v2624, %v2720
  %v2722 = vpop.f32.mrf.mxu0
  %v2723 = vpop.f32.mrf.mxu0
  %v2724 = vadd.f32 %v2627, %v2723
  %v2725 = vpop.f32.mrf.mxu0
  %2726 = vmatprep.mubr.bf16.mxu0 %v906
  %2727 = vmatmul.mubr.bf16.gmra.mxu0 %v905
  %v2728 = vpop.f32.mrf.mxu0
  %v2729 = vadd.f32 %v2632, %v2728
  %v2730 = vpop.f32.mrf.mxu0
  %v2731 = vpop.f32.mrf.mxu0
  %v2732 = vadd.f32 %v2635, %v2731
  %v2733 = vpop.f32.mrf.mxu0
  %2734 = vmatprep.mubr.bf16.mxu0 %v924
  %2735 = vmatmul.mubr.bf16.gmra.mxu0 %v923
  %v2736 = vpop.f32.mrf.mxu0
  %v2737 = vadd.f32 %v2640, %v2736
  %v2738 = vpop.f32.mrf.mxu0
  %v2739 = vpop.f32.mrf.mxu0
  %v2740 = vadd.f32 %v2643, %v2739
  %v2741 = vpop.f32.mrf.mxu0
  %2742 = vmatprep.mubr.bf16.mxu0 %v942
  %2743 = vmatmul.mubr.bf16.gmra.mxu0 %v941
  %v2744 = vpop.f32.mrf.mxu0
  %v2745 = vadd.f32 %v2648, %v2744
  %v2746 = vpop.f32.mrf.mxu0
  %v2747 = vpop.f32.mrf.mxu0
  %v2748 = vadd.f32 %v2651, %v2747
  %v2749 = vpop.f32.mrf.mxu0
  %2750 = vmatprep.mubr.bf16.mxu0 %v960
  %2751 = vmatmul.mubr.bf16.gmra.mxu0 %v959
  %v2752 = vpop.f32.mrf.mxu0
  %v2753 = vadd.f32 %v2656, %v2752
  %v2754 = vpop.f32.mrf.mxu0
  %v2755 = vpop.f32.mrf.mxu0
  %v2756 = vadd.f32 %v2659, %v2755
  %v2757 = vpop.f32.mrf.mxu0
  %2758 = vmatprep.mubr.bf16.mxu0 %v978
  %2759 = vmatmul.mubr.bf16.gmra.mxu0 %v977
  %v2760 = vpop.f32.mrf.mxu0
  %v2761 = vadd.f32 %v2664, %v2760
  %v2762 = vpop.f32.mrf.mxu0
  %v2763 = vpop.f32.mrf.mxu0
  %v2764 = vadd.f32 %v2667, %v2763
  %v2765 = vpop.f32.mrf.mxu0
  %2766 = vmatprep.mubr.bf16.mxu0 %v996
  %2767 = vmatmul.mubr.bf16.gmra.mxu0 %v995
  %v2768 = vpop.f32.mrf.mxu0
  %v2769 = vadd.f32 %v2672, %v2768
  %v2770 = vpop.f32.mrf.mxu0
  %v2771 = vpop.f32.mrf.mxu0
  %v2772 = vadd.f32 %v2675, %v2771
  %v2773 = vpop.f32.mrf.mxu0
  %2774 = vmatprep.mubr.bf16.mxu0 %v1014
  %2775 = vmatmul.mubr.bf16.gmra.mxu0 %v1013
  %v2776 = vpop.f32.mrf.mxu0
  %v2777 = vadd.f32 %v2680, %v2776
  %v2778 = vpop.f32.mrf.mxu0
  %v2779 = vpop.f32.mrf.mxu0
  %v2780 = vadd.f32 %v2683, %v2779
  %v2781 = vpop.f32.mrf.mxu0
  %2782 = vdwg.mxu0
  %2783 = vmatprep.subr.bf16.mxu0 0
  %2784 = vmatpush1.bf16.msra.mxu0 %v1838
  %2785 = vmatprep.subr.bf16.mxu0 0
  %2786 = vmatpush1.bf16.msra.mxu0 %v1837
  %2787 = vmatprep.subr.bf16.mxu0 0
  %2788 = vmatpush1.bf16.msra.mxu0 %v1836
  %2789 = vmatprep.subr.bf16.mxu0 0
  %2790 = vmatpush1.bf16.msra.mxu0 %v1835
  %2791 = vmatprep.subr.bf16.mxu0 0
  %2792 = vmatpush1.bf16.msra.mxu0 %v1834
  %2793 = vmatprep.subr.bf16.mxu0 0
  %2794 = vmatpush1.bf16.msra.mxu0 %v1833
  %2795 = vmatprep.subr.bf16.mxu0 0
  %2796 = vmatpush1.bf16.msra.mxu0 %v1832
  %2797 = vmatprep.subr.bf16.mxu0 0
  %2798 = vmatpush1.bf16.msra.mxu0 %v1831
  %2799 = vmatprep.subr.bf16.mxu0 0
  %2800 = vmatpush2.bf16.msra.mxu0 0
  %2801 = vmatprep.subr.bf16.mxu0 0
  %2802 = vmatpush2.bf16.msra.mxu0 0
  %2803 = vmatprep.subr.bf16.mxu0 0
  %2804 = vmatpush2.bf16.msra.mxu0 0
  %2805 = vmatprep.subr.bf16.mxu0 0
  %2806 = vmatpush2.bf16.msra.mxu0 0
  %2807 = vmatprep.subr.bf16.mxu0 0
  %2808 = vmatpush2.bf16.msra.mxu0 0
  %2809 = vmatprep.subr.bf16.mxu0 0
  %2810 = vmatpush2.bf16.msra.mxu0 0
  %2811 = vmatprep.subr.bf16.mxu0 0
  %2812 = vmatpush2.bf16.msra.mxu0 %v2005
  %2813 = vmatprep.subr.bf16.mxu0 0
  %2814 = vmatpush2.bf16.msra.mxu0 %v1839
  %2815 = vmatprep.mubr.bf16.mxu0 %v1980
  %2816 = vmatmul.mubr.bf16.gmra.mxu0 %v889
  %v2817 = vpop.f32.mrf.mxu0
  %v2818 = vadd.f32 %v2721, %v2817
  %v2819 = vpop.f32.mrf.mxu0
  %v2820 = vpop.f32.mrf.mxu0
  %v2821 = vadd.f32 %v2724, %v2820
  %v2822 = vpop.f32.mrf.mxu0
  %2823 = vmatprep.mubr.bf16.mxu0 %v1983
  %2824 = vmatmul.mubr.bf16.gmra.mxu0 %v907
  %v2825 = vpop.f32.mrf.mxu0
  %v2826 = vadd.f32 %v2729, %v2825
  %v2827 = vpop.f32.mrf.mxu0
  %v2828 = vpop.f32.mrf.mxu0
  %v2829 = vadd.f32 %v2732, %v2828
  %v2830 = vpop.f32.mrf.mxu0
  %2831 = vmatprep.mubr.bf16.mxu0 %v1986
  %2832 = vmatmul.mubr.bf16.gmra.mxu0 %v925
  %v2833 = vpop.f32.mrf.mxu0
  %v2834 = vadd.f32 %v2737, %v2833
  %v2835 = vpop.f32.mrf.mxu0
  %v2836 = vpop.f32.mrf.mxu0
  %v2837 = vadd.f32 %v2740, %v2836
  %v2838 = vpop.f32.mrf.mxu0
  %2839 = vmatprep.mubr.bf16.mxu0 %v1989
  %2840 = vmatmul.mubr.bf16.gmra.mxu0 %v943
  %v2841 = vpop.f32.mrf.mxu0
  %v2842 = vadd.f32 %v2745, %v2841
  %v2843 = vpop.f32.mrf.mxu0
  %v2844 = vpop.f32.mrf.mxu0
  %v2845 = vadd.f32 %v2748, %v2844
  %v2846 = vpop.f32.mrf.mxu0
  %2847 = vmatprep.mubr.bf16.mxu0 %v1992
  %2848 = vmatmul.mubr.bf16.gmra.mxu0 %v961
  %v2849 = vpop.f32.mrf.mxu0
  %v2850 = vadd.f32 %v2753, %v2849
  %v2851 = vpop.f32.mrf.mxu0
  %v2852 = vpop.f32.mrf.mxu0
  %v2853 = vadd.f32 %v2756, %v2852
  %v2854 = vpop.f32.mrf.mxu0
  %2855 = vmatprep.mubr.bf16.mxu0 %v1995
  %2856 = vmatmul.mubr.bf16.gmra.mxu0 %v979
  %v2857 = vpop.f32.mrf.mxu0
  %v2858 = vadd.f32 %v2761, %v2857
  %v2859 = vpop.f32.mrf.mxu0
  %v2860 = vpop.f32.mrf.mxu0
  %v2861 = vadd.f32 %v2764, %v2860
  %v2862 = vpop.f32.mrf.mxu0
  %2863 = vmatprep.mubr.bf16.mxu0 %v1998
  %2864 = vmatmul.mubr.bf16.gmra.mxu0 %v997
  %v2865 = vpop.f32.mrf.mxu0
  %v2866 = vadd.f32 %v2769, %v2865
  %v2867 = vpop.f32.mrf.mxu0
  %v2868 = vpop.f32.mrf.mxu0
  %v2869 = vadd.f32 %v2772, %v2868
  %v2870 = vpop.f32.mrf.mxu0
  %2871 = vmatprep.mubr.bf16.mxu0 %v2001
  %2872 = vmatmul.mubr.bf16.gmra.mxu0 %v1015
  %v2873 = vpop.f32.mrf.mxu0
  %v2874 = vadd.f32 %v2777, %v2873
  %v2875 = vpop.f32.mrf.mxu0
  %v2876 = vpop.f32.mrf.mxu0
  %v2877 = vadd.f32 %v2780, %v2876
  %v2878 = vpop.f32.mrf.mxu0
  %2879 = vdwg.mxu0
  %v2880 = vmax.f32 %v2818, 0.0
  %v2881 = vmax.f32 %v2821, 0.0
  %v2882 = vmax.f32 %v2826, 0.0
  %v2883 = vmax.f32 %v2829, 0.0
  %v2884 = vmax.f32 %v2834, 0.0
  %v2885 = vmax.f32 %v2837, 0.0
  %v2886 = vmax.f32 %v2842, 0.0
  %v2887 = vmax.f32 %v2845, 0.0
  %v2888 = vmax.f32 %v2850, 0.0
  %v2889 = vmax.f32 %v2853, 0.0
  %v2890 = vmax.f32 %v2858, 0.0
  %v2891 = vmax.f32 %v2861, 0.0
  %v2892 = vmax.f32 %v2866, 0.0
  %v2893 = vmax.f32 %v2869, 0.0
  %v2894 = vmax.f32 %v2874, 0.0
  %v2895 = vmax.f32 %v2877, 0.0
  %v2896 = vpack.c.bf16 %v2881, %v2880
  %v2897 = vpack.c.bf16 %v2883, %v2882
  %v2898 = vpack.c.bf16 %v2885, %v2884
  %v2899 = vpack.c.bf16 %v2887, %v2886
  %v2900 = vpack.c.bf16 %v2889, %v2888
  %v2901 = vpack.c.bf16 %v2891, %v2890
  %v2902 = vpack.c.bf16 %v2893, %v2892
  %v2903 = vpack.c.bf16 %v2895, %v2894
  %v2912 = vunpack.c.l.b16 %v2896
  %v2913 = vunpack.c.h.b16 %v2896
  %v2914 = vunpack.c.l.b16 %v2897
  %v2915 = vunpack.c.h.b16 %v2897
  %v2916 = vunpack.c.l.b16 %v2898
  %v2917 = vunpack.c.h.b16 %v2898
  %v2918 = vunpack.c.l.b16 %v2899
  %v2919 = vunpack.c.h.b16 %v2899
  %v2920 = vunpack.c.l.b16 %v2900
  %v2921 = vunpack.c.h.b16 %v2900
  %v2922 = vunpack.c.l.b16 %v2901
  %v2923 = vunpack.c.h.b16 %v2901
  %v2924 = vunpack.c.l.b16 %v2902
  %v2925 = vunpack.c.h.b16 %v2902
  %v2926 = vunpack.c.l.b16 %v2903
  %v2927 = vunpack.c.h.b16 %v2903
  %v2928 = vpack.c.b16 %v2912, %v2912
  %v2929 = vpack.c.b16 %v2913, %v2913
  %v2930 = vpack.c.b16 %v2914, %v2914
  %v2931 = vpack.c.b16 %v2915, %v2915
  %v2932 = vpack.c.b16 %v2916, %v2916
  %v2933 = vpack.c.b16 %v2917, %v2917
  %v2934 = vpack.c.b16 %v2918, %v2918
  %v2935 = vpack.c.b16 %v2919, %v2919
  %v2936 = vpack.c.b16 %v2920, %v2920
  %v2937 = vpack.c.b16 %v2921, %v2921
  %v2938 = vpack.c.b16 %v2922, %v2922
  %v2939 = vpack.c.b16 %v2923, %v2923
  %v2940 = vpack.c.b16 %v2924, %v2924
  %v2941 = vpack.c.b16 %v2925, %v2925
  %v2942 = vpack.c.b16 %v2926, %v2926
  %v2943 = vpack.c.b16 %v2927, %v2927
  %vm2960 = vcmask 158720
  %2961 = vst.msk [vmem:[%s3] sm:$0xf] %vm2960, %v2928
  %2962 = vst.msk [vmem:[%s3 + $0x4] sm:$0xf] %vm2960, %v2929
  %2963 = vst.msk [vmem:[%s3 + $0x8] sm:$0xf] %vm2960, %v2930
  %2964 = vst.msk [vmem:[%s3 + $0xc] sm:$0xf] %vm2960, %v2931
  %2965 = vst.msk [vmem:[%s3 + $0x10] sm:$0xf] %vm2960, %v2932
  %2966 = vst.msk [vmem:[%s3 + $0x14] sm:$0xf] %vm2960, %v2933
  %2967 = vst.msk [vmem:[%s3 + $0x18] sm:$0xf] %vm2960, %v2934
  %2968 = vst.msk [vmem:[%s3 + $0x1c] sm:$0xf] %vm2960, %v2935
  %2969 = vst.msk [vmem:[%s3 + $0x20] sm:$0xf] %vm2960, %v2936
  %2970 = vst.msk [vmem:[%s3 + $0x24] sm:$0xf] %vm2960, %v2937
  %2971 = vst.msk [vmem:[%s3 + $0x28] sm:$0xf] %vm2960, %v2938
  %2972 = vst.msk [vmem:[%s3 + $0x2c] sm:$0xf] %vm2960, %v2939
  %2973 = vst.msk [vmem:[%s3 + $0x30] sm:$0xf] %vm2960, %v2940
  %2974 = vst.msk [vmem:[%s3 + $0x34] sm:$0xf] %vm2960, %v2941
  %2975 = vst.msk [vmem:[%s3 + $0x38] sm:$0xf] %vm2960, %v2942
  %2976 = vst.msk [vmem:[%s3 + $0x3c] sm:$0xf] %vm2960, %v2943
  // Predicated region
  $region14: #{net_forward.13} parent=0 // pred_check
    _
  $region15: #{net_forward.13} parent=0 // pred_check_branch
    %2978 = sbr.rel (0) target = $region17
  $region16: #{net_forward.13} parent=0 // pred_region
    _
  $region17: #{net_forward.13} parent=0 // pred_fallthru
    _
  // Predicated region
  $region18: #{net_forward.13} parent=0 // pred_check
    _
  $region19: #{net_forward.13} parent=0 // pred_check_branch
    %2980 = sbr.rel (0) target = $region21
  $region20: #{net_forward.13} parent=0 // pred_region
    _
  $region21: #{net_forward.13} parent=0 // pred_fallthru
    _

// kernel: net_forward.14
$region0: #{net_forward.14}
  #allocation0 [shape = 'u32[]', space=smem, size = 0x4, offset = 0x4, fixed_abs, tag = 'smem constant byte address 0x4 - core index']
  #allocation1 [shape = 'u32[144,128]{1,0:T(1,128)}', space=vmem, size = 0x12000, scoped, tag = 'internal scratch']
  %s0 = inlined_call_operand.vmem [shape: bf16[32,180], index: 0, kind: input, shape index: {}]
  %s1 = inlined_call_operand.vmem [shape: bf16[180,72], index: 1, kind: input, shape index: {}]
  %s2 = inlined_call_operand.vmem [shape: f32[1,72], index: 2, kind: input, shape index: {}]
  %s3 = inlined_call_operand.vmem [shape: bf16[32,72], index: 3, kind: output, shape index: {}]
  %s4 = sld [smem:[#allocation0]]
  $region22: #{net_forward.14} parent=0
    _
  %s6 = ssub.s32 1, %s4
  %s7 = scalar_select 0, %s6, %s4
  // Predicated region
  $region2: #{net_forward.14} parent=0 // pred_check
    _
  $region3: #{net_forward.14} parent=0 // pred_check_branch
    %9 = sbr.rel (0) target = $region5
  $region4: #{net_forward.14} parent=0 // pred_region
    _
  $region5: #{net_forward.14} parent=0 // pred_fallthru
    _
  // Predicated region
  $region6: #{net_forward.14} parent=0 // pred_check
    _
  $region7: #{net_forward.14} parent=0 // pred_check_branch
    %11 = sbr.rel (0) target = $region9
  $region8: #{net_forward.14} parent=0 // pred_region
    _
  $region9: #{net_forward.14} parent=0 // pred_fallthru
    _
  // Predicated region
  $region10: #{net_forward.14} parent=0 // pred_check
    _
  $region11: #{net_forward.14} parent=0 // pred_check_branch
    %13 = sbr.rel (0) target = $region13
  $region12: #{net_forward.14} parent=0 // pred_region
    _
  $region13: #{net_forward.14} parent=0 // pred_fallthru
    _
  %v15 = vld [vmem:[%s0] sm:$0xff]
  %v16 = vld [vmem:[%s0 + $0x8] sm:$0xff]
  %v17 = vld [vmem:[%s0 + $0x10] sm:$0xff]
  %v18 = vld [vmem:[%s0 + $0x18] sm:$0xff]
  %v19 = vld [vmem:[%s1] sm:$0xf]
  %v20 = vld [vmem:[%s1 + $0x4] sm:$0xf]
  %v21 = vld [vmem:[%s1 + $0x8] sm:$0xf]
  %v22 = vld [vmem:[%s1 + $0xc] sm:$0xf]
  %v23 = vld [vmem:[%s1 + $0x10] sm:$0xf]
  %v24 = vld [vmem:[%s1 + $0x14] sm:$0xf]
  %v25 = vld [vmem:[%s1 + $0x18] sm:$0xf]
  %v26 = vld [vmem:[%s1 + $0x1c] sm:$0xf]
  %v27 = vld [vmem:[%s1 + $0x20] sm:$0xf]
  %v28 = vld [vmem:[%s1 + $0x24] sm:$0xf]
  %v29 = vld [vmem:[%s1 + $0x28] sm:$0xf]
  %v30 = vld [vmem:[%s1 + $0x2c] sm:$0xf]
  %v31 = vld [vmem:[%s1 + $0x30] sm:$0xf]
  %v32 = vld [vmem:[%s1 + $0x34] sm:$0xf]
  %v33 = vld [vmem:[%s1 + $0x38] sm:$0xf]
  %v34 = vld [vmem:[%s1 + $0x3c] sm:$0xf]
  %v35 = vld [vmem:[%s1 + $0x40] sm:$0xf]
  %v36 = vld [vmem:[%s1 + $0x44] sm:$0xf]
  %v37 = vld [vmem:[%s1 + $0x48] sm:$0xf]
  %v38 = vld [vmem:[%s1 + $0x4c] sm:$0xf]
  %v39 = vld [vmem:[%s1 + $0x50] sm:$0xf]
  %v40 = vld [vmem:[%s1 + $0x54] sm:$0xf]
  %v41 = vld [vmem:[%s1 + $0x58] sm:$0x3]
  %v42 = vld [vmem:[%s2] sm:$0x1]
  %v44 = vlaneseq
  %v45 = vshrl.u32 %v44, 7
  %v46 = vsub.s32 0, %v45
  %v47 = vrot.slane %v42, %v46
  %v53 = vunpack.c.l.b16 %v15
  %v54 = vunpack.c.h.b16 %v15
  %v55 = vunpack.c.l.b16 %v16
  %v56 = vunpack.c.h.b16 %v16
  %v57 = vunpack.c.l.b16 %v17
  %v58 = vunpack.c.h.b16 %v17
  %v59 = vunpack.c.l.b16 %v18
  %v60 = vunpack.c.h.b16 %v18
  %v61 = vpack.c.b16 %v55, %v53
  %v62 = vpack.c.b16 %v56, %v54
  %v63 = vpack.c.b16 %v59, %v57
  %v64 = vpack.c.b16 %v60, %v58
  %v90 = vunpack.c.l.b16 %v19
  %v91 = vunpack.c.l.b16 %v20
  %v92 = vunpack.c.l.b16 %v21
  %v93 = vunpack.c.l.b16 %v22
  %v94 = vunpack.c.l.b16 %v23
  %v95 = vunpack.c.l.b16 %v24
  %v96 = vunpack.c.l.b16 %v25
  %v97 = vunpack.c.l.b16 %v26
  %v98 = vunpack.c.l.b16 %v27
  %v99 = vunpack.c.l.b16 %v28
  %v100 = vunpack.c.l.b16 %v29
  %v101 = vunpack.c.l.b16 %v30
  %v102 = vunpack.c.l.b16 %v31
  %v103 = vunpack.c.l.b16 %v32
  %v104 = vunpack.c.l.b16 %v33
  %v105 = vunpack.c.l.b16 %v34
  %v106 = vunpack.c.l.b16 %v35
  %v107 = vunpack.c.l.b16 %v36
  %v108 = vunpack.c.l.b16 %v37
  %v109 = vunpack.c.l.b16 %v38
  %v110 = vunpack.c.l.b16 %v39
  %v111 = vunpack.c.l.b16 %v40
  %v112 = vunpack.c.l.b16 %v41
  %v113 = vpack.c.b16 %v91, %v90
  %v114 = vpack.c.b16 %v93, %v92
  %v115 = vpack.c.b16 %v95, %v94
  %v116 = vpack.c.b16 %v97, %v96
  %v117 = vpack.c.b16 %v99, %v98
  %v118 = vpack.c.b16 %v101, %v100
  %v119 = vpack.c.b16 %v103, %v102
  %v120 = vpack.c.b16 %v105, %v104
  %v121 = vpack.c.b16 %v107, %v106
  %v122 = vpack.c.b16 %v109, %v108
  %v123 = vpack.c.b16 %v111, %v110
  %v124 = vpack.c.b16 %v112, %v112
  %vm136 = vcmask 424960
  %v138 = vsel %vm136, %v62, 0
  %v141 = vsel %vm136, %v64, 0
  %vm143 = vcmask 1041408
  %v145 = vsel %vm143, %v124, 0
  %147 = vmatprep.subr.bf16.mxu0 0
  %148 = vmatpush1.bf16.msra.mxu0 %v120
  %149 = vmatprep.subr.bf16.mxu0 0
  %150 = vmatpush1.bf16.msra.mxu0 %v119
  %151 = vmatprep.subr.bf16.mxu0 0
  %152 = vmatpush1.bf16.msra.mxu0 %v118
  %153 = vmatprep.subr.bf16.mxu0 0
  %154 = vmatpush1.bf16.msra.mxu0 %v117
  %155 = vmatprep.subr.bf16.mxu0 0
  %156 = vmatpush1.bf16.msra.mxu0 %v116
  %157 = vmatprep.subr.bf16.mxu0 0
  %158 = vmatpush1.bf16.msra.mxu0 %v115
  %159 = vmatprep.subr.bf16.mxu0 0
  %160 = vmatpush1.bf16.msra.mxu0 %v114
  %161 = vmatprep.subr.bf16.mxu0 0
  %162 = vmatpush1.bf16.msra.mxu0 %v113
  %163 = vmatprep.subr.bf16.mxu0 0
  %164 = vmatpush2.bf16.msra.mxu0 0
  %165 = vmatprep.subr.bf16.mxu0 0
  %166 = vmatpush2.bf16.msra.mxu0 0
  %167 = vmatprep.subr.bf16.mxu0 0
  %168 = vmatpush2.bf16.msra.mxu0 0
  %169 = vmatprep.subr.bf16.mxu0 0
  %170 = vmatpush2.bf16.msra.mxu0 0
  %171 = vmatprep.subr.bf16.mxu0 0
  %172 = vmatpush2.bf16.msra.mxu0 %v145
  %173 = vmatprep.subr.bf16.mxu0 0
  %174 = vmatpush2.bf16.msra.mxu0 %v123
  %175 = vmatprep.subr.bf16.mxu0 0
  %176 = vmatpush2.bf16.msra.mxu0 %v122
  %177 = vmatprep.subr.bf16.mxu0 0
  %178 = vmatpush2.bf16.msra.mxu0 %v121
  %179 = vmatprep.mubr.bf16.mxu0 %v138
  %180 = vmatmul.mubr.bf16.gmra.mxu0 %v61
  %v181 = vpop.f32.mrf.mxu0
  %v182 = vadd.f32 %v47, %v181
  %v183 = vpop.f32.mrf.mxu0
  %v184 = vpop.f32.mrf.mxu0
  %v185 = vadd.f32 %v47, %v184
  %v186 = vpop.f32.mrf.mxu0
  %187 = vmatprep.mubr.bf16.mxu0 %v141
  %188 = vmatmul.mubr.bf16.gmra.mxu0 %v63
  %v189 = vpop.f32.mrf.mxu0
  %v190 = vadd.f32 %v47, %v189
  %v191 = vpop.f32.mrf.mxu0
  %v192 = vpop.f32.mrf.mxu0
  %v193 = vadd.f32 %v47, %v192
  %v194 = vpop.f32.mrf.mxu0
  %195 = vdwg.mxu0
  %v196 = vpack.c.bf16 %v185, %v182
  %v197 = vpack.c.bf16 %v193, %v190
  %v200 = vunpack.c.l.b16 %v196
  %v201 = vunpack.c.h.b16 %v196
  %v202 = vunpack.c.l.b16 %v197
  %v203 = vunpack.c.h.b16 %v197
  %v204 = vpack.c.b16 %v200, %v200
  %v205 = vpack.c.b16 %v201, %v201
  %v206 = vpack.c.b16 %v202, %v202
  %v207 = vpack.c.b16 %v203, %v203
  %vm212 = vcmask 584704
  %213 = vst.msk [vmem:[%s3] sm:$0xf] %vm212, %v204
  %214 = vst.msk [vmem:[%s3 + $0x4] sm:$0xf] %vm212, %v205
  %215 = vst.msk [vmem:[%s3 + $0x8] sm:$0xf] %vm212, %v206
  %216 = vst.msk [vmem:[%s3 + $0xc] sm:$0xf] %vm212, %v207
  // Predicated region
  $region14: #{net_forward.14} parent=0 // pred_check
    _
  $region15: #{net_forward.14} parent=0 // pred_check_branch
    %218 = sbr.rel (0) target = $region17
  $region16: #{net_forward.14} parent=0 // pred_region
    _
  $region17: #{net_forward.14} parent=0 // pred_fallthru
    _
  // Predicated region
  $region18: #{net_forward.14} parent=0 // pred_check
    _
  $region19: #{net_forward.14} parent=0 // pred_check_branch
    %220 = sbr.rel (0) target = $region21
  $region20: #{net_forward.14} parent=0 // pred_region
    _
  $region21: #{net_forward.14} parent=0 // pred_fallthru
    _

// kernel: net_forward.15
$region0: #{net_forward.15}
  #allocation0 [shape = 'u32[]', space=smem, size = 0x4, offset = 0x4, fixed_abs, tag = 'smem constant byte address 0x4 - core index']
  #allocation1 [shape = 'u32[144,128]{1,0:T(1,128)}', space=vmem, size = 0x12000, scoped, tag = 'internal scratch']
  %s0 = inlined_call_operand.vmem [shape: bf16[32,544], index: 0, kind: input, shape index: {}]
  %s1 = inlined_call_operand.vmem [shape: bf16[544,48], index: 1, kind: input, shape index: {}]
  %s2 = inlined_call_operand.vmem [shape: f32[1,48], index: 2, kind: input, shape index: {}]
  %s3 = inlined_call_operand.vmem [shape: bf16[32,48], index: 3, kind: output, shape index: {}]
  %s4 = sld [smem:[#allocation0]]
  $region22: #{net_forward.15} parent=0
    _
  %s6 = ssub.s32 1, %s4
  %s7 = scalar_select 0, %s6, %s4
  // Predicated region
  $region2: #{net_forward.15} parent=0 // pred_check
    _
  $region3: #{net_forward.15} parent=0 // pred_check_branch
    %9 = sbr.rel (0) target = $region5
  $region4: #{net_forward.15} parent=0 // pred_region
    _
  $region5: #{net_forward.15} parent=0 // pred_fallthru
    _
  // Predicated region
  $region6: #{net_forward.15} parent=0 // pred_check
    _
  $region7: #{net_forward.15} parent=0 // pred_check_branch
    %11 = sbr.rel (0) target = $region9
  $region8: #{net_forward.15} parent=0 // pred_region
    _
  $region9: #{net_forward.15} parent=0 // pred_fallthru
    _
  // Predicated region
  $region10: #{net_forward.15} parent=0 // pred_check
    _
  $region11: #{net_forward.15} parent=0 // pred_check_branch
    %13 = sbr.rel (0) target = $region13
  $region12: #{net_forward.15} parent=0 // pred_region
    _
  $region13: #{net_forward.15} parent=0 // pred_fallthru
    _
  %v15 = vld [vmem:[%s0] sm:$0xff]
  %v16 = vld [vmem:[%s0 + $0x8] sm:$0xff]
  %v17 = vld [vmem:[%s0 + $0x10] sm:$0xf]
  %v18 = vld [vmem:[%s0 + $0x14] sm:$0xff]
  %v19 = vld [vmem:[%s0 + $0x1c] sm:$0xff]
  %v20 = vld [vmem:[%s0 + $0x24] sm:$0xf]
  %v21 = vld [vmem:[%s0 + $0x28] sm:$0xff]
  %v22 = vld [vmem:[%s0 + $0x30] sm:$0xff]
  %v23 = vld [vmem:[%s0 + $0x38] sm:$0xf]
  %v24 = vld [vmem:[%s0 + $0x3c] sm:$0xff]
  %v25 = vld [vmem:[%s0 + $0x44] sm:$0xff]
  %v26 = vld [vmem:[%s0 + $0x4c] sm:$0xf]
  %v27 = vld [vmem:[%s1] sm:$0xf]
  %v28 = vld [vmem:[%s1 + $0x4] sm:$0xf]
  %v29 = vld [vmem:[%s1 + $0x8] sm:$0xf]
  %v30 = vld [vmem:[%s1 + $0xc] sm:$0xf]
  %v31 = vld [vmem:[%s1 + $0x10] sm:$0xf]
  %v32 = vld [vmem:[%s1 + $0x14] sm:$0xf]
  %v33 = vld [vmem:[%s1 + $0x18] sm:$0xf]
  %v34 = vld [vmem:[%s1 + $0x1c] sm:$0xf]
  %v35 = vld [vmem:[%s1 + $0x20] sm:$0xf]
  %v36 = vld [vmem:[%s1 + $0x24] sm:$0xf]
  %v37 = vld [vmem:[%s1 + $0x28] sm:$0xf]
  %v38 = vld [vmem:[%s1 + $0x2c] sm:$0xf]
  %v39 = vld [vmem:[%s1 + $0x30] sm:$0xf]
  %v40 = vld [vmem:[%s1 + $0x34] sm:$0xf]
  %v41 = vld [vmem:[%s1 + $0x38] sm:$0xf]
  %v42 = vld [vmem:[%s1 + $0x3c] sm:$0xf]
  %v43 = vld [vmem:[%s1 + $0x40] sm:$0xf]
  %v44 = vld [vmem:[%s1 + $0x44] sm:$0xf]
  %v45 = vld [vmem:[%s1 + $0x48] sm:$0xf]
  %v46 = vld [vmem:[%s1 + $0x4c] sm:$0xf]
  %v47 = vld [vmem:[%s1 + $0x50] sm:$0xf]
  %v48 = vld [vmem:[%s1 + $0x54] sm:$0xf]
  %v49 = vld [vmem:[%s1 + $0x58] sm:$0xf]
  %v50 = vld [vmem:[%s1 + $0x5c] sm:$0xf]
  %v51 = vld [vmem:[%s1 + $0x60] sm:$0xf]
  %v52 = vld [vmem:[%s1 + $0x64] sm:$0xf]
  %v53 = vld [vmem:[%s1 + $0x68] sm:$0xf]
  %v54 = vld [vmem:[%s1 + $0x6c] sm:$0xf]
  %v55 = vld [vmem:[%s1 + $0x70] sm:$0xf]
  %v56 = vld [vmem:[%s1 + $0x74] sm:$0xf]
  %v57 = vld [vmem:[%s1 + $0x78] sm:$0xf]
  %v58 = vld [vmem:[%s1 + $0x7c] sm:$0xf]
  %v59 = vld [vmem:[%s1 + $0x80] sm:$0xf]
  %v60 = vld [vmem:[%s1 + $0x84] sm:$0xf]
  %v61 = vld [vmem:[%s1 + $0x88] sm:$0xf]
  %v62 = vld [vmem:[%s1 + $0x8c] sm:$0xf]
  %v63 = vld [vmem:[%s1 + $0x90] sm:$0xf]
  %v64 = vld [vmem:[%s1 + $0x94] sm:$0xf]
  %v65 = vld [vmem:[%s1 + $0x98] sm:$0xf]
  %v66 = vld [vmem:[%s1 + $0x9c] sm:$0xf]
  %v67 = vld [vmem:[%s1 + $0xa0] sm:$0xf]
  %v68 = vld [vmem:[%s1 + $0xa4] sm:$0xf]
  %v69 = vld [vmem:[%s1 + $0xa8] sm:$0xf]
  %v70 = vld [vmem:[%s1 + $0xac] sm:$0xf]
  %v71 = vld [vmem:[%s1 + $0xb0] sm:$0xf]
  %v72 = vld [vmem:[%s1 + $0xb4] sm:$0xf]
  %v73 = vld [vmem:[%s1 + $0xb8] sm:$0xf]
  %v74 = vld [vmem:[%s1 + $0xbc] sm:$0xf]
  %v75 = vld [vmem:[%s1 + $0xc0] sm:$0xf]
  %v76 = vld [vmem:[%s1 + $0xc4] sm:$0xf]
  %v77 = vld [vmem:[%s1 + $0xc8] sm:$0xf]
  %v78 = vld [vmem:[%s1 + $0xcc] sm:$0xf]
  %v79 = vld [vmem:[%s1 + $0xd0] sm:$0xf]
  %v80 = vld [vmem:[%s1 + $0xd4] sm:$0xf]
  %v81 = vld [vmem:[%s1 + $0xd8] sm:$0xf]
  %v82 = vld [vmem:[%s1 + $0xdc] sm:$0xf]
  %v83 = vld [vmem:[%s1 + $0xe0] sm:$0xf]
  %v84 = vld [vmem:[%s1 + $0xe4] sm:$0xf]
  %v85 = vld [vmem:[%s1 + $0xe8] sm:$0xf]
  %v86 = vld [vmem:[%s1 + $0xec] sm:$0xf]
  %v87 = vld [vmem:[%s1 + $0xf0] sm:$0xf]
  %v88 = vld [vmem:[%s1 + $0xf4] sm:$0xf]
  %v89 = vld [vmem:[%s1 + $0xf8] sm:$0xf]
  %v90 = vld [vmem:[%s1 + $0xfc] sm:$0xf]
  %v91 = vld [vmem:[%s1 + $0x100] sm:$0xf]
  %v92 = vld [vmem:[%s1 + $0x104] sm:$0xf]
  %v93 = vld [vmem:[%s1 + $0x108] sm:$0xf]
  %v94 = vld [vmem:[%s1 + $0x10c] sm:$0xf]
  %v95 = vld [vmem:[%s2] sm:$0x1]
  %v97 = vlaneseq
  %v98 = vshrl.u32 %v97, 7
  %v99 = vsub.s32 0, %v98
  %v100 = vrot.slane %v95, %v99
  %v114 = vunpack.c.l.b16 %v15
  %v115 = vunpack.c.h.b16 %v15
  %v116 = vunpack.c.l.b16 %v16
  %v117 = vunpack.c.h.b16 %v16
  %v118 = vunpack.c.l.b16 %v17
  %v119 = vunpack.c.l.b16 %v18
  %v120 = vunpack.c.h.b16 %v18
  %v121 = vunpack.c.l.b16 %v19
  %v122 = vunpack.c.h.b16 %v19
  %v123 = vunpack.c.l.b16 %v20
  %v124 = vunpack.c.l.b16 %v21
  %v125 = vunpack.c.h.b16 %v21
  %v126 = vunpack.c.l.b16 %v22
  %v127 = vunpack.c.h.b16 %v22
  %v128 = vunpack.c.l.b16 %v23
  %v129 = vunpack.c.l.b16 %v24
  %v130 = vunpack.c.h.b16 %v24
  %v131 = vunpack.c.l.b16 %v25
  %v132 = vunpack.c.h.b16 %v25
  %v133 = vunpack.c.l.b16 %v26
  %v134 = vpack.c.b16 %v119, %v114
  %v135 = vpack.c.b16 %v120, %v115
  %v136 = vpack.c.b16 %v121, %v116
  %v137 = vpack.c.b16 %v122, %v117
  %v138 = vpack.c.b16 %v123, %v118
  %v139 = vpack.c.b16 %v129, %v124
  %v140 = vpack.c.b16 %v130, %v125
  %v141 = vpack.c.b16 %v131, %v126
  %v142 = vpack.c.b16 %v132, %v127
  %v143 = vpack.c.b16 %v133, %v128
  %v220 = vunpack.c.l.b16 %v27
  %v221 = vunpack.c.l.b16 %v28
  %v222 = vunpack.c.l.b16 %v29
  %v223 = vunpack.c.l.b16 %v30
  %v224 = vunpack.c.l.b16 %v31
  %v225 = vunpack.c.l.b16 %v32
  %v226 = vunpack.c.l.b16 %v33
  %v227 = vunpack.c.l.b16 %v34
  %v228 = vunpack.c.l.b16 %v35
  %v229 = vunpack.c.l.b16 %v36
  %v230 = vunpack.c.l.b16 %v37
  %v231 = vunpack.c.l.b16 %v38
  %v232 = vunpack.c.l.b16 %v39
  %v233 = vunpack.c.l.b16 %v40
  %v234 = vunpack.c.l.b16 %v41
  %v235 = vunpack.c.l.b16 %v42
  %v236 = vunpack.c.l.b16 %v43
  %v237 = vunpack.c.l.b16 %v44
  %v238 = vunpack.c.l.b16 %v45
  %v239 = vunpack.c.l.b16 %v46
  %v240 = vunpack.c.l.b16 %v47
  %v241 = vunpack.c.l.b16 %v48
  %v242 = vunpack.c.l.b16 %v49
  %v243 = vunpack.c.l.b16 %v50
  %v244 = vunpack.c.l.b16 %v51
  %v245 = vunpack.c.l.b16 %v52
  %v246 = vunpack.c.l.b16 %v53
  %v247 = vunpack.c.l.b16 %v54
  %v248 = vunpack.c.l.b16 %v55
  %v249 = vunpack.c.l.b16 %v56
  %v250 = vunpack.c.l.b16 %v57
  %v251 = vunpack.c.l.b16 %v58
  %v252 = vunpack.c.l.b16 %v59
  %v253 = vunpack.c.l.b16 %v60
  %v254 = vunpack.c.l.b16 %v61
  %v255 = vunpack.c.l.b16 %v62
  %v256 = vunpack.c.l.b16 %v63
  %v257 = vunpack.c.l.b16 %v64
  %v258 = vunpack.c.l.b16 %v65
  %v259 = vunpack.c.l.b16 %v66
  %v260 = vunpack.c.l.b16 %v67
  %v261 = vunpack.c.l.b16 %v68
  %v262 = vunpack.c.l.b16 %v69
  %v263 = vunpack.c.l.b16 %v70
  %v264 = vunpack.c.l.b16 %v71
  %v265 = vunpack.c.l.b16 %v72
  %v266 = vunpack.c.l.b16 %v73
  %v267 = vunpack.c.l.b16 %v74
  %v268 = vunpack.c.l.b16 %v75
  %v269 = vunpack.c.l.b16 %v76
  %v270 = vunpack.c.l.b16 %v77
  %v271 = vunpack.c.l.b16 %v78
  %v272 = vunpack.c.l.b16 %v79
  %v273 = vunpack.c.l.b16 %v80
  %v274 = vunpack.c.l.b16 %v81
  %v275 = vunpack.c.l.b16 %v82
  %v276 = vunpack.c.l.b16 %v83
  %v277 = vunpack.c.l.b16 %v84
  %v278 = vunpack.c.l.b16 %v85
  %v279 = vunpack.c.l.b16 %v86
  %v280 = vunpack.c.l.b16 %v87
  %v281 = vunpack.c.l.b16 %v88
  %v282 = vunpack.c.l.b16 %v89
  %v283 = vunpack.c.l.b16 %v90
  %v284 = vunpack.c.l.b16 %v91
  %v285 = vunpack.c.l.b16 %v92
  %v286 = vunpack.c.l.b16 %v93
  %v287 = vunpack.c.l.b16 %v94
  %v288 = vpack.c.b16 %v221, %v220
  %v289 = vpack.c.b16 %v223, %v222
  %v290 = vpack.c.b16 %v225, %v224
  %v291 = vpack.c.b16 %v227, %v226
  %v292 = vpack.c.b16 %v229, %v228
  %v293 = vpack.c.b16 %v231, %v230
  %v294 = vpack.c.b16 %v233, %v232
  %v295 = vpack.c.b16 %v235, %v234
  %v296 = vpack.c.b16 %v237, %v236
  %v297 = vpack.c.b16 %v239, %v238
  %v298 = vpack.c.b16 %v241, %v240
  %v299 = vpack.c.b16 %v243, %v242
  %v300 = vpack.c.b16 %v245, %v244
  %v301 = vpack.c.b16 %v247, %v246
  %v302 = vpack.c.b16 %v249, %v248
  %v303 = vpack.c.b16 %v251, %v250
  %v304 = vpack.c.b16 %v253, %v252
  %v305 = vpack.c.b16 %v255, %v254
  %v306 = vpack.c.b16 %v257, %v256
  %v307 = vpack.c.b16 %v259, %v258
  %v308 = vpack.c.b16 %v261, %v260
  %v309 = vpack.c.b16 %v263, %v262
  %v310 = vpack.c.b16 %v265, %v264
  %v311 = vpack.c.b16 %v267, %v266
  %v312 = vpack.c.b16 %v269, %v268
  %v313 = vpack.c.b16 %v271, %v270
  %v314 = vpack.c.b16 %v273, %v272
  %v315 = vpack.c.b16 %v275, %v274
  %v316 = vpack.c.b16 %v277, %v276
  %v317 = vpack.c.b16 %v279, %v278
  %v318 = vpack.c.b16 %v281, %v280
  %v319 = vpack.c.b16 %v283, %v282
  %v320 = vpack.c.b16 %v285, %v284
  %v321 = vpack.c.b16 %v287, %v286
  %vm356 = vcmask 261120
  %v358 = vsel %vm356, %v138, 0
  %v361 = vsel %vm356, %v143, 0
  %363 = vmatprep.subr.bf16.mxu0 0
  %364 = vmatpush1.bf16.msra.mxu0 %v295
  %365 = vmatprep.subr.bf16.mxu0 0
  %366 = vmatpush1.bf16.msra.mxu0 %v294
  %367 = vmatprep.subr.bf16.mxu0 0
  %368 = vmatpush1.bf16.msra.mxu0 %v293
  %369 = vmatprep.subr.bf16.mxu0 0
  %370 = vmatpush1.bf16.msra.mxu0 %v292
  %371 = vmatprep.subr.bf16.mxu0 0
  %372 = vmatpush1.bf16.msra.mxu0 %v291
  %373 = vmatprep.subr.bf16.mxu0 0
  %374 = vmatpush1.bf16.msra.mxu0 %v290
  %375 = vmatprep.subr.bf16.mxu0 0
  %376 = vmatpush1.bf16.msra.mxu0 %v289
  %377 = vmatprep.subr.bf16.mxu0 0
  %378 = vmatpush1.bf16.msra.mxu0 %v288
  %379 = vmatprep.subr.bf16.mxu0 0
  %380 = vmatpush2.bf16.msra.mxu0 %v303
  %381 = vmatprep.subr.bf16.mxu0 0
  %382 = vmatpush2.bf16.msra.mxu0 %v302
  %383 = vmatprep.subr.bf16.mxu0 0
  %384 = vmatpush2.bf16.msra.mxu0 %v301
  %385 = vmatprep.subr.bf16.mxu0 0
  %386 = vmatpush2.bf16.msra.mxu0 %v300
  %387 = vmatprep.subr.bf16.mxu0 0
  %388 = vmatpush2.bf16.msra.mxu0 %v299
  %389 = vmatprep.subr.bf16.mxu0 0
  %390 = vmatpush2.bf16.msra.mxu0 %v298
  %391 = vmatprep.subr.bf16.mxu0 0
  %392 = vmatpush2.bf16.msra.mxu0 %v297
  %393 = vmatprep.subr.bf16.mxu0 0
  %394 = vmatpush2.bf16.msra.mxu0 %v296
  %395 = vmatprep.mubr.bf16.mxu0 %v135
  %396 = vmatmul.mubr.bf16.gmra.mxu0 %v134
  %v397 = vpop.f32.mrf.mxu0
  %v398 = vadd.f32 %v100, %v397
  %v399 = vpop.f32.mrf.mxu0
  %v400 = vpop.f32.mrf.mxu0
  %v401 = vadd.f32 %v100, %v400
  %v402 = vpop.f32.mrf.mxu0
  %403 = vmatprep.mubr.bf16.mxu0 %v140
  %404 = vmatmul.mubr.bf16.gmra.mxu0 %v139
  %v405 = vpop.f32.mrf.mxu0
  %v406 = vadd.f32 %v100, %v405
  %v407 = vpop.f32.mrf.mxu0
  %v408 = vpop.f32.mrf.mxu0
  %v409 = vadd.f32 %v100, %v408
  %v410 = vpop.f32.mrf.mxu0
  %411 = vdwg.mxu0
  %412 = vmatprep.subr.bf16.mxu0 0
  %413 = vmatpush1.bf16.msra.mxu0 %v311
  %414 = vmatprep.subr.bf16.mxu0 0
  %415 = vmatpush1.bf16.msra.mxu0 %v310
  %416 = vmatprep.subr.bf16.mxu0 0
  %417 = vmatpush1.bf16.msra.mxu0 %v309
  %418 = vmatprep.subr.bf16.mxu0 0
  %419 = vmatpush1.bf16.msra.mxu0 %v308
  %420 = vmatprep.subr.bf16.mxu0 0
  %421 = vmatpush1.bf16.msra.mxu0 %v307
  %422 = vmatprep.subr.bf16.mxu0 0
  %423 = vmatpush1.bf16.msra.mxu0 %v306
  %424 = vmatprep.subr.bf16.mxu0 0
  %425 = vmatpush1.bf16.msra.mxu0 %v305
  %426 = vmatprep.subr.bf16.mxu0 0
  %427 = vmatpush1.bf16.msra.mxu0 %v304
  %428 = vmatprep.subr.bf16.mxu0 0
  %429 = vmatpush2.bf16.msra.mxu0 %v319
  %430 = vmatprep.subr.bf16.mxu0 0
  %431 = vmatpush2.bf16.msra.mxu0 %v318
  %432 = vmatprep.subr.bf16.mxu0 0
  %433 = vmatpush2.bf16.msra.mxu0 %v317
  %434 = vmatprep.subr.bf16.mxu0 0
  %435 = vmatpush2.bf16.msra.mxu0 %v316
  %436 = vmatprep.subr.bf16.mxu0 0
  %437 = vmatpush2.bf16.msra.mxu0 %v315
  %438 = vmatprep.subr.bf16.mxu0 0
  %439 = vmatpush2.bf16.msra.mxu0 %v314
  %440 = vmatprep.subr.bf16.mxu0 0
  %441 = vmatpush2.bf16.msra.mxu0 %v313
  %442 = vmatprep.subr.bf16.mxu0 0
  %443 = vmatpush2.bf16.msra.mxu0 %v312
  %444 = vmatprep.mubr.bf16.mxu0 %v137
  %445 = vmatmul.mubr.bf16.gmra.mxu0 %v136
  %v446 = vpop.f32.mrf.mxu0
  %v447 = vadd.f32 %v398, %v446
  %v448 = vpop.f32.mrf.mxu0
  %v449 = vpop.f32.mrf.mxu0
  %v450 = vadd.f32 %v401, %v449
  %v451 = vpop.f32.mrf.mxu0
  %452 = vmatprep.mubr.bf16.mxu0 %v142
  %453 = vmatmul.mubr.bf16.gmra.mxu0 %v141
  %v454 = vpop.f32.mrf.mxu0
  %v455 = vadd.f32 %v406, %v454
  %v456 = vpop.f32.mrf.mxu0
  %v457 = vpop.f32.mrf.mxu0
  %v458 = vadd.f32 %v409, %v457
  %v459 = vpop.f32.mrf.mxu0
  %460 = vdwg.mxu0
  %461 = vmatprep.subr.bf16.mxu0 0
  %462 = vmatpush1.bf16.msra.mxu0 0
  %463 = vmatprep.subr.bf16.mxu0 0
  %464 = vmatpush1.bf16.msra.mxu0 0
  %465 = vmatprep.subr.bf16.mxu0 0
  %466 = vmatpush1.bf16.msra.mxu0 0
  %467 = vmatprep.subr.bf16.mxu0 0
  %468 = vmatpush1.bf16.msra.mxu0 0
  %469 = vmatprep.subr.bf16.mxu0 0
  %470 = vmatpush1.bf16.msra.mxu0 0
  %471 = vmatprep.subr.bf16.mxu0 0
  %472 = vmatpush1.bf16.msra.mxu0 0
  %473 = vmatprep.subr.bf16.mxu0 0
  %474 = vmatpush1.bf16.msra.mxu0 %v321
  %475 = vmatprep.subr.bf16.mxu0 0
  %476 = vmatpush1.bf16.msra.mxu0 %v320
  %477 = vmatprep.subr.bf16.mxu0 0
  %478 = vmatpush2.bf16.msra.mxu0 0
  %479 = vmatprep.subr.bf16.mxu0 0
  %480 = vmatpush2.bf16.msra.mxu0 0
  %481 = vmatprep.subr.bf16.mxu0 0
  %482 = vmatpush2.bf16.msra.mxu0 0
  %483 = vmatprep.subr.bf16.mxu0 0
  %484 = vmatpush2.bf16.msra.mxu0 0
  %485 = vmatprep.subr.bf16.mxu0 0
  %486 = vmatpush2.bf16.msra.mxu0 0
  %487 = vmatprep.subr.bf16.mxu0 0
  %488 = vmatpush2.bf16.msra.mxu0 0
  %489 = vmatprep.subr.bf16.mxu0 0
  %490 = vmatpush2.bf16.msra.mxu0 0
  %491 = vmatprep.subr.bf16.mxu0 0
  %492 = vmatpush2.bf16.msra.mxu0 0
  %493 = vmatprep.mubr.bf16.mxu0 0
  %494 = vmatmul.mubr.bf16.gmra.mxu0 %v358
  %v495 = vpop.f32.mrf.mxu0
  %v496 = vadd.f32 %v447, %v495
  %v497 = vpop.f32.mrf.mxu0
  %v498 = vpop.f32.mrf.mxu0
  %v499 = vadd.f32 %v450, %v498
  %v500 = vpop.f32.mrf.mxu0
  %501 = vmatprep.mubr.bf16.mxu0 0
  %502 = vmatmul.mubr.bf16.gmra.mxu0 %v361
  %v503 = vpop.f32.mrf.mxu0
  %v504 = vadd.f32 %v455, %v503
  %v505 = vpop.f32.mrf.mxu0
  %v506 = vpop.f32.mrf.mxu0
  %v507 = vadd.f32 %v458, %v506
  %v508 = vpop.f32.mrf.mxu0
  %509 = vdwg.mxu0
  %v510 = vpack.c.bf16 %v499, %v496
  %v511 = vpack.c.bf16 %v507, %v504
  %v514 = vunpack.c.l.b16 %v510
  %v515 = vunpack.c.h.b16 %v510
  %v516 = vunpack.c.l.b16 %v511
  %v517 = vunpack.c.h.b16 %v511
  %v518 = vpack.c.b16 %v514, %v514
  %v519 = vpack.c.b16 %v515, %v515
  %v520 = vpack.c.b16 %v516, %v516
  %v521 = vpack.c.b16 %v517, %v517
  %vm526 = vcmask 388096
  %527 = vst.msk [vmem:[%s3] sm:$0xf] %vm526, %v518
  %528 = vst.msk [vmem:[%s3 + $0x4] sm:$0xf] %vm526, %v519
  %529 = vst.msk [vmem:[%s3 + $0x8] sm:$0xf] %vm526, %v520
  %530 = vst.msk [vmem:[%s3 + $0xc] sm:$0xf] %vm526, %v521
  // Predicated region
  $region14: #{net_forward.15} parent=0 // pred_check
    _
  $region15: #{net_forward.15} parent=0 // pred_check_branch
    %532 = sbr.rel (0) target = $region17
  $region16: #{net_forward.15} parent=0 // pred_region
    _
  $region17: #{net_forward.15} parent=0 // pred_fallthru
    _
  // Predicated region
  $region18: #{net_forward.15} parent=0 // pred_check
    _
  $region19: #{net_forward.15} parent=0 // pred_check_branch
    %534 = sbr.rel (0) target = $region21
  $region20: #{net_forward.15} parent=0 // pred_region
    _
  $region21: #{net_forward.15} parent=0 // pred_fallthru
    _

// kernel: net_forward.16
$region0: #{net_forward.16}
  #allocation0 [shape = 'u32[]', space=smem, size = 0x4, offset = 0x4, fixed_abs, tag = 'smem constant byte address 0x4 - core index']
  #allocation1 [shape = 'u32[144,128]{1,0:T(1,128)}', space=vmem, size = 0x12000, scoped, tag = 'internal scratch']
  %s0 = inlined_call_operand.vmem [shape: bf16[32,216], index: 0, kind: input, shape index: {}]
  %s1 = inlined_call_operand.vmem [shape: bf16[216,24], index: 1, kind: input, shape index: {}]
  %s2 = inlined_call_operand.vmem [shape: f32[1,24], index: 2, kind: input, shape index: {}]
  %s3 = inlined_call_operand.vmem [shape: bf16[32,24], index: 3, kind: output, shape index: {}]
  %s4 = sld [smem:[#allocation0]]
  $region22: #{net_forward.16} parent=0
    _
  %s6 = ssub.s32 1, %s4
  %s7 = scalar_select 0, %s6, %s4
  // Predicated region
  $region2: #{net_forward.16} parent=0 // pred_check
    _
  $region3: #{net_forward.16} parent=0 // pred_check_branch
    %9 = sbr.rel (0) target = $region5
  $region4: #{net_forward.16} parent=0 // pred_region
    _
  $region5: #{net_forward.16} parent=0 // pred_fallthru
    _
  // Predicated region
  $region6: #{net_forward.16} parent=0 // pred_check
    _
  $region7: #{net_forward.16} parent=0 // pred_check_branch
    %11 = sbr.rel (0) target = $region9
  $region8: #{net_forward.16} parent=0 // pred_region
    _
  $region9: #{net_forward.16} parent=0 // pred_fallthru
    _
  // Predicated region
  $region10: #{net_forward.16} parent=0 // pred_check
    _
  $region11: #{net_forward.16} parent=0 // pred_check_branch
    %13 = sbr.rel (0) target = $region13
  $region12: #{net_forward.16} parent=0 // pred_region
    _
  $region13: #{net_forward.16} parent=0 // pred_fallthru
    _
  %v15 = vld [vmem:[%s0] sm:$0xff]
  %v16 = vld [vmem:[%s0 + $0x8] sm:$0xff]
  %v17 = vld [vmem:[%s0 + $0x10] sm:$0xff]
  %v18 = vld [vmem:[%s0 + $0x18] sm:$0xff]
  %v19 = vld [vmem:[%s1] sm:$0xf]
  %v20 = vld [vmem:[%s1 + $0x4] sm:$0xf]
  %v21 = vld [vmem:[%s1 + $0x8] sm:$0xf]
  %v22 = vld [vmem:[%s1 + $0xc] sm:$0xf]
  %v23 = vld [vmem:[%s1 + $0x10] sm:$0xf]
  %v24 = vld [vmem:[%s1 + $0x14] sm:$0xf]
  %v25 = vld [vmem:[%s1 + $0x18] sm:$0xf]
  %v26 = vld [vmem:[%s1 + $0x1c] sm:$0xf]
  %v27 = vld [vmem:[%s1 + $0x20] sm:$0xf]
  %v28 = vld [vmem:[%s1 + $0x24] sm:$0xf]
  %v29 = vld [vmem:[%s1 + $0x28] sm:$0xf]
  %v30 = vld [vmem:[%s1 + $0x2c] sm:$0xf]
  %v31 = vld [vmem:[%s1 + $0x30] sm:$0xf]
  %v32 = vld [vmem:[%s1 + $0x34] sm:$0xf]
  %v33 = vld [vmem:[%s1 + $0x38] sm:$0xf]
  %v34 = vld [vmem:[%s1 + $0x3c] sm:$0xf]
  %v35 = vld [vmem:[%s1 + $0x40] sm:$0xf]
  %v36 = vld [vmem:[%s1 + $0x44] sm:$0xf]
  %v37 = vld [vmem:[%s1 + $0x48] sm:$0xf]
  %v38 = vld [vmem:[%s1 + $0x4c] sm:$0xf]
  %v39 = vld [vmem:[%s1 + $0x50] sm:$0xf]
  %v40 = vld [vmem:[%s1 + $0x54] sm:$0xf]
  %v41 = vld [vmem:[%s1 + $0x58] sm:$0xf]
  %v42 = vld [vmem:[%s1 + $0x5c] sm:$0xf]
  %v43 = vld [vmem:[%s1 + $0x60] sm:$0xf]
  %v44 = vld [vmem:[%s1 + $0x64] sm:$0xf]
  %v45 = vld [vmem:[%s1 + $0x68] sm:$0xf]
  %v46 = vld [vmem:[%s2] sm:$0x1]
  %v48 = vlaneseq
  %v49 = vshrl.u32 %v48, 7
  %v50 = vsub.s32 0, %v49
  %v51 = vrot.slane %v46, %v50
  %v57 = vunpack.c.l.b16 %v15
  %v58 = vunpack.c.h.b16 %v15
  %v59 = vunpack.c.l.b16 %v16
  %v60 = vunpack.c.h.b16 %v16
  %v61 = vunpack.c.l.b16 %v17
  %v62 = vunpack.c.h.b16 %v17
  %v63 = vunpack.c.l.b16 %v18
  %v64 = vunpack.c.h.b16 %v18
  %v65 = vpack.c.b16 %v59, %v57
  %v66 = vpack.c.b16 %v60, %v58
  %v67 = vpack.c.b16 %v63, %v61
  %v68 = vpack.c.b16 %v64, %v62
  %v98 = vunpack.c.l.b16 %v19
  %v99 = vunpack.c.l.b16 %v20
  %v100 = vunpack.c.l.b16 %v21
  %v101 = vunpack.c.l.b16 %v22
  %v102 = vunpack.c.l.b16 %v23
  %v103 = vunpack.c.l.b16 %v24
  %v104 = vunpack.c.l.b16 %v25
  %v105 = vunpack.c.l.b16 %v26
  %v106 = vunpack.c.l.b16 %v27
  %v107 = vunpack.c.l.b16 %v28
  %v108 = vunpack.c.l.b16 %v29
  %v109 = vunpack.c.l.b16 %v30
  %v110 = vunpack.c.l.b16 %v31
  %v111 = vunpack.c.l.b16 %v32
  %v112 = vunpack.c.l.b16 %v33
  %v113 = vunpack.c.l.b16 %v34
  %v114 = vunpack.c.l.b16 %v35
  %v115 = vunpack.c.l.b16 %v36
  %v116 = vunpack.c.l.b16 %v37
  %v117 = vunpack.c.l.b16 %v38
  %v118 = vunpack.c.l.b16 %v39
  %v119 = vunpack.c.l.b16 %v40
  %v120 = vunpack.c.l.b16 %v41
  %v121 = vunpack.c.l.b16 %v42
  %v122 = vunpack.c.l.b16 %v43
  %v123 = vunpack.c.l.b16 %v44
  %v124 = vunpack.c.l.b16 %v45
  %v125 = vpack.c.b16 %v99, %v98
  %v126 = vpack.c.b16 %v101, %v100
  %v127 = vpack.c.b16 %v103, %v102
  %v128 = vpack.c.b16 %v105, %v104
  %v129 = vpack.c.b16 %v107, %v106
  %v130 = vpack.c.b16 %v109, %v108
  %v131 = vpack.c.b16 %v111, %v110
  %v132 = vpack.c.b16 %v113, %v112
  %v133 = vpack.c.b16 %v115, %v114
  %v134 = vpack.c.b16 %v117, %v116
  %v135 = vpack.c.b16 %v119, %v118
  %v136 = vpack.c.b16 %v121, %v120
  %v137 = vpack.c.b16 %v123, %v122
  %v138 = vpack.c.b16 %v124, %v124
  %vm152 = vcmask 719872
  %v154 = vsel %vm152, %v66, 0
  %v157 = vsel %vm152, %v68, 0
  %vm159 = vcmask 1043456
  %v161 = vsel %vm159, %v138, 0
  %163 = vmatprep.subr.bf16.mxu0 0
  %164 = vmatpush1.bf16.msra.mxu0 %v132
  %165 = vmatprep.subr.bf16.mxu0 0
  %166 = vmatpush1.bf16.msra.mxu0 %v131
  %167 = vmatprep.subr.bf16.mxu0 0
  %168 = vmatpush1.bf16.msra.mxu0 %v130
  %169 = vmatprep.subr.bf16.mxu0 0
  %170 = vmatpush1.bf16.msra.mxu0 %v129
  %171 = vmatprep.subr.bf16.mxu0 0
  %172 = vmatpush1.bf16.msra.mxu0 %v128
  %173 = vmatprep.subr.bf16.mxu0 0
  %174 = vmatpush1.bf16.msra.mxu0 %v127
  %175 = vmatprep.subr.bf16.mxu0 0
  %176 = vmatpush1.bf16.msra.mxu0 %v126
  %177 = vmatprep.subr.bf16.mxu0 0
  %178 = vmatpush1.bf16.msra.mxu0 %v125
  %179 = vmatprep.subr.bf16.mxu0 0
  %180 = vmatpush2.bf16.msra.mxu0 0
  %181 = vmatprep.subr.bf16.mxu0 0
  %182 = vmatpush2.bf16.msra.mxu0 0
  %183 = vmatprep.subr.bf16.mxu0 0
  %184 = vmatpush2.bf16.msra.mxu0 %v161
  %185 = vmatprep.subr.bf16.mxu0 0
  %186 = vmatpush2.bf16.msra.mxu0 %v137
  %187 = vmatprep.subr.bf16.mxu0 0
  %188 = vmatpush2.bf16.msra.mxu0 %v136
  %189 = vmatprep.subr.bf16.mxu0 0
  %190 = vmatpush2.bf16.msra.mxu0 %v135
  %191 = vmatprep.subr.bf16.mxu0 0
  %192 = vmatpush2.bf16.msra.mxu0 %v134
  %193 = vmatprep.subr.bf16.mxu0 0
  %194 = vmatpush2.bf16.msra.mxu0 %v133
  %195 = vmatprep.mubr.bf16.mxu0 %v154
  %196 = vmatmul.mubr.bf16.gmra.mxu0 %v65
  %v197 = vpop.f32.mrf.mxu0
  %v198 = vadd.f32 %v51, %v197
  %v199 = vpop.f32.mrf.mxu0
  %v200 = vpop.f32.mrf.mxu0
  %v201 = vadd.f32 %v51, %v200
  %v202 = vpop.f32.mrf.mxu0
  %203 = vmatprep.mubr.bf16.mxu0 %v157
  %204 = vmatmul.mubr.bf16.gmra.mxu0 %v67
  %v205 = vpop.f32.mrf.mxu0
  %v206 = vadd.f32 %v51, %v205
  %v207 = vpop.f32.mrf.mxu0
  %v208 = vpop.f32.mrf.mxu0
  %v209 = vadd.f32 %v51, %v208
  %v210 = vpop.f32.mrf.mxu0
  %211 = vdwg.mxu0
  %v212 = vpack.c.bf16 %v201, %v198
  %v213 = vpack.c.bf16 %v209, %v206
  %v216 = vunpack.c.l.b16 %v212
  %v217 = vunpack.c.h.b16 %v212
  %v218 = vunpack.c.l.b16 %v213
  %v219 = vunpack.c.h.b16 %v213
  %v220 = vpack.c.b16 %v216, %v216
  %v221 = vpack.c.b16 %v217, %v217
  %v222 = vpack.c.b16 %v218, %v218
  %v223 = vpack.c.b16 %v219, %v219
  %vm228 = vcmask 191488
  %229 = vst.msk [vmem:[%s3] sm:$0xf] %vm228, %v220
  %230 = vst.msk [vmem:[%s3 + $0x4] sm:$0xf] %vm228, %v221
  %231 = vst.msk [vmem:[%s3 + $0x8] sm:$0xf] %vm228, %v222
  %232 = vst.msk [vmem:[%s3 + $0xc] sm:$0xf] %vm228, %v223
  // Predicated region
  $region14: #{net_forward.16} parent=0 // pred_check
    _
  $region15: #{net_forward.16} parent=0 // pred_check_branch
    %234 = sbr.rel (0) target = $region17
  $region16: #{net_forward.16} parent=0 // pred_region
    _
  $region17: #{net_forward.16} parent=0 // pred_fallthru
    _
  // Predicated region
  $region18: #{net_forward.16} parent=0 // pred_check
    _
  $region19: #{net_forward.16} parent=0 // pred_check_branch
    %236 = sbr.rel (0) target = $region21
  $region20: #{net_forward.16} parent=0 // pred_region
    _
  $region21: #{net_forward.16} parent=0 // pred_fallthru
    _

// kernel: net_forward.17
$region0: #{net_forward.17}
  #allocation0 [shape = 'u32[]', space=smem, size = 0x4, offset = 0x4, fixed_abs, tag = 'smem constant byte address 0x4 - core index']
  #allocation1 [shape = 'u32[144,128]{1,0:T(1,128)}', space=vmem, size = 0x12000, scoped, tag = 'internal scratch']
  %s0 = inlined_call_operand.vmem [shape: bf16[2,1408], index: 0, kind: input, shape index: {}]
  %s1 = inlined_call_operand.vmem [shape: bf16[1408,10], index: 1, kind: input, shape index: {}]
  %s2 = inlined_call_operand.vmem [shape: f32[1,10], index: 2, kind: input, shape index: {}]
  %s3 = inlined_call_operand.hbm [shape: f32[2,10], index: 3, kind: output, shape index: {}]
  %s4 = sld [smem:[#allocation0]]
  $region22: #{net_forward.17} parent=0
    _
  %s6 = ssub.s32 1, %s4
  %s7 = scalar_select 0, %s6, %s4
  $region1: #{net_forward.17} parent=0
    #allocation2 [shape = 'u8[1024]{0}', space=vmem, size = 0x400, scoped, tag = 'output window, operand 0, single buffered']
    #allocation3 [shape = 's32[1]{0}', space=sflag, size = 0x4, scoped, tag = 'scoped memory for net_forward.17']
    %8 = vsyncpa [#allocation3], 0
    // Predicated region
    $region2: #{net_forward.17} parent=1 // pred_check
      _
    $region3: #{net_forward.17} parent=1 // pred_check_branch
      %10 = sbr.rel (0) target = $region5
    $region4: #{net_forward.17} parent=1 // pred_region
      _
    $region5: #{net_forward.17} parent=1 // pred_fallthru
      _
    // Predicated region
    $region6: #{net_forward.17} parent=1 // pred_check
      _
    $region7: #{net_forward.17} parent=1 // pred_check_branch
      %12 = sbr.rel (0) target = $region9
    $region8: #{net_forward.17} parent=1 // pred_region
      _
    $region9: #{net_forward.17} parent=1 // pred_fallthru
      _
    // Predicated region
    $region10: #{net_forward.17} parent=1 // pred_check
      _
    $region11: #{net_forward.17} parent=1 // pred_check_branch
      %14 = sbr.rel (0) target = $region13
    $region12: #{net_forward.17} parent=1 // pred_region
      _
    $region13: #{net_forward.17} parent=1 // pred_fallthru
      _
    %v16 = vld [vmem:[%s0] sm:$0xff]
    %v17 = vld [vmem:[%s0 + $0x8] sm:$0x7]
    %v18 = vld [vmem:[%s1] sm:$0xf]
    %v19 = vld [vmem:[%s1 + $0x4] sm:$0xf]
    %v20 = vld [vmem:[%s1 + $0x8] sm:$0xf]
    %v21 = vld [vmem:[%s1 + $0xc] sm:$0xf]
    %v22 = vld [vmem:[%s1 + $0x10] sm:$0xf]
    %v23 = vld [vmem:[%s1 + $0x14] sm:$0xf]
    %v24 = vld [vmem:[%s1 + $0x18] sm:$0xf]
    %v25 = vld [vmem:[%s1 + $0x1c] sm:$0xf]
    %v26 = vld [vmem:[%s1 + $0x20] sm:$0xf]
    %v27 = vld [vmem:[%s1 + $0x24] sm:$0xf]
    %v28 = vld [vmem:[%s1 + $0x28] sm:$0xf]
    %v29 = vld [vmem:[%s1 + $0x2c] sm:$0xf]
    %v30 = vld [vmem:[%s1 + $0x30] sm:$0xf]
    %v31 = vld [vmem:[%s1 + $0x34] sm:$0xf]
    %v32 = vld [vmem:[%s1 + $0x38] sm:$0xf]
    %v33 = vld [vmem:[%s1 + $0x3c] sm:$0xf]
    %v34 = vld [vmem:[%s1 + $0x40] sm:$0xf]
    %v35 = vld [vmem:[%s1 + $0x44] sm:$0xf]
    %v36 = vld [vmem:[%s1 + $0x48] sm:$0xf]
    %v37 = vld [vmem:[%s1 + $0x4c] sm:$0xf]
    %v38 = vld [vmem:[%s1 + $0x50] sm:$0xf]
    %v39 = vld [vmem:[%s1 + $0x54] sm:$0xf]
    %v40 = vld [vmem:[%s1 + $0x58] sm:$0xf]
    %v41 = vld [vmem:[%s1 + $0x5c] sm:$0xf]
    %v42 = vld [vmem:[%s1 + $0x60] sm:$0xf]
    %v43 = vld [vmem:[%s1 + $0x64] sm:$0xf]
    %v44 = vld [vmem:[%s1 + $0x68] sm:$0xf]
    %v45 = vld [vmem:[%s1 + $0x6c] sm:$0xf]
    %v46 = vld [vmem:[%s1 + $0x70] sm:$0xf]
    %v47 = vld [vmem:[%s1 + $0x74] sm:$0xf]
    %v48 = vld [vmem:[%s1 + $0x78] sm:$0xf]
    %v49 = vld [vmem:[%s1 + $0x7c] sm:$0xf]
    %v50 = vld [vmem:[%s1 + $0x80] sm:$0xf]
    %v51 = vld [vmem:[%s1 + $0x84] sm:$0xf]
    %v52 = vld [vmem:[%s1 + $0x88] sm:$0xf]
    %v53 = vld [vmem:[%s1 + $0x8c] sm:$0xf]
    %v54 = vld [vmem:[%s1 + $0x90] sm:$0xf]
    %v55 = vld [vmem:[%s1 + $0x94] sm:$0xf]
    %v56 = vld [vmem:[%s1 + $0x98] sm:$0xf]
    %v57 = vld [vmem:[%s1 + $0x9c] sm:$0xf]
    %v58 = vld [vmem:[%s1 + $0xa0] sm:$0xf]
    %v59 = vld [vmem:[%s1 + $0xa4] sm:$0xf]
    %v60 = vld [vmem:[%s1 + $0xa8] sm:$0xf]
    %v61 = vld [vmem:[%s1 + $0xac] sm:$0xf]
    %v62 = vld [vmem:[%s1 + $0xb0] sm:$0xf]
    %v63 = vld [vmem:[%s1 + $0xb4] sm:$0xf]
    %v64 = vld [vmem:[%s1 + $0xb8] sm:$0xf]
    %v65 = vld [vmem:[%s1 + $0xbc] sm:$0xf]
    %v66 = vld [vmem:[%s1 + $0xc0] sm:$0xf]
    %v67 = vld [vmem:[%s1 + $0xc4] sm:$0xf]
    %v68 = vld [vmem:[%s1 + $0xc8] sm:$0xf]
    %v69 = vld [vmem:[%s1 + $0xcc] sm:$0xf]
    %v70 = vld [vmem:[%s1 + $0xd0] sm:$0xf]
    %v71 = vld [vmem:[%s1 + $0xd4] sm:$0xf]
    %v72 = vld [vmem:[%s1 + $0xd8] sm:$0xf]
    %v73 = vld [vmem:[%s1 + $0xdc] sm:$0xf]
    %v74 = vld [vmem:[%s1 + $0xe0] sm:$0xf]
    %v75 = vld [vmem:[%s1 + $0xe4] sm:$0xf]
    %v76 = vld [vmem:[%s1 + $0xe8] sm:$0xf]
    %v77 = vld [vmem:[%s1 + $0xec] sm:$0xf]
    %v78 = vld [vmem:[%s1 + $0xf0] sm:$0xf]
    %v79 = vld [vmem:[%s1 + $0xf4] sm:$0xf]
    %v80 = vld [vmem:[%s1 + $0xf8] sm:$0xf]
    %v81 = vld [vmem:[%s1 + $0xfc] sm:$0xf]
    %v82 = vld [vmem:[%s1 + $0x100] sm:$0xf]
    %v83 = vld [vmem:[%s1 + $0x104] sm:$0xf]
    %v84 = vld [vmem:[%s1 + $0x108] sm:$0xf]
    %v85 = vld [vmem:[%s1 + $0x10c] sm:$0xf]
    %v86 = vld [vmem:[%s1 + $0x110] sm:$0xf]
    %v87 = vld [vmem:[%s1 + $0x114] sm:$0xf]
    %v88 = vld [vmem:[%s1 + $0x118] sm:$0xf]
    %v89 = vld [vmem:[%s1 + $0x11c] sm:$0xf]
    %v90 = vld [vmem:[%s1 + $0x120] sm:$0xf]
    %v91 = vld [vmem:[%s1 + $0x124] sm:$0xf]
    %v92 = vld [vmem:[%s1 + $0x128] sm:$0xf]
    %v93 = vld [vmem:[%s1 + $0x12c] sm:$0xf]
    %v94 = vld [vmem:[%s1 + $0x130] sm:$0xf]
    %v95 = vld [vmem:[%s1 + $0x134] sm:$0xf]
    %v96 = vld [vmem:[%s1 + $0x138] sm:$0xf]
    %v97 = vld [vmem:[%s1 + $0x13c] sm:$0xf]
    %v98 = vld [vmem:[%s1 + $0x140] sm:$0xf]
    %v99 = vld [vmem:[%s1 + $0x144] sm:$0xf]
    %v100 = vld [vmem:[%s1 + $0x148] sm:$0xf]
    %v101 = vld [vmem:[%s1 + $0x14c] sm:$0xf]
    %v102 = vld [vmem:[%s1 + $0x150] sm:$0xf]
    %v103 = vld [vmem:[%s1 + $0x154] sm:$0xf]
    %v104 = vld [vmem:[%s1 + $0x158] sm:$0xf]
    %v105 = vld [vmem:[%s1 + $0x15c] sm:$0xf]
    %v106 = vld [vmem:[%s1 + $0x160] sm:$0xf]
    %v107 = vld [vmem:[%s1 + $0x164] sm:$0xf]
    %v108 = vld [vmem:[%s1 + $0x168] sm:$0xf]
    %v109 = vld [vmem:[%s1 + $0x16c] sm:$0xf]
    %v110 = vld [vmem:[%s1 + $0x170] sm:$0xf]
    %v111 = vld [vmem:[%s1 + $0x174] sm:$0xf]
    %v112 = vld [vmem:[%s1 + $0x178] sm:$0xf]
    %v113 = vld [vmem:[%s1 + $0x17c] sm:$0xf]
    %v114 = vld [vmem:[%s1 + $0x180] sm:$0xf]
    %v115 = vld [vmem:[%s1 + $0x184] sm:$0xf]
    %v116 = vld [vmem:[%s1 + $0x188] sm:$0xf]
    %v117 = vld [vmem:[%s1 + $0x18c] sm:$0xf]
    %v118 = vld [vmem:[%s1 + $0x190] sm:$0xf]
    %v119 = vld [vmem:[%s1 + $0x194] sm:$0xf]
    %v120 = vld [vmem:[%s1 + $0x198] sm:$0xf]
    %v121 = vld [vmem:[%s1 + $0x19c] sm:$0xf]
    %v122 = vld [vmem:[%s1 + $0x1a0] sm:$0xf]
    %v123 = vld [vmem:[%s1 + $0x1a4] sm:$0xf]
    %v124 = vld [vmem:[%s1 + $0x1a8] sm:$0xf]
    %v125 = vld [vmem:[%s1 + $0x1ac] sm:$0xf]
    %v126 = vld [vmem:[%s1 + $0x1b0] sm:$0xf]
    %v127 = vld [vmem:[%s1 + $0x1b4] sm:$0xf]
    %v128 = vld [vmem:[%s1 + $0x1b8] sm:$0xf]
    %v129 = vld [vmem:[%s1 + $0x1bc] sm:$0xf]
    %v130 = vld [vmem:[%s1 + $0x1c0] sm:$0xf]
    %v131 = vld [vmem:[%s1 + $0x1c4] sm:$0xf]
    %v132 = vld [vmem:[%s1 + $0x1c8] sm:$0xf]
    %v133 = vld [vmem:[%s1 + $0x1cc] sm:$0xf]
    %v134 = vld [vmem:[%s1 + $0x1d0] sm:$0xf]
    %v135 = vld [vmem:[%s1 + $0x1d4] sm:$0xf]
    %v136 = vld [vmem:[%s1 + $0x1d8] sm:$0xf]
    %v137 = vld [vmem:[%s1 + $0x1dc] sm:$0xf]
    %v138 = vld [vmem:[%s1 + $0x1e0] sm:$0xf]
    %v139 = vld [vmem:[%s1 + $0x1e4] sm:$0xf]
    %v140 = vld [vmem:[%s1 + $0x1e8] sm:$0xf]
    %v141 = vld [vmem:[%s1 + $0x1ec] sm:$0xf]
    %v142 = vld [vmem:[%s1 + $0x1f0] sm:$0xf]
    %v143 = vld [vmem:[%s1 + $0x1f4] sm:$0xf]
    %v144 = vld [vmem:[%s1 + $0x1f8] sm:$0xf]
    %v145 = vld [vmem:[%s1 + $0x1fc] sm:$0xf]
    %v146 = vld [vmem:[%s1 + $0x200] sm:$0xf]
    %v147 = vld [vmem:[%s1 + $0x204] sm:$0xf]
    %v148 = vld [vmem:[%s1 + $0x208] sm:$0xf]
    %v149 = vld [vmem:[%s1 + $0x20c] sm:$0xf]
    %v150 = vld [vmem:[%s1 + $0x210] sm:$0xf]
    %v151 = vld [vmem:[%s1 + $0x214] sm:$0xf]
    %v152 = vld [vmem:[%s1 + $0x218] sm:$0xf]
    %v153 = vld [vmem:[%s1 + $0x21c] sm:$0xf]
    %v154 = vld [vmem:[%s1 + $0x220] sm:$0xf]
    %v155 = vld [vmem:[%s1 + $0x224] sm:$0xf]
    %v156 = vld [vmem:[%s1 + $0x228] sm:$0xf]
    %v157 = vld [vmem:[%s1 + $0x22c] sm:$0xf]
    %v158 = vld [vmem:[%s1 + $0x230] sm:$0xf]
    %v159 = vld [vmem:[%s1 + $0x234] sm:$0xf]
    %v160 = vld [vmem:[%s1 + $0x238] sm:$0xf]
    %v161 = vld [vmem:[%s1 + $0x23c] sm:$0xf]
    %v162 = vld [vmem:[%s1 + $0x240] sm:$0xf]
    %v163 = vld [vmem:[%s1 + $0x244] sm:$0xf]
    %v164 = vld [vmem:[%s1 + $0x248] sm:$0xf]
    %v165 = vld [vmem:[%s1 + $0x24c] sm:$0xf]
    %v166 = vld [vmem:[%s1 + $0x250] sm:$0xf]
    %v167 = vld [vmem:[%s1 + $0x254] sm:$0xf]
    %v168 = vld [vmem:[%s1 + $0x258] sm:$0xf]
    %v169 = vld [vmem:[%s1 + $0x25c] sm:$0xf]
    %v170 = vld [vmem:[%s1 + $0x260] sm:$0xf]
    %v171 = vld [vmem:[%s1 + $0x264] sm:$0xf]
    %v172 = vld [vmem:[%s1 + $0x268] sm:$0xf]
    %v173 = vld [vmem:[%s1 + $0x26c] sm:$0xf]
    %v174 = vld [vmem:[%s1 + $0x270] sm:$0xf]
    %v175 = vld [vmem:[%s1 + $0x274] sm:$0xf]
    %v176 = vld [vmem:[%s1 + $0x278] sm:$0xf]
    %v177 = vld [vmem:[%s1 + $0x27c] sm:$0xf]
    %v178 = vld [vmem:[%s1 + $0x280] sm:$0xf]
    %v179 = vld [vmem:[%s1 + $0x284] sm:$0xf]
    %v180 = vld [vmem:[%s1 + $0x288] sm:$0xf]
    %v181 = vld [vmem:[%s1 + $0x28c] sm:$0xf]
    %v182 = vld [vmem:[%s1 + $0x290] sm:$0xf]
    %v183 = vld [vmem:[%s1 + $0x294] sm:$0xf]
    %v184 = vld [vmem:[%s1 + $0x298] sm:$0xf]
    %v185 = vld [vmem:[%s1 + $0x29c] sm:$0xf]
    %v186 = vld [vmem:[%s1 + $0x2a0] sm:$0xf]
    %v187 = vld [vmem:[%s1 + $0x2a4] sm:$0xf]
    %v188 = vld [vmem:[%s1 + $0x2a8] sm:$0xf]
    %v189 = vld [vmem:[%s1 + $0x2ac] sm:$0xf]
    %v190 = vld [vmem:[%s1 + $0x2b0] sm:$0xf]
    %v191 = vld [vmem:[%s1 + $0x2b4] sm:$0xf]
    %v192 = vld [vmem:[%s1 + $0x2b8] sm:$0xf]
    %v193 = vld [vmem:[%s1 + $0x2bc] sm:$0xf]
    %v194 = vld [vmem:[%s2] sm:$0x1]
    %v196 = vlaneseq
    %v197 = vshrl.u32 %v196, 7
    %v198 = vsub.s32 0, %v197
    %v199 = vrot.slane %v194, %v198
    %v203 = vcombine.high %v16, %v16
    %v205 = vunpack.c.l.s4 1966171168
    %v206 = vunpack.c.0.s8 %v205
    %v207 = vlaneseq
    %v208 = vshrl.u32 %v207, 7
    %v209 = vsub.s32 %v206, %v208
    %v210 = vrot.slane %v16, %v209
    %v212 = vunpack.c.l.s4 1966171168
    %v213 = vunpack.c.0.s8 %v212
    %v214 = vlaneseq
    %v215 = vshrl.u32 %v214, 7
    %v216 = vsub.s32 %v213, %v215
    %v217 = vrot.slane %v203, %v216
    %v218 = vcombine.high %v210, %v210
    %v219 = vcombine.high %v217, %v217
    %v221 = vunpack.c.l.s4 1966171168
    %v222 = vunpack.c.0.s8 %v221
    %v223 = vlaneseq
    %v224 = vshrl.u32 %v223, 7
    %v225 = vsub.s32 %v222, %v224
    %v226 = vrot.slane %v210, %v225
    %v228 = vunpack.c.l.s4 1966171168
    %v229 = vunpack.c.0.s8 %v228
    %v230 = vlaneseq
    %v231 = vshrl.u32 %v230, 7
    %v232 = vsub.s32 %v229, %v231
    %v233 = vrot.slane %v217, %v232
    %v235 = vunpack.c.l.s4 1966171168
    %v236 = vunpack.c.0.s8 %v235
    %v237 = vlaneseq
    %v238 = vshrl.u32 %v237, 7
    %v239 = vsub.s32 %v236, %v238
    %v240 = vrot.slane %v218, %v239
    %v242 = vunpack.c.l.s4 1966171168
    %v243 = vunpack.c.0.s8 %v242
    %v244 = vlaneseq
    %v245 = vshrl.u32 %v244, 7
    %v246 = vsub.s32 %v243, %v245
    %v247 = vrot.slane %v219, %v246
    %v248 = vcombine.high %v226, %v226
    %v249 = vcombine.high %v233, %v233
    %v250 = vcombine.high %v240, %v240
    %v251 = vcombine.high %v247, %v247
    %v253 = vunpack.c.l.s4 1966171168
    %v254 = vunpack.c.0.s8 %v253
    %v255 = vlaneseq
    %v256 = vshrl.u32 %v255, 7
    %v257 = vsub.s32 %v254, %v256
    %v258 = vrot.slane %v17, %v257
    %v259 = vcombine.high %v258, %v258
    %v261 = vunpack.c.l.s4 1966171168
    %v262 = vunpack.c.0.s8 %v261
    %v263 = vlaneseq
    %v264 = vshrl.u32 %v263, 7
    %v265 = vsub.s32 %v262, %v264
    %v266 = vrot.slane %v258, %v265
    %v268 = vunpack.c.l.s4 1966171168
    %v269 = vunpack.c.0.s8 %v268
    %v270 = vlaneseq
    %v271 = vshrl.u32 %v270, 7
    %v272 = vsub.s32 %v269, %v271
    %v273 = vrot.slane %v259, %v272
    %v274 = vcombine.high %v266, %v266
    %v462 = vunpack.c.l.b16 %v18
    %v463 = vunpack.c.l.b16 %v19
    %v464 = vunpack.c.l.b16 %v20
    %v465 = vunpack.c.l.b16 %v21
    %v466 = vunpack.c.l.b16 %v22
    %v467 = vunpack.c.l.b16 %v23
    %v468 = vunpack.c.l.b16 %v24
    %v469 = vunpack.c.l.b16 %v25
    %v470 = vunpack.c.l.b16 %v26
    %v471 = vunpack.c.l.b16 %v27
    %v472 = vunpack.c.l.b16 %v28
    %v473 = vunpack.c.l.b16 %v29
    %v474 = vunpack.c.l.b16 %v30
    %v475 = vunpack.c.l.b16 %v31
    %v476 = vunpack.c.l.b16 %v32
    %v477 = vunpack.c.l.b16 %v33
    %v478 = vunpack.c.l.b16 %v34
    %v479 = vunpack.c.l.b16 %v35
    %v480 = vunpack.c.l.b16 %v36
    %v481 = vunpack.c.l.b16 %v37
    %v482 = vunpack.c.l.b16 %v38
    %v483 = vunpack.c.l.b16 %v39
    %v484 = vunpack.c.l.b16 %v40
    %v485 = vunpack.c.l.b16 %v41
    %v486 = vunpack.c.l.b16 %v42
    %v487 = vunpack.c.l.b16 %v43
    %v488 = vunpack.c.l.b16 %v44
    %v489 = vunpack.c.l.b16 %v45
    %v490 = vunpack.c.l.b16 %v46
    %v491 = vunpack.c.l.b16 %v47
    %v492 = vunpack.c.l.b16 %v48
    %v493 = vunpack.c.l.b16 %v49
    %v494 = vunpack.c.l.b16 %v50
    %v495 = vunpack.c.l.b16 %v51
    %v496 = vunpack.c.l.b16 %v52
    %v497 = vunpack.c.l.b16 %v53
    %v498 = vunpack.c.l.b16 %v54
    %v499 = vunpack.c.l.b16 %v55
    %v500 = vunpack.c.l.b16 %v56
    %v501 = vunpack.c.l.b16 %v57
    %v502 = vunpack.c.l.b16 %v58
    %v503 = vunpack.c.l.b16 %v59
    %v504 = vunpack.c.l.b16 %v60
    %v505 = vunpack.c.l.b16 %v61
    %v506 = vunpack.c.l.b16 %v62
    %v507 = vunpack.c.l.b16 %v63
    %v508 = vunpack.c.l.b16 %v64
    %v509 = vunpack.c.l.b16 %v65
    %v510 = vunpack.c.l.b16 %v66
    %v511 = vunpack.c.l.b16 %v67
    %v512 = vunpack.c.l.b16 %v68
    %v513 = vunpack.c.l.b16 %v69
    %v514 = vunpack.c.l.b16 %v70
    %v515 = vunpack.c.l.b16 %v71
    %v516 = vunpack.c.l.b16 %v72
    %v517 = vunpack.c.l.b16 %v73
    %v518 = vunpack.c.l.b16 %v74
    %v519 = vunpack.c.l.b16 %v75
    %v520 = vunpack.c.l.b16 %v76
    %v521 = vunpack.c.l.b16 %v77
    %v522 = vunpack.c.l.b16 %v78
    %v523 = vunpack.c.l.b16 %v79
    %v524 = vunpack.c.l.b16 %v80
    %v525 = vunpack.c.l.b16 %v81
    %v526 = vunpack.c.l.b16 %v82
    %v527 = vunpack.c.l.b16 %v83
    %v528 = vunpack.c.l.b16 %v84
    %v529 = vunpack.c.l.b16 %v85
    %v530 = vunpack.c.l.b16 %v86
    %v531 = vunpack.c.l.b16 %v87
    %v532 = vunpack.c.l.b16 %v88
    %v533 = vunpack.c.l.b16 %v89
    %v534 = vunpack.c.l.b16 %v90
    %v535 = vunpack.c.l.b16 %v91
    %v536 = vunpack.c.l.b16 %v92
    %v537 = vunpack.c.l.b16 %v93
    %v538 = vunpack.c.l.b16 %v94
    %v539 = vunpack.c.l.b16 %v95
    %v540 = vunpack.c.l.b16 %v96
    %v541 = vunpack.c.l.b16 %v97
    %v542 = vunpack.c.l.b16 %v98
    %v543 = vunpack.c.l.b16 %v99
    %v544 = vunpack.c.l.b16 %v100
    %v545 = vunpack.c.l.b16 %v101
    %v546 = vunpack.c.l.b16 %v102
    %v547 = vunpack.c.l.b16 %v103
    %v548 = vunpack.c.l.b16 %v104
    %v549 = vunpack.c.l.b16 %v105
    %v550 = vunpack.c.l.b16 %v106
    %v551 = vunpack.c.l.b16 %v107
    %v552 = vunpack.c.l.b16 %v108
    %v553 = vunpack.c.l.b16 %v109
    %v554 = vunpack.c.l.b16 %v110
    %v555 = vunpack.c.l.b16 %v111
    %v556 = vunpack.c.l.b16 %v112
    %v557 = vunpack.c.l.b16 %v113
    %v558 = vunpack.c.l.b16 %v114
    %v559 = vunpack.c.l.b16 %v115
    %v560 = vunpack.c.l.b16 %v116
    %v561 = vunpack.c.l.b16 %v117
    %v562 = vunpack.c.l.b16 %v118
    %v563 = vunpack.c.l.b16 %v119
    %v564 = vunpack.c.l.b16 %v120
    %v565 = vunpack.c.l.b16 %v121
    %v566 = vunpack.c.l.b16 %v122
    %v567 = vunpack.c.l.b16 %v123
    %v568 = vunpack.c.l.b16 %v124
    %v569 = vunpack.c.l.b16 %v125
    %v570 = vunpack.c.l.b16 %v126
    %v571 = vunpack.c.l.b16 %v127
    %v572 = vunpack.c.l.b16 %v128
    %v573 = vunpack.c.l.b16 %v129
    %v574 = vunpack.c.l.b16 %v130
    %v575 = vunpack.c.l.b16 %v131
    %v576 = vunpack.c.l.b16 %v132
    %v577 = vunpack.c.l.b16 %v133
    %v578 = vunpack.c.l.b16 %v134
    %v579 = vunpack.c.l.b16 %v135
    %v580 = vunpack.c.l.b16 %v136
    %v581 = vunpack.c.l.b16 %v137
    %v582 = vunpack.c.l.b16 %v138
    %v583 = vunpack.c.l.b16 %v139
    %v584 = vunpack.c.l.b16 %v140
    %v585 = vunpack.c.l.b16 %v141
    %v586 = vunpack.c.l.b16 %v142
    %v587 = vunpack.c.l.b16 %v143
    %v588 = vunpack.c.l.b16 %v144
    %v589 = vunpack.c.l.b16 %v145
    %v590 = vunpack.c.l.b16 %v146
    %v591 = vunpack.c.l.b16 %v147
    %v592 = vunpack.c.l.b16 %v148
    %v593 = vunpack.c.l.b16 %v149
    %v594 = vunpack.c.l.b16 %v150
    %v595 = vunpack.c.l.b16 %v151
    %v596 = vunpack.c.l.b16 %v152
    %v597 = vunpack.c.l.b16 %v153
    %v598 = vunpack.c.l.b16 %v154
    %v599 = vunpack.c.l.b16 %v155
    %v600 = vunpack.c.l.b16 %v156
    %v601 = vunpack.c.l.b16 %v157
    %v602 = vunpack.c.l.b16 %v158
    %v603 = vunpack.c.l.b16 %v159
    %v604 = vunpack.c.l.b16 %v160
    %v605 = vunpack.c.l.b16 %v161
    %v606 = vunpack.c.l.b16 %v162
    %v607 = vunpack.c.l.b16 %v163
    %v608 = vunpack.c.l.b16 %v164
    %v609 = vunpack.c.l.b16 %v165
    %v610 = vunpack.c.l.b16 %v166
    %v611 = vunpack.c.l.b16 %v167
    %v612 = vunpack.c.l.b16 %v168
    %v613 = vunpack.c.l.b16 %v169
    %v614 = vunpack.c.l.b16 %v170
    %v615 = vunpack.c.l.b16 %v171
    %v616 = vunpack.c.l.b16 %v172
    %v617 = vunpack.c.l.b16 %v173
    %v618 = vunpack.c.l.b16 %v174
    %v619 = vunpack.c.l.b16 %v175
    %v620 = vunpack.c.l.b16 %v176
    %v621 = vunpack.c.l.b16 %v177
    %v622 = vunpack.c.l.b16 %v178
    %v623 = vunpack.c.l.b16 %v179
    %v624 = vunpack.c.l.b16 %v180
    %v625 = vunpack.c.l.b16 %v181
    %v626 = vunpack.c.l.b16 %v182
    %v627 = vunpack.c.l.b16 %v183
    %v628 = vunpack.c.l.b16 %v184
    %v629 = vunpack.c.l.b16 %v185
    %v630 = vunpack.c.l.b16 %v186
    %v631 = vunpack.c.l.b16 %v187
    %v632 = vunpack.c.l.b16 %v188
    %v633 = vunpack.c.l.b16 %v189
    %v634 = vunpack.c.l.b16 %v190
    %v635 = vunpack.c.l.b16 %v191
    %v636 = vunpack.c.l.b16 %v192
    %v637 = vunpack.c.l.b16 %v193
    %v638 = vpack.c.b16 %v463, %v462
    %v639 = vpack.c.b16 %v465, %v464
    %v640 = vpack.c.b16 %v467, %v466
    %v641 = vpack.c.b16 %v469, %v468
    %v642 = vpack.c.b16 %v471, %v470
    %v643 = vpack.c.b16 %v473, %v472
    %v644 = vpack.c.b16 %v475, %v474
    %v645 = vpack.c.b16 %v477, %v476
    %v646 = vpack.c.b16 %v479, %v478
    %v647 = vpack.c.b16 %v481, %v480
    %v648 = vpack.c.b16 %v483, %v482
    %v649 = vpack.c.b16 %v485, %v484
    %v650 = vpack.c.b16 %v487, %v486
    %v651 = vpack.c.b16 %v489, %v488
    %v652 = vpack.c.b16 %v491, %v490
    %v653 = vpack.c.b16 %v493, %v492
    %v654 = vpack.c.b16 %v495, %v494
    %v655 = vpack.c.b16 %v497, %v496
    %v656 = vpack.c.b16 %v499, %v498
    %v657 = vpack.c.b16 %v501, %v500
    %v658 = vpack.c.b16 %v503, %v502
    %v659 = vpack.c.b16 %v505, %v504
    %v660 = vpack.c.b16 %v507, %v506
    %v661 = vpack.c.b16 %v509, %v508
    %v662 = vpack.c.b16 %v511, %v510
    %v663 = vpack.c.b16 %v513, %v512
    %v664 = vpack.c.b16 %v515, %v514
    %v665 = vpack.c.b16 %v517, %v516
    %v666 = vpack.c.b16 %v519, %v518
    %v667 = vpack.c.b16 %v521, %v520
    %v668 = vpack.c.b16 %v523, %v522
    %v669 = vpack.c.b16 %v525, %v524
    %v670 = vpack.c.b16 %v527, %v526
    %v671 = vpack.c.b16 %v529, %v528
    %v672 = vpack.c.b16 %v531, %v530
    %v673 = vpack.c.b16 %v533, %v532
    %v674 = vpack.c.b16 %v535, %v534
    %v675 = vpack.c.b16 %v537, %v536
    %v676 = vpack.c.b16 %v539, %v538
    %v677 = vpack.c.b16 %v541, %v540
    %v678 = vpack.c.b16 %v543, %v542
    %v679 = vpack.c.b16 %v545, %v544
    %v680 = vpack.c.b16 %v547, %v546
    %v681 = vpack.c.b16 %v549, %v548
    %v682 = vpack.c.b16 %v551, %v550
    %v683 = vpack.c.b16 %v553, %v552
    %v684 = vpack.c.b16 %v555, %v554
    %v685 = vpack.c.b16 %v557, %v556
    %v686 = vpack.c.b16 %v559, %v558
    %v687 = vpack.c.b16 %v561, %v560
    %v688 = vpack.c.b16 %v563, %v562
    %v689 = vpack.c.b16 %v565, %v564
    %v690 = vpack.c.b16 %v567, %v566
    %v691 = vpack.c.b16 %v569, %v568
    %v692 = vpack.c.b16 %v571, %v570
    %v693 = vpack.c.b16 %v573, %v572
    %v694 = vpack.c.b16 %v575, %v574
    %v695 = vpack.c.b16 %v577, %v576
    %v696 = vpack.c.b16 %v579, %v578
    %v697 = vpack.c.b16 %v581, %v580
    %v698 = vpack.c.b16 %v583, %v582
    %v699 = vpack.c.b16 %v585, %v584
    %v700 = vpack.c.b16 %v587, %v586
    %v701 = vpack.c.b16 %v589, %v588
    %v702 = vpack.c.b16 %v591, %v590
    %v703 = vpack.c.b16 %v593, %v592
    %v704 = vpack.c.b16 %v595, %v594
    %v705 = vpack.c.b16 %v597, %v596
    %v706 = vpack.c.b16 %v599, %v598
    %v707 = vpack.c.b16 %v601, %v600
    %v708 = vpack.c.b16 %v603, %v602
    %v709 = vpack.c.b16 %v605, %v604
    %v710 = vpack.c.b16 %v607, %v606
    %v711 = vpack.c.b16 %v609, %v608
    %v712 = vpack.c.b16 %v611, %v610
    %v713 = vpack.c.b16 %v613, %v612
    %v714 = vpack.c.b16 %v615, %v614
    %v715 = vpack.c.b16 %v617, %v616
    %v716 = vpack.c.b16 %v619, %v618
    %v717 = vpack.c.b16 %v621, %v620
    %v718 = vpack.c.b16 %v623, %v622
    %v719 = vpack.c.b16 %v625, %v624
    %v720 = vpack.c.b16 %v627, %v626
    %v721 = vpack.c.b16 %v629, %v628
    %v722 = vpack.c.b16 %v631, %v630
    %v723 = vpack.c.b16 %v633, %v632
    %v724 = vpack.c.b16 %v635, %v634
    %v725 = vpack.c.b16 %v637, %v636
    %814 = vmatprep.subr.bf16.mxu0 0
    %815 = vmatpush1.bf16.msra.mxu0 %v645
    %816 = vmatprep.subr.bf16.mxu0 0
    %817 = vmatpush1.bf16.msra.mxu0 %v644
    %818 = vmatprep.subr.bf16.mxu0 0
    %819 = vmatpush1.bf16.msra.mxu0 %v643
    %820 = vmatprep.subr.bf16.mxu0 0
    %821 = vmatpush1.bf16.msra.mxu0 %v642
    %822 = vmatprep.subr.bf16.mxu0 0
    %823 = vmatpush1.bf16.msra.mxu0 %v641
    %824 = vmatprep.subr.bf16.mxu0 0
    %825 = vmatpush1.bf16.msra.mxu0 %v640
    %826 = vmatprep.subr.bf16.mxu0 0
    %827 = vmatpush1.bf16.msra.mxu0 %v639
    %828 = vmatprep.subr.bf16.mxu0 0
    %829 = vmatpush1.bf16.msra.mxu0 %v638
    %830 = vmatprep.subr.bf16.mxu0 0
    %831 = vmatpush2.bf16.msra.mxu0 %v653
    %832 = vmatprep.subr.bf16.mxu0 0
    %833 = vmatpush2.bf16.msra.mxu0 %v652
    %834 = vmatprep.subr.bf16.mxu0 0
    %835 = vmatpush2.bf16.msra.mxu0 %v651
    %836 = vmatprep.subr.bf16.mxu0 0
    %837 = vmatpush2.bf16.msra.mxu0 %v650
    %838 = vmatprep.subr.bf16.mxu0 0
    %839 = vmatpush2.bf16.msra.mxu0 %v649
    %840 = vmatprep.subr.bf16.mxu0 0
    %841 = vmatpush2.bf16.msra.mxu0 %v648
    %842 = vmatprep.subr.bf16.mxu0 0
    %843 = vmatpush2.bf16.msra.mxu0 %v647
    %844 = vmatprep.subr.bf16.mxu0 0
    %845 = vmatpush2.bf16.msra.mxu0 %v646
    %846 = vmatprep.mubr.bf16.mxu0 %v240
    %847 = vmatmul.mubr.bf16.gmra.mxu0 %v226
    %v848 = vpop.f32.mrf.mxu0
    %v849 = vadd.f32 %v199, %v848
    %v850 = vpop.f32.mrf.mxu0
    %v851 = vpop.f32.mrf.mxu0
    %v852 = vpop.f32.mrf.mxu0
    %853 = vdwg.mxu0
    %854 = vmatprep.subr.bf16.mxu0 0
    %855 = vmatpush1.bf16.msra.mxu0 %v661
    %856 = vmatprep.subr.bf16.mxu0 0
    %857 = vmatpush1.bf16.msra.mxu0 %v660
    %858 = vmatprep.subr.bf16.mxu0 0
    %859 = vmatpush1.bf16.msra.mxu0 %v659
    %860 = vmatprep.subr.bf16.mxu0 0
    %861 = vmatpush1.bf16.msra.mxu0 %v658
    %862 = vmatprep.subr.bf16.mxu0 0
    %863 = vmatpush1.bf16.msra.mxu0 %v657
    %864 = vmatprep.subr.bf16.mxu0 0
    %865 = vmatpush1.bf16.msra.mxu0 %v656
    %866 = vmatprep.subr.bf16.mxu0 0
    %867 = vmatpush1.bf16.msra.mxu0 %v655
    %868 = vmatprep.subr.bf16.mxu0 0
    %869 = vmatpush1.bf16.msra.mxu0 %v654
    %870 = vmatprep.subr.bf16.mxu0 0
    %871 = vmatpush2.bf16.msra.mxu0 %v669
    %872 = vmatprep.subr.bf16.mxu0 0
    %873 = vmatpush2.bf16.msra.mxu0 %v668
    %874 = vmatprep.subr.bf16.mxu0 0
    %875 = vmatpush2.bf16.msra.mxu0 %v667
    %876 = vmatprep.subr.bf16.mxu0 0
    %877 = vmatpush2.bf16.msra.mxu0 %v666
    %878 = vmatprep.subr.bf16.mxu0 0
    %879 = vmatpush2.bf16.msra.mxu0 %v665
    %880 = vmatprep.subr.bf16.mxu0 0
    %881 = vmatpush2.bf16.msra.mxu0 %v664
    %882 = vmatprep.subr.bf16.mxu0 0
    %883 = vmatpush2.bf16.msra.mxu0 %v663
    %884 = vmatprep.subr.bf16.mxu0 0
    %885 = vmatpush2.bf16.msra.mxu0 %v662
    %886 = vmatprep.mubr.bf16.mxu0 %v250
    %887 = vmatmul.mubr.bf16.gmra.mxu0 %v248
    %v888 = vpop.f32.mrf.mxu0
    %v889 = vadd.f32 %v849, %v888
    %v890 = vpop.f32.mrf.mxu0
    %v891 = vpop.f32.mrf.mxu0
    %v892 = vpop.f32.mrf.mxu0
    %893 = vdwg.mxu0
    %894 = vmatprep.subr.bf16.mxu0 0
    %895 = vmatpush1.bf16.msra.mxu0 %v677
    %896 = vmatprep.subr.bf16.mxu0 0
    %897 = vmatpush1.bf16.msra.mxu0 %v676
    %898 = vmatprep.subr.bf16.mxu0 0
    %899 = vmatpush1.bf16.msra.mxu0 %v675
    %900 = vmatprep.subr.bf16.mxu0 0
    %901 = vmatpush1.bf16.msra.mxu0 %v674
    %902 = vmatprep.subr.bf16.mxu0 0
    %903 = vmatpush1.bf16.msra.mxu0 %v673
    %904 = vmatprep.subr.bf16.mxu0 0
    %905 = vmatpush1.bf16.msra.mxu0 %v672
    %906 = vmatprep.subr.bf16.mxu0 0
    %907 = vmatpush1.bf16.msra.mxu0 %v671
    %908 = vmatprep.subr.bf16.mxu0 0
    %909 = vmatpush1.bf16.msra.mxu0 %v670
    %910 = vmatprep.subr.bf16.mxu0 0
    %911 = vmatpush2.bf16.msra.mxu0 %v685
    %912 = vmatprep.subr.bf16.mxu0 0
    %913 = vmatpush2.bf16.msra.mxu0 %v684
    %914 = vmatprep.subr.bf16.mxu0 0
    %915 = vmatpush2.bf16.msra.mxu0 %v683
    %916 = vmatprep.subr.bf16.mxu0 0
    %917 = vmatpush2.bf16.msra.mxu0 %v682
    %918 = vmatprep.subr.bf16.mxu0 0
    %919 = vmatpush2.bf16.msra.mxu0 %v681
    %920 = vmatprep.subr.bf16.mxu0 0
    %921 = vmatpush2.bf16.msra.mxu0 %v680
    %922 = vmatprep.subr.bf16.mxu0 0
    %923 = vmatpush2.bf16.msra.mxu0 %v679
    %924 = vmatprep.subr.bf16.mxu0 0
    %925 = vmatpush2.bf16.msra.mxu0 %v678
    %926 = vmatprep.mubr.bf16.mxu0 %v247
    %927 = vmatmul.mubr.bf16.gmra.mxu0 %v233
    %v928 = vpop.f32.mrf.mxu0
    %v929 = vadd.f32 %v889, %v928
    %v930 = vpop.f32.mrf.mxu0
    %v931 = vpop.f32.mrf.mxu0
    %v932 = vpop.f32.mrf.mxu0
    %933 = vdwg.mxu0
    %934 = vmatprep.subr.bf16.mxu0 0
    %935 = vmatpush1.bf16.msra.mxu0 %v693
    %936 = vmatprep.subr.bf16.mxu0 0
    %937 = vmatpush1.bf16.msra.mxu0 %v692
    %938 = vmatprep.subr.bf16.mxu0 0
    %939 = vmatpush1.bf16.msra.mxu0 %v691
    %940 = vmatprep.subr.bf16.mxu0 0
    %941 = vmatpush1.bf16.msra.mxu0 %v690
    %942 = vmatprep.subr.bf16.mxu0 0
    %943 = vmatpush1.bf16.msra.mxu0 %v689
    %944 = vmatprep.subr.bf16.mxu0 0
    %945 = vmatpush1.bf16.msra.mxu0 %v688
    %946 = vmatprep.subr.bf16.mxu0 0
    %947 = vmatpush1.bf16.msra.mxu0 %v687
    %948 = vmatprep.subr.bf16.mxu0 0
    %949 = vmatpush1.bf16.msra.mxu0 %v686
    %950 = vmatprep.subr.bf16.mxu0 0
    %951 = vmatpush2.bf16.msra.mxu0 %v701
    %952 = vmatprep.subr.bf16.mxu0 0
    %953 = vmatpush2.bf16.msra.mxu0 %v700
    %954 = vmatprep.subr.bf16.mxu0 0
    %955 = vmatpush2.bf16.msra.mxu0 %v699
    %956 = vmatprep.subr.bf16.mxu0 0
    %957 = vmatpush2.bf16.msra.mxu0 %v698
    %958 = vmatprep.subr.bf16.mxu0 0
    %959 = vmatpush2.bf16.msra.mxu0 %v697
    %960 = vmatprep.subr.bf16.mxu0 0
    %961 = vmatpush2.bf16.msra.mxu0 %v696
    %962 = vmatprep.subr.bf16.mxu0 0
    %963 = vmatpush2.bf16.msra.mxu0 %v695
    %964 = vmatprep.subr.bf16.mxu0 0
    %965 = vmatpush2.bf16.msra.mxu0 %v694
    %966 = vmatprep.mubr.bf16.mxu0 %v251
    %967 = vmatmul.mubr.bf16.gmra.mxu0 %v249
    %v968 = vpop.f32.mrf.mxu0
    %v969 = vadd.f32 %v929, %v968
    %v970 = vpop.f32.mrf.mxu0
    %v971 = vpop.f32.mrf.mxu0
    %v972 = vpop.f32.mrf.mxu0
    %973 = vdwg.mxu0
    %974 = vmatprep.subr.bf16.mxu0 0
    %975 = vmatpush1.bf16.msra.mxu0 %v709
    %976 = vmatprep.subr.bf16.mxu0 0
    %977 = vmatpush1.bf16.msra.mxu0 %v708
    %978 = vmatprep.subr.bf16.mxu0 0
    %979 = vmatpush1.bf16.msra.mxu0 %v707
    %980 = vmatprep.subr.bf16.mxu0 0
    %981 = vmatpush1.bf16.msra.mxu0 %v706
    %982 = vmatprep.subr.bf16.mxu0 0
    %983 = vmatpush1.bf16.msra.mxu0 %v705
    %984 = vmatprep.subr.bf16.mxu0 0
    %985 = vmatpush1.bf16.msra.mxu0 %v704
    %986 = vmatprep.subr.bf16.mxu0 0
    %987 = vmatpush1.bf16.msra.mxu0 %v703
    %988 = vmatprep.subr.bf16.mxu0 0
    %989 = vmatpush1.bf16.msra.mxu0 %v702
    %990 = vmatprep.subr.bf16.mxu0 0
    %991 = vmatpush2.bf16.msra.mxu0 %v717
    %992 = vmatprep.subr.bf16.mxu0 0
    %993 = vmatpush2.bf16.msra.mxu0 %v716
    %994 = vmatprep.subr.bf16.mxu0 0
    %995 = vmatpush2.bf16.msra.mxu0 %v715
    %996 = vmatprep.subr.bf16.mxu0 0
    %997 = vmatpush2.bf16.msra.mxu0 %v714
    %998 = vmatprep.subr.bf16.mxu0 0
    %999 = vmatpush2.bf16.msra.mxu0 %v713
    %1000 = vmatprep.subr.bf16.mxu0 0
    %1001 = vmatpush2.bf16.msra.mxu0 %v712
    %1002 = vmatprep.subr.bf16.mxu0 0
    %1003 = vmatpush2.bf16.msra.mxu0 %v711
    %1004 = vmatprep.subr.bf16.mxu0 0
    %1005 = vmatpush2.bf16.msra.mxu0 %v710
    %1006 = vmatprep.mubr.bf16.mxu0 %v273
    %1007 = vmatmul.mubr.bf16.gmra.mxu0 %v266
    %v1008 = vpop.f32.mrf.mxu0
    %v1009 = vadd.f32 %v969, %v1008
    %v1010 = vpop.f32.mrf.mxu0
    %v1011 = vpop.f32.mrf.mxu0
    %v1012 = vpop.f32.mrf.mxu0
    %1013 = vdwg.mxu0
    %1014 = vmatprep.subr.bf16.mxu0 0
    %1015 = vmatpush1.bf16.msra.mxu0 %v725
    %1016 = vmatprep.subr.bf16.mxu0 0
    %1017 = vmatpush1.bf16.msra.mxu0 %v724
    %1018 = vmatprep.subr.bf16.mxu0 0
    %1019 = vmatpush1.bf16.msra.mxu0 %v723
    %1020 = vmatprep.subr.bf16.mxu0 0
    %1021 = vmatpush1.bf16.msra.mxu0 %v722
    %1022 = vmatprep.subr.bf16.mxu0 0
    %1023 = vmatpush1.bf16.msra.mxu0 %v721
    %1024 = vmatprep.subr.bf16.mxu0 0
    %1025 = vmatpush1.bf16.msra.mxu0 %v720
    %1026 = vmatprep.subr.bf16.mxu0 0
    %1027 = vmatpush1.bf16.msra.mxu0 %v719
    %1028 = vmatprep.subr.bf16.mxu0 0
    %1029 = vmatpush1.bf16.msra.mxu0 %v718
    %1030 = vmatprep.subr.bf16.mxu0 0
    %1031 = vmatpush2.bf16.msra.mxu0 0
    %1032 = vmatprep.subr.bf16.mxu0 0
    %1033 = vmatpush2.bf16.msra.mxu0 0
    %1034 = vmatprep.subr.bf16.mxu0 0
    %1035 = vmatpush2.bf16.msra.mxu0 0
    %1036 = vmatprep.subr.bf16.mxu0 0
    %1037 = vmatpush2.bf16.msra.mxu0 0
    %1038 = vmatprep.subr.bf16.mxu0 0
    %1039 = vmatpush2.bf16.msra.mxu0 0
    %1040 = vmatprep.subr.bf16.mxu0 0
    %1041 = vmatpush2.bf16.msra.mxu0 0
    %1042 = vmatprep.subr.bf16.mxu0 0
    %1043 = vmatpush2.bf16.msra.mxu0 0
    %1044 = vmatprep.subr.bf16.mxu0 0
    %1045 = vmatpush2.bf16.msra.mxu0 0
    %1046 = vmatprep.mubr.bf16.mxu0 0
    %1047 = vmatmul.mubr.bf16.gmra.mxu0 %v274
    %v1048 = vpop.f32.mrf.mxu0
    %v1049 = vadd.f32 %v1009, %v1048
    %v1050 = vpop.f32.mrf.mxu0
    %v1051 = vpop.f32.mrf.mxu0
    %v1052 = vpop.f32.mrf.mxu0
    %1053 = vdwg.mxu0
    %vm1054 = vcmask 74752
    %1055 = vst.msk [vmem:[#allocation2] sm:$0x3] %vm1054, %v1049
    // Predicated region
    $region14: #{net_forward.17} parent=1 // pred_check
      _
    $region15: #{net_forward.17} parent=1 // pred_check_branch
      %1057 = sbr.rel (0) target = $region17
    $region16: #{net_forward.17} parent=1 // pred_region
      %s1059 = ssub.s32 32, 32
      %1060 = vsyncadd [#allocation3], %s1059
      %s1062 = sshll.u32 [#allocation2], 4
      %s1063 = int_to_ptr.vmem [resolvable:$true] %s1062
      %1065 = dma.vmem_to_hbm [thread:$0]  %s1063, 32, %s3, [#allocation3]
    $region17: #{net_forward.17} parent=1 // pred_fallthru
      _
    // Predicated region
    $region18: #{net_forward.17} parent=1 // pred_check
      _
    $region19: #{net_forward.17} parent=1 // pred_check_branch
      %1067 = sbr.rel (0) target = $region21
    $region20: #{net_forward.17} parent=1 // pred_region
      %1068 = dma.done [#allocation3], 32
    $region21: #{net_forward.17} parent=1 // pred_fallthru
      _
    %1069 = vsyncpa [#allocation3], 1

</llo_original>
